<compile_context>
chip_gen: v7x
topology: tpu7x:2x2x1
jax: 0.10.0
libtpu: 0.0.40
codegen_flags: <defaults>
</compile_context>

<pallas_src>
import functools
import math

import numpy as np
import jax
import jax.numpy as jnp
from jax.experimental import pallas as pl
from jax.experimental.pallas import tpu as pltpu

EMBED_DIM = 32
N_HEADS = 4
N_LAYERS = 2
DFF = 2048           # nn.TransformerEncoderLayer default dim_feedforward
DFF_CHUNK = 512      # FFN hidden chunking (keeps (N, chunk) intermediates small)
LN_EPS = 1e-5
VMEM_LIMIT_BYTES = 40 * 1024 * 1024   # > default scoped VMEM, < v7x 64 MiB physical
# TODO(synk): dropout (p=0.1) is train-time only; forward here matches eval mode.


def _layer_norm(x, w, b):
    mu = jnp.mean(x, axis=-1, keepdims=True)
    var = jnp.mean((x - mu) ** 2, axis=-1, keepdims=True)
    return (x - mu) * jax.lax.rsqrt(var + LN_EPS) * w + b


def tab_transformer_kernel(
    x_ref,                        # (bt*F, 1) f32
    emb_w_ref, emb_b_ref,         # (1, E), (1, E) f32
    wqkv_ref, bqkv_ref,           # (L, E, 3E) bf16, (L, 1, 3E) f32
    wo_ref, ob_ref,               # (L, E, E) bf16, (L, 1, E) f32
    ln1_w_ref, ln1_b_ref,         # (L, 1, E) f32
    ff1_w_ref, ff1_b_ref,         # (L, E, DFF) bf16, (L, 1, DFF) f32
    ff2_w_ref, ff2_b_ref,         # (L, DFF, E) bf16, (L, 1, E) f32
    ln2_w_ref, ln2_b_ref,         # (L, 1, E) f32
    fc_w_ref, fc_b_ref,           # (1, E), (1, 1) f32
    o_ref,                        # (bt, 1) f32
    *,
    n_features,
):
    N = x_ref.shape[0]            # bt * F rows in this batch tile
    F = n_features
    Bt = N // F
    E = EMBED_DIM
    H = N_HEADS
    Dh = E // H
    scale = 1.0 / math.sqrt(Dh)
    bf16 = jnp.bfloat16

    # ---- embedding: Linear(1, E) applied to all bt*F scalars in one broadcast ----
    x = x_ref[...] * emb_w_ref[...] + emb_b_ref[...]                  # (N, E) f32

    for l in range(N_LAYERS):                                          # static unroll
        # ---- multi-head self-attention: single fused QKV projection ----
        x_bf = x.astype(bf16)                                          # one cast / layer
        qkv = jnp.dot(x_bf, wqkv_ref[l],
                      preferred_element_type=jnp.float32) + bqkv_ref[l]   # (N, 3E)

        heads = []
        for h in range(H):                                             # H = 4, static
            qh = qkv[:, h * Dh:(h + 1) * Dh].reshape(Bt, F, Dh).astype(bf16)
            kh = qkv[:, E + h * Dh:E + (h + 1) * Dh].reshape(Bt, F, Dh).astype(bf16)
            vh = qkv[:, 2 * E + h * Dh:2 * E + (h + 1) * Dh].reshape(Bt, F, Dh).astype(bf16)

            s = jnp.einsum("bqd,bkd->bqk", qh, kh,
                           preferred_element_type=jnp.float32) * scale     # (Bt, F, F)
            s = s - jnp.max(s, axis=-1, keepdims=True)
            p = jnp.exp(s)
            p = p * pl.reciprocal(jnp.sum(p, axis=-1, keepdims=True), approx=True)

            oh = jnp.einsum("bqk,bkd->bqd", p.astype(bf16), vh,
                            preferred_element_type=jnp.float32)            # (Bt, F, Dh)
            heads.append(oh.reshape(N, Dh))

        attn = jnp.concatenate(heads, axis=-1)                          # (N, E) f32
        attn = jnp.dot(attn.astype(bf16), wo_ref[l],
                       preferred_element_type=jnp.float32) + ob_ref[l]  # out-proj

        x = _layer_norm(x + attn, ln1_w_ref[l], ln1_b_ref[l])

        # ---- feed-forward (relu), chunked over DFF with an (N, E) accumulator ----
        x_ff = x.astype(bf16)                                           # one cast / layer
        ff = jnp.zeros((N, E), jnp.float32)
        for c in range(DFF // DFF_CHUNK):                               # 4 chunks, static
            c0 = c * DFF_CHUNK
            h1 = jnp.dot(x_ff, ff1_w_ref[l, :, c0:c0 + DFF_CHUNK],
                         preferred_element_type=jnp.float32)
            h1 = h1 + ff1_b_ref[l, :, c0:c0 + DFF_CHUNK]                # (N, chunk)
            h1 = jnp.maximum(h1, 0.0).astype(bf16)
            ff = ff + jnp.dot(h1, ff2_w_ref[l, c0:c0 + DFF_CHUNK, :],
                              preferred_element_type=jnp.float32)       # (N, E)
        ff = ff + ff2_b_ref[l]

        x = _layer_norm(x + ff, ln2_w_ref[l], ln2_b_ref[l])

    # ---- mean-pool over features + classifier (VPU multiply + lane reduce) ----
    pooled = jnp.mean(x.reshape(Bt, F, E), axis=1)                      # (Bt, E)
    logits = jnp.sum(pooled * fc_w_ref[...], axis=-1, keepdims=True) + fc_b_ref[...]
    o_ref[...] = logits                                                 # (Bt, 1)


def init_params(key):
    """PyTorch-shaped, float32 master parameters (deterministic, synthetic)."""
    E, L, D = EMBED_DIM, N_LAYERS, DFF
    keys = iter(jax.random.split(key, 32))

    def rnd(shape, s=0.05):
        return s * jax.random.normal(next(keys), shape, dtype=jnp.float32)

    return {
        "emb_w": rnd((E, 1)), "emb_b": rnd((E,)),          # nn.Linear(1, E)
        "in_w": rnd((L, 3 * E, E)), "in_b": rnd((L, 3 * E)),
        "out_w": rnd((L, E, E)), "out_b": rnd((L, E)),
        "ln1_w": 1.0 + rnd((L, E)), "ln1_b": rnd((L, E)),
        "ff1_w": rnd((L, D, E)), "ff1_b": rnd((L, D)),
        "ff2_w": rnd((L, E, D)), "ff2_b": rnd((L, E)),
        "ln2_w": 1.0 + rnd((L, E)), "ln2_b": rnd((L, E)),
        "fc_w": rnd((1, E)), "fc_b": rnd((1,)),            # nn.Linear(E, 1)
    }


def pack_params(pt):
    """Pre-transpose / fuse / bf16-cast for the kernel."""
    E, L, D = EMBED_DIM, N_LAYERS, DFF
    bf16 = jnp.bfloat16

    return {
        "emb_w": pt["emb_w"].T,                                       # (1, E)
        "emb_b": pt["emb_b"].reshape(1, E),
        # fused QKV projection: columns ordered [q | k | v], heads contiguous.
        "wqkv": jnp.transpose(pt["in_w"], (0, 2, 1)).astype(bf16),    # (L, E, 3E)
        "bqkv": pt["in_b"].reshape(L, 1, 3 * E),
        "wo": jnp.transpose(pt["out_w"], (0, 2, 1)).astype(bf16),     # (L, E, E)
        "ob": pt["out_b"].reshape(L, 1, E),
        "ln1_w": pt["ln1_w"].reshape(L, 1, E), "ln1_b": pt["ln1_b"].reshape(L, 1, E),
        "ff1_w": jnp.transpose(pt["ff1_w"], (0, 2, 1)).astype(bf16),  # (L, E, DFF)
        "ff1_b": pt["ff1_b"].reshape(L, 1, D),
        "ff2_w": jnp.transpose(pt["ff2_w"], (0, 2, 1)).astype(bf16),  # (L, DFF, E)
        "ff2_b": pt["ff2_b"].reshape(L, 1, E),
        "ln2_w": pt["ln2_w"].reshape(L, 1, E), "ln2_b": pt["ln2_b"].reshape(L, 1, E),
        "fc_w": pt["fc_w"],                                           # (1, E) row
        "fc_b": pt["fc_b"].reshape(1, 1),
    }


def _pick_batch_tile(batch):
    """Batch-tile rows per grid step.

    - small batches: single tile.
    - otherwise: cap at 128 rows (bounded VMEM on all generations) and at
      batch // 2 (grid >= 2 so v7x's second TensorCore gets a tile); never
      fall back to bt == batch for large batches (the batch is padded instead).
    """
    if batch < 16:
        return batch
    bt = min(128, (batch // 2) // 8 * 8)
    return max(bt, 8)


def tab_transformer(x, kp):
    B, F = x.shape
    bt = _pick_batch_tile(B)
    grid_n = pl.cdiv(B, bt)
    Bp = grid_n * bt
    if Bp != B:
        x = jnp.pad(x, ((0, Bp - B), (0, 0)))       # padded rows stay finite end-to-end

    x2 = x.reshape(Bp * F, 1).astype(jnp.float32)

    weight_args = (
        kp["emb_w"], kp["emb_b"],
        kp["wqkv"], kp["bqkv"],
        kp["wo"], kp["ob"],
        kp["ln1_w"], kp["ln1_b"],
        kp["ff1_w"], kp["ff1_b"], kp["ff2_w"], kp["ff2_b"],
        kp["ln2_w"], kp["ln2_b"],
        kp["fc_w"], kp["fc_b"],
    )

    def full_spec(a):
        nd = a.ndim
        return pl.BlockSpec(a.shape, lambda i, _nd=nd: (0,) * _nd)

    in_specs = [pl.BlockSpec((bt * F, 1), lambda i: (i, 0))]
    in_specs += [full_spec(a) for a in weight_args]
    out_specs = pl.BlockSpec((bt, 1), lambda i: (i, 0))

    out = pl.pallas_call(
        functools.partial(tab_transformer_kernel, n_features=F),
        out_shape=jax.ShapeDtypeStruct((Bp, 1), jnp.float32),
        grid=(grid_n,),
        in_specs=in_specs,
        out_specs=out_specs,
        compiler_params=pltpu.CompilerParams(
            dimension_semantics=("parallel",),
            vmem_limit_bytes=VMEM_LIMIT_BYTES),
    )(x2, *weight_args)
    return out[:B, 0]


def tab_transformer_ref(x, pt):
    """Pure-JAX f32 reference mirroring the PyTorch eval-mode forward."""
    B, F = x.shape
    E, H = EMBED_DIM, N_HEADS
    Dh = E // H
    h = x[..., None] * pt["emb_w"][:, 0] + pt["emb_b"]                 # (B, F, E)
    for l in range(N_LAYERS):
        qkv = h @ pt["in_w"][l].T + pt["in_b"][l]                      # (B, F, 3E)
        q, k, v = qkv[..., :E], qkv[..., E:2 * E], qkv[..., 2 * E:]
        q = q.reshape(B, F, H, Dh)
        k = k.reshape(B, F, H, Dh)
        v = v.reshape(B, F, H, Dh)
        s = jnp.einsum("bqhd,bkhd->bhqk", q, k) / math.sqrt(Dh)
        p = jax.nn.softmax(s, axis=-1)
        o = jnp.einsum("bhqk,bkhd->bqhd", p, v).reshape(B, F, E)
        o = o @ pt["out_w"][l].T + pt["out_b"][l]
        h = _layer_norm(h + o, pt["ln1_w"][l], pt["ln1_b"][l])
        ff = jax.nn.relu(h @ pt["ff1_w"][l].T + pt["ff1_b"][l])
        ff = ff @ pt["ff2_w"][l].T + pt["ff2_b"][l]
        h = _layer_norm(h + ff, pt["ln2_w"][l], pt["ln2_b"][l])
    pooled = h.mean(axis=1)                                            # (B, E)
    logits = pooled @ pt["fc_w"].T + pt["fc_b"]                        # (B, 1)
    return logits[:, 0]


if __name__ == "__main__":
    B, N_FEATURES = 2, 8
    key = jax.random.PRNGKey(0)
    kx, kparam = jax.random.split(key)
    x = jax.random.normal(kx, (B, N_FEATURES), dtype=jnp.float32)

    pt = init_params(kparam)
    kparams = pack_params(pt)

    out = jax.block_until_ready(tab_transformer(x, kparams))
    assert out.shape == (B,)

    ref = tab_transformer_ref(x, pt)
    np.testing.assert_allclose(np.asarray(out), np.asarray(ref), rtol=2e-2, atol=2e-2)
    print("KERNEL_OK")
</pallas_src>

<mosaic_0001>
module attributes {stable_mosaic.version = 11 : i64} {
  func.func @tab_transformer_kernel(%arg0: i32, %arg1: memref<16x1xf32, #tpu.memory_space<vmem>>, %arg2: memref<1x32xf32, #tpu.memory_space<vmem>>, %arg3: memref<1x32xf32, #tpu.memory_space<vmem>>, %arg4: memref<2x32x96xbf16, #tpu.memory_space<vmem>>, %arg5: memref<2x1x96xf32, #tpu.memory_space<vmem>>, %arg6: memref<2x32x32xbf16, #tpu.memory_space<vmem>>, %arg7: memref<2x1x32xf32, #tpu.memory_space<vmem>>, %arg8: memref<2x1x32xf32, #tpu.memory_space<vmem>>, %arg9: memref<2x1x32xf32, #tpu.memory_space<vmem>>, %arg10: memref<2x32x2048xbf16, #tpu.memory_space<vmem>>, %arg11: memref<2x1x2048xf32, #tpu.memory_space<vmem>>, %arg12: memref<2x2048x32xbf16, #tpu.memory_space<vmem>>, %arg13: memref<2x1x32xf32, #tpu.memory_space<vmem>>, %arg14: memref<2x1x32xf32, #tpu.memory_space<vmem>>, %arg15: memref<2x1x32xf32, #tpu.memory_space<vmem>>, %arg16: memref<1x32xf32, #tpu.memory_space<vmem>>, %arg17: memref<1x1xf32, #tpu.memory_space<vmem>>, %arg18: memref<2x1xf32, #tpu.memory_space<vmem>>) attributes {dimension_semantics = [#tpu.dimension_semantics<parallel>], iteration_bounds = array<i64: 1>, scalar_prefetch = 0 : i64, scratch_operands = 0 : i64, tpu.core_type = #tpu.core_type<tc>, window_params = [{transform_indices = @transform_0, window_bounds = array<i64: 16, 1>}, {pipeline_mode = #tpu.pipeline_mode<synchronous>, transform_indices = @transform_1, window_bounds = array<i64: 1, 32>}, {pipeline_mode = #tpu.pipeline_mode<synchronous>, transform_indices = @transform_2, window_bounds = array<i64: 1, 32>}, {pipeline_mode = #tpu.pipeline_mode<synchronous>, transform_indices = @transform_3, window_bounds = array<i64: 2, 32, 96>}, {pipeline_mode = #tpu.pipeline_mode<synchronous>, transform_indices = @transform_4, window_bounds = array<i64: 2, 1, 96>}, {pipeline_mode = #tpu.pipeline_mode<synchronous>, transform_indices = @transform_5, window_bounds = array<i64: 2, 32, 32>}, {pipeline_mode = #tpu.pipeline_mode<synchronous>, transform_indices = @transform_6, window_bounds = array<i64: 2, 1, 32>}, {pipeline_mode = #tpu.pipeline_mode<synchronous>, transform_indices = @transform_7, window_bounds = array<i64: 2, 1, 32>}, {pipeline_mode = #tpu.pipeline_mode<synchronous>, transform_indices = @transform_8, window_bounds = array<i64: 2, 1, 32>}, {pipeline_mode = #tpu.pipeline_mode<synchronous>, transform_indices = @transform_9, window_bounds = array<i64: 2, 32, 2048>}, {pipeline_mode = #tpu.pipeline_mode<synchronous>, transform_indices = @transform_10, window_bounds = array<i64: 2, 1, 2048>}, {pipeline_mode = #tpu.pipeline_mode<synchronous>, transform_indices = @transform_11, window_bounds = array<i64: 2, 2048, 32>}, {pipeline_mode = #tpu.pipeline_mode<synchronous>, transform_indices = @transform_12, window_bounds = array<i64: 2, 1, 32>}, {pipeline_mode = #tpu.pipeline_mode<synchronous>, transform_indices = @transform_13, window_bounds = array<i64: 2, 1, 32>}, {pipeline_mode = #tpu.pipeline_mode<synchronous>, transform_indices = @transform_14, window_bounds = array<i64: 2, 1, 32>}, {pipeline_mode = #tpu.pipeline_mode<synchronous>, transform_indices = @transform_15, window_bounds = array<i64: 1, 32>}, {pipeline_mode = #tpu.pipeline_mode<synchronous>, transform_indices = @transform_16, window_bounds = array<i64: 1, 1>}, {transform_indices = @transform_17, window_bounds = array<i64: 2, 1>}]} {
    %c0 = arith.constant 0 : index
    %c0_0 = arith.constant 0 : index
    %0 = vector.load %arg1[%c0, %c0_0] : memref<16x1xf32, #tpu.memory_space<vmem>>, vector<16x1xf32>
    %c0_1 = arith.constant 0 : index
    %c0_2 = arith.constant 0 : index
    %1 = vector.load %arg2[%c0_1, %c0_2] : memref<1x32xf32, #tpu.memory_space<vmem>>, vector<1x32xf32>
    %2 = vector.broadcast %0 : vector<16x1xf32> to vector<16x32xf32>
    %3 = vector.broadcast %1 : vector<1x32xf32> to vector<16x32xf32>
    %4 = arith.mulf %2, %3 : vector<16x32xf32>
    %c0_3 = arith.constant 0 : index
    %c0_4 = arith.constant 0 : index
    %5 = vector.load %arg3[%c0_3, %c0_4] : memref<1x32xf32, #tpu.memory_space<vmem>>, vector<1x32xf32>
    %6 = vector.broadcast %5 : vector<1x32xf32> to vector<16x32xf32>
    %7 = arith.addf %4, %6 : vector<16x32xf32>
    %8 = arith.truncf %7 : vector<16x32xf32> to vector<16x32xbf16>
    %c0_5 = arith.constant 0 : index
    %c0_6 = arith.constant 0 : index
    %c0_7 = arith.constant 0 : index
    %9 = vector.load %arg4[%c0_5, %c0_6, %c0_7] : memref<2x32x96xbf16, #tpu.memory_space<vmem>>, vector<1x32x96xbf16>
    %10 = vector.shape_cast %9 : vector<1x32x96xbf16> to vector<32x96xbf16>
    %cst = arith.constant dense<0.000000e+00> : vector<16x96xf32>
    %11 = tpu.matmul %8, %10, %cst {dimension_numbers = #tpu.dot_dimension_numbers<[1], [0], [0], [1], [0, 0, 1, 1], [], []>} : vector<16x32xbf16>, vector<32x96xbf16>, vector<16x96xf32> -> vector<16x96xf32>
    %c0_8 = arith.constant 0 : index
    %c0_9 = arith.constant 0 : index
    %c0_10 = arith.constant 0 : index
    %12 = vector.load %arg5[%c0_8, %c0_9, %c0_10] : memref<2x1x96xf32, #tpu.memory_space<vmem>>, vector<1x1x96xf32>
    %13 = vector.shape_cast %12 : vector<1x1x96xf32> to vector<1x96xf32>
    %14 = vector.broadcast %13 : vector<1x96xf32> to vector<16x96xf32>
    %15 = arith.addf %11, %14 : vector<16x96xf32>
    %16 = vector.extract_strided_slice %15 {offsets = [0, 0], sizes = [16, 8], strides = [1, 1]} : vector<16x96xf32> to vector<16x8xf32>
    %17 = vector.shape_cast %16 : vector<16x8xf32> to vector<2x8x8xf32>
    %18 = arith.truncf %17 : vector<2x8x8xf32> to vector<2x8x8xbf16>
    %19 = vector.extract_strided_slice %15 {offsets = [0, 32], sizes = [16, 8], strides = [1, 1]} : vector<16x96xf32> to vector<16x8xf32>
    %20 = vector.shape_cast %19 : vector<16x8xf32> to vector<2x8x8xf32>
    %21 = arith.truncf %20 : vector<2x8x8xf32> to vector<2x8x8xbf16>
    %22 = vector.extract_strided_slice %15 {offsets = [0, 64], sizes = [16, 8], strides = [1, 1]} : vector<16x96xf32> to vector<16x8xf32>
    %23 = vector.shape_cast %22 : vector<16x8xf32> to vector<2x8x8xf32>
    %24 = arith.truncf %23 : vector<2x8x8xf32> to vector<2x8x8xbf16>
    "tpu.trace_start"() <{level = 10 : i32, message = "bqd,bkd->bqk"}> : () -> ()
    %cst_11 = arith.constant dense<0.000000e+00> : vector<2x8x8xf32>
    %25 = tpu.matmul %18, %21, %cst_11 {dimension_numbers = #tpu.dot_dimension_numbers<[2], [2], [1], [1], [0, 0, 0, 1, 1, 1], [0], [0]>} : vector<2x8x8xbf16>, vector<2x8x8xbf16>, vector<2x8x8xf32> -> vector<2x8x8xf32>
    "tpu.trace_stop"() : () -> ()
    %cst_12 = arith.constant 0.353553385 : f32
    %26 = vector.broadcast %cst_12 : f32 to vector<2x8x8xf32>
    %27 = arith.mulf %25, %26 : vector<2x8x8xf32>
    %cst_13 = arith.constant dense<0xFF800000> : vector<2x8xf32>
    %28 = vector.multi_reduction <maximumf>, %27, %cst_13 [2] : vector<2x8x8xf32> to vector<2x8xf32>
    %29 = vector.shape_cast %28 : vector<2x8xf32> to vector<2x8x1xf32>
    %30 = vector.broadcast %29 : vector<2x8x1xf32> to vector<2x8x8xf32>
    %31 = arith.subf %27, %30 : vector<2x8x8xf32>
    %32 = math.exp %31 : vector<2x8x8xf32>
    %cst_14 = arith.constant dense<0.000000e+00> : vector<2x8xf32>
    %33 = vector.multi_reduction <add>, %32, %cst_14 [2] : vector<2x8x8xf32> to vector<2x8xf32>
    %34 = vector.shape_cast %33 : vector<2x8xf32> to vector<2x8x1xf32>
    %35 = tpu.reciprocal %34 {approx = true} : vector<2x8x1xf32> -> vector<2x8x1xf32>
    %36 = vector.broadcast %35 : vector<2x8x1xf32> to vector<2x8x8xf32>
    %37 = arith.mulf %32, %36 : vector<2x8x8xf32>
    %38 = arith.truncf %37 : vector<2x8x8xf32> to vector<2x8x8xbf16>
    "tpu.trace_start"() <{level = 10 : i32, message = "bqk,bkd->bqd"}> : () -> ()
    %cst_15 = arith.constant dense<0.000000e+00> : vector<2x8x8xf32>
    %39 = tpu.matmul %38, %24, %cst_15 {dimension_numbers = #tpu.dot_dimension_numbers<[2], [1], [1], [2], [0, 0, 0, 1, 1, 2], [0], [0]>} : vector<2x8x8xbf16>, vector<2x8x8xbf16>, vector<2x8x8xf32> -> vector<2x8x8xf32>
    "tpu.trace_stop"() : () -> ()
    %40 = vector.shape_cast %39 : vector<2x8x8xf32> to vector<16x8xf32>
    %41 = vector.extract_strided_slice %15 {offsets = [0, 8], sizes = [16, 8], strides = [1, 1]} : vector<16x96xf32> to vector<16x8xf32>
    %42 = vector.shape_cast %41 : vector<16x8xf32> to vector<2x8x8xf32>
    %43 = arith.truncf %42 : vector<2x8x8xf32> to vector<2x8x8xbf16>
    %44 = vector.extract_strided_slice %15 {offsets = [0, 40], sizes = [16, 8], strides = [1, 1]} : vector<16x96xf32> to vector<16x8xf32>
    %45 = vector.shape_cast %44 : vector<16x8xf32> to vector<2x8x8xf32>
    %46 = arith.truncf %45 : vector<2x8x8xf32> to vector<2x8x8xbf16>
    %47 = vector.extract_strided_slice %15 {offsets = [0, 72], sizes = [16, 8], strides = [1, 1]} : vector<16x96xf32> to vector<16x8xf32>
    %48 = vector.shape_cast %47 : vector<16x8xf32> to vector<2x8x8xf32>
    %49 = arith.truncf %48 : vector<2x8x8xf32> to vector<2x8x8xbf16>
    "tpu.trace_start"() <{level = 10 : i32, message = "bqd,bkd->bqk"}> : () -> ()
    %cst_16 = arith.constant dense<0.000000e+00> : vector<2x8x8xf32>
    %50 = tpu.matmul %43, %46, %cst_16 {dimension_numbers = #tpu.dot_dimension_numbers<[2], [2], [1], [1], [0, 0, 0, 1, 1, 1], [0], [0]>} : vector<2x8x8xbf16>, vector<2x8x8xbf16>, vector<2x8x8xf32> -> vector<2x8x8xf32>
    "tpu.trace_stop"() : () -> ()
    %cst_17 = arith.constant 0.353553385 : f32
    %51 = vector.broadcast %cst_17 : f32 to vector<2x8x8xf32>
    %52 = arith.mulf %50, %51 : vector<2x8x8xf32>
    %cst_18 = arith.constant dense<0xFF800000> : vector<2x8xf32>
    %53 = vector.multi_reduction <maximumf>, %52, %cst_18 [2] : vector<2x8x8xf32> to vector<2x8xf32>
    %54 = vector.shape_cast %53 : vector<2x8xf32> to vector<2x8x1xf32>
    %55 = vector.broadcast %54 : vector<2x8x1xf32> to vector<2x8x8xf32>
    %56 = arith.subf %52, %55 : vector<2x8x8xf32>
    %57 = math.exp %56 : vector<2x8x8xf32>
    %cst_19 = arith.constant dense<0.000000e+00> : vector<2x8xf32>
    %58 = vector.multi_reduction <add>, %57, %cst_19 [2] : vector<2x8x8xf32> to vector<2x8xf32>
    %59 = vector.shape_cast %58 : vector<2x8xf32> to vector<2x8x1xf32>
    %60 = tpu.reciprocal %59 {approx = true} : vector<2x8x1xf32> -> vector<2x8x1xf32>
    %61 = vector.broadcast %60 : vector<2x8x1xf32> to vector<2x8x8xf32>
    %62 = arith.mulf %57, %61 : vector<2x8x8xf32>
    %63 = arith.truncf %62 : vector<2x8x8xf32> to vector<2x8x8xbf16>
    "tpu.trace_start"() <{level = 10 : i32, message = "bqk,bkd->bqd"}> : () -> ()
    %cst_20 = arith.constant dense<0.000000e+00> : vector<2x8x8xf32>
    %64 = tpu.matmul %63, %49, %cst_20 {dimension_numbers = #tpu.dot_dimension_numbers<[2], [1], [1], [2], [0, 0, 0, 1, 1, 2], [0], [0]>} : vector<2x8x8xbf16>, vector<2x8x8xbf16>, vector<2x8x8xf32> -> vector<2x8x8xf32>
    "tpu.trace_stop"() : () -> ()
    %65 = vector.shape_cast %64 : vector<2x8x8xf32> to vector<16x8xf32>
    %66 = vector.extract_strided_slice %15 {offsets = [0, 16], sizes = [16, 8], strides = [1, 1]} : vector<16x96xf32> to vector<16x8xf32>
    %67 = vector.shape_cast %66 : vector<16x8xf32> to vector<2x8x8xf32>
    %68 = arith.truncf %67 : vector<2x8x8xf32> to vector<2x8x8xbf16>
    %69 = vector.extract_strided_slice %15 {offsets = [0, 48], sizes = [16, 8], strides = [1, 1]} : vector<16x96xf32> to vector<16x8xf32>
    %70 = vector.shape_cast %69 : vector<16x8xf32> to vector<2x8x8xf32>
    %71 = arith.truncf %70 : vector<2x8x8xf32> to vector<2x8x8xbf16>
    %72 = vector.extract_strided_slice %15 {offsets = [0, 80], sizes = [16, 8], strides = [1, 1]} : vector<16x96xf32> to vector<16x8xf32>
    %73 = vector.shape_cast %72 : vector<16x8xf32> to vector<2x8x8xf32>
    %74 = arith.truncf %73 : vector<2x8x8xf32> to vector<2x8x8xbf16>
    "tpu.trace_start"() <{level = 10 : i32, message = "bqd,bkd->bqk"}> : () -> ()
    %cst_21 = arith.constant dense<0.000000e+00> : vector<2x8x8xf32>
    %75 = tpu.matmul %68, %71, %cst_21 {dimension_numbers = #tpu.dot_dimension_numbers<[2], [2], [1], [1], [0, 0, 0, 1, 1, 1], [0], [0]>} : vector<2x8x8xbf16>, vector<2x8x8xbf16>, vector<2x8x8xf32> -> vector<2x8x8xf32>
    "tpu.trace_stop"() : () -> ()
    %cst_22 = arith.constant 0.353553385 : f32
    %76 = vector.broadcast %cst_22 : f32 to vector<2x8x8xf32>
    %77 = arith.mulf %75, %76 : vector<2x8x8xf32>
    %cst_23 = arith.constant dense<0xFF800000> : vector<2x8xf32>
    %78 = vector.multi_reduction <maximumf>, %77, %cst_23 [2] : vector<2x8x8xf32> to vector<2x8xf32>
    %79 = vector.shape_cast %78 : vector<2x8xf32> to vector<2x8x1xf32>
    %80 = vector.broadcast %79 : vector<2x8x1xf32> to vector<2x8x8xf32>
    %81 = arith.subf %77, %80 : vector<2x8x8xf32>
    %82 = math.exp %81 : vector<2x8x8xf32>
    %cst_24 = arith.constant dense<0.000000e+00> : vector<2x8xf32>
    %83 = vector.multi_reduction <add>, %82, %cst_24 [2] : vector<2x8x8xf32> to vector<2x8xf32>
    %84 = vector.shape_cast %83 : vector<2x8xf32> to vector<2x8x1xf32>
    %85 = tpu.reciprocal %84 {approx = true} : vector<2x8x1xf32> -> vector<2x8x1xf32>
    %86 = vector.broadcast %85 : vector<2x8x1xf32> to vector<2x8x8xf32>
    %87 = arith.mulf %82, %86 : vector<2x8x8xf32>
    %88 = arith.truncf %87 : vector<2x8x8xf32> to vector<2x8x8xbf16>
    "tpu.trace_start"() <{level = 10 : i32, message = "bqk,bkd->bqd"}> : () -> ()
    %cst_25 = arith.constant dense<0.000000e+00> : vector<2x8x8xf32>
    %89 = tpu.matmul %88, %74, %cst_25 {dimension_numbers = #tpu.dot_dimension_numbers<[2], [1], [1], [2], [0, 0, 0, 1, 1, 2], [0], [0]>} : vector<2x8x8xbf16>, vector<2x8x8xbf16>, vector<2x8x8xf32> -> vector<2x8x8xf32>
    "tpu.trace_stop"() : () -> ()
    %90 = vector.shape_cast %89 : vector<2x8x8xf32> to vector<16x8xf32>
    %91 = vector.extract_strided_slice %15 {offsets = [0, 24], sizes = [16, 8], strides = [1, 1]} : vector<16x96xf32> to vector<16x8xf32>
    %92 = vector.shape_cast %91 : vector<16x8xf32> to vector<2x8x8xf32>
    %93 = arith.truncf %92 : vector<2x8x8xf32> to vector<2x8x8xbf16>
    %94 = vector.extract_strided_slice %15 {offsets = [0, 56], sizes = [16, 8], strides = [1, 1]} : vector<16x96xf32> to vector<16x8xf32>
    %95 = vector.shape_cast %94 : vector<16x8xf32> to vector<2x8x8xf32>
    %96 = arith.truncf %95 : vector<2x8x8xf32> to vector<2x8x8xbf16>
    %97 = vector.extract_strided_slice %15 {offsets = [0, 88], sizes = [16, 8], strides = [1, 1]} : vector<16x96xf32> to vector<16x8xf32>
    %98 = vector.shape_cast %97 : vector<16x8xf32> to vector<2x8x8xf32>
    %99 = arith.truncf %98 : vector<2x8x8xf32> to vector<2x8x8xbf16>
    "tpu.trace_start"() <{level = 10 : i32, message = "bqd,bkd->bqk"}> : () -> ()
    %cst_26 = arith.constant dense<0.000000e+00> : vector<2x8x8xf32>
    %100 = tpu.matmul %93, %96, %cst_26 {dimension_numbers = #tpu.dot_dimension_numbers<[2], [2], [1], [1], [0, 0, 0, 1, 1, 1], [0], [0]>} : vector<2x8x8xbf16>, vector<2x8x8xbf16>, vector<2x8x8xf32> -> vector<2x8x8xf32>
    "tpu.trace_stop"() : () -> ()
    %cst_27 = arith.constant 0.353553385 : f32
    %101 = vector.broadcast %cst_27 : f32 to vector<2x8x8xf32>
    %102 = arith.mulf %100, %101 : vector<2x8x8xf32>
    %cst_28 = arith.constant dense<0xFF800000> : vector<2x8xf32>
    %103 = vector.multi_reduction <maximumf>, %102, %cst_28 [2] : vector<2x8x8xf32> to vector<2x8xf32>
    %104 = vector.shape_cast %103 : vector<2x8xf32> to vector<2x8x1xf32>
    %105 = vector.broadcast %104 : vector<2x8x1xf32> to vector<2x8x8xf32>
    %106 = arith.subf %102, %105 : vector<2x8x8xf32>
    %107 = math.exp %106 : vector<2x8x8xf32>
    %cst_29 = arith.constant dense<0.000000e+00> : vector<2x8xf32>
    %108 = vector.multi_reduction <add>, %107, %cst_29 [2] : vector<2x8x8xf32> to vector<2x8xf32>
    %109 = vector.shape_cast %108 : vector<2x8xf32> to vector<2x8x1xf32>
    %110 = tpu.reciprocal %109 {approx = true} : vector<2x8x1xf32> -> vector<2x8x1xf32>
    %111 = vector.broadcast %110 : vector<2x8x1xf32> to vector<2x8x8xf32>
    %112 = arith.mulf %107, %111 : vector<2x8x8xf32>
    %113 = arith.truncf %112 : vector<2x8x8xf32> to vector<2x8x8xbf16>
    "tpu.trace_start"() <{level = 10 : i32, message = "bqk,bkd->bqd"}> : () -> ()
    %cst_30 = arith.constant dense<0.000000e+00> : vector<2x8x8xf32>
    %114 = tpu.matmul %113, %99, %cst_30 {dimension_numbers = #tpu.dot_dimension_numbers<[2], [1], [1], [2], [0, 0, 0, 1, 1, 2], [0], [0]>} : vector<2x8x8xbf16>, vector<2x8x8xbf16>, vector<2x8x8xf32> -> vector<2x8x8xf32>
    "tpu.trace_stop"() : () -> ()
    %115 = vector.shape_cast %114 : vector<2x8x8xf32> to vector<16x8xf32>
    %116 = tpu.concatenate %40, %65, %90, %115 in 1 : vector<16x8xf32>, vector<16x8xf32>, vector<16x8xf32>, vector<16x8xf32> -> vector<16x32xf32>
    %117 = arith.truncf %116 : vector<16x32xf32> to vector<16x32xbf16>
    %c0_31 = arith.constant 0 : index
    %c0_32 = arith.constant 0 : index
    %c0_33 = arith.constant 0 : index
    %118 = vector.load %arg6[%c0_31, %c0_32, %c0_33] : memref<2x32x32xbf16, #tpu.memory_space<vmem>>, vector<1x32x32xbf16>
    %119 = vector.shape_cast %118 : vector<1x32x32xbf16> to vector<32x32xbf16>
    %cst_34 = arith.constant dense<0.000000e+00> : vector<16x32xf32>
    %120 = tpu.matmul %117, %119, %cst_34 {dimension_numbers = #tpu.dot_dimension_numbers<[1], [0], [0], [1], [0, 0, 1, 1], [], []>} : vector<16x32xbf16>, vector<32x32xbf16>, vector<16x32xf32> -> vector<16x32xf32>
    %c0_35 = arith.constant 0 : index
    %c0_36 = arith.constant 0 : index
    %c0_37 = arith.constant 0 : index
    %121 = vector.load %arg7[%c0_35, %c0_36, %c0_37] : memref<2x1x32xf32, #tpu.memory_space<vmem>>, vector<1x1x32xf32>
    %122 = vector.shape_cast %121 : vector<1x1x32xf32> to vector<1x32xf32>
    %123 = vector.broadcast %122 : vector<1x32xf32> to vector<16x32xf32>
    %124 = arith.addf %120, %123 : vector<16x32xf32>
    %125 = arith.addf %7, %124 : vector<16x32xf32>
    %c0_38 = arith.constant 0 : index
    %c0_39 = arith.constant 0 : index
    %c0_40 = arith.constant 0 : index
    %126 = vector.load %arg8[%c0_38, %c0_39, %c0_40] : memref<2x1x32xf32, #tpu.memory_space<vmem>>, vector<1x1x32xf32>
    %127 = vector.shape_cast %126 : vector<1x1x32xf32> to vector<1x32xf32>
    %c0_41 = arith.constant 0 : index
    %c0_42 = arith.constant 0 : index
    %c0_43 = arith.constant 0 : index
    %128 = vector.load %arg9[%c0_41, %c0_42, %c0_43] : memref<2x1x32xf32, #tpu.memory_space<vmem>>, vector<1x1x32xf32>
    %129 = vector.shape_cast %128 : vector<1x1x32xf32> to vector<1x32xf32>
    %cst_44 = arith.constant dense<0.000000e+00> : vector<16xf32>
    %130 = vector.multi_reduction <add>, %125, %cst_44 [1] : vector<16x32xf32> to vector<16xf32>
    %131 = vector.shape_cast %130 : vector<16xf32> to vector<16x1xf32>
    %cst_45 = arith.constant 3.200000e+01 : f32
    %132 = vector.broadcast %cst_45 : f32 to vector<16x1xf32>
    %133 = arith.divf %131, %132 : vector<16x1xf32>
    %134 = vector.broadcast %133 : vector<16x1xf32> to vector<16x32xf32>
    %135 = arith.subf %125, %134 : vector<16x32xf32>
    %136 = arith.mulf %135, %135 : vector<16x32xf32>
    %cst_46 = arith.constant dense<0.000000e+00> : vector<16xf32>
    %137 = vector.multi_reduction <add>, %136, %cst_46 [1] : vector<16x32xf32> to vector<16xf32>
    %138 = vector.shape_cast %137 : vector<16xf32> to vector<16x1xf32>
    %cst_47 = arith.constant 3.200000e+01 : f32
    %139 = vector.broadcast %cst_47 : f32 to vector<16x1xf32>
    %140 = arith.divf %138, %139 : vector<16x1xf32>
    %141 = vector.broadcast %133 : vector<16x1xf32> to vector<16x32xf32>
    %142 = arith.subf %125, %141 : vector<16x32xf32>
    %cst_48 = arith.constant 9.99999974E-6 : f32
    %143 = vector.broadcast %cst_48 : f32 to vector<16x1xf32>
    %144 = arith.addf %140, %143 : vector<16x1xf32>
    %145 = math.rsqrt %144 : vector<16x1xf32>
    %146 = vector.broadcast %145 : vector<16x1xf32> to vector<16x32xf32>
    %147 = arith.mulf %142, %146 : vector<16x32xf32>
    %148 = vector.broadcast %127 : vector<1x32xf32> to vector<16x32xf32>
    %149 = arith.mulf %147, %148 : vector<16x32xf32>
    %150 = vector.broadcast %129 : vector<1x32xf32> to vector<16x32xf32>
    %151 = arith.addf %149, %150 : vector<16x32xf32>
    %152 = arith.truncf %151 : vector<16x32xf32> to vector<16x32xbf16>
    %cst_49 = arith.constant 0.000000e+00 : f32
    %153 = vector.broadcast %cst_49 : f32 to vector<16x32xf32>
    %c0_50 = arith.constant 0 : index
    %c0_51 = arith.constant 0 : index
    %c0_52 = arith.constant 0 : index
    %154 = vector.load %arg10[%c0_50, %c0_51, %c0_52] : memref<2x32x2048xbf16, #tpu.memory_space<vmem>>, vector<1x32x512xbf16>
    %155 = vector.shape_cast %154 : vector<1x32x512xbf16> to vector<32x512xbf16>
    %cst_53 = arith.constant dense<0.000000e+00> : vector<16x512xf32>
    %156 = tpu.matmul %152, %155, %cst_53 {dimension_numbers = #tpu.dot_dimension_numbers<[1], [0], [0], [1], [0, 0, 1, 1], [], []>} : vector<16x32xbf16>, vector<32x512xbf16>, vector<16x512xf32> -> vector<16x512xf32>
    %c0_54 = arith.constant 0 : index
    %c0_55 = arith.constant 0 : index
    %c0_56 = arith.constant 0 : index
    %157 = vector.load %arg11[%c0_54, %c0_55, %c0_56] : memref<2x1x2048xf32, #tpu.memory_space<vmem>>, vector<1x1x512xf32>
    %158 = vector.shape_cast %157 : vector<1x1x512xf32> to vector<1x512xf32>
    %159 = vector.broadcast %158 : vector<1x512xf32> to vector<16x512xf32>
    %160 = arith.addf %156, %159 : vector<16x512xf32>
    %cst_57 = arith.constant 0.000000e+00 : f32
    %161 = vector.broadcast %cst_57 : f32 to vector<16x512xf32>
    %162 = arith.maximumf %160, %161 : vector<16x512xf32>
    %163 = arith.truncf %162 : vector<16x512xf32> to vector<16x512xbf16>
    %c0_58 = arith.constant 0 : index
    %c0_59 = arith.constant 0 : index
    %c0_60 = arith.constant 0 : index
    %164 = vector.load %arg12[%c0_58, %c0_59, %c0_60] : memref<2x2048x32xbf16, #tpu.memory_space<vmem>>, vector<1x512x32xbf16>
    %165 = vector.shape_cast %164 : vector<1x512x32xbf16> to vector<512x32xbf16>
    %cst_61 = arith.constant dense<0.000000e+00> : vector<16x32xf32>
    %166 = tpu.matmul %163, %165, %cst_61 {dimension_numbers = #tpu.dot_dimension_numbers<[1], [0], [0], [1], [0, 0, 1, 1], [], []>} : vector<16x512xbf16>, vector<512x32xbf16>, vector<16x32xf32> -> vector<16x32xf32>
    %167 = arith.addf %153, %166 : vector<16x32xf32>
    %c0_62 = arith.constant 0 : index
    %c0_63 = arith.constant 0 : index
    %c512 = arith.constant 512 : index
    %168 = vector.load %arg10[%c0_62, %c0_63, %c512] : memref<2x32x2048xbf16, #tpu.memory_space<vmem>>, vector<1x32x512xbf16>
    %169 = vector.shape_cast %168 : vector<1x32x512xbf16> to vector<32x512xbf16>
    %cst_64 = arith.constant dense<0.000000e+00> : vector<16x512xf32>
    %170 = tpu.matmul %152, %169, %cst_64 {dimension_numbers = #tpu.dot_dimension_numbers<[1], [0], [0], [1], [0, 0, 1, 1], [], []>} : vector<16x32xbf16>, vector<32x512xbf16>, vector<16x512xf32> -> vector<16x512xf32>
    %c0_65 = arith.constant 0 : index
    %c0_66 = arith.constant 0 : index
    %c512_67 = arith.constant 512 : index
    %171 = vector.load %arg11[%c0_65, %c0_66, %c512_67] : memref<2x1x2048xf32, #tpu.memory_space<vmem>>, vector<1x1x512xf32>
    %172 = vector.shape_cast %171 : vector<1x1x512xf32> to vector<1x512xf32>
    %173 = vector.broadcast %172 : vector<1x512xf32> to vector<16x512xf32>
    %174 = arith.addf %170, %173 : vector<16x512xf32>
    %cst_68 = arith.constant 0.000000e+00 : f32
    %175 = vector.broadcast %cst_68 : f32 to vector<16x512xf32>
    %176 = arith.maximumf %174, %175 : vector<16x512xf32>
    %177 = arith.truncf %176 : vector<16x512xf32> to vector<16x512xbf16>
    %c0_69 = arith.constant 0 : index
    %c512_70 = arith.constant 512 : index
    %c0_71 = arith.constant 0 : index
    %178 = vector.load %arg12[%c0_69, %c512_70, %c0_71] : memref<2x2048x32xbf16, #tpu.memory_space<vmem>>, vector<1x512x32xbf16>
    %179 = vector.shape_cast %178 : vector<1x512x32xbf16> to vector<512x32xbf16>
    %cst_72 = arith.constant dense<0.000000e+00> : vector<16x32xf32>
    %180 = tpu.matmul %177, %179, %cst_72 {dimension_numbers = #tpu.dot_dimension_numbers<[1], [0], [0], [1], [0, 0, 1, 1], [], []>} : vector<16x512xbf16>, vector<512x32xbf16>, vector<16x32xf32> -> vector<16x32xf32>
    %181 = arith.addf %167, %180 : vector<16x32xf32>
    %c0_73 = arith.constant 0 : index
    %c0_74 = arith.constant 0 : index
    %c1024 = arith.constant 1024 : index
    %182 = vector.load %arg10[%c0_73, %c0_74, %c1024] : memref<2x32x2048xbf16, #tpu.memory_space<vmem>>, vector<1x32x512xbf16>
    %183 = vector.shape_cast %182 : vector<1x32x512xbf16> to vector<32x512xbf16>
    %cst_75 = arith.constant dense<0.000000e+00> : vector<16x512xf32>
    %184 = tpu.matmul %152, %183, %cst_75 {dimension_numbers = #tpu.dot_dimension_numbers<[1], [0], [0], [1], [0, 0, 1, 1], [], []>} : vector<16x32xbf16>, vector<32x512xbf16>, vector<16x512xf32> -> vector<16x512xf32>
    %c0_76 = arith.constant 0 : index
    %c0_77 = arith.constant 0 : index
    %c1024_78 = arith.constant 1024 : index
    %185 = vector.load %arg11[%c0_76, %c0_77, %c1024_78] : memref<2x1x2048xf32, #tpu.memory_space<vmem>>, vector<1x1x512xf32>
    %186 = vector.shape_cast %185 : vector<1x1x512xf32> to vector<1x512xf32>
    %187 = vector.broadcast %186 : vector<1x512xf32> to vector<16x512xf32>
    %188 = arith.addf %184, %187 : vector<16x512xf32>
    %cst_79 = arith.constant 0.000000e+00 : f32
    %189 = vector.broadcast %cst_79 : f32 to vector<16x512xf32>
    %190 = arith.maximumf %188, %189 : vector<16x512xf32>
    %191 = arith.truncf %190 : vector<16x512xf32> to vector<16x512xbf16>
    %c0_80 = arith.constant 0 : index
    %c1024_81 = arith.constant 1024 : index
    %c0_82 = arith.constant 0 : index
    %192 = vector.load %arg12[%c0_80, %c1024_81, %c0_82] : memref<2x2048x32xbf16, #tpu.memory_space<vmem>>, vector<1x512x32xbf16>
    %193 = vector.shape_cast %192 : vector<1x512x32xbf16> to vector<512x32xbf16>
    %cst_83 = arith.constant dense<0.000000e+00> : vector<16x32xf32>
    %194 = tpu.matmul %191, %193, %cst_83 {dimension_numbers = #tpu.dot_dimension_numbers<[1], [0], [0], [1], [0, 0, 1, 1], [], []>} : vector<16x512xbf16>, vector<512x32xbf16>, vector<16x32xf32> -> vector<16x32xf32>
    %195 = arith.addf %181, %194 : vector<16x32xf32>
    %c0_84 = arith.constant 0 : index
    %c0_85 = arith.constant 0 : index
    %c1536 = arith.constant 1536 : index
    %196 = vector.load %arg10[%c0_84, %c0_85, %c1536] : memref<2x32x2048xbf16, #tpu.memory_space<vmem>>, vector<1x32x512xbf16>
    %197 = vector.shape_cast %196 : vector<1x32x512xbf16> to vector<32x512xbf16>
    %cst_86 = arith.constant dense<0.000000e+00> : vector<16x512xf32>
    %198 = tpu.matmul %152, %197, %cst_86 {dimension_numbers = #tpu.dot_dimension_numbers<[1], [0], [0], [1], [0, 0, 1, 1], [], []>} : vector<16x32xbf16>, vector<32x512xbf16>, vector<16x512xf32> -> vector<16x512xf32>
    %c0_87 = arith.constant 0 : index
    %c0_88 = arith.constant 0 : index
    %c1536_89 = arith.constant 1536 : index
    %199 = vector.load %arg11[%c0_87, %c0_88, %c1536_89] : memref<2x1x2048xf32, #tpu.memory_space<vmem>>, vector<1x1x512xf32>
    %200 = vector.shape_cast %199 : vector<1x1x512xf32> to vector<1x512xf32>
    %201 = vector.broadcast %200 : vector<1x512xf32> to vector<16x512xf32>
    %202 = arith.addf %198, %201 : vector<16x512xf32>
    %cst_90 = arith.constant 0.000000e+00 : f32
    %203 = vector.broadcast %cst_90 : f32 to vector<16x512xf32>
    %204 = arith.maximumf %202, %203 : vector<16x512xf32>
    %205 = arith.truncf %204 : vector<16x512xf32> to vector<16x512xbf16>
    %c0_91 = arith.constant 0 : index
    %c1536_92 = arith.constant 1536 : index
    %c0_93 = arith.constant 0 : index
    %206 = vector.load %arg12[%c0_91, %c1536_92, %c0_93] : memref<2x2048x32xbf16, #tpu.memory_space<vmem>>, vector<1x512x32xbf16>
    %207 = vector.shape_cast %206 : vector<1x512x32xbf16> to vector<512x32xbf16>
    %cst_94 = arith.constant dense<0.000000e+00> : vector<16x32xf32>
    %208 = tpu.matmul %205, %207, %cst_94 {dimension_numbers = #tpu.dot_dimension_numbers<[1], [0], [0], [1], [0, 0, 1, 1], [], []>} : vector<16x512xbf16>, vector<512x32xbf16>, vector<16x32xf32> -> vector<16x32xf32>
    %209 = arith.addf %195, %208 : vector<16x32xf32>
    %c0_95 = arith.constant 0 : index
    %c0_96 = arith.constant 0 : index
    %c0_97 = arith.constant 0 : index
    %210 = vector.load %arg13[%c0_95, %c0_96, %c0_97] : memref<2x1x32xf32, #tpu.memory_space<vmem>>, vector<1x1x32xf32>
    %211 = vector.shape_cast %210 : vector<1x1x32xf32> to vector<1x32xf32>
    %212 = vector.broadcast %211 : vector<1x32xf32> to vector<16x32xf32>
    %213 = arith.addf %209, %212 : vector<16x32xf32>
    %214 = arith.addf %151, %213 : vector<16x32xf32>
    %c0_98 = arith.constant 0 : index
    %c0_99 = arith.constant 0 : index
    %c0_100 = arith.constant 0 : index
    %215 = vector.load %arg14[%c0_98, %c0_99, %c0_100] : memref<2x1x32xf32, #tpu.memory_space<vmem>>, vector<1x1x32xf32>
    %216 = vector.shape_cast %215 : vector<1x1x32xf32> to vector<1x32xf32>
    %c0_101 = arith.constant 0 : index
    %c0_102 = arith.constant 0 : index
    %c0_103 = arith.constant 0 : index
    %217 = vector.load %arg15[%c0_101, %c0_102, %c0_103] : memref<2x1x32xf32, #tpu.memory_space<vmem>>, vector<1x1x32xf32>
    %218 = vector.shape_cast %217 : vector<1x1x32xf32> to vector<1x32xf32>
    %cst_104 = arith.constant dense<0.000000e+00> : vector<16xf32>
    %219 = vector.multi_reduction <add>, %214, %cst_104 [1] : vector<16x32xf32> to vector<16xf32>
    %220 = vector.shape_cast %219 : vector<16xf32> to vector<16x1xf32>
    %cst_105 = arith.constant 3.200000e+01 : f32
    %221 = vector.broadcast %cst_105 : f32 to vector<16x1xf32>
    %222 = arith.divf %220, %221 : vector<16x1xf32>
    %223 = vector.broadcast %222 : vector<16x1xf32> to vector<16x32xf32>
    %224 = arith.subf %214, %223 : vector<16x32xf32>
    %225 = arith.mulf %224, %224 : vector<16x32xf32>
    %cst_106 = arith.constant dense<0.000000e+00> : vector<16xf32>
    %226 = vector.multi_reduction <add>, %225, %cst_106 [1] : vector<16x32xf32> to vector<16xf32>
    %227 = vector.shape_cast %226 : vector<16xf32> to vector<16x1xf32>
    %cst_107 = arith.constant 3.200000e+01 : f32
    %228 = vector.broadcast %cst_107 : f32 to vector<16x1xf32>
    %229 = arith.divf %227, %228 : vector<16x1xf32>
    %230 = vector.broadcast %222 : vector<16x1xf32> to vector<16x32xf32>
    %231 = arith.subf %214, %230 : vector<16x32xf32>
    %cst_108 = arith.constant 9.99999974E-6 : f32
    %232 = vector.broadcast %cst_108 : f32 to vector<16x1xf32>
    %233 = arith.addf %229, %232 : vector<16x1xf32>
    %234 = math.rsqrt %233 : vector<16x1xf32>
    %235 = vector.broadcast %234 : vector<16x1xf32> to vector<16x32xf32>
    %236 = arith.mulf %231, %235 : vector<16x32xf32>
    %237 = vector.broadcast %216 : vector<1x32xf32> to vector<16x32xf32>
    %238 = arith.mulf %236, %237 : vector<16x32xf32>
    %239 = vector.broadcast %218 : vector<1x32xf32> to vector<16x32xf32>
    %240 = arith.addf %238, %239 : vector<16x32xf32>
    %241 = arith.truncf %240 : vector<16x32xf32> to vector<16x32xbf16>
    %c1 = arith.constant 1 : index
    %c0_109 = arith.constant 0 : index
    %c0_110 = arith.constant 0 : index
    %242 = vector.load %arg4[%c1, %c0_109, %c0_110] : memref<2x32x96xbf16, #tpu.memory_space<vmem>>, vector<1x32x96xbf16>
    %243 = vector.shape_cast %242 : vector<1x32x96xbf16> to vector<32x96xbf16>
    %cst_111 = arith.constant dense<0.000000e+00> : vector<16x96xf32>
    %244 = tpu.matmul %241, %243, %cst_111 {dimension_numbers = #tpu.dot_dimension_numbers<[1], [0], [0], [1], [0, 0, 1, 1], [], []>} : vector<16x32xbf16>, vector<32x96xbf16>, vector<16x96xf32> -> vector<16x96xf32>
    %c1_112 = arith.constant 1 : index
    %c0_113 = arith.constant 0 : index
    %c0_114 = arith.constant 0 : index
    %245 = vector.load %arg5[%c1_112, %c0_113, %c0_114] : memref<2x1x96xf32, #tpu.memory_space<vmem>>, vector<1x1x96xf32>
    %246 = vector.shape_cast %245 : vector<1x1x96xf32> to vector<1x96xf32>
    %247 = vector.broadcast %246 : vector<1x96xf32> to vector<16x96xf32>
    %248 = arith.addf %244, %247 : vector<16x96xf32>
    %249 = vector.extract_strided_slice %248 {offsets = [0, 0], sizes = [16, 8], strides = [1, 1]} : vector<16x96xf32> to vector<16x8xf32>
    %250 = vector.shape_cast %249 : vector<16x8xf32> to vector<2x8x8xf32>
    %251 = arith.truncf %250 : vector<2x8x8xf32> to vector<2x8x8xbf16>
    %252 = vector.extract_strided_slice %248 {offsets = [0, 32], sizes = [16, 8], strides = [1, 1]} : vector<16x96xf32> to vector<16x8xf32>
    %253 = vector.shape_cast %252 : vector<16x8xf32> to vector<2x8x8xf32>
    %254 = arith.truncf %253 : vector<2x8x8xf32> to vector<2x8x8xbf16>
    %255 = vector.extract_strided_slice %248 {offsets = [0, 64], sizes = [16, 8], strides = [1, 1]} : vector<16x96xf32> to vector<16x8xf32>
    %256 = vector.shape_cast %255 : vector<16x8xf32> to vector<2x8x8xf32>
    %257 = arith.truncf %256 : vector<2x8x8xf32> to vector<2x8x8xbf16>
    "tpu.trace_start"() <{level = 10 : i32, message = "bqd,bkd->bqk"}> : () -> ()
    %cst_115 = arith.constant dense<0.000000e+00> : vector<2x8x8xf32>
    %258 = tpu.matmul %251, %254, %cst_115 {dimension_numbers = #tpu.dot_dimension_numbers<[2], [2], [1], [1], [0, 0, 0, 1, 1, 1], [0], [0]>} : vector<2x8x8xbf16>, vector<2x8x8xbf16>, vector<2x8x8xf32> -> vector<2x8x8xf32>
    "tpu.trace_stop"() : () -> ()
    %cst_116 = arith.constant 0.353553385 : f32
    %259 = vector.broadcast %cst_116 : f32 to vector<2x8x8xf32>
    %260 = arith.mulf %258, %259 : vector<2x8x8xf32>
    %cst_117 = arith.constant dense<0xFF800000> : vector<2x8xf32>
    %261 = vector.multi_reduction <maximumf>, %260, %cst_117 [2] : vector<2x8x8xf32> to vector<2x8xf32>
    %262 = vector.shape_cast %261 : vector<2x8xf32> to vector<2x8x1xf32>
    %263 = vector.broadcast %262 : vector<2x8x1xf32> to vector<2x8x8xf32>
    %264 = arith.subf %260, %263 : vector<2x8x8xf32>
    %265 = math.exp %264 : vector<2x8x8xf32>
    %cst_118 = arith.constant dense<0.000000e+00> : vector<2x8xf32>
    %266 = vector.multi_reduction <add>, %265, %cst_118 [2] : vector<2x8x8xf32> to vector<2x8xf32>
    %267 = vector.shape_cast %266 : vector<2x8xf32> to vector<2x8x1xf32>
    %268 = tpu.reciprocal %267 {approx = true} : vector<2x8x1xf32> -> vector<2x8x1xf32>
    %269 = vector.broadcast %268 : vector<2x8x1xf32> to vector<2x8x8xf32>
    %270 = arith.mulf %265, %269 : vector<2x8x8xf32>
    %271 = arith.truncf %270 : vector<2x8x8xf32> to vector<2x8x8xbf16>
    "tpu.trace_start"() <{level = 10 : i32, message = "bqk,bkd->bqd"}> : () -> ()
    %cst_119 = arith.constant dense<0.000000e+00> : vector<2x8x8xf32>
    %272 = tpu.matmul %271, %257, %cst_119 {dimension_numbers = #tpu.dot_dimension_numbers<[2], [1], [1], [2], [0, 0, 0, 1, 1, 2], [0], [0]>} : vector<2x8x8xbf16>, vector<2x8x8xbf16>, vector<2x8x8xf32> -> vector<2x8x8xf32>
    "tpu.trace_stop"() : () -> ()
    %273 = vector.shape_cast %272 : vector<2x8x8xf32> to vector<16x8xf32>
    %274 = vector.extract_strided_slice %248 {offsets = [0, 8], sizes = [16, 8], strides = [1, 1]} : vector<16x96xf32> to vector<16x8xf32>
    %275 = vector.shape_cast %274 : vector<16x8xf32> to vector<2x8x8xf32>
    %276 = arith.truncf %275 : vector<2x8x8xf32> to vector<2x8x8xbf16>
    %277 = vector.extract_strided_slice %248 {offsets = [0, 40], sizes = [16, 8], strides = [1, 1]} : vector<16x96xf32> to vector<16x8xf32>
    %278 = vector.shape_cast %277 : vector<16x8xf32> to vector<2x8x8xf32>
    %279 = arith.truncf %278 : vector<2x8x8xf32> to vector<2x8x8xbf16>
    %280 = vector.extract_strided_slice %248 {offsets = [0, 72], sizes = [16, 8], strides = [1, 1]} : vector<16x96xf32> to vector<16x8xf32>
    %281 = vector.shape_cast %280 : vector<16x8xf32> to vector<2x8x8xf32>
    %282 = arith.truncf %281 : vector<2x8x8xf32> to vector<2x8x8xbf16>
    "tpu.trace_start"() <{level = 10 : i32, message = "bqd,bkd->bqk"}> : () -> ()
    %cst_120 = arith.constant dense<0.000000e+00> : vector<2x8x8xf32>
    %283 = tpu.matmul %276, %279, %cst_120 {dimension_numbers = #tpu.dot_dimension_numbers<[2], [2], [1], [1], [0, 0, 0, 1, 1, 1], [0], [0]>} : vector<2x8x8xbf16>, vector<2x8x8xbf16>, vector<2x8x8xf32> -> vector<2x8x8xf32>
    "tpu.trace_stop"() : () -> ()
    %cst_121 = arith.constant 0.353553385 : f32
    %284 = vector.broadcast %cst_121 : f32 to vector<2x8x8xf32>
    %285 = arith.mulf %283, %284 : vector<2x8x8xf32>
    %cst_122 = arith.constant dense<0xFF800000> : vector<2x8xf32>
    %286 = vector.multi_reduction <maximumf>, %285, %cst_122 [2] : vector<2x8x8xf32> to vector<2x8xf32>
    %287 = vector.shape_cast %286 : vector<2x8xf32> to vector<2x8x1xf32>
    %288 = vector.broadcast %287 : vector<2x8x1xf32> to vector<2x8x8xf32>
    %289 = arith.subf %285, %288 : vector<2x8x8xf32>
    %290 = math.exp %289 : vector<2x8x8xf32>
    %cst_123 = arith.constant dense<0.000000e+00> : vector<2x8xf32>
    %291 = vector.multi_reduction <add>, %290, %cst_123 [2] : vector<2x8x8xf32> to vector<2x8xf32>
    %292 = vector.shape_cast %291 : vector<2x8xf32> to vector<2x8x1xf32>
    %293 = tpu.reciprocal %292 {approx = true} : vector<2x8x1xf32> -> vector<2x8x1xf32>
    %294 = vector.broadcast %293 : vector<2x8x1xf32> to vector<2x8x8xf32>
    %295 = arith.mulf %290, %294 : vector<2x8x8xf32>
    %296 = arith.truncf %295 : vector<2x8x8xf32> to vector<2x8x8xbf16>
    "tpu.trace_start"() <{level = 10 : i32, message = "bqk,bkd->bqd"}> : () -> ()
    %cst_124 = arith.constant dense<0.000000e+00> : vector<2x8x8xf32>
    %297 = tpu.matmul %296, %282, %cst_124 {dimension_numbers = #tpu.dot_dimension_numbers<[2], [1], [1], [2], [0, 0, 0, 1, 1, 2], [0], [0]>} : vector<2x8x8xbf16>, vector<2x8x8xbf16>, vector<2x8x8xf32> -> vector<2x8x8xf32>
    "tpu.trace_stop"() : () -> ()
    %298 = vector.shape_cast %297 : vector<2x8x8xf32> to vector<16x8xf32>
    %299 = vector.extract_strided_slice %248 {offsets = [0, 16], sizes = [16, 8], strides = [1, 1]} : vector<16x96xf32> to vector<16x8xf32>
    %300 = vector.shape_cast %299 : vector<16x8xf32> to vector<2x8x8xf32>
    %301 = arith.truncf %300 : vector<2x8x8xf32> to vector<2x8x8xbf16>
    %302 = vector.extract_strided_slice %248 {offsets = [0, 48], sizes = [16, 8], strides = [1, 1]} : vector<16x96xf32> to vector<16x8xf32>
    %303 = vector.shape_cast %302 : vector<16x8xf32> to vector<2x8x8xf32>
    %304 = arith.truncf %303 : vector<2x8x8xf32> to vector<2x8x8xbf16>
    %305 = vector.extract_strided_slice %248 {offsets = [0, 80], sizes = [16, 8], strides = [1, 1]} : vector<16x96xf32> to vector<16x8xf32>
    %306 = vector.shape_cast %305 : vector<16x8xf32> to vector<2x8x8xf32>
    %307 = arith.truncf %306 : vector<2x8x8xf32> to vector<2x8x8xbf16>
    "tpu.trace_start"() <{level = 10 : i32, message = "bqd,bkd->bqk"}> : () -> ()
    %cst_125 = arith.constant dense<0.000000e+00> : vector<2x8x8xf32>
    %308 = tpu.matmul %301, %304, %cst_125 {dimension_numbers = #tpu.dot_dimension_numbers<[2], [2], [1], [1], [0, 0, 0, 1, 1, 1], [0], [0]>} : vector<2x8x8xbf16>, vector<2x8x8xbf16>, vector<2x8x8xf32> -> vector<2x8x8xf32>
    "tpu.trace_stop"() : () -> ()
    %cst_126 = arith.constant 0.353553385 : f32
    %309 = vector.broadcast %cst_126 : f32 to vector<2x8x8xf32>
    %310 = arith.mulf %308, %309 : vector<2x8x8xf32>
    %cst_127 = arith.constant dense<0xFF800000> : vector<2x8xf32>
    %311 = vector.multi_reduction <maximumf>, %310, %cst_127 [2] : vector<2x8x8xf32> to vector<2x8xf32>
    %312 = vector.shape_cast %311 : vector<2x8xf32> to vector<2x8x1xf32>
    %313 = vector.broadcast %312 : vector<2x8x1xf32> to vector<2x8x8xf32>
    %314 = arith.subf %310, %313 : vector<2x8x8xf32>
    %315 = math.exp %314 : vector<2x8x8xf32>
    %cst_128 = arith.constant dense<0.000000e+00> : vector<2x8xf32>
    %316 = vector.multi_reduction <add>, %315, %cst_128 [2] : vector<2x8x8xf32> to vector<2x8xf32>
    %317 = vector.shape_cast %316 : vector<2x8xf32> to vector<2x8x1xf32>
    %318 = tpu.reciprocal %317 {approx = true} : vector<2x8x1xf32> -> vector<2x8x1xf32>
    %319 = vector.broadcast %318 : vector<2x8x1xf32> to vector<2x8x8xf32>
    %320 = arith.mulf %315, %319 : vector<2x8x8xf32>
    %321 = arith.truncf %320 : vector<2x8x8xf32> to vector<2x8x8xbf16>
    "tpu.trace_start"() <{level = 10 : i32, message = "bqk,bkd->bqd"}> : () -> ()
    %cst_129 = arith.constant dense<0.000000e+00> : vector<2x8x8xf32>
    %322 = tpu.matmul %321, %307, %cst_129 {dimension_numbers = #tpu.dot_dimension_numbers<[2], [1], [1], [2], [0, 0, 0, 1, 1, 2], [0], [0]>} : vector<2x8x8xbf16>, vector<2x8x8xbf16>, vector<2x8x8xf32> -> vector<2x8x8xf32>
    "tpu.trace_stop"() : () -> ()
    %323 = vector.shape_cast %322 : vector<2x8x8xf32> to vector<16x8xf32>
    %324 = vector.extract_strided_slice %248 {offsets = [0, 24], sizes = [16, 8], strides = [1, 1]} : vector<16x96xf32> to vector<16x8xf32>
    %325 = vector.shape_cast %324 : vector<16x8xf32> to vector<2x8x8xf32>
    %326 = arith.truncf %325 : vector<2x8x8xf32> to vector<2x8x8xbf16>
    %327 = vector.extract_strided_slice %248 {offsets = [0, 56], sizes = [16, 8], strides = [1, 1]} : vector<16x96xf32> to vector<16x8xf32>
    %328 = vector.shape_cast %327 : vector<16x8xf32> to vector<2x8x8xf32>
    %329 = arith.truncf %328 : vector<2x8x8xf32> to vector<2x8x8xbf16>
    %330 = vector.extract_strided_slice %248 {offsets = [0, 88], sizes = [16, 8], strides = [1, 1]} : vector<16x96xf32> to vector<16x8xf32>
    %331 = vector.shape_cast %330 : vector<16x8xf32> to vector<2x8x8xf32>
    %332 = arith.truncf %331 : vector<2x8x8xf32> to vector<2x8x8xbf16>
    "tpu.trace_start"() <{level = 10 : i32, message = "bqd,bkd->bqk"}> : () -> ()
    %cst_130 = arith.constant dense<0.000000e+00> : vector<2x8x8xf32>
    %333 = tpu.matmul %326, %329, %cst_130 {dimension_numbers = #tpu.dot_dimension_numbers<[2], [2], [1], [1], [0, 0, 0, 1, 1, 1], [0], [0]>} : vector<2x8x8xbf16>, vector<2x8x8xbf16>, vector<2x8x8xf32> -> vector<2x8x8xf32>
    "tpu.trace_stop"() : () -> ()
    %cst_131 = arith.constant 0.353553385 : f32
    %334 = vector.broadcast %cst_131 : f32 to vector<2x8x8xf32>
    %335 = arith.mulf %333, %334 : vector<2x8x8xf32>
    %cst_132 = arith.constant dense<0xFF800000> : vector<2x8xf32>
    %336 = vector.multi_reduction <maximumf>, %335, %cst_132 [2] : vector<2x8x8xf32> to vector<2x8xf32>
    %337 = vector.shape_cast %336 : vector<2x8xf32> to vector<2x8x1xf32>
    %338 = vector.broadcast %337 : vector<2x8x1xf32> to vector<2x8x8xf32>
    %339 = arith.subf %335, %338 : vector<2x8x8xf32>
    %340 = math.exp %339 : vector<2x8x8xf32>
    %cst_133 = arith.constant dense<0.000000e+00> : vector<2x8xf32>
    %341 = vector.multi_reduction <add>, %340, %cst_133 [2] : vector<2x8x8xf32> to vector<2x8xf32>
    %342 = vector.shape_cast %341 : vector<2x8xf32> to vector<2x8x1xf32>
    %343 = tpu.reciprocal %342 {approx = true} : vector<2x8x1xf32> -> vector<2x8x1xf32>
    %344 = vector.broadcast %343 : vector<2x8x1xf32> to vector<2x8x8xf32>
    %345 = arith.mulf %340, %344 : vector<2x8x8xf32>
    %346 = arith.truncf %345 : vector<2x8x8xf32> to vector<2x8x8xbf16>
    "tpu.trace_start"() <{level = 10 : i32, message = "bqk,bkd->bqd"}> : () -> ()
    %cst_134 = arith.constant dense<0.000000e+00> : vector<2x8x8xf32>
    %347 = tpu.matmul %346, %332, %cst_134 {dimension_numbers = #tpu.dot_dimension_numbers<[2], [1], [1], [2], [0, 0, 0, 1, 1, 2], [0], [0]>} : vector<2x8x8xbf16>, vector<2x8x8xbf16>, vector<2x8x8xf32> -> vector<2x8x8xf32>
    "tpu.trace_stop"() : () -> ()
    %348 = vector.shape_cast %347 : vector<2x8x8xf32> to vector<16x8xf32>
    %349 = tpu.concatenate %273, %298, %323, %348 in 1 : vector<16x8xf32>, vector<16x8xf32>, vector<16x8xf32>, vector<16x8xf32> -> vector<16x32xf32>
    %350 = arith.truncf %349 : vector<16x32xf32> to vector<16x32xbf16>
    %c1_135 = arith.constant 1 : index
    %c0_136 = arith.constant 0 : index
    %c0_137 = arith.constant 0 : index
    %351 = vector.load %arg6[%c1_135, %c0_136, %c0_137] : memref<2x32x32xbf16, #tpu.memory_space<vmem>>, vector<1x32x32xbf16>
    %352 = vector.shape_cast %351 : vector<1x32x32xbf16> to vector<32x32xbf16>
    %cst_138 = arith.constant dense<0.000000e+00> : vector<16x32xf32>
    %353 = tpu.matmul %350, %352, %cst_138 {dimension_numbers = #tpu.dot_dimension_numbers<[1], [0], [0], [1], [0, 0, 1, 1], [], []>} : vector<16x32xbf16>, vector<32x32xbf16>, vector<16x32xf32> -> vector<16x32xf32>
    %c1_139 = arith.constant 1 : index
    %c0_140 = arith.constant 0 : index
    %c0_141 = arith.constant 0 : index
    %354 = vector.load %arg7[%c1_139, %c0_140, %c0_141] : memref<2x1x32xf32, #tpu.memory_space<vmem>>, vector<1x1x32xf32>
    %355 = vector.shape_cast %354 : vector<1x1x32xf32> to vector<1x32xf32>
    %356 = vector.broadcast %355 : vector<1x32xf32> to vector<16x32xf32>
    %357 = arith.addf %353, %356 : vector<16x32xf32>
    %358 = arith.addf %240, %357 : vector<16x32xf32>
    %c1_142 = arith.constant 1 : index
    %c0_143 = arith.constant 0 : index
    %c0_144 = arith.constant 0 : index
    %359 = vector.load %arg8[%c1_142, %c0_143, %c0_144] : memref<2x1x32xf32, #tpu.memory_space<vmem>>, vector<1x1x32xf32>
    %360 = vector.shape_cast %359 : vector<1x1x32xf32> to vector<1x32xf32>
    %c1_145 = arith.constant 1 : index
    %c0_146 = arith.constant 0 : index
    %c0_147 = arith.constant 0 : index
    %361 = vector.load %arg9[%c1_145, %c0_146, %c0_147] : memref<2x1x32xf32, #tpu.memory_space<vmem>>, vector<1x1x32xf32>
    %362 = vector.shape_cast %361 : vector<1x1x32xf32> to vector<1x32xf32>
    %cst_148 = arith.constant dense<0.000000e+00> : vector<16xf32>
    %363 = vector.multi_reduction <add>, %358, %cst_148 [1] : vector<16x32xf32> to vector<16xf32>
    %364 = vector.shape_cast %363 : vector<16xf32> to vector<16x1xf32>
    %cst_149 = arith.constant 3.200000e+01 : f32
    %365 = vector.broadcast %cst_149 : f32 to vector<16x1xf32>
    %366 = arith.divf %364, %365 : vector<16x1xf32>
    %367 = vector.broadcast %366 : vector<16x1xf32> to vector<16x32xf32>
    %368 = arith.subf %358, %367 : vector<16x32xf32>
    %369 = arith.mulf %368, %368 : vector<16x32xf32>
    %cst_150 = arith.constant dense<0.000000e+00> : vector<16xf32>
    %370 = vector.multi_reduction <add>, %369, %cst_150 [1] : vector<16x32xf32> to vector<16xf32>
    %371 = vector.shape_cast %370 : vector<16xf32> to vector<16x1xf32>
    %cst_151 = arith.constant 3.200000e+01 : f32
    %372 = vector.broadcast %cst_151 : f32 to vector<16x1xf32>
    %373 = arith.divf %371, %372 : vector<16x1xf32>
    %374 = vector.broadcast %366 : vector<16x1xf32> to vector<16x32xf32>
    %375 = arith.subf %358, %374 : vector<16x32xf32>
    %cst_152 = arith.constant 9.99999974E-6 : f32
    %376 = vector.broadcast %cst_152 : f32 to vector<16x1xf32>
    %377 = arith.addf %373, %376 : vector<16x1xf32>
    %378 = math.rsqrt %377 : vector<16x1xf32>
    %379 = vector.broadcast %378 : vector<16x1xf32> to vector<16x32xf32>
    %380 = arith.mulf %375, %379 : vector<16x32xf32>
    %381 = vector.broadcast %360 : vector<1x32xf32> to vector<16x32xf32>
    %382 = arith.mulf %380, %381 : vector<16x32xf32>
    %383 = vector.broadcast %362 : vector<1x32xf32> to vector<16x32xf32>
    %384 = arith.addf %382, %383 : vector<16x32xf32>
    %385 = arith.truncf %384 : vector<16x32xf32> to vector<16x32xbf16>
    %cst_153 = arith.constant 0.000000e+00 : f32
    %386 = vector.broadcast %cst_153 : f32 to vector<16x32xf32>
    %c1_154 = arith.constant 1 : index
    %c0_155 = arith.constant 0 : index
    %c0_156 = arith.constant 0 : index
    %387 = vector.load %arg10[%c1_154, %c0_155, %c0_156] : memref<2x32x2048xbf16, #tpu.memory_space<vmem>>, vector<1x32x512xbf16>
    %388 = vector.shape_cast %387 : vector<1x32x512xbf16> to vector<32x512xbf16>
    %cst_157 = arith.constant dense<0.000000e+00> : vector<16x512xf32>
    %389 = tpu.matmul %385, %388, %cst_157 {dimension_numbers = #tpu.dot_dimension_numbers<[1], [0], [0], [1], [0, 0, 1, 1], [], []>} : vector<16x32xbf16>, vector<32x512xbf16>, vector<16x512xf32> -> vector<16x512xf32>
    %c1_158 = arith.constant 1 : index
    %c0_159 = arith.constant 0 : index
    %c0_160 = arith.constant 0 : index
    %390 = vector.load %arg11[%c1_158, %c0_159, %c0_160] : memref<2x1x2048xf32, #tpu.memory_space<vmem>>, vector<1x1x512xf32>
    %391 = vector.shape_cast %390 : vector<1x1x512xf32> to vector<1x512xf32>
    %392 = vector.broadcast %391 : vector<1x512xf32> to vector<16x512xf32>
    %393 = arith.addf %389, %392 : vector<16x512xf32>
    %cst_161 = arith.constant 0.000000e+00 : f32
    %394 = vector.broadcast %cst_161 : f32 to vector<16x512xf32>
    %395 = arith.maximumf %393, %394 : vector<16x512xf32>
    %396 = arith.truncf %395 : vector<16x512xf32> to vector<16x512xbf16>
    %c1_162 = arith.constant 1 : index
    %c0_163 = arith.constant 0 : index
    %c0_164 = arith.constant 0 : index
    %397 = vector.load %arg12[%c1_162, %c0_163, %c0_164] : memref<2x2048x32xbf16, #tpu.memory_space<vmem>>, vector<1x512x32xbf16>
    %398 = vector.shape_cast %397 : vector<1x512x32xbf16> to vector<512x32xbf16>
    %cst_165 = arith.constant dense<0.000000e+00> : vector<16x32xf32>
    %399 = tpu.matmul %396, %398, %cst_165 {dimension_numbers = #tpu.dot_dimension_numbers<[1], [0], [0], [1], [0, 0, 1, 1], [], []>} : vector<16x512xbf16>, vector<512x32xbf16>, vector<16x32xf32> -> vector<16x32xf32>
    %400 = arith.addf %386, %399 : vector<16x32xf32>
    %c1_166 = arith.constant 1 : index
    %c0_167 = arith.constant 0 : index
    %c512_168 = arith.constant 512 : index
    %401 = vector.load %arg10[%c1_166, %c0_167, %c512_168] : memref<2x32x2048xbf16, #tpu.memory_space<vmem>>, vector<1x32x512xbf16>
    %402 = vector.shape_cast %401 : vector<1x32x512xbf16> to vector<32x512xbf16>
    %cst_169 = arith.constant dense<0.000000e+00> : vector<16x512xf32>
    %403 = tpu.matmul %385, %402, %cst_169 {dimension_numbers = #tpu.dot_dimension_numbers<[1], [0], [0], [1], [0, 0, 1, 1], [], []>} : vector<16x32xbf16>, vector<32x512xbf16>, vector<16x512xf32> -> vector<16x512xf32>
    %c1_170 = arith.constant 1 : index
    %c0_171 = arith.constant 0 : index
    %c512_172 = arith.constant 512 : index
    %404 = vector.load %arg11[%c1_170, %c0_171, %c512_172] : memref<2x1x2048xf32, #tpu.memory_space<vmem>>, vector<1x1x512xf32>
    %405 = vector.shape_cast %404 : vector<1x1x512xf32> to vector<1x512xf32>
    %406 = vector.broadcast %405 : vector<1x512xf32> to vector<16x512xf32>
    %407 = arith.addf %403, %406 : vector<16x512xf32>
    %cst_173 = arith.constant 0.000000e+00 : f32
    %408 = vector.broadcast %cst_173 : f32 to vector<16x512xf32>
    %409 = arith.maximumf %407, %408 : vector<16x512xf32>
    %410 = arith.truncf %409 : vector<16x512xf32> to vector<16x512xbf16>
    %c1_174 = arith.constant 1 : index
    %c512_175 = arith.constant 512 : index
    %c0_176 = arith.constant 0 : index
    %411 = vector.load %arg12[%c1_174, %c512_175, %c0_176] : memref<2x2048x32xbf16, #tpu.memory_space<vmem>>, vector<1x512x32xbf16>
    %412 = vector.shape_cast %411 : vector<1x512x32xbf16> to vector<512x32xbf16>
    %cst_177 = arith.constant dense<0.000000e+00> : vector<16x32xf32>
    %413 = tpu.matmul %410, %412, %cst_177 {dimension_numbers = #tpu.dot_dimension_numbers<[1], [0], [0], [1], [0, 0, 1, 1], [], []>} : vector<16x512xbf16>, vector<512x32xbf16>, vector<16x32xf32> -> vector<16x32xf32>
    %414 = arith.addf %400, %413 : vector<16x32xf32>
    %c1_178 = arith.constant 1 : index
    %c0_179 = arith.constant 0 : index
    %c1024_180 = arith.constant 1024 : index
    %415 = vector.load %arg10[%c1_178, %c0_179, %c1024_180] : memref<2x32x2048xbf16, #tpu.memory_space<vmem>>, vector<1x32x512xbf16>
    %416 = vector.shape_cast %415 : vector<1x32x512xbf16> to vector<32x512xbf16>
    %cst_181 = arith.constant dense<0.000000e+00> : vector<16x512xf32>
    %417 = tpu.matmul %385, %416, %cst_181 {dimension_numbers = #tpu.dot_dimension_numbers<[1], [0], [0], [1], [0, 0, 1, 1], [], []>} : vector<16x32xbf16>, vector<32x512xbf16>, vector<16x512xf32> -> vector<16x512xf32>
    %c1_182 = arith.constant 1 : index
    %c0_183 = arith.constant 0 : index
    %c1024_184 = arith.constant 1024 : index
    %418 = vector.load %arg11[%c1_182, %c0_183, %c1024_184] : memref<2x1x2048xf32, #tpu.memory_space<vmem>>, vector<1x1x512xf32>
    %419 = vector.shape_cast %418 : vector<1x1x512xf32> to vector<1x512xf32>
    %420 = vector.broadcast %419 : vector<1x512xf32> to vector<16x512xf32>
    %421 = arith.addf %417, %420 : vector<16x512xf32>
    %cst_185 = arith.constant 0.000000e+00 : f32
    %422 = vector.broadcast %cst_185 : f32 to vector<16x512xf32>
    %423 = arith.maximumf %421, %422 : vector<16x512xf32>
    %424 = arith.truncf %423 : vector<16x512xf32> to vector<16x512xbf16>
    %c1_186 = arith.constant 1 : index
    %c1024_187 = arith.constant 1024 : index
    %c0_188 = arith.constant 0 : index
    %425 = vector.load %arg12[%c1_186, %c1024_187, %c0_188] : memref<2x2048x32xbf16, #tpu.memory_space<vmem>>, vector<1x512x32xbf16>
    %426 = vector.shape_cast %425 : vector<1x512x32xbf16> to vector<512x32xbf16>
    %cst_189 = arith.constant dense<0.000000e+00> : vector<16x32xf32>
    %427 = tpu.matmul %424, %426, %cst_189 {dimension_numbers = #tpu.dot_dimension_numbers<[1], [0], [0], [1], [0, 0, 1, 1], [], []>} : vector<16x512xbf16>, vector<512x32xbf16>, vector<16x32xf32> -> vector<16x32xf32>
    %428 = arith.addf %414, %427 : vector<16x32xf32>
    %c1_190 = arith.constant 1 : index
    %c0_191 = arith.constant 0 : index
    %c1536_192 = arith.constant 1536 : index
    %429 = vector.load %arg10[%c1_190, %c0_191, %c1536_192] : memref<2x32x2048xbf16, #tpu.memory_space<vmem>>, vector<1x32x512xbf16>
    %430 = vector.shape_cast %429 : vector<1x32x512xbf16> to vector<32x512xbf16>
    %cst_193 = arith.constant dense<0.000000e+00> : vector<16x512xf32>
    %431 = tpu.matmul %385, %430, %cst_193 {dimension_numbers = #tpu.dot_dimension_numbers<[1], [0], [0], [1], [0, 0, 1, 1], [], []>} : vector<16x32xbf16>, vector<32x512xbf16>, vector<16x512xf32> -> vector<16x512xf32>
    %c1_194 = arith.constant 1 : index
    %c0_195 = arith.constant 0 : index
    %c1536_196 = arith.constant 1536 : index
    %432 = vector.load %arg11[%c1_194, %c0_195, %c1536_196] : memref<2x1x2048xf32, #tpu.memory_space<vmem>>, vector<1x1x512xf32>
    %433 = vector.shape_cast %432 : vector<1x1x512xf32> to vector<1x512xf32>
    %434 = vector.broadcast %433 : vector<1x512xf32> to vector<16x512xf32>
    %435 = arith.addf %431, %434 : vector<16x512xf32>
    %cst_197 = arith.constant 0.000000e+00 : f32
    %436 = vector.broadcast %cst_197 : f32 to vector<16x512xf32>
    %437 = arith.maximumf %435, %436 : vector<16x512xf32>
    %438 = arith.truncf %437 : vector<16x512xf32> to vector<16x512xbf16>
    %c1_198 = arith.constant 1 : index
    %c1536_199 = arith.constant 1536 : index
    %c0_200 = arith.constant 0 : index
    %439 = vector.load %arg12[%c1_198, %c1536_199, %c0_200] : memref<2x2048x32xbf16, #tpu.memory_space<vmem>>, vector<1x512x32xbf16>
    %440 = vector.shape_cast %439 : vector<1x512x32xbf16> to vector<512x32xbf16>
    %cst_201 = arith.constant dense<0.000000e+00> : vector<16x32xf32>
    %441 = tpu.matmul %438, %440, %cst_201 {dimension_numbers = #tpu.dot_dimension_numbers<[1], [0], [0], [1], [0, 0, 1, 1], [], []>} : vector<16x512xbf16>, vector<512x32xbf16>, vector<16x32xf32> -> vector<16x32xf32>
    %442 = arith.addf %428, %441 : vector<16x32xf32>
    %c1_202 = arith.constant 1 : index
    %c0_203 = arith.constant 0 : index
    %c0_204 = arith.constant 0 : index
    %443 = vector.load %arg13[%c1_202, %c0_203, %c0_204] : memref<2x1x32xf32, #tpu.memory_space<vmem>>, vector<1x1x32xf32>
    %444 = vector.shape_cast %443 : vector<1x1x32xf32> to vector<1x32xf32>
    %445 = vector.broadcast %444 : vector<1x32xf32> to vector<16x32xf32>
    %446 = arith.addf %442, %445 : vector<16x32xf32>
    %447 = arith.addf %384, %446 : vector<16x32xf32>
    %c1_205 = arith.constant 1 : index
    %c0_206 = arith.constant 0 : index
    %c0_207 = arith.constant 0 : index
    %448 = vector.load %arg14[%c1_205, %c0_206, %c0_207] : memref<2x1x32xf32, #tpu.memory_space<vmem>>, vector<1x1x32xf32>
    %449 = vector.shape_cast %448 : vector<1x1x32xf32> to vector<1x32xf32>
    %c1_208 = arith.constant 1 : index
    %c0_209 = arith.constant 0 : index
    %c0_210 = arith.constant 0 : index
    %450 = vector.load %arg15[%c1_208, %c0_209, %c0_210] : memref<2x1x32xf32, #tpu.memory_space<vmem>>, vector<1x1x32xf32>
    %451 = vector.shape_cast %450 : vector<1x1x32xf32> to vector<1x32xf32>
    %cst_211 = arith.constant dense<0.000000e+00> : vector<16xf32>
    %452 = vector.multi_reduction <add>, %447, %cst_211 [1] : vector<16x32xf32> to vector<16xf32>
    %453 = vector.shape_cast %452 : vector<16xf32> to vector<16x1xf32>
    %cst_212 = arith.constant 3.200000e+01 : f32
    %454 = vector.broadcast %cst_212 : f32 to vector<16x1xf32>
    %455 = arith.divf %453, %454 : vector<16x1xf32>
    %456 = vector.broadcast %455 : vector<16x1xf32> to vector<16x32xf32>
    %457 = arith.subf %447, %456 : vector<16x32xf32>
    %458 = arith.mulf %457, %457 : vector<16x32xf32>
    %cst_213 = arith.constant dense<0.000000e+00> : vector<16xf32>
    %459 = vector.multi_reduction <add>, %458, %cst_213 [1] : vector<16x32xf32> to vector<16xf32>
    %460 = vector.shape_cast %459 : vector<16xf32> to vector<16x1xf32>
    %cst_214 = arith.constant 3.200000e+01 : f32
    %461 = vector.broadcast %cst_214 : f32 to vector<16x1xf32>
    %462 = arith.divf %460, %461 : vector<16x1xf32>
    %463 = vector.broadcast %455 : vector<16x1xf32> to vector<16x32xf32>
    %464 = arith.subf %447, %463 : vector<16x32xf32>
    %cst_215 = arith.constant 9.99999974E-6 : f32
    %465 = vector.broadcast %cst_215 : f32 to vector<16x1xf32>
    %466 = arith.addf %462, %465 : vector<16x1xf32>
    %467 = math.rsqrt %466 : vector<16x1xf32>
    %468 = vector.broadcast %467 : vector<16x1xf32> to vector<16x32xf32>
    %469 = arith.mulf %464, %468 : vector<16x32xf32>
    %470 = vector.broadcast %449 : vector<1x32xf32> to vector<16x32xf32>
    %471 = arith.mulf %469, %470 : vector<16x32xf32>
    %472 = vector.broadcast %451 : vector<1x32xf32> to vector<16x32xf32>
    %473 = arith.addf %471, %472 : vector<16x32xf32>
    %474 = vector.shape_cast %473 : vector<16x32xf32> to vector<2x8x32xf32>
    %cst_216 = arith.constant dense<0.000000e+00> : vector<2x32xf32>
    %475 = vector.multi_reduction <add>, %474, %cst_216 [1] : vector<2x8x32xf32> to vector<2x32xf32>
    %cst_217 = arith.constant 8.000000e+00 : f32
    %476 = vector.broadcast %cst_217 : f32 to vector<2x32xf32>
    %477 = arith.divf %475, %476 : vector<2x32xf32>
    %c0_218 = arith.constant 0 : index
    %c0_219 = arith.constant 0 : index
    %478 = vector.load %arg16[%c0_218, %c0_219] : memref<1x32xf32, #tpu.memory_space<vmem>>, vector<1x32xf32>
    %479 = vector.broadcast %478 : vector<1x32xf32> to vector<2x32xf32>
    %480 = arith.mulf %477, %479 : vector<2x32xf32>
    %cst_220 = arith.constant dense<0.000000e+00> : vector<2xf32>
    %481 = vector.multi_reduction <add>, %480, %cst_220 [1] : vector<2x32xf32> to vector<2xf32>
    %482 = vector.shape_cast %481 : vector<2xf32> to vector<2x1xf32>
    %c0_221 = arith.constant 0 : index
    %c0_222 = arith.constant 0 : index
    %483 = vector.load %arg17[%c0_221, %c0_222] : memref<1x1xf32, #tpu.memory_space<vmem>>, vector<1x1xf32>
    %484 = vector.broadcast %483 : vector<1x1xf32> to vector<2x1xf32>
    %485 = arith.addf %482, %484 : vector<2x1xf32>
    %c0_223 = arith.constant 0 : index
    %c0_224 = arith.constant 0 : index
    %486 = vector.load %arg18[%c0_223, %c0_224] : memref<2x1xf32, #tpu.memory_space<vmem>>, vector<2x1xf32>
    tpu.vector_store %arg18[%c0_223, %c0_224], %485 {strides = array<i32>} : memref<2x1xf32, #tpu.memory_space<vmem>>, vector<2x1xf32>,
    return
  }
  func.func @transform_0(%arg0: i32) -> (i32, i32) {
    %c0_i32 = arith.constant 0 : i32
    %c0_i32_0 = arith.constant 0 : i32
    return %arg0, %c0_i32 : i32, i32
  }
  func.func @transform_1(%arg0: i32) -> (i32, i32) {
    %c0_i32 = arith.constant 0 : i32
    %c0_i32_0 = arith.constant 0 : i32
    %c0_i32_1 = arith.constant 0 : i32
    return %c0_i32, %c0_i32_0 : i32, i32
  }
  func.func @transform_2(%arg0: i32) -> (i32, i32) {
    %c0_i32 = arith.constant 0 : i32
    %c0_i32_0 = arith.constant 0 : i32
    %c0_i32_1 = arith.constant 0 : i32
    return %c0_i32, %c0_i32_0 : i32, i32
  }
  func.func @transform_3(%arg0: i32) -> (i32, i32, i32) {
    %c0_i32 = arith.constant 0 : i32
    %c0_i32_0 = arith.constant 0 : i32
    %c0_i32_1 = arith.constant 0 : i32
    %c0_i32_2 = arith.constant 0 : i32
    return %c0_i32, %c0_i32_0, %c0_i32_1 : i32, i32, i32
  }
  func.func @transform_4(%arg0: i32) -> (i32, i32, i32) {
    %c0_i32 = arith.constant 0 : i32
    %c0_i32_0 = arith.constant 0 : i32
    %c0_i32_1 = arith.constant 0 : i32
    %c0_i32_2 = arith.constant 0 : i32
    return %c0_i32, %c0_i32_0, %c0_i32_1 : i32, i32, i32
  }
  func.func @transform_5(%arg0: i32) -> (i32, i32, i32) {
    %c0_i32 = arith.constant 0 : i32
    %c0_i32_0 = arith.constant 0 : i32
    %c0_i32_1 = arith.constant 0 : i32
    %c0_i32_2 = arith.constant 0 : i32
    return %c0_i32, %c0_i32_0, %c0_i32_1 : i32, i32, i32
  }
  func.func @transform_6(%arg0: i32) -> (i32, i32, i32) {
    %c0_i32 = arith.constant 0 : i32
    %c0_i32_0 = arith.constant 0 : i32
    %c0_i32_1 = arith.constant 0 : i32
    %c0_i32_2 = arith.constant 0 : i32
    return %c0_i32, %c0_i32_0, %c0_i32_1 : i32, i32, i32
  }
  func.func @transform_7(%arg0: i32) -> (i32, i32, i32) {
    %c0_i32 = arith.constant 0 : i32
    %c0_i32_0 = arith.constant 0 : i32
    %c0_i32_1 = arith.constant 0 : i32
    %c0_i32_2 = arith.constant 0 : i32
    return %c0_i32, %c0_i32_0, %c0_i32_1 : i32, i32, i32
  }
  func.func @transform_8(%arg0: i32) -> (i32, i32, i32) {
    %c0_i32 = arith.constant 0 : i32
    %c0_i32_0 = arith.constant 0 : i32
    %c0_i32_1 = arith.constant 0 : i32
    %c0_i32_2 = arith.constant 0 : i32
    return %c0_i32, %c0_i32_0, %c0_i32_1 : i32, i32, i32
  }
  func.func @transform_9(%arg0: i32) -> (i32, i32, i32) {
    %c0_i32 = arith.constant 0 : i32
    %c0_i32_0 = arith.constant 0 : i32
    %c0_i32_1 = arith.constant 0 : i32
    %c0_i32_2 = arith.constant 0 : i32
    return %c0_i32, %c0_i32_0, %c0_i32_1 : i32, i32, i32
  }
  func.func @transform_10(%arg0: i32) -> (i32, i32, i32) {
    %c0_i32 = arith.constant 0 : i32
    %c0_i32_0 = arith.constant 0 : i32
    %c0_i32_1 = arith.constant 0 : i32
    %c0_i32_2 = arith.constant 0 : i32
    return %c0_i32, %c0_i32_0, %c0_i32_1 : i32, i32, i32
  }
  func.func @transform_11(%arg0: i32) -> (i32, i32, i32) {
    %c0_i32 = arith.constant 0 : i32
    %c0_i32_0 = arith.constant 0 : i32
    %c0_i32_1 = arith.constant 0 : i32
    %c0_i32_2 = arith.constant 0 : i32
    return %c0_i32, %c0_i32_0, %c0_i32_1 : i32, i32, i32
  }
  func.func @transform_12(%arg0: i32) -> (i32, i32, i32) {
    %c0_i32 = arith.constant 0 : i32
    %c0_i32_0 = arith.constant 0 : i32
    %c0_i32_1 = arith.constant 0 : i32
    %c0_i32_2 = arith.constant 0 : i32
    return %c0_i32, %c0_i32_0, %c0_i32_1 : i32, i32, i32
  }
  func.func @transform_13(%arg0: i32) -> (i32, i32, i32) {
    %c0_i32 = arith.constant 0 : i32
    %c0_i32_0 = arith.constant 0 : i32
    %c0_i32_1 = arith.constant 0 : i32
    %c0_i32_2 = arith.constant 0 : i32
    return %c0_i32, %c0_i32_0, %c0_i32_1 : i32, i32, i32
  }
  func.func @transform_14(%arg0: i32) -> (i32, i32, i32) {
    %c0_i32 = arith.constant 0 : i32
    %c0_i32_0 = arith.constant 0 : i32
    %c0_i32_1 = arith.constant 0 : i32
    %c0_i32_2 = arith.constant 0 : i32
    return %c0_i32, %c0_i32_0, %c0_i32_1 : i32, i32, i32
  }
  func.func @transform_15(%arg0: i32) -> (i32, i32) {
    %c0_i32 = arith.constant 0 : i32
    %c0_i32_0 = arith.constant 0 : i32
    %c0_i32_1 = arith.constant 0 : i32
    return %c0_i32, %c0_i32_0 : i32, i32
  }
  func.func @transform_16(%arg0: i32) -> (i32, i32) {
    %c0_i32 = arith.constant 0 : i32
    %c0_i32_0 = arith.constant 0 : i32
    %c0_i32_1 = arith.constant 0 : i32
    return %c0_i32, %c0_i32_0 : i32, i32
  }
  func.func @transform_17(%arg0: i32) -> (i32, i32) {
    %c0_i32 = arith.constant 0 : i32
    %c0_i32_0 = arith.constant 0 : i32
    return %arg0, %c0_i32 : i32, i32
  }
}

</mosaic_0001>

<llo_original>
// kernel: tpu_custom_call.1
$region0: #{tpu_custom_call.1}
  #allocation0 [shape = 'u32[]', space=smem, size = 0x4, offset = 0x4, fixed_abs, tag = 'smem constant byte address 0x4 - core index']
  #allocation1 [shape = 'u32[144,128]{1,0:T(1,128)}', space=vmem, size = 0x12000, scoped, tag = 'internal scratch']
  #allocation2 [shape = 'f32[1,1]{1,0:T(1,128)S(1)}', space=vmem, size = 0x200, scoped, tag = 'scoped memory for tpu_custom_call.1']
  %s0 = inlined_call_operand.vmem [shape: f32[16,1], index: 0, kind: input, shape index: {}]
  %s1 = inlined_call_operand.vmem [shape: f32[1,32], index: 1, kind: input, shape index: {}]
  %s2 = inlined_call_operand.vmem [shape: f32[1,32], index: 2, kind: input, shape index: {}]
  %s3 = inlined_call_operand.vmem [shape: bf16[2,32,96], index: 3, kind: input, shape index: {}]
  %s4 = inlined_call_operand.vmem [shape: f32[2,1,96], index: 4, kind: input, shape index: {}]
  %s5 = inlined_call_operand.vmem [shape: bf16[2,32,32], index: 5, kind: input, shape index: {}]
  %s6 = inlined_call_operand.vmem [shape: f32[2,1,32], index: 6, kind: input, shape index: {}]
  %s7 = inlined_call_operand.vmem [shape: f32[2,1,32], index: 7, kind: input, shape index: {}]
  %s8 = inlined_call_operand.vmem [shape: f32[2,1,32], index: 8, kind: input, shape index: {}]
  %s9 = inlined_call_operand.vmem [shape: bf16[2,32,2048], index: 9, kind: input, shape index: {}]
  %s10 = inlined_call_operand.vmem [shape: f32[2,1,2048], index: 10, kind: input, shape index: {}]
  %s11 = inlined_call_operand.vmem [shape: bf16[2,2048,32], index: 11, kind: input, shape index: {}]
  %s12 = inlined_call_operand.vmem [shape: f32[2,1,32], index: 12, kind: input, shape index: {}]
  %s13 = inlined_call_operand.vmem [shape: f32[2,1,32], index: 13, kind: input, shape index: {}]
  %s14 = inlined_call_operand.vmem [shape: f32[2,1,32], index: 14, kind: input, shape index: {}]
  %s15 = inlined_call_operand.vmem [shape: f32[1,32], index: 15, kind: input, shape index: {}]
  %s16 = inlined_call_operand.<no memory space> [shape: f32[1,1], index: 16, kind: input, shape index: {}]
  %s17 = inlined_call_operand.vmem [shape: f32[2,1], index: 17, kind: output, shape index: {}]
  %s18 = sld [smem:[#allocation0]]
  $region78: #{tpu_custom_call.1} parent=0
    _
  %s20 = ssub.s32 1, %s18
  %s21 = scalar_select 0, %s20, %s18
  %v22 = vstv %s16
  %23 = vst [vmem:[#allocation2] sm:$0x1] %v22
  // Predicated region
  $region2: #{tpu_custom_call.1} parent=0 // pred_check
    _
  $region3: #{tpu_custom_call.1} parent=0 // pred_check_branch
    %25 = sbr.rel (0) target = $region5
  $region4: #{tpu_custom_call.1} parent=0 // pred_region
    _
  $region5: #{tpu_custom_call.1} parent=0 // pred_fallthru
    _
  // Predicated region
  $region6: #{tpu_custom_call.1} parent=0 // pred_check
    _
  $region7: #{tpu_custom_call.1} parent=0 // pred_check_branch
    %27 = sbr.rel (0) target = $region9
  $region8: #{tpu_custom_call.1} parent=0 // pred_region
    _
  $region9: #{tpu_custom_call.1} parent=0 // pred_fallthru
    _
  // Predicated region
  $region10: #{tpu_custom_call.1} parent=0 // pred_check
    _
  $region11: #{tpu_custom_call.1} parent=0 // pred_check_branch
    %29 = sbr.rel (0) target = $region13
  $region12: #{tpu_custom_call.1} parent=0 // pred_region
    _
  $region13: #{tpu_custom_call.1} parent=0 // pred_fallthru
    _
  // Predicated region
  $region14: #{tpu_custom_call.1} parent=0 // pred_check
    _
  $region15: #{tpu_custom_call.1} parent=0 // pred_check_branch
    %31 = sbr.rel (0) target = $region17
  $region16: #{tpu_custom_call.1} parent=0 // pred_region
    _
  $region17: #{tpu_custom_call.1} parent=0 // pred_fallthru
    _
  // Predicated region
  $region18: #{tpu_custom_call.1} parent=0 // pred_check
    _
  $region19: #{tpu_custom_call.1} parent=0 // pred_check_branch
    %33 = sbr.rel (0) target = $region21
  $region20: #{tpu_custom_call.1} parent=0 // pred_region
    _
  $region21: #{tpu_custom_call.1} parent=0 // pred_fallthru
    _
  // Predicated region
  $region22: #{tpu_custom_call.1} parent=0 // pred_check
    _
  $region23: #{tpu_custom_call.1} parent=0 // pred_check_branch
    %35 = sbr.rel (0) target = $region25
  $region24: #{tpu_custom_call.1} parent=0 // pred_region
    _
  $region25: #{tpu_custom_call.1} parent=0 // pred_fallthru
    _
  // Predicated region
  $region26: #{tpu_custom_call.1} parent=0 // pred_check
    _
  $region27: #{tpu_custom_call.1} parent=0 // pred_check_branch
    %37 = sbr.rel (0) target = $region29
  $region28: #{tpu_custom_call.1} parent=0 // pred_region
    _
  $region29: #{tpu_custom_call.1} parent=0 // pred_fallthru
    _
  // Predicated region
  $region30: #{tpu_custom_call.1} parent=0 // pred_check
    _
  $region31: #{tpu_custom_call.1} parent=0 // pred_check_branch
    %39 = sbr.rel (0) target = $region33
  $region32: #{tpu_custom_call.1} parent=0 // pred_region
    _
  $region33: #{tpu_custom_call.1} parent=0 // pred_fallthru
    _
  // Predicated region
  $region34: #{tpu_custom_call.1} parent=0 // pred_check
    _
  $region35: #{tpu_custom_call.1} parent=0 // pred_check_branch
    %41 = sbr.rel (0) target = $region37
  $region36: #{tpu_custom_call.1} parent=0 // pred_region
    _
  $region37: #{tpu_custom_call.1} parent=0 // pred_fallthru
    _
  // Predicated region
  $region38: #{tpu_custom_call.1} parent=0 // pred_check
    _
  $region39: #{tpu_custom_call.1} parent=0 // pred_check_branch
    %43 = sbr.rel (0) target = $region41
  $region40: #{tpu_custom_call.1} parent=0 // pred_region
    _
  $region41: #{tpu_custom_call.1} parent=0 // pred_fallthru
    _
  // Predicated region
  $region42: #{tpu_custom_call.1} parent=0 // pred_check
    _
  $region43: #{tpu_custom_call.1} parent=0 // pred_check_branch
    %45 = sbr.rel (0) target = $region45
  $region44: #{tpu_custom_call.1} parent=0 // pred_region
    _
  $region45: #{tpu_custom_call.1} parent=0 // pred_fallthru
    _
  // Predicated region
  $region46: #{tpu_custom_call.1} parent=0 // pred_check
    _
  $region47: #{tpu_custom_call.1} parent=0 // pred_check_branch
    %47 = sbr.rel (0) target = $region49
  $region48: #{tpu_custom_call.1} parent=0 // pred_region
    _
  $region49: #{tpu_custom_call.1} parent=0 // pred_fallthru
    _
  // Predicated region
  $region50: #{tpu_custom_call.1} parent=0 // pred_check
    _
  $region51: #{tpu_custom_call.1} parent=0 // pred_check_branch
    %49 = sbr.rel (0) target = $region53
  $region52: #{tpu_custom_call.1} parent=0 // pred_region
    _
  $region53: #{tpu_custom_call.1} parent=0 // pred_fallthru
    _
  // Predicated region
  $region54: #{tpu_custom_call.1} parent=0 // pred_check
    _
  $region55: #{tpu_custom_call.1} parent=0 // pred_check_branch
    %51 = sbr.rel (0) target = $region57
  $region56: #{tpu_custom_call.1} parent=0 // pred_region
    _
  $region57: #{tpu_custom_call.1} parent=0 // pred_fallthru
    _
  // Predicated region
  $region58: #{tpu_custom_call.1} parent=0 // pred_check
    _
  $region59: #{tpu_custom_call.1} parent=0 // pred_check_branch
    %53 = sbr.rel (0) target = $region61
  $region60: #{tpu_custom_call.1} parent=0 // pred_region
    _
  $region61: #{tpu_custom_call.1} parent=0 // pred_fallthru
    _
  // Predicated region
  $region62: #{tpu_custom_call.1} parent=0 // pred_check
    _
  $region63: #{tpu_custom_call.1} parent=0 // pred_check_branch
    %55 = sbr.rel (0) target = $region65
  $region64: #{tpu_custom_call.1} parent=0 // pred_region
    _
  $region65: #{tpu_custom_call.1} parent=0 // pred_fallthru
    _
  // Predicated region
  $region66: #{tpu_custom_call.1} parent=0 // pred_check
    _
  $region67: #{tpu_custom_call.1} parent=0 // pred_check_branch
    %57 = sbr.rel (0) target = $region69
  $region68: #{tpu_custom_call.1} parent=0 // pred_region
    _
  $region69: #{tpu_custom_call.1} parent=0 // pred_fallthru
    _
  %v59 = vld [vmem:[%s0] sm:$0xff]
  %v60 = vld [vmem:[%s0 + $0x8] sm:$0xff]
  %v61 = vld [vmem:[%s1] sm:$0x1]
  %63 = vset.pattern.permute.xlu0 0
  %64 = vperm.xlu0 %63, %v59
  %v65 = vpop.permute.xlu0 %64
  %68 = vset.pattern.permute.xlu0 0
  %69 = vperm.xlu0 %68, %v60
  %v70 = vpop.permute.xlu0 %69
  %v73 = vlaneseq
  %v74 = vshrl.u32 %v73, 7
  %v75 = vsub.s32 0, %v74
  %v76 = vrot.slane %v61, %v75
  %v78 = vmul.f32 %v65, %v76
  %v79 = vmul.f32 %v70, %v76
  %v80 = vld [vmem:[%s2] sm:$0x1]
  %v82 = vlaneseq
  %v83 = vshrl.u32 %v82, 7
  %v84 = vsub.s32 0, %v83
  %v85 = vrot.slane %v80, %v84
  %v87 = vadd.f32 %v78, %v85
  %v88 = vadd.f32 %v79, %v85
  %v89 = vpack.c.bf16 %v88, %v87
  %v90 = vld [vmem:[%s3] sm:$0xf]
  %v91 = vld [vmem:[%s3 + $0x4] sm:$0xf]
  %v92 = vld [vmem:[%s3 + $0x8] sm:$0xf]
  %v93 = vld [vmem:[%s3 + $0xc] sm:$0xf]
  %v94 = vld [vmem:[%s4] sm:$0x1]
  %v96 = vlaneseq
  %v97 = vshrl.u32 %v96, 7
  %v98 = vsub.s32 0, %v97
  %v99 = vrot.slane %v94, %v98
  %v105 = vunpack.c.l.b16 %v90
  %v106 = vunpack.c.l.b16 %v91
  %v107 = vunpack.c.l.b16 %v92
  %v108 = vunpack.c.l.b16 %v93
  %v109 = vpack.c.b16 %v106, %v105
  %v110 = vpack.c.b16 %v108, %v107
  %vm113 = vcmask 261120
  %v115 = vsel %vm113, %v89, 0
  %117 = vmatprep.subr.bf16.mxu0 0
  %118 = vmatpush1.bf16.msra.mxu0 %v109
  %119 = vmatprep.subr.bf16.mxu0 0
  %120 = vmatpush1.bf16.msra.mxu0 %v110
  %121 = vmatprep.subr.bf16.mxu0 0
  %122 = vmatpush1.bf16.msra.mxu0 0
  %123 = vmatprep.subr.bf16.mxu0 0
  %124 = vmatpush1.bf16.msra.mxu0 0
  %125 = vmatprep.subr.bf16.mxu0 0
  %126 = vmatpush1.bf16.msra.mxu0 0
  %127 = vmatprep.subr.bf16.mxu0 0
  %128 = vmatpush1.bf16.msra.mxu0 0
  %129 = vmatprep.subr.bf16.mxu0 0
  %130 = vmatpush1.bf16.msra.mxu0 0
  %131 = vmatprep.subr.bf16.mxu0 0
  %132 = vmatpush1.bf16.msra.mxu0 0
  %133 = vmatprep.subr.bf16.mxu0 0
  %134 = vmatpush1.bf16.msra.mxu0 0
  %135 = vmatprep.subr.bf16.mxu0 0
  %136 = vmatpush1.bf16.msra.mxu0 0
  %137 = vmatprep.subr.bf16.mxu0 0
  %138 = vmatpush1.bf16.msra.mxu0 0
  %139 = vmatprep.subr.bf16.mxu0 0
  %140 = vmatpush1.bf16.msra.mxu0 0
  %141 = vmatprep.subr.bf16.mxu0 0
  %142 = vmatpush1.bf16.msra.mxu0 0
  %143 = vmatprep.subr.bf16.mxu0 0
  %144 = vmatpush1.bf16.msra.mxu0 0
  %145 = vmatprep.subr.bf16.mxu0 0
  %146 = vmatpush1.bf16.msra.mxu0 0
  %147 = vmatprep.subr.bf16.mxu0 0
  %148 = vmatpush1.bf16.msra.mxu0 0
  %149 = vmatprep.mubr.bf16.mxu0 0
  %150 = vmatmul.mubr.bf16.gmra.mrb[0].mxu0 %v115
  %v151 = vpop.f32.mrb[0].mxu0
  %v152 = vadd.f32 %v99, %v151
  %v153 = vpop.f32.mrb[0].mxu0
  %v154 = vpop.f32.mrb[0].mxu0
  %v155 = vadd.f32 %v99, %v154
  %v156 = vpop.f32.mrb[0].mxu0
  %157 = vdwg.mxu0
  %v158 = vpack.c.bf16 %v152, %v152
  %v159 = vpack.c.bf16 %v155, %v155
  %161 = vrot.lane.b32.xlu0 %v158, 96
  %v162 = vpop.permute.xlu0 %161
  %vm163 = vcmask 64512
  %v165 = vsel %vm163, %v158, 0
  %v168 = vsel %vm163, %v162, 0
  %170 = vmatprep.subr.bf16.mxu0 0
  %171 = vmatpush1.bf16.xpose.msra.mxu0 %v168
  %172 = vmatprep.subr.bf16.mxu0 0
  %173 = vmatpush1.bf16.xpose.msra.mxu0 0
  %174 = vmatprep.subr.bf16.mxu0 0
  %175 = vmatpush1.bf16.xpose.msra.mxu0 0
  %176 = vmatprep.subr.bf16.mxu0 0
  %177 = vmatpush1.bf16.xpose.msra.mxu0 0
  %178 = vmatprep.subr.bf16.mxu0 0
  %179 = vmatpush1.bf16.xpose.msra.mxu0 0
  %180 = vmatprep.subr.bf16.mxu0 0
  %181 = vmatpush1.bf16.xpose.msra.mxu0 0
  %182 = vmatprep.subr.bf16.mxu0 0
  %183 = vmatpush1.bf16.xpose.msra.mxu0 0
  %184 = vmatprep.subr.bf16.mxu0 0
  %185 = vmatpush1.bf16.xpose.msra.mxu0 0
  %186 = vmatprep.subr.bf16.mxu0 0
  %187 = vmatpush1.bf16.xpose.msra.mxu0 0
  %188 = vmatprep.subr.bf16.mxu0 0
  %189 = vmatpush1.bf16.xpose.msra.mxu0 0
  %190 = vmatprep.subr.bf16.mxu0 0
  %191 = vmatpush1.bf16.xpose.msra.mxu0 0
  %192 = vmatprep.subr.bf16.mxu0 0
  %193 = vmatpush1.bf16.xpose.msra.mxu0 0
  %194 = vmatprep.subr.bf16.mxu0 0
  %195 = vmatpush1.bf16.xpose.msra.mxu0 0
  %196 = vmatprep.subr.bf16.mxu0 0
  %197 = vmatpush1.bf16.xpose.msra.mxu0 0
  %198 = vmatprep.subr.bf16.mxu0 0
  %199 = vmatpush1.bf16.xpose.msra.mxu0 0
  %200 = vmatprep.subr.bf16.mxu0 0
  %201 = vmatpush1.bf16.xpose.msra.mxu0 0
  %202 = vmatprep.mubr.bf16.mxu0 0
  %203 = vmatmul.mubr.bf16.gmra.mrb[0].mxu0 %v165
  %v204 = vpop.f32.mrb[0].mxu0
  %v205 = vadd.f32 0.0, %v204
  %v206 = vpop.f32.mrb[0].mxu0
  %v207 = vpop.f32.mrb[0].mxu0
  %v208 = vpop.f32.mrb[0].mxu0
  %209 = vdwg.mxu0
  %211 = vrot.lane.b32.xlu0 %v159, 96
  %v212 = vpop.permute.xlu0 %211
  %v214 = vsel %vm163, %v159, 0
  %v217 = vsel %vm163, %v212, 0
  %219 = vmatprep.subr.bf16.mxu0 0
  %220 = vmatpush1.bf16.xpose.msra.mxu0 %v217
  %221 = vmatprep.subr.bf16.mxu0 0
  %222 = vmatpush1.bf16.xpose.msra.mxu0 0
  %223 = vmatprep.subr.bf16.mxu0 0
  %224 = vmatpush1.bf16.xpose.msra.mxu0 0
  %225 = vmatprep.subr.bf16.mxu0 0
  %226 = vmatpush1.bf16.xpose.msra.mxu0 0
  %227 = vmatprep.subr.bf16.mxu0 0
  %228 = vmatpush1.bf16.xpose.msra.mxu0 0
  %229 = vmatprep.subr.bf16.mxu0 0
  %230 = vmatpush1.bf16.xpose.msra.mxu0 0
  %231 = vmatprep.subr.bf16.mxu0 0
  %232 = vmatpush1.bf16.xpose.msra.mxu0 0
  %233 = vmatprep.subr.bf16.mxu0 0
  %234 = vmatpush1.bf16.xpose.msra.mxu0 0
  %235 = vmatprep.subr.bf16.mxu0 0
  %236 = vmatpush1.bf16.xpose.msra.mxu0 0
  %237 = vmatprep.subr.bf16.mxu0 0
  %238 = vmatpush1.bf16.xpose.msra.mxu0 0
  %239 = vmatprep.subr.bf16.mxu0 0
  %240 = vmatpush1.bf16.xpose.msra.mxu0 0
  %241 = vmatprep.subr.bf16.mxu0 0
  %242 = vmatpush1.bf16.xpose.msra.mxu0 0
  %243 = vmatprep.subr.bf16.mxu0 0
  %244 = vmatpush1.bf16.xpose.msra.mxu0 0
  %245 = vmatprep.subr.bf16.mxu0 0
  %246 = vmatpush1.bf16.xpose.msra.mxu0 0
  %247 = vmatprep.subr.bf16.mxu0 0
  %248 = vmatpush1.bf16.xpose.msra.mxu0 0
  %249 = vmatprep.subr.bf16.mxu0 0
  %250 = vmatpush1.bf16.xpose.msra.mxu0 0
  %251 = vmatprep.mubr.bf16.mxu0 0
  %252 = vmatmul.mubr.bf16.gmra.mrb[0].mxu0 %v214
  %v253 = vpop.f32.mrb[0].mxu0
  %v254 = vadd.f32 0.0, %v253
  %v255 = vpop.f32.mrb[0].mxu0
  %v256 = vpop.f32.mrb[0].mxu0
  %v257 = vpop.f32.mrb[0].mxu0
  %258 = vdwg.mxu0
  %v259 = vmul.f32 %v205, 0.35355338
  %v260 = vmul.f32 %v254, 0.35355338
  %v261 = vsel %vm163, %v259, -inf
  %262 = vmax.xlane.f32.xlu0 %v261
  %v263 = vpop.xlane.xlu0 %262
  %v264 = vsel %vm163, %v260, -inf
  %265 = vmax.xlane.f32.xlu0 %v264
  %v266 = vpop.xlane.xlu0 %265
  %v267 = vsub.f32 %v259, %v263
  %v268 = vsub.f32 %v260, %v266
  %v269 = vmul.f32 %v267, 1.442695
  %v270 = vpow.pop %v269
  %v271 = vmul.f32 %v268, 1.442695
  %v272 = vpow.pop %v271
  %v273 = vsel %vm163, %v270, 0.0
  %274 = vadd.xlane.f32.xlu0 %v273
  %v275 = vpop.xlane.xlu0 %274
  %v276 = vsel %vm163, %v272, 0.0
  %277 = vadd.xlane.f32.xlu0 %v276
  %v278 = vpop.xlane.xlu0 %277
  %v279 = vrcp.pop %v275
  %v280 = vrcp.pop %v278
  %v281 = vmul.f32 %v270, %v279
  %v282 = vmul.f32 %v272, %v280
  %v283 = vpack.c.bf16 %v281, %v281
  %v284 = vpack.c.bf16 %v282, %v282
  %285 = vrot.lane.b32.xlu0 %v158, 64
  %v286 = vpop.permute.xlu0 %285
  %v288 = vsel %vm163, %v283, 0
  %vm290 = vcmask 1043456
  %v292 = vsel %vm290, %v286, 0
  %294 = vmatprep.subr.bf16.mxu0 0
  %295 = vmatpush1.bf16.msra.mxu0 %v292
  %296 = vmatprep.subr.bf16.mxu0 0
  %297 = vmatpush1.bf16.msra.mxu0 0
  %298 = vmatprep.subr.bf16.mxu0 0
  %299 = vmatpush1.bf16.msra.mxu0 0
  %300 = vmatprep.subr.bf16.mxu0 0
  %301 = vmatpush1.bf16.msra.mxu0 0
  %302 = vmatprep.subr.bf16.mxu0 0
  %303 = vmatpush1.bf16.msra.mxu0 0
  %304 = vmatprep.subr.bf16.mxu0 0
  %305 = vmatpush1.bf16.msra.mxu0 0
  %306 = vmatprep.subr.bf16.mxu0 0
  %307 = vmatpush1.bf16.msra.mxu0 0
  %308 = vmatprep.subr.bf16.mxu0 0
  %309 = vmatpush1.bf16.msra.mxu0 0
  %310 = vmatprep.subr.bf16.mxu0 0
  %311 = vmatpush1.bf16.msra.mxu0 0
  %312 = vmatprep.subr.bf16.mxu0 0
  %313 = vmatpush1.bf16.msra.mxu0 0
  %314 = vmatprep.subr.bf16.mxu0 0
  %315 = vmatpush1.bf16.msra.mxu0 0
  %316 = vmatprep.subr.bf16.mxu0 0
  %317 = vmatpush1.bf16.msra.mxu0 0
  %318 = vmatprep.subr.bf16.mxu0 0
  %319 = vmatpush1.bf16.msra.mxu0 0
  %320 = vmatprep.subr.bf16.mxu0 0
  %321 = vmatpush1.bf16.msra.mxu0 0
  %322 = vmatprep.subr.bf16.mxu0 0
  %323 = vmatpush1.bf16.msra.mxu0 0
  %324 = vmatprep.subr.bf16.mxu0 0
  %325 = vmatpush1.bf16.msra.mxu0 0
  %326 = vmatprep.mubr.bf16.mxu0 0
  %327 = vmatmul.mubr.bf16.gmra.mrb[0].mxu0 %v288
  %v328 = vpop.f32.mrb[0].mxu0
  %v329 = vadd.f32 0.0, %v328
  %v330 = vpop.f32.mrb[0].mxu0
  %v331 = vpop.f32.mrb[0].mxu0
  %v332 = vpop.f32.mrb[0].mxu0
  %333 = vdwg.mxu0
  %334 = vrot.lane.b32.xlu0 %v159, 64
  %v335 = vpop.permute.xlu0 %334
  %v337 = vsel %vm163, %v284, 0
  %v340 = vsel %vm290, %v335, 0
  %342 = vmatprep.subr.bf16.mxu0 0
  %343 = vmatpush1.bf16.msra.mxu0 %v340
  %344 = vmatprep.subr.bf16.mxu0 0
  %345 = vmatpush1.bf16.msra.mxu0 0
  %346 = vmatprep.subr.bf16.mxu0 0
  %347 = vmatpush1.bf16.msra.mxu0 0
  %348 = vmatprep.subr.bf16.mxu0 0
  %349 = vmatpush1.bf16.msra.mxu0 0
  %350 = vmatprep.subr.bf16.mxu0 0
  %351 = vmatpush1.bf16.msra.mxu0 0
  %352 = vmatprep.subr.bf16.mxu0 0
  %353 = vmatpush1.bf16.msra.mxu0 0
  %354 = vmatprep.subr.bf16.mxu0 0
  %355 = vmatpush1.bf16.msra.mxu0 0
  %356 = vmatprep.subr.bf16.mxu0 0
  %357 = vmatpush1.bf16.msra.mxu0 0
  %358 = vmatprep.subr.bf16.mxu0 0
  %359 = vmatpush1.bf16.msra.mxu0 0
  %360 = vmatprep.subr.bf16.mxu0 0
  %361 = vmatpush1.bf16.msra.mxu0 0
  %362 = vmatprep.subr.bf16.mxu0 0
  %363 = vmatpush1.bf16.msra.mxu0 0
  %364 = vmatprep.subr.bf16.mxu0 0
  %365 = vmatpush1.bf16.msra.mxu0 0
  %366 = vmatprep.subr.bf16.mxu0 0
  %367 = vmatpush1.bf16.msra.mxu0 0
  %368 = vmatprep.subr.bf16.mxu0 0
  %369 = vmatpush1.bf16.msra.mxu0 0
  %370 = vmatprep.subr.bf16.mxu0 0
  %371 = vmatpush1.bf16.msra.mxu0 0
  %372 = vmatprep.subr.bf16.mxu0 0
  %373 = vmatpush1.bf16.msra.mxu0 0
  %374 = vmatprep.mubr.bf16.mxu0 0
  %375 = vmatmul.mubr.bf16.gmra.mrb[0].mxu0 %v337
  %v376 = vpop.f32.mrb[0].mxu0
  %v377 = vadd.f32 0.0, %v376
  %v378 = vpop.f32.mrb[0].mxu0
  %v379 = vpop.f32.mrb[0].mxu0
  %v380 = vpop.f32.mrb[0].mxu0
  %381 = vdwg.mxu0
  %382 = vrot.lane.b32.xlu0 %v158, 120
  %v383 = vpop.permute.xlu0 %382
  %384 = vrot.lane.b32.xlu0 %v158, 88
  %v385 = vpop.permute.xlu0 %384
  %v387 = vsel %vm163, %v383, 0
  %v390 = vsel %vm163, %v385, 0
  %392 = vmatprep.subr.bf16.mxu0 0
  %393 = vmatpush1.bf16.xpose.msra.mxu0 %v390
  %394 = vmatprep.subr.bf16.mxu0 0
  %395 = vmatpush1.bf16.xpose.msra.mxu0 0
  %396 = vmatprep.subr.bf16.mxu0 0
  %397 = vmatpush1.bf16.xpose.msra.mxu0 0
  %398 = vmatprep.subr.bf16.mxu0 0
  %399 = vmatpush1.bf16.xpose.msra.mxu0 0
  %400 = vmatprep.subr.bf16.mxu0 0
  %401 = vmatpush1.bf16.xpose.msra.mxu0 0
  %402 = vmatprep.subr.bf16.mxu0 0
  %403 = vmatpush1.bf16.xpose.msra.mxu0 0
  %404 = vmatprep.subr.bf16.mxu0 0
  %405 = vmatpush1.bf16.xpose.msra.mxu0 0
  %406 = vmatprep.subr.bf16.mxu0 0
  %407 = vmatpush1.bf16.xpose.msra.mxu0 0
  %408 = vmatprep.subr.bf16.mxu0 0
  %409 = vmatpush1.bf16.xpose.msra.mxu0 0
  %410 = vmatprep.subr.bf16.mxu0 0
  %411 = vmatpush1.bf16.xpose.msra.mxu0 0
  %412 = vmatprep.subr.bf16.mxu0 0
  %413 = vmatpush1.bf16.xpose.msra.mxu0 0
  %414 = vmatprep.subr.bf16.mxu0 0
  %415 = vmatpush1.bf16.xpose.msra.mxu0 0
  %416 = vmatprep.subr.bf16.mxu0 0
  %417 = vmatpush1.bf16.xpose.msra.mxu0 0
  %418 = vmatprep.subr.bf16.mxu0 0
  %419 = vmatpush1.bf16.xpose.msra.mxu0 0
  %420 = vmatprep.subr.bf16.mxu0 0
  %421 = vmatpush1.bf16.xpose.msra.mxu0 0
  %422 = vmatprep.subr.bf16.mxu0 0
  %423 = vmatpush1.bf16.xpose.msra.mxu0 0
  %424 = vmatprep.mubr.bf16.mxu0 0
  %425 = vmatmul.mubr.bf16.gmra.mrb[0].mxu0 %v387
  %v426 = vpop.f32.mrb[0].mxu0
  %v427 = vadd.f32 0.0, %v426
  %v428 = vpop.f32.mrb[0].mxu0
  %v429 = vpop.f32.mrb[0].mxu0
  %v430 = vpop.f32.mrb[0].mxu0
  %431 = vdwg.mxu0
  %432 = vrot.lane.b32.xlu0 %v159, 120
  %v433 = vpop.permute.xlu0 %432
  %434 = vrot.lane.b32.xlu0 %v159, 88
  %v435 = vpop.permute.xlu0 %434
  %v437 = vsel %vm163, %v433, 0
  %v440 = vsel %vm163, %v435, 0
  %442 = vmatprep.subr.bf16.mxu0 0
  %443 = vmatpush1.bf16.xpose.msra.mxu0 %v440
  %444 = vmatprep.subr.bf16.mxu0 0
  %445 = vmatpush1.bf16.xpose.msra.mxu0 0
  %446 = vmatprep.subr.bf16.mxu0 0
  %447 = vmatpush1.bf16.xpose.msra.mxu0 0
  %448 = vmatprep.subr.bf16.mxu0 0
  %449 = vmatpush1.bf16.xpose.msra.mxu0 0
  %450 = vmatprep.subr.bf16.mxu0 0
  %451 = vmatpush1.bf16.xpose.msra.mxu0 0
  %452 = vmatprep.subr.bf16.mxu0 0
  %453 = vmatpush1.bf16.xpose.msra.mxu0 0
  %454 = vmatprep.subr.bf16.mxu0 0
  %455 = vmatpush1.bf16.xpose.msra.mxu0 0
  %456 = vmatprep.subr.bf16.mxu0 0
  %457 = vmatpush1.bf16.xpose.msra.mxu0 0
  %458 = vmatprep.subr.bf16.mxu0 0
  %459 = vmatpush1.bf16.xpose.msra.mxu0 0
  %460 = vmatprep.subr.bf16.mxu0 0
  %461 = vmatpush1.bf16.xpose.msra.mxu0 0
  %462 = vmatprep.subr.bf16.mxu0 0
  %463 = vmatpush1.bf16.xpose.msra.mxu0 0
  %464 = vmatprep.subr.bf16.mxu0 0
  %465 = vmatpush1.bf16.xpose.msra.mxu0 0
  %466 = vmatprep.subr.bf16.mxu0 0
  %467 = vmatpush1.bf16.xpose.msra.mxu0 0
  %468 = vmatprep.subr.bf16.mxu0 0
  %469 = vmatpush1.bf16.xpose.msra.mxu0 0
  %470 = vmatprep.subr.bf16.mxu0 0
  %471 = vmatpush1.bf16.xpose.msra.mxu0 0
  %472 = vmatprep.subr.bf16.mxu0 0
  %473 = vmatpush1.bf16.xpose.msra.mxu0 0
  %474 = vmatprep.mubr.bf16.mxu0 0
  %475 = vmatmul.mubr.bf16.gmra.mrb[0].mxu0 %v437
  %v476 = vpop.f32.mrb[0].mxu0
  %v477 = vadd.f32 0.0, %v476
  %v478 = vpop.f32.mrb[0].mxu0
  %v479 = vpop.f32.mrb[0].mxu0
  %v480 = vpop.f32.mrb[0].mxu0
  %481 = vdwg.mxu0
  %v482 = vmul.f32 %v427, 0.35355338
  %v483 = vmul.f32 %v477, 0.35355338
  %v484 = vsel %vm163, %v482, -inf
  %485 = vmax.xlane.f32.xlu0 %v484
  %v486 = vpop.xlane.xlu0 %485
  %v487 = vsel %vm163, %v483, -inf
  %488 = vmax.xlane.f32.xlu0 %v487
  %v489 = vpop.xlane.xlu0 %488
  %v490 = vsub.f32 %v482, %v486
  %v491 = vsub.f32 %v483, %v489
  %v492 = vmul.f32 %v490, 1.442695
  %v493 = vpow.pop %v492
  %v494 = vmul.f32 %v491, 1.442695
  %v495 = vpow.pop %v494
  %v496 = vsel %vm163, %v493, 0.0
  %497 = vadd.xlane.f32.xlu0 %v496
  %v498 = vpop.xlane.xlu0 %497
  %v499 = vsel %vm163, %v495, 0.0
  %500 = vadd.xlane.f32.xlu0 %v499
  %v501 = vpop.xlane.xlu0 %500
  %v502 = vrcp.pop %v498
  %v503 = vrcp.pop %v501
  %v504 = vmul.f32 %v493, %v502
  %v505 = vmul.f32 %v495, %v503
  %v506 = vpack.c.bf16 %v504, %v504
  %v507 = vpack.c.bf16 %v505, %v505
  %508 = vrot.lane.b32.xlu0 %v158, 56
  %v509 = vpop.permute.xlu0 %508
  %v511 = vsel %vm163, %v506, 0
  %v514 = vsel %vm290, %v509, 0
  %516 = vmatprep.subr.bf16.mxu0 0
  %517 = vmatpush1.bf16.msra.mxu0 %v514
  %518 = vmatprep.subr.bf16.mxu0 0
  %519 = vmatpush1.bf16.msra.mxu0 0
  %520 = vmatprep.subr.bf16.mxu0 0
  %521 = vmatpush1.bf16.msra.mxu0 0
  %522 = vmatprep.subr.bf16.mxu0 0
  %523 = vmatpush1.bf16.msra.mxu0 0
  %524 = vmatprep.subr.bf16.mxu0 0
  %525 = vmatpush1.bf16.msra.mxu0 0
  %526 = vmatprep.subr.bf16.mxu0 0
  %527 = vmatpush1.bf16.msra.mxu0 0
  %528 = vmatprep.subr.bf16.mxu0 0
  %529 = vmatpush1.bf16.msra.mxu0 0
  %530 = vmatprep.subr.bf16.mxu0 0
  %531 = vmatpush1.bf16.msra.mxu0 0
  %532 = vmatprep.subr.bf16.mxu0 0
  %533 = vmatpush1.bf16.msra.mxu0 0
  %534 = vmatprep.subr.bf16.mxu0 0
  %535 = vmatpush1.bf16.msra.mxu0 0
  %536 = vmatprep.subr.bf16.mxu0 0
  %537 = vmatpush1.bf16.msra.mxu0 0
  %538 = vmatprep.subr.bf16.mxu0 0
  %539 = vmatpush1.bf16.msra.mxu0 0
  %540 = vmatprep.subr.bf16.mxu0 0
  %541 = vmatpush1.bf16.msra.mxu0 0
  %542 = vmatprep.subr.bf16.mxu0 0
  %543 = vmatpush1.bf16.msra.mxu0 0
  %544 = vmatprep.subr.bf16.mxu0 0
  %545 = vmatpush1.bf16.msra.mxu0 0
  %546 = vmatprep.subr.bf16.mxu0 0
  %547 = vmatpush1.bf16.msra.mxu0 0
  %548 = vmatprep.mubr.bf16.mxu0 0
  %549 = vmatmul.mubr.bf16.gmra.mrb[0].mxu0 %v511
  %v550 = vpop.f32.mrb[0].mxu0
  %v551 = vadd.f32 0.0, %v550
  %v552 = vpop.f32.mrb[0].mxu0
  %v553 = vpop.f32.mrb[0].mxu0
  %v554 = vpop.f32.mrb[0].mxu0
  %555 = vdwg.mxu0
  %556 = vrot.lane.b32.xlu0 %v159, 56
  %v557 = vpop.permute.xlu0 %556
  %v559 = vsel %vm163, %v507, 0
  %v562 = vsel %vm290, %v557, 0
  %564 = vmatprep.subr.bf16.mxu0 0
  %565 = vmatpush1.bf16.msra.mxu0 %v562
  %566 = vmatprep.subr.bf16.mxu0 0
  %567 = vmatpush1.bf16.msra.mxu0 0
  %568 = vmatprep.subr.bf16.mxu0 0
  %569 = vmatpush1.bf16.msra.mxu0 0
  %570 = vmatprep.subr.bf16.mxu0 0
  %571 = vmatpush1.bf16.msra.mxu0 0
  %572 = vmatprep.subr.bf16.mxu0 0
  %573 = vmatpush1.bf16.msra.mxu0 0
  %574 = vmatprep.subr.bf16.mxu0 0
  %575 = vmatpush1.bf16.msra.mxu0 0
  %576 = vmatprep.subr.bf16.mxu0 0
  %577 = vmatpush1.bf16.msra.mxu0 0
  %578 = vmatprep.subr.bf16.mxu0 0
  %579 = vmatpush1.bf16.msra.mxu0 0
  %580 = vmatprep.subr.bf16.mxu0 0
  %581 = vmatpush1.bf16.msra.mxu0 0
  %582 = vmatprep.subr.bf16.mxu0 0
  %583 = vmatpush1.bf16.msra.mxu0 0
  %584 = vmatprep.subr.bf16.mxu0 0
  %585 = vmatpush1.bf16.msra.mxu0 0
  %586 = vmatprep.subr.bf16.mxu0 0
  %587 = vmatpush1.bf16.msra.mxu0 0
  %588 = vmatprep.subr.bf16.mxu0 0
  %589 = vmatpush1.bf16.msra.mxu0 0
  %590 = vmatprep.subr.bf16.mxu0 0
  %591 = vmatpush1.bf16.msra.mxu0 0
  %592 = vmatprep.subr.bf16.mxu0 0
  %593 = vmatpush1.bf16.msra.mxu0 0
  %594 = vmatprep.subr.bf16.mxu0 0
  %595 = vmatpush1.bf16.msra.mxu0 0
  %596 = vmatprep.mubr.bf16.mxu0 0
  %597 = vmatmul.mubr.bf16.gmra.mrb[0].mxu0 %v559
  %v598 = vpop.f32.mrb[0].mxu0
  %v599 = vadd.f32 0.0, %v598
  %v600 = vpop.f32.mrb[0].mxu0
  %v601 = vpop.f32.mrb[0].mxu0
  %v602 = vpop.f32.mrb[0].mxu0
  %603 = vdwg.mxu0
  %604 = vrot.lane.b32.xlu0 %v158, 112
  %v605 = vpop.permute.xlu0 %604
  %606 = vrot.lane.b32.xlu0 %v158, 80
  %v607 = vpop.permute.xlu0 %606
  %v609 = vsel %vm163, %v605, 0
  %v612 = vsel %vm163, %v607, 0
  %614 = vmatprep.subr.bf16.mxu0 0
  %615 = vmatpush1.bf16.xpose.msra.mxu0 %v612
  %616 = vmatprep.subr.bf16.mxu0 0
  %617 = vmatpush1.bf16.xpose.msra.mxu0 0
  %618 = vmatprep.subr.bf16.mxu0 0
  %619 = vmatpush1.bf16.xpose.msra.mxu0 0
  %620 = vmatprep.subr.bf16.mxu0 0
  %621 = vmatpush1.bf16.xpose.msra.mxu0 0
  %622 = vmatprep.subr.bf16.mxu0 0
  %623 = vmatpush1.bf16.xpose.msra.mxu0 0
  %624 = vmatprep.subr.bf16.mxu0 0
  %625 = vmatpush1.bf16.xpose.msra.mxu0 0
  %626 = vmatprep.subr.bf16.mxu0 0
  %627 = vmatpush1.bf16.xpose.msra.mxu0 0
  %628 = vmatprep.subr.bf16.mxu0 0
  %629 = vmatpush1.bf16.xpose.msra.mxu0 0
  %630 = vmatprep.subr.bf16.mxu0 0
  %631 = vmatpush1.bf16.xpose.msra.mxu0 0
  %632 = vmatprep.subr.bf16.mxu0 0
  %633 = vmatpush1.bf16.xpose.msra.mxu0 0
  %634 = vmatprep.subr.bf16.mxu0 0
  %635 = vmatpush1.bf16.xpose.msra.mxu0 0
  %636 = vmatprep.subr.bf16.mxu0 0
  %637 = vmatpush1.bf16.xpose.msra.mxu0 0
  %638 = vmatprep.subr.bf16.mxu0 0
  %639 = vmatpush1.bf16.xpose.msra.mxu0 0
  %640 = vmatprep.subr.bf16.mxu0 0
  %641 = vmatpush1.bf16.xpose.msra.mxu0 0
  %642 = vmatprep.subr.bf16.mxu0 0
  %643 = vmatpush1.bf16.xpose.msra.mxu0 0
  %644 = vmatprep.subr.bf16.mxu0 0
  %645 = vmatpush1.bf16.xpose.msra.mxu0 0
  %646 = vmatprep.mubr.bf16.mxu0 0
  %647 = vmatmul.mubr.bf16.gmra.mrb[0].mxu0 %v609
  %v648 = vpop.f32.mrb[0].mxu0
  %v649 = vadd.f32 0.0, %v648
  %v650 = vpop.f32.mrb[0].mxu0
  %v651 = vpop.f32.mrb[0].mxu0
  %v652 = vpop.f32.mrb[0].mxu0
  %653 = vdwg.mxu0
  %654 = vrot.lane.b32.xlu0 %v159, 112
  %v655 = vpop.permute.xlu0 %654
  %656 = vrot.lane.b32.xlu0 %v159, 80
  %v657 = vpop.permute.xlu0 %656
  %v659 = vsel %vm163, %v655, 0
  %v662 = vsel %vm163, %v657, 0
  %664 = vmatprep.subr.bf16.mxu0 0
  %665 = vmatpush1.bf16.xpose.msra.mxu0 %v662
  %666 = vmatprep.subr.bf16.mxu0 0
  %667 = vmatpush1.bf16.xpose.msra.mxu0 0
  %668 = vmatprep.subr.bf16.mxu0 0
  %669 = vmatpush1.bf16.xpose.msra.mxu0 0
  %670 = vmatprep.subr.bf16.mxu0 0
  %671 = vmatpush1.bf16.xpose.msra.mxu0 0
  %672 = vmatprep.subr.bf16.mxu0 0
  %673 = vmatpush1.bf16.xpose.msra.mxu0 0
  %674 = vmatprep.subr.bf16.mxu0 0
  %675 = vmatpush1.bf16.xpose.msra.mxu0 0
  %676 = vmatprep.subr.bf16.mxu0 0
  %677 = vmatpush1.bf16.xpose.msra.mxu0 0
  %678 = vmatprep.subr.bf16.mxu0 0
  %679 = vmatpush1.bf16.xpose.msra.mxu0 0
  %680 = vmatprep.subr.bf16.mxu0 0
  %681 = vmatpush1.bf16.xpose.msra.mxu0 0
  %682 = vmatprep.subr.bf16.mxu0 0
  %683 = vmatpush1.bf16.xpose.msra.mxu0 0
  %684 = vmatprep.subr.bf16.mxu0 0
  %685 = vmatpush1.bf16.xpose.msra.mxu0 0
  %686 = vmatprep.subr.bf16.mxu0 0
  %687 = vmatpush1.bf16.xpose.msra.mxu0 0
  %688 = vmatprep.subr.bf16.mxu0 0
  %689 = vmatpush1.bf16.xpose.msra.mxu0 0
  %690 = vmatprep.subr.bf16.mxu0 0
  %691 = vmatpush1.bf16.xpose.msra.mxu0 0
  %692 = vmatprep.subr.bf16.mxu0 0
  %693 = vmatpush1.bf16.xpose.msra.mxu0 0
  %694 = vmatprep.subr.bf16.mxu0 0
  %695 = vmatpush1.bf16.xpose.msra.mxu0 0
  %696 = vmatprep.mubr.bf16.mxu0 0
  %697 = vmatmul.mubr.bf16.gmra.mrb[0].mxu0 %v659
  %v698 = vpop.f32.mrb[0].mxu0
  %v699 = vadd.f32 0.0, %v698
  %v700 = vpop.f32.mrb[0].mxu0
  %v701 = vpop.f32.mrb[0].mxu0
  %v702 = vpop.f32.mrb[0].mxu0
  %703 = vdwg.mxu0
  %v704 = vmul.f32 %v649, 0.35355338
  %v705 = vmul.f32 %v699, 0.35355338
  %v706 = vsel %vm163, %v704, -inf
  %707 = vmax.xlane.f32.xlu0 %v706
  %v708 = vpop.xlane.xlu0 %707
  %v709 = vsel %vm163, %v705, -inf
  %710 = vmax.xlane.f32.xlu0 %v709
  %v711 = vpop.xlane.xlu0 %710
  %v712 = vsub.f32 %v704, %v708
  %v713 = vsub.f32 %v705, %v711
  %v714 = vmul.f32 %v712, 1.442695
  %v715 = vpow.pop %v714
  %v716 = vmul.f32 %v713, 1.442695
  %v717 = vpow.pop %v716
  %v718 = vsel %vm163, %v715, 0.0
  %719 = vadd.xlane.f32.xlu0 %v718
  %v720 = vpop.xlane.xlu0 %719
  %v721 = vsel %vm163, %v717, 0.0
  %722 = vadd.xlane.f32.xlu0 %v721
  %v723 = vpop.xlane.xlu0 %722
  %v724 = vrcp.pop %v720
  %v725 = vrcp.pop %v723
  %v726 = vmul.f32 %v715, %v724
  %v727 = vmul.f32 %v717, %v725
  %v728 = vpack.c.bf16 %v726, %v726
  %v729 = vpack.c.bf16 %v727, %v727
  %730 = vrot.lane.b32.xlu0 %v158, 48
  %v731 = vpop.permute.xlu0 %730
  %v733 = vsel %vm163, %v728, 0
  %v736 = vsel %vm290, %v731, 0
  %738 = vmatprep.subr.bf16.mxu0 0
  %739 = vmatpush1.bf16.msra.mxu0 %v736
  %740 = vmatprep.subr.bf16.mxu0 0
  %741 = vmatpush1.bf16.msra.mxu0 0
  %742 = vmatprep.subr.bf16.mxu0 0
  %743 = vmatpush1.bf16.msra.mxu0 0
  %744 = vmatprep.subr.bf16.mxu0 0
  %745 = vmatpush1.bf16.msra.mxu0 0
  %746 = vmatprep.subr.bf16.mxu0 0
  %747 = vmatpush1.bf16.msra.mxu0 0
  %748 = vmatprep.subr.bf16.mxu0 0
  %749 = vmatpush1.bf16.msra.mxu0 0
  %750 = vmatprep.subr.bf16.mxu0 0
  %751 = vmatpush1.bf16.msra.mxu0 0
  %752 = vmatprep.subr.bf16.mxu0 0
  %753 = vmatpush1.bf16.msra.mxu0 0
  %754 = vmatprep.subr.bf16.mxu0 0
  %755 = vmatpush1.bf16.msra.mxu0 0
  %756 = vmatprep.subr.bf16.mxu0 0
  %757 = vmatpush1.bf16.msra.mxu0 0
  %758 = vmatprep.subr.bf16.mxu0 0
  %759 = vmatpush1.bf16.msra.mxu0 0
  %760 = vmatprep.subr.bf16.mxu0 0
  %761 = vmatpush1.bf16.msra.mxu0 0
  %762 = vmatprep.subr.bf16.mxu0 0
  %763 = vmatpush1.bf16.msra.mxu0 0
  %764 = vmatprep.subr.bf16.mxu0 0
  %765 = vmatpush1.bf16.msra.mxu0 0
  %766 = vmatprep.subr.bf16.mxu0 0
  %767 = vmatpush1.bf16.msra.mxu0 0
  %768 = vmatprep.subr.bf16.mxu0 0
  %769 = vmatpush1.bf16.msra.mxu0 0
  %770 = vmatprep.mubr.bf16.mxu0 0
  %771 = vmatmul.mubr.bf16.gmra.mrb[0].mxu0 %v733
  %v772 = vpop.f32.mrb[0].mxu0
  %v773 = vadd.f32 0.0, %v772
  %v774 = vpop.f32.mrb[0].mxu0
  %v775 = vpop.f32.mrb[0].mxu0
  %v776 = vpop.f32.mrb[0].mxu0
  %777 = vdwg.mxu0
  %778 = vrot.lane.b32.xlu0 %v159, 48
  %v779 = vpop.permute.xlu0 %778
  %v781 = vsel %vm163, %v729, 0
  %v784 = vsel %vm290, %v779, 0
  %786 = vmatprep.subr.bf16.mxu0 0
  %787 = vmatpush1.bf16.msra.mxu0 %v784
  %788 = vmatprep.subr.bf16.mxu0 0
  %789 = vmatpush1.bf16.msra.mxu0 0
  %790 = vmatprep.subr.bf16.mxu0 0
  %791 = vmatpush1.bf16.msra.mxu0 0
  %792 = vmatprep.subr.bf16.mxu0 0
  %793 = vmatpush1.bf16.msra.mxu0 0
  %794 = vmatprep.subr.bf16.mxu0 0
  %795 = vmatpush1.bf16.msra.mxu0 0
  %796 = vmatprep.subr.bf16.mxu0 0
  %797 = vmatpush1.bf16.msra.mxu0 0
  %798 = vmatprep.subr.bf16.mxu0 0
  %799 = vmatpush1.bf16.msra.mxu0 0
  %800 = vmatprep.subr.bf16.mxu0 0
  %801 = vmatpush1.bf16.msra.mxu0 0
  %802 = vmatprep.subr.bf16.mxu0 0
  %803 = vmatpush1.bf16.msra.mxu0 0
  %804 = vmatprep.subr.bf16.mxu0 0
  %805 = vmatpush1.bf16.msra.mxu0 0
  %806 = vmatprep.subr.bf16.mxu0 0
  %807 = vmatpush1.bf16.msra.mxu0 0
  %808 = vmatprep.subr.bf16.mxu0 0
  %809 = vmatpush1.bf16.msra.mxu0 0
  %810 = vmatprep.subr.bf16.mxu0 0
  %811 = vmatpush1.bf16.msra.mxu0 0
  %812 = vmatprep.subr.bf16.mxu0 0
  %813 = vmatpush1.bf16.msra.mxu0 0
  %814 = vmatprep.subr.bf16.mxu0 0
  %815 = vmatpush1.bf16.msra.mxu0 0
  %816 = vmatprep.subr.bf16.mxu0 0
  %817 = vmatpush1.bf16.msra.mxu0 0
  %818 = vmatprep.mubr.bf16.mxu0 0
  %819 = vmatmul.mubr.bf16.gmra.mrb[0].mxu0 %v781
  %v820 = vpop.f32.mrb[0].mxu0
  %v821 = vadd.f32 0.0, %v820
  %v822 = vpop.f32.mrb[0].mxu0
  %v823 = vpop.f32.mrb[0].mxu0
  %v824 = vpop.f32.mrb[0].mxu0
  %825 = vdwg.mxu0
  %826 = vrot.lane.b32.xlu0 %v158, 104
  %v827 = vpop.permute.xlu0 %826
  %828 = vrot.lane.b32.xlu0 %v158, 72
  %v829 = vpop.permute.xlu0 %828
  %v831 = vsel %vm163, %v827, 0
  %v834 = vsel %vm163, %v829, 0
  %836 = vmatprep.subr.bf16.mxu0 0
  %837 = vmatpush1.bf16.xpose.msra.mxu0 %v834
  %838 = vmatprep.subr.bf16.mxu0 0
  %839 = vmatpush1.bf16.xpose.msra.mxu0 0
  %840 = vmatprep.subr.bf16.mxu0 0
  %841 = vmatpush1.bf16.xpose.msra.mxu0 0
  %842 = vmatprep.subr.bf16.mxu0 0
  %843 = vmatpush1.bf16.xpose.msra.mxu0 0
  %844 = vmatprep.subr.bf16.mxu0 0
  %845 = vmatpush1.bf16.xpose.msra.mxu0 0
  %846 = vmatprep.subr.bf16.mxu0 0
  %847 = vmatpush1.bf16.xpose.msra.mxu0 0
  %848 = vmatprep.subr.bf16.mxu0 0
  %849 = vmatpush1.bf16.xpose.msra.mxu0 0
  %850 = vmatprep.subr.bf16.mxu0 0
  %851 = vmatpush1.bf16.xpose.msra.mxu0 0
  %852 = vmatprep.subr.bf16.mxu0 0
  %853 = vmatpush1.bf16.xpose.msra.mxu0 0
  %854 = vmatprep.subr.bf16.mxu0 0
  %855 = vmatpush1.bf16.xpose.msra.mxu0 0
  %856 = vmatprep.subr.bf16.mxu0 0
  %857 = vmatpush1.bf16.xpose.msra.mxu0 0
  %858 = vmatprep.subr.bf16.mxu0 0
  %859 = vmatpush1.bf16.xpose.msra.mxu0 0
  %860 = vmatprep.subr.bf16.mxu0 0
  %861 = vmatpush1.bf16.xpose.msra.mxu0 0
  %862 = vmatprep.subr.bf16.mxu0 0
  %863 = vmatpush1.bf16.xpose.msra.mxu0 0
  %864 = vmatprep.subr.bf16.mxu0 0
  %865 = vmatpush1.bf16.xpose.msra.mxu0 0
  %866 = vmatprep.subr.bf16.mxu0 0
  %867 = vmatpush1.bf16.xpose.msra.mxu0 0
  %868 = vmatprep.mubr.bf16.mxu0 0
  %869 = vmatmul.mubr.bf16.gmra.mrb[0].mxu0 %v831
  %v870 = vpop.f32.mrb[0].mxu0
  %v871 = vadd.f32 0.0, %v870
  %v872 = vpop.f32.mrb[0].mxu0
  %v873 = vpop.f32.mrb[0].mxu0
  %v874 = vpop.f32.mrb[0].mxu0
  %875 = vdwg.mxu0
  %876 = vrot.lane.b32.xlu0 %v159, 104
  %v877 = vpop.permute.xlu0 %876
  %878 = vrot.lane.b32.xlu0 %v159, 72
  %v879 = vpop.permute.xlu0 %878
  %v881 = vsel %vm163, %v877, 0
  %v884 = vsel %vm163, %v879, 0
  %886 = vmatprep.subr.bf16.mxu0 0
  %887 = vmatpush1.bf16.xpose.msra.mxu0 %v884
  %888 = vmatprep.subr.bf16.mxu0 0
  %889 = vmatpush1.bf16.xpose.msra.mxu0 0
  %890 = vmatprep.subr.bf16.mxu0 0
  %891 = vmatpush1.bf16.xpose.msra.mxu0 0
  %892 = vmatprep.subr.bf16.mxu0 0
  %893 = vmatpush1.bf16.xpose.msra.mxu0 0
  %894 = vmatprep.subr.bf16.mxu0 0
  %895 = vmatpush1.bf16.xpose.msra.mxu0 0
  %896 = vmatprep.subr.bf16.mxu0 0
  %897 = vmatpush1.bf16.xpose.msra.mxu0 0
  %898 = vmatprep.subr.bf16.mxu0 0
  %899 = vmatpush1.bf16.xpose.msra.mxu0 0
  %900 = vmatprep.subr.bf16.mxu0 0
  %901 = vmatpush1.bf16.xpose.msra.mxu0 0
  %902 = vmatprep.subr.bf16.mxu0 0
  %903 = vmatpush1.bf16.xpose.msra.mxu0 0
  %904 = vmatprep.subr.bf16.mxu0 0
  %905 = vmatpush1.bf16.xpose.msra.mxu0 0
  %906 = vmatprep.subr.bf16.mxu0 0
  %907 = vmatpush1.bf16.xpose.msra.mxu0 0
  %908 = vmatprep.subr.bf16.mxu0 0
  %909 = vmatpush1.bf16.xpose.msra.mxu0 0
  %910 = vmatprep.subr.bf16.mxu0 0
  %911 = vmatpush1.bf16.xpose.msra.mxu0 0
  %912 = vmatprep.subr.bf16.mxu0 0
  %913 = vmatpush1.bf16.xpose.msra.mxu0 0
  %914 = vmatprep.subr.bf16.mxu0 0
  %915 = vmatpush1.bf16.xpose.msra.mxu0 0
  %916 = vmatprep.subr.bf16.mxu0 0
  %917 = vmatpush1.bf16.xpose.msra.mxu0 0
  %918 = vmatprep.mubr.bf16.mxu0 0
  %919 = vmatmul.mubr.bf16.gmra.mrb[0].mxu0 %v881
  %v920 = vpop.f32.mrb[0].mxu0
  %v921 = vadd.f32 0.0, %v920
  %v922 = vpop.f32.mrb[0].mxu0
  %v923 = vpop.f32.mrb[0].mxu0
  %v924 = vpop.f32.mrb[0].mxu0
  %925 = vdwg.mxu0
  %v926 = vmul.f32 %v871, 0.35355338
  %v927 = vmul.f32 %v921, 0.35355338
  %v928 = vsel %vm163, %v926, -inf
  %929 = vmax.xlane.f32.xlu0 %v928
  %v930 = vpop.xlane.xlu0 %929
  %v931 = vsel %vm163, %v927, -inf
  %932 = vmax.xlane.f32.xlu0 %v931
  %v933 = vpop.xlane.xlu0 %932
  %v934 = vsub.f32 %v926, %v930
  %v935 = vsub.f32 %v927, %v933
  %v936 = vmul.f32 %v934, 1.442695
  %v937 = vpow.pop %v936
  %v938 = vmul.f32 %v935, 1.442695
  %v939 = vpow.pop %v938
  %v940 = vsel %vm163, %v937, 0.0
  %941 = vadd.xlane.f32.xlu0 %v940
  %v942 = vpop.xlane.xlu0 %941
  %v943 = vsel %vm163, %v939, 0.0
  %944 = vadd.xlane.f32.xlu0 %v943
  %v945 = vpop.xlane.xlu0 %944
  %v946 = vrcp.pop %v942
  %v947 = vrcp.pop %v945
  %v948 = vmul.f32 %v937, %v946
  %v949 = vmul.f32 %v939, %v947
  %v950 = vpack.c.bf16 %v948, %v948
  %v951 = vpack.c.bf16 %v949, %v949
  %952 = vrot.lane.b32.xlu0 %v158, 40
  %v953 = vpop.permute.xlu0 %952
  %v955 = vsel %vm163, %v950, 0
  %v958 = vsel %vm290, %v953, 0
  %960 = vmatprep.subr.bf16.mxu0 0
  %961 = vmatpush1.bf16.msra.mxu0 %v958
  %962 = vmatprep.subr.bf16.mxu0 0
  %963 = vmatpush1.bf16.msra.mxu0 0
  %964 = vmatprep.subr.bf16.mxu0 0
  %965 = vmatpush1.bf16.msra.mxu0 0
  %966 = vmatprep.subr.bf16.mxu0 0
  %967 = vmatpush1.bf16.msra.mxu0 0
  %968 = vmatprep.subr.bf16.mxu0 0
  %969 = vmatpush1.bf16.msra.mxu0 0
  %970 = vmatprep.subr.bf16.mxu0 0
  %971 = vmatpush1.bf16.msra.mxu0 0
  %972 = vmatprep.subr.bf16.mxu0 0
  %973 = vmatpush1.bf16.msra.mxu0 0
  %974 = vmatprep.subr.bf16.mxu0 0
  %975 = vmatpush1.bf16.msra.mxu0 0
  %976 = vmatprep.subr.bf16.mxu0 0
  %977 = vmatpush1.bf16.msra.mxu0 0
  %978 = vmatprep.subr.bf16.mxu0 0
  %979 = vmatpush1.bf16.msra.mxu0 0
  %980 = vmatprep.subr.bf16.mxu0 0
  %981 = vmatpush1.bf16.msra.mxu0 0
  %982 = vmatprep.subr.bf16.mxu0 0
  %983 = vmatpush1.bf16.msra.mxu0 0
  %984 = vmatprep.subr.bf16.mxu0 0
  %985 = vmatpush1.bf16.msra.mxu0 0
  %986 = vmatprep.subr.bf16.mxu0 0
  %987 = vmatpush1.bf16.msra.mxu0 0
  %988 = vmatprep.subr.bf16.mxu0 0
  %989 = vmatpush1.bf16.msra.mxu0 0
  %990 = vmatprep.subr.bf16.mxu0 0
  %991 = vmatpush1.bf16.msra.mxu0 0
  %992 = vmatprep.mubr.bf16.mxu0 0
  %993 = vmatmul.mubr.bf16.gmra.mrb[0].mxu0 %v955
  %v994 = vpop.f32.mrb[0].mxu0
  %v995 = vadd.f32 0.0, %v994
  %v996 = vpop.f32.mrb[0].mxu0
  %v997 = vpop.f32.mrb[0].mxu0
  %v998 = vpop.f32.mrb[0].mxu0
  %999 = vdwg.mxu0
  %1000 = vrot.lane.b32.xlu0 %v159, 40
  %v1001 = vpop.permute.xlu0 %1000
  %v1003 = vsel %vm163, %v951, 0
  %v1006 = vsel %vm290, %v1001, 0
  %1008 = vmatprep.subr.bf16.mxu0 0
  %1009 = vmatpush1.bf16.msra.mxu0 %v1006
  %1010 = vmatprep.subr.bf16.mxu0 0
  %1011 = vmatpush1.bf16.msra.mxu0 0
  %1012 = vmatprep.subr.bf16.mxu0 0
  %1013 = vmatpush1.bf16.msra.mxu0 0
  %1014 = vmatprep.subr.bf16.mxu0 0
  %1015 = vmatpush1.bf16.msra.mxu0 0
  %1016 = vmatprep.subr.bf16.mxu0 0
  %1017 = vmatpush1.bf16.msra.mxu0 0
  %1018 = vmatprep.subr.bf16.mxu0 0
  %1019 = vmatpush1.bf16.msra.mxu0 0
  %1020 = vmatprep.subr.bf16.mxu0 0
  %1021 = vmatpush1.bf16.msra.mxu0 0
  %1022 = vmatprep.subr.bf16.mxu0 0
  %1023 = vmatpush1.bf16.msra.mxu0 0
  %1024 = vmatprep.subr.bf16.mxu0 0
  %1025 = vmatpush1.bf16.msra.mxu0 0
  %1026 = vmatprep.subr.bf16.mxu0 0
  %1027 = vmatpush1.bf16.msra.mxu0 0
  %1028 = vmatprep.subr.bf16.mxu0 0
  %1029 = vmatpush1.bf16.msra.mxu0 0
  %1030 = vmatprep.subr.bf16.mxu0 0
  %1031 = vmatpush1.bf16.msra.mxu0 0
  %1032 = vmatprep.subr.bf16.mxu0 0
  %1033 = vmatpush1.bf16.msra.mxu0 0
  %1034 = vmatprep.subr.bf16.mxu0 0
  %1035 = vmatpush1.bf16.msra.mxu0 0
  %1036 = vmatprep.subr.bf16.mxu0 0
  %1037 = vmatpush1.bf16.msra.mxu0 0
  %1038 = vmatprep.subr.bf16.mxu0 0
  %1039 = vmatpush1.bf16.msra.mxu0 0
  %1040 = vmatprep.mubr.bf16.mxu0 0
  %1041 = vmatmul.mubr.bf16.gmra.mrb[0].mxu0 %v1003
  %v1042 = vpop.f32.mrb[0].mxu0
  %v1043 = vadd.f32 0.0, %v1042
  %v1044 = vpop.f32.mrb[0].mxu0
  %v1045 = vpop.f32.mrb[0].mxu0
  %v1046 = vpop.f32.mrb[0].mxu0
  %1047 = vdwg.mxu0
  %1050 = vrot.lane.b32.xlu0 %v551, 8
  %v1051 = vpop.permute.xlu0 %1050
  %1052 = vrot.lane.b32.xlu0 %v599, 8
  %v1053 = vpop.permute.xlu0 %1052
  %1058 = vrot.lane.b32.xlu0 %v773, 16
  %v1059 = vpop.permute.xlu0 %1058
  %1060 = vrot.lane.b32.xlu0 %v821, 16
  %v1061 = vpop.permute.xlu0 %1060
  %1066 = vrot.lane.b32.xlu0 %v995, 24
  %v1067 = vpop.permute.xlu0 %1066
  %1068 = vrot.lane.b32.xlu0 %v1043, 24
  %v1069 = vpop.permute.xlu0 %1068
  %v1072 = vsel %vm163, %v329, %v1051
  %v1073 = vsel %vm163, %v377, %v1053
  %vm1074 = vcmask 130048
  %v1075 = vsel %vm1074, %v1072, %v1059
  %v1076 = vsel %vm1074, %v1073, %v1061
  %vm1077 = vcmask 195584
  %v1078 = vsel %vm1077, %v1075, %v1067
  %v1079 = vsel %vm1077, %v1076, %v1069
  %v1080 = vpack.c.bf16 %v1079, %v1078
  %v1081 = vld [vmem:[%s5] sm:$0xf]
  %v1082 = vld [vmem:[%s5 + $0x4] sm:$0xf]
  %v1083 = vld [vmem:[%s5 + $0x8] sm:$0xf]
  %v1084 = vld [vmem:[%s5 + $0xc] sm:$0xf]
  %v1085 = vld [vmem:[%s6] sm:$0x1]
  %v1087 = vlaneseq
  %v1088 = vshrl.u32 %v1087, 7
  %v1089 = vsub.s32 0, %v1088
  %v1090 = vrot.slane %v1085, %v1089
  %v1096 = vunpack.c.l.b16 %v1081
  %v1097 = vunpack.c.l.b16 %v1082
  %v1098 = vunpack.c.l.b16 %v1083
  %v1099 = vunpack.c.l.b16 %v1084
  %v1100 = vpack.c.b16 %v1097, %v1096
  %v1101 = vpack.c.b16 %v1099, %v1098
  %v1105 = vsel %vm113, %v1080, 0
  %1107 = vmatprep.subr.bf16.mxu0 0
  %1108 = vmatpush1.bf16.msra.mxu0 %v1100
  %1109 = vmatprep.subr.bf16.mxu0 0
  %1110 = vmatpush1.bf16.msra.mxu0 %v1101
  %1111 = vmatprep.subr.bf16.mxu0 0
  %1112 = vmatpush1.bf16.msra.mxu0 0
  %1113 = vmatprep.subr.bf16.mxu0 0
  %1114 = vmatpush1.bf16.msra.mxu0 0
  %1115 = vmatprep.subr.bf16.mxu0 0
  %1116 = vmatpush1.bf16.msra.mxu0 0
  %1117 = vmatprep.subr.bf16.mxu0 0
  %1118 = vmatpush1.bf16.msra.mxu0 0
  %1119 = vmatprep.subr.bf16.mxu0 0
  %1120 = vmatpush1.bf16.msra.mxu0 0
  %1121 = vmatprep.subr.bf16.mxu0 0
  %1122 = vmatpush1.bf16.msra.mxu0 0
  %1123 = vmatprep.subr.bf16.mxu0 0
  %1124 = vmatpush1.bf16.msra.mxu0 0
  %1125 = vmatprep.subr.bf16.mxu0 0
  %1126 = vmatpush1.bf16.msra.mxu0 0
  %1127 = vmatprep.subr.bf16.mxu0 0
  %1128 = vmatpush1.bf16.msra.mxu0 0
  %1129 = vmatprep.subr.bf16.mxu0 0
  %1130 = vmatpush1.bf16.msra.mxu0 0
  %1131 = vmatprep.subr.bf16.mxu0 0
  %1132 = vmatpush1.bf16.msra.mxu0 0
  %1133 = vmatprep.subr.bf16.mxu0 0
  %1134 = vmatpush1.bf16.msra.mxu0 0
  %1135 = vmatprep.subr.bf16.mxu0 0
  %1136 = vmatpush1.bf16.msra.mxu0 0
  %1137 = vmatprep.subr.bf16.mxu0 0
  %1138 = vmatpush1.bf16.msra.mxu0 0
  %1139 = vmatprep.mubr.bf16.mxu0 0
  %1140 = vmatmul.mubr.bf16.gmra.mrb[0].mxu0 %v1105
  %v1141 = vpop.f32.mrb[0].mxu0
  %v1142 = vadd.f32 %v1090, %v1141
  %v1143 = vpop.f32.mrb[0].mxu0
  %v1144 = vpop.f32.mrb[0].mxu0
  %v1145 = vadd.f32 %v1090, %v1144
  %v1146 = vpop.f32.mrb[0].mxu0
  %1147 = vdwg.mxu0
  %v1148 = vadd.f32 %v87, %v1142
  %v1149 = vadd.f32 %v88, %v1145
  %v1150 = vld [vmem:[%s7] sm:$0x1]
  %v1151 = vld [vmem:[%s8] sm:$0x1]
  %v1152 = vsel %vm113, %v1148, 0.0
  %1153 = vadd.xlane.f32.xlu0 %v1152
  %v1154 = vpop.xlane.xlu0 %1153
  %v1155 = vsel %vm113, %v1149, 0.0
  %1156 = vadd.xlane.f32.xlu0 %v1155
  %v1157 = vpop.xlane.xlu0 %1156
  %v1158 = vrcp.pop 32.0
  %v1159 = vmul.f32 %v1154, %v1158
  %v1160 = vmul.f32 %v1157, %v1158
  %v1161 = vsub.f32 %v1148, %v1159
  %v1162 = vsub.f32 %v1149, %v1160
  %v1163 = vmul.f32 %v1161, %v1161
  %v1164 = vmul.f32 %v1162, %v1162
  %v1165 = vsel %vm113, %v1163, 0.0
  %1166 = vadd.xlane.f32.xlu0 %v1165
  %v1167 = vpop.xlane.xlu0 %1166
  %v1168 = vsel %vm113, %v1164, 0.0
  %1169 = vadd.xlane.f32.xlu0 %v1168
  %v1170 = vpop.xlane.xlu0 %1169
  %v1171 = vmul.f32 %v1167, %v1158
  %v1172 = vmul.f32 %v1170, %v1158
  %v1173 = vadd.f32 %v1171, 1e-05
  %v1174 = vadd.f32 %v1172, 1e-05
  %v1175 = vrsqrt.pop %v1173
  %v1176 = vrsqrt.pop %v1174
  %v1177 = vmul.f32 %v1161, %v1175
  %v1178 = vmul.f32 %v1162, %v1176
  %v1180 = vlaneseq
  %v1181 = vshrl.u32 %v1180, 7
  %v1182 = vsub.s32 0, %v1181
  %v1183 = vrot.slane %v1150, %v1182
  %v1185 = vmul.f32 %v1177, %v1183
  %v1186 = vmul.f32 %v1178, %v1183
  %v1188 = vlaneseq
  %v1189 = vshrl.u32 %v1188, 7
  %v1190 = vsub.s32 0, %v1189
  %v1191 = vrot.slane %v1151, %v1190
  %v1193 = vadd.f32 %v1185, %v1191
  %v1194 = vadd.f32 %v1186, %v1191
  %v1195 = vpack.c.bf16 %v1194, %v1193
  %v1196 = vld [vmem:[%s9] sm:$0xff]
  %v1197 = vld [vmem:[%s9 + $0x8] sm:$0xff]
  %v1198 = vld [vmem:[%s9 + $0x40] sm:$0xff]
  %v1199 = vld [vmem:[%s9 + $0x48] sm:$0xff]
  %v1200 = vld [vmem:[%s9 + $0x80] sm:$0xff]
  %v1201 = vld [vmem:[%s9 + $0x88] sm:$0xff]
  %v1202 = vld [vmem:[%s9 + $0xc0] sm:$0xff]
  %v1203 = vld [vmem:[%s9 + $0xc8] sm:$0xff]
  %v1204 = vld [vmem:[%s10] sm:$0xf]
  %v1206 = vlaneseq
  %v1207 = vshrl.u32 %v1206, 7
  %v1208 = vsub.s32 0, %v1207
  %v1209 = vrot.slane %v1204, %v1208
  %v1210 = vlaneseq
  %v1211 = vshrl.u32 %v1210, 7
  %v1212 = vsub.s32 1, %v1211
  %v1213 = vrot.slane %v1204, %v1212
  %v1214 = vlaneseq
  %v1215 = vshrl.u32 %v1214, 7
  %v1216 = vsub.s32 2, %v1215
  %v1217 = vrot.slane %v1204, %v1216
  %v1218 = vlaneseq
  %v1219 = vshrl.u32 %v1218, 7
  %v1220 = vsub.s32 3, %v1219
  %v1221 = vrot.slane %v1204, %v1220
  %v1234 = vunpack.c.l.b16 %v1196
  %v1235 = vunpack.c.h.b16 %v1196
  %v1236 = vunpack.c.l.b16 %v1197
  %v1237 = vunpack.c.h.b16 %v1197
  %v1238 = vunpack.c.l.b16 %v1198
  %v1239 = vunpack.c.h.b16 %v1198
  %v1240 = vunpack.c.l.b16 %v1199
  %v1241 = vunpack.c.h.b16 %v1199
  %v1242 = vunpack.c.l.b16 %v1200
  %v1243 = vunpack.c.h.b16 %v1200
  %v1244 = vunpack.c.l.b16 %v1201
  %v1245 = vunpack.c.h.b16 %v1201
  %v1246 = vunpack.c.l.b16 %v1202
  %v1247 = vunpack.c.h.b16 %v1202
  %v1248 = vunpack.c.l.b16 %v1203
  %v1249 = vunpack.c.h.b16 %v1203
  %v1250 = vpack.c.b16 %v1238, %v1234
  %v1251 = vpack.c.b16 %v1239, %v1235
  %v1252 = vpack.c.b16 %v1240, %v1236
  %v1253 = vpack.c.b16 %v1241, %v1237
  %v1254 = vpack.c.b16 %v1246, %v1242
  %v1255 = vpack.c.b16 %v1247, %v1243
  %v1256 = vpack.c.b16 %v1248, %v1244
  %v1257 = vpack.c.b16 %v1249, %v1245
  %v1267 = vsel %vm113, %v1195, 0
  %1269 = vmatprep.subr.bf16.mxu0 %v1251
  %1270 = vmatpush1.bf16.msra.mxu0 %v1250
  %1271 = vmatprep.subr.bf16.mxu0 %v1255
  %1272 = vmatpush1.bf16.msra.mxu0 %v1254
  %1273 = vmatprep.subr.bf16.mxu0 0
  %1274 = vmatpush1.bf16.msra.mxu0 0
  %1275 = vmatprep.subr.bf16.mxu0 0
  %1276 = vmatpush1.bf16.msra.mxu0 0
  %1277 = vmatprep.subr.bf16.mxu0 0
  %1278 = vmatpush1.bf16.msra.mxu0 0
  %1279 = vmatprep.subr.bf16.mxu0 0
  %1280 = vmatpush1.bf16.msra.mxu0 0
  %1281 = vmatprep.subr.bf16.mxu0 0
  %1282 = vmatpush1.bf16.msra.mxu0 0
  %1283 = vmatprep.subr.bf16.mxu0 0
  %1284 = vmatpush1.bf16.msra.mxu0 0
  %1285 = vmatprep.subr.bf16.mxu0 0
  %1286 = vmatpush1.bf16.msra.mxu0 0
  %1287 = vmatprep.subr.bf16.mxu0 0
  %1288 = vmatpush1.bf16.msra.mxu0 0
  %1289 = vmatprep.subr.bf16.mxu0 0
  %1290 = vmatpush1.bf16.msra.mxu0 0
  %1291 = vmatprep.subr.bf16.mxu0 0
  %1292 = vmatpush1.bf16.msra.mxu0 0
  %1293 = vmatprep.subr.bf16.mxu0 0
  %1294 = vmatpush1.bf16.msra.mxu0 0
  %1295 = vmatprep.subr.bf16.mxu0 0
  %1296 = vmatpush1.bf16.msra.mxu0 0
  %1297 = vmatprep.subr.bf16.mxu0 0
  %1298 = vmatpush1.bf16.msra.mxu0 0
  %1299 = vmatprep.subr.bf16.mxu0 0
  %1300 = vmatpush1.bf16.msra.mxu0 0
  %1301 = vmatprep.mubr.bf16.mxu0 0
  %1302 = vmatmul.mubr.bf16.gmra.mrb[0].mxu0 %v1267
  %v1303 = vpop.f32.mrb[0].mxu0
  %v1304 = vadd.f32 %v1209, %v1303
  %v1305 = vpop.f32.mrb[0].mxu0
  %v1306 = vadd.f32 %v1213, %v1305
  %v1307 = vpop.f32.mrb[0].mxu0
  %v1308 = vadd.f32 %v1209, %v1307
  %v1309 = vpop.f32.mrb[0].mxu0
  %v1310 = vadd.f32 %v1213, %v1309
  %1311 = vdwg.mxu0
  %1312 = vmatprep.subr.bf16.mxu0 %v1253
  %1313 = vmatpush1.bf16.msra.mxu0 %v1252
  %1314 = vmatprep.subr.bf16.mxu0 %v1257
  %1315 = vmatpush1.bf16.msra.mxu0 %v1256
  %1316 = vmatprep.subr.bf16.mxu0 0
  %1317 = vmatpush1.bf16.msra.mxu0 0
  %1318 = vmatprep.subr.bf16.mxu0 0
  %1319 = vmatpush1.bf16.msra.mxu0 0
  %1320 = vmatprep.subr.bf16.mxu0 0
  %1321 = vmatpush1.bf16.msra.mxu0 0
  %1322 = vmatprep.subr.bf16.mxu0 0
  %1323 = vmatpush1.bf16.msra.mxu0 0
  %1324 = vmatprep.subr.bf16.mxu0 0
  %1325 = vmatpush1.bf16.msra.mxu0 0
  %1326 = vmatprep.subr.bf16.mxu0 0
  %1327 = vmatpush1.bf16.msra.mxu0 0
  %1328 = vmatprep.subr.bf16.mxu0 0
  %1329 = vmatpush1.bf16.msra.mxu0 0
  %1330 = vmatprep.subr.bf16.mxu0 0
  %1331 = vmatpush1.bf16.msra.mxu0 0
  %1332 = vmatprep.subr.bf16.mxu0 0
  %1333 = vmatpush1.bf16.msra.mxu0 0
  %1334 = vmatprep.subr.bf16.mxu0 0
  %1335 = vmatpush1.bf16.msra.mxu0 0
  %1336 = vmatprep.subr.bf16.mxu0 0
  %1337 = vmatpush1.bf16.msra.mxu0 0
  %1338 = vmatprep.subr.bf16.mxu0 0
  %1339 = vmatpush1.bf16.msra.mxu0 0
  %1340 = vmatprep.subr.bf16.mxu0 0
  %1341 = vmatpush1.bf16.msra.mxu0 0
  %1342 = vmatprep.subr.bf16.mxu0 0
  %1343 = vmatpush1.bf16.msra.mxu0 0
  %1344 = vmatprep.mubr.bf16.mxu0 0
  %1345 = vmatmul.mubr.bf16.gmra.mrb[0].mxu0 %v1267
  %v1346 = vpop.f32.mrb[0].mxu0
  %v1347 = vadd.f32 %v1217, %v1346
  %v1348 = vpop.f32.mrb[0].mxu0
  %v1349 = vadd.f32 %v1221, %v1348
  %v1350 = vpop.f32.mrb[0].mxu0
  %v1351 = vadd.f32 %v1217, %v1350
  %v1352 = vpop.f32.mrb[0].mxu0
  %v1353 = vadd.f32 %v1221, %v1352
  %1354 = vdwg.mxu0
  %v1355 = vmax.f32 %v1304, 0.0
  %v1356 = vmax.f32 %v1306, 0.0
  %v1357 = vmax.f32 %v1347, 0.0
  %v1358 = vmax.f32 %v1349, 0.0
  %v1359 = vmax.f32 %v1308, 0.0
  %v1360 = vmax.f32 %v1310, 0.0
  %v1361 = vmax.f32 %v1351, 0.0
  %v1362 = vmax.f32 %v1353, 0.0
  %v1363 = vpack.c.bf16 %v1359, %v1355
  %v1364 = vpack.c.bf16 %v1360, %v1356
  %v1365 = vpack.c.bf16 %v1361, %v1357
  %v1366 = vpack.c.bf16 %v1362, %v1358
  %v1367 = vld [vmem:[%s11] sm:$0xf]
  %v1368 = vld [vmem:[%s11 + $0x4] sm:$0xf]
  %v1369 = vld [vmem:[%s11 + $0x8] sm:$0xf]
  %v1370 = vld [vmem:[%s11 + $0xc] sm:$0xf]
  %v1371 = vld [vmem:[%s11 + $0x10] sm:$0xf]
  %v1372 = vld [vmem:[%s11 + $0x14] sm:$0xf]
  %v1373 = vld [vmem:[%s11 + $0x18] sm:$0xf]
  %v1374 = vld [vmem:[%s11 + $0x1c] sm:$0xf]
  %v1375 = vld [vmem:[%s11 + $0x20] sm:$0xf]
  %v1376 = vld [vmem:[%s11 + $0x24] sm:$0xf]
  %v1377 = vld [vmem:[%s11 + $0x28] sm:$0xf]
  %v1378 = vld [vmem:[%s11 + $0x2c] sm:$0xf]
  %v1379 = vld [vmem:[%s11 + $0x30] sm:$0xf]
  %v1380 = vld [vmem:[%s11 + $0x34] sm:$0xf]
  %v1381 = vld [vmem:[%s11 + $0x38] sm:$0xf]
  %v1382 = vld [vmem:[%s11 + $0x3c] sm:$0xf]
  %v1383 = vld [vmem:[%s11 + $0x40] sm:$0xf]
  %v1384 = vld [vmem:[%s11 + $0x44] sm:$0xf]
  %v1385 = vld [vmem:[%s11 + $0x48] sm:$0xf]
  %v1386 = vld [vmem:[%s11 + $0x4c] sm:$0xf]
  %v1387 = vld [vmem:[%s11 + $0x50] sm:$0xf]
  %v1388 = vld [vmem:[%s11 + $0x54] sm:$0xf]
  %v1389 = vld [vmem:[%s11 + $0x58] sm:$0xf]
  %v1390 = vld [vmem:[%s11 + $0x5c] sm:$0xf]
  %v1391 = vld [vmem:[%s11 + $0x60] sm:$0xf]
  %v1392 = vld [vmem:[%s11 + $0x64] sm:$0xf]
  %v1393 = vld [vmem:[%s11 + $0x68] sm:$0xf]
  %v1394 = vld [vmem:[%s11 + $0x6c] sm:$0xf]
  %v1395 = vld [vmem:[%s11 + $0x70] sm:$0xf]
  %v1396 = vld [vmem:[%s11 + $0x74] sm:$0xf]
  %v1397 = vld [vmem:[%s11 + $0x78] sm:$0xf]
  %v1398 = vld [vmem:[%s11 + $0x7c] sm:$0xf]
  %v1399 = vld [vmem:[%s11 + $0x80] sm:$0xf]
  %v1400 = vld [vmem:[%s11 + $0x84] sm:$0xf]
  %v1401 = vld [vmem:[%s11 + $0x88] sm:$0xf]
  %v1402 = vld [vmem:[%s11 + $0x8c] sm:$0xf]
  %v1403 = vld [vmem:[%s11 + $0x90] sm:$0xf]
  %v1404 = vld [vmem:[%s11 + $0x94] sm:$0xf]
  %v1405 = vld [vmem:[%s11 + $0x98] sm:$0xf]
  %v1406 = vld [vmem:[%s11 + $0x9c] sm:$0xf]
  %v1407 = vld [vmem:[%s11 + $0xa0] sm:$0xf]
  %v1408 = vld [vmem:[%s11 + $0xa4] sm:$0xf]
  %v1409 = vld [vmem:[%s11 + $0xa8] sm:$0xf]
  %v1410 = vld [vmem:[%s11 + $0xac] sm:$0xf]
  %v1411 = vld [vmem:[%s11 + $0xb0] sm:$0xf]
  %v1412 = vld [vmem:[%s11 + $0xb4] sm:$0xf]
  %v1413 = vld [vmem:[%s11 + $0xb8] sm:$0xf]
  %v1414 = vld [vmem:[%s11 + $0xbc] sm:$0xf]
  %v1415 = vld [vmem:[%s11 + $0xc0] sm:$0xf]
  %v1416 = vld [vmem:[%s11 + $0xc4] sm:$0xf]
  %v1417 = vld [vmem:[%s11 + $0xc8] sm:$0xf]
  %v1418 = vld [vmem:[%s11 + $0xcc] sm:$0xf]
  %v1419 = vld [vmem:[%s11 + $0xd0] sm:$0xf]
  %v1420 = vld [vmem:[%s11 + $0xd4] sm:$0xf]
  %v1421 = vld [vmem:[%s11 + $0xd8] sm:$0xf]
  %v1422 = vld [vmem:[%s11 + $0xdc] sm:$0xf]
  %v1423 = vld [vmem:[%s11 + $0xe0] sm:$0xf]
  %v1424 = vld [vmem:[%s11 + $0xe4] sm:$0xf]
  %v1425 = vld [vmem:[%s11 + $0xe8] sm:$0xf]
  %v1426 = vld [vmem:[%s11 + $0xec] sm:$0xf]
  %v1427 = vld [vmem:[%s11 + $0xf0] sm:$0xf]
  %v1428 = vld [vmem:[%s11 + $0xf4] sm:$0xf]
  %v1429 = vld [vmem:[%s11 + $0xf8] sm:$0xf]
  %v1430 = vld [vmem:[%s11 + $0xfc] sm:$0xf]
  %v1431 = vld [vmem:[%s9 + $0x10] sm:$0xff]
  %v1432 = vld [vmem:[%s9 + $0x18] sm:$0xff]
  %v1433 = vld [vmem:[%s9 + $0x50] sm:$0xff]
  %v1434 = vld [vmem:[%s9 + $0x58] sm:$0xff]
  %v1435 = vld [vmem:[%s9 + $0x90] sm:$0xff]
  %v1436 = vld [vmem:[%s9 + $0x98] sm:$0xff]
  %v1437 = vld [vmem:[%s9 + $0xd0] sm:$0xff]
  %v1438 = vld [vmem:[%s9 + $0xd8] sm:$0xff]
  %v1439 = vld [vmem:[%s10 + $0x4] sm:$0xf]
  %v1441 = vlaneseq
  %v1442 = vshrl.u32 %v1441, 7
  %v1443 = vsub.s32 0, %v1442
  %v1444 = vrot.slane %v1439, %v1443
  %v1445 = vlaneseq
  %v1446 = vshrl.u32 %v1445, 7
  %v1447 = vsub.s32 1, %v1446
  %v1448 = vrot.slane %v1439, %v1447
  %v1449 = vlaneseq
  %v1450 = vshrl.u32 %v1449, 7
  %v1451 = vsub.s32 2, %v1450
  %v1452 = vrot.slane %v1439, %v1451
  %v1453 = vlaneseq
  %v1454 = vshrl.u32 %v1453, 7
  %v1455 = vsub.s32 3, %v1454
  %v1456 = vrot.slane %v1439, %v1455
  %v1469 = vunpack.c.l.b16 %v1431
  %v1470 = vunpack.c.h.b16 %v1431
  %v1471 = vunpack.c.l.b16 %v1432
  %v1472 = vunpack.c.h.b16 %v1432
  %v1473 = vunpack.c.l.b16 %v1433
  %v1474 = vunpack.c.h.b16 %v1433
  %v1475 = vunpack.c.l.b16 %v1434
  %v1476 = vunpack.c.h.b16 %v1434
  %v1477 = vunpack.c.l.b16 %v1435
  %v1478 = vunpack.c.h.b16 %v1435
  %v1479 = vunpack.c.l.b16 %v1436
  %v1480 = vunpack.c.h.b16 %v1436
  %v1481 = vunpack.c.l.b16 %v1437
  %v1482 = vunpack.c.h.b16 %v1437
  %v1483 = vunpack.c.l.b16 %v1438
  %v1484 = vunpack.c.h.b16 %v1438
  %v1485 = vpack.c.b16 %v1473, %v1469
  %v1486 = vpack.c.b16 %v1474, %v1470
  %v1487 = vpack.c.b16 %v1475, %v1471
  %v1488 = vpack.c.b16 %v1476, %v1472
  %v1489 = vpack.c.b16 %v1481, %v1477
  %v1490 = vpack.c.b16 %v1482, %v1478
  %v1491 = vpack.c.b16 %v1483, %v1479
  %v1492 = vpack.c.b16 %v1484, %v1480
  %1501 = vmatprep.subr.bf16.mxu0 %v1486
  %1502 = vmatpush1.bf16.msra.mxu0 %v1485
  %1503 = vmatprep.subr.bf16.mxu0 %v1490
  %1504 = vmatpush1.bf16.msra.mxu0 %v1489
  %1505 = vmatprep.subr.bf16.mxu0 0
  %1506 = vmatpush1.bf16.msra.mxu0 0
  %1507 = vmatprep.subr.bf16.mxu0 0
  %1508 = vmatpush1.bf16.msra.mxu0 0
  %1509 = vmatprep.subr.bf16.mxu0 0
  %1510 = vmatpush1.bf16.msra.mxu0 0
  %1511 = vmatprep.subr.bf16.mxu0 0
  %1512 = vmatpush1.bf16.msra.mxu0 0
  %1513 = vmatprep.subr.bf16.mxu0 0
  %1514 = vmatpush1.bf16.msra.mxu0 0
  %1515 = vmatprep.subr.bf16.mxu0 0
  %1516 = vmatpush1.bf16.msra.mxu0 0
  %1517 = vmatprep.subr.bf16.mxu0 0
  %1518 = vmatpush1.bf16.msra.mxu0 0
  %1519 = vmatprep.subr.bf16.mxu0 0
  %1520 = vmatpush1.bf16.msra.mxu0 0
  %1521 = vmatprep.subr.bf16.mxu0 0
  %1522 = vmatpush1.bf16.msra.mxu0 0
  %1523 = vmatprep.subr.bf16.mxu0 0
  %1524 = vmatpush1.bf16.msra.mxu0 0
  %1525 = vmatprep.subr.bf16.mxu0 0
  %1526 = vmatpush1.bf16.msra.mxu0 0
  %1527 = vmatprep.subr.bf16.mxu0 0
  %1528 = vmatpush1.bf16.msra.mxu0 0
  %1529 = vmatprep.subr.bf16.mxu0 0
  %1530 = vmatpush1.bf16.msra.mxu0 0
  %1531 = vmatprep.subr.bf16.mxu0 0
  %1532 = vmatpush1.bf16.msra.mxu0 0
  %1533 = vmatprep.mubr.bf16.mxu0 0
  %1534 = vmatmul.mubr.bf16.gmra.mrb[0].mxu0 %v1267
  %v1535 = vpop.f32.mrb[0].mxu0
  %v1536 = vadd.f32 %v1444, %v1535
  %v1537 = vpop.f32.mrb[0].mxu0
  %v1538 = vadd.f32 %v1448, %v1537
  %v1539 = vpop.f32.mrb[0].mxu0
  %v1540 = vadd.f32 %v1444, %v1539
  %v1541 = vpop.f32.mrb[0].mxu0
  %v1542 = vadd.f32 %v1448, %v1541
  %1543 = vdwg.mxu0
  %1544 = vmatprep.subr.bf16.mxu0 %v1488
  %1545 = vmatpush1.bf16.msra.mxu0 %v1487
  %1546 = vmatprep.subr.bf16.mxu0 %v1492
  %1547 = vmatpush1.bf16.msra.mxu0 %v1491
  %1548 = vmatprep.subr.bf16.mxu0 0
  %1549 = vmatpush1.bf16.msra.mxu0 0
  %1550 = vmatprep.subr.bf16.mxu0 0
  %1551 = vmatpush1.bf16.msra.mxu0 0
  %1552 = vmatprep.subr.bf16.mxu0 0
  %1553 = vmatpush1.bf16.msra.mxu0 0
  %1554 = vmatprep.subr.bf16.mxu0 0
  %1555 = vmatpush1.bf16.msra.mxu0 0
  %1556 = vmatprep.subr.bf16.mxu0 0
  %1557 = vmatpush1.bf16.msra.mxu0 0
  %1558 = vmatprep.subr.bf16.mxu0 0
  %1559 = vmatpush1.bf16.msra.mxu0 0
  %1560 = vmatprep.subr.bf16.mxu0 0
  %1561 = vmatpush1.bf16.msra.mxu0 0
  %1562 = vmatprep.subr.bf16.mxu0 0
  %1563 = vmatpush1.bf16.msra.mxu0 0
  %1564 = vmatprep.subr.bf16.mxu0 0
  %1565 = vmatpush1.bf16.msra.mxu0 0
  %1566 = vmatprep.subr.bf16.mxu0 0
  %1567 = vmatpush1.bf16.msra.mxu0 0
  %1568 = vmatprep.subr.bf16.mxu0 0
  %1569 = vmatpush1.bf16.msra.mxu0 0
  %1570 = vmatprep.subr.bf16.mxu0 0
  %1571 = vmatpush1.bf16.msra.mxu0 0
  %1572 = vmatprep.subr.bf16.mxu0 0
  %1573 = vmatpush1.bf16.msra.mxu0 0
  %1574 = vmatprep.subr.bf16.mxu0 0
  %1575 = vmatpush1.bf16.msra.mxu0 0
  %1576 = vmatprep.mubr.bf16.mxu0 0
  %1577 = vmatmul.mubr.bf16.gmra.mrb[0].mxu0 %v1267
  %v1578 = vpop.f32.mrb[0].mxu0
  %v1579 = vadd.f32 %v1452, %v1578
  %v1580 = vpop.f32.mrb[0].mxu0
  %v1581 = vadd.f32 %v1456, %v1580
  %v1582 = vpop.f32.mrb[0].mxu0
  %v1583 = vadd.f32 %v1452, %v1582
  %v1584 = vpop.f32.mrb[0].mxu0
  %v1585 = vadd.f32 %v1456, %v1584
  %1586 = vdwg.mxu0
  %v1587 = vmax.f32 %v1536, 0.0
  %v1588 = vmax.f32 %v1538, 0.0
  %v1589 = vmax.f32 %v1579, 0.0
  %v1590 = vmax.f32 %v1581, 0.0
  %v1591 = vmax.f32 %v1540, 0.0
  %v1592 = vmax.f32 %v1542, 0.0
  %v1593 = vmax.f32 %v1583, 0.0
  %v1594 = vmax.f32 %v1585, 0.0
  %v1595 = vpack.c.bf16 %v1591, %v1587
  %v1596 = vpack.c.bf16 %v1592, %v1588
  %v1597 = vpack.c.bf16 %v1593, %v1589
  %v1598 = vpack.c.bf16 %v1594, %v1590
  %v1599 = vld [vmem:[%s11 + $0x100] sm:$0xf]
  %v1600 = vld [vmem:[%s11 + $0x104] sm:$0xf]
  %v1601 = vld [vmem:[%s11 + $0x108] sm:$0xf]
  %v1602 = vld [vmem:[%s11 + $0x10c] sm:$0xf]
  %v1603 = vld [vmem:[%s11 + $0x110] sm:$0xf]
  %v1604 = vld [vmem:[%s11 + $0x114] sm:$0xf]
  %v1605 = vld [vmem:[%s11 + $0x118] sm:$0xf]
  %v1606 = vld [vmem:[%s11 + $0x11c] sm:$0xf]
  %v1607 = vld [vmem:[%s11 + $0x120] sm:$0xf]
  %v1608 = vld [vmem:[%s11 + $0x124] sm:$0xf]
  %v1609 = vld [vmem:[%s11 + $0x128] sm:$0xf]
  %v1610 = vld [vmem:[%s11 + $0x12c] sm:$0xf]
  %v1611 = vld [vmem:[%s11 + $0x130] sm:$0xf]
  %v1612 = vld [vmem:[%s11 + $0x134] sm:$0xf]
  %v1613 = vld [vmem:[%s11 + $0x138] sm:$0xf]
  %v1614 = vld [vmem:[%s11 + $0x13c] sm:$0xf]
  %v1615 = vld [vmem:[%s11 + $0x140] sm:$0xf]
  %v1616 = vld [vmem:[%s11 + $0x144] sm:$0xf]
  %v1617 = vld [vmem:[%s11 + $0x148] sm:$0xf]
  %v1618 = vld [vmem:[%s11 + $0x14c] sm:$0xf]
  %v1619 = vld [vmem:[%s11 + $0x150] sm:$0xf]
  %v1620 = vld [vmem:[%s11 + $0x154] sm:$0xf]
  %v1621 = vld [vmem:[%s11 + $0x158] sm:$0xf]
  %v1622 = vld [vmem:[%s11 + $0x15c] sm:$0xf]
  %v1623 = vld [vmem:[%s11 + $0x160] sm:$0xf]
  %v1624 = vld [vmem:[%s11 + $0x164] sm:$0xf]
  %v1625 = vld [vmem:[%s11 + $0x168] sm:$0xf]
  %v1626 = vld [vmem:[%s11 + $0x16c] sm:$0xf]
  %v1627 = vld [vmem:[%s11 + $0x170] sm:$0xf]
  %v1628 = vld [vmem:[%s11 + $0x174] sm:$0xf]
  %v1629 = vld [vmem:[%s11 + $0x178] sm:$0xf]
  %v1630 = vld [vmem:[%s11 + $0x17c] sm:$0xf]
  %v1631 = vld [vmem:[%s11 + $0x180] sm:$0xf]
  %v1632 = vld [vmem:[%s11 + $0x184] sm:$0xf]
  %v1633 = vld [vmem:[%s11 + $0x188] sm:$0xf]
  %v1634 = vld [vmem:[%s11 + $0x18c] sm:$0xf]
  %v1635 = vld [vmem:[%s11 + $0x190] sm:$0xf]
  %v1636 = vld [vmem:[%s11 + $0x194] sm:$0xf]
  %v1637 = vld [vmem:[%s11 + $0x198] sm:$0xf]
  %v1638 = vld [vmem:[%s11 + $0x19c] sm:$0xf]
  %v1639 = vld [vmem:[%s11 + $0x1a0] sm:$0xf]
  %v1640 = vld [vmem:[%s11 + $0x1a4] sm:$0xf]
  %v1641 = vld [vmem:[%s11 + $0x1a8] sm:$0xf]
  %v1642 = vld [vmem:[%s11 + $0x1ac] sm:$0xf]
  %v1643 = vld [vmem:[%s11 + $0x1b0] sm:$0xf]
  %v1644 = vld [vmem:[%s11 + $0x1b4] sm:$0xf]
  %v1645 = vld [vmem:[%s11 + $0x1b8] sm:$0xf]
  %v1646 = vld [vmem:[%s11 + $0x1bc] sm:$0xf]
  %v1647 = vld [vmem:[%s11 + $0x1c0] sm:$0xf]
  %v1648 = vld [vmem:[%s11 + $0x1c4] sm:$0xf]
  %v1649 = vld [vmem:[%s11 + $0x1c8] sm:$0xf]
  %v1650 = vld [vmem:[%s11 + $0x1cc] sm:$0xf]
  %v1651 = vld [vmem:[%s11 + $0x1d0] sm:$0xf]
  %v1652 = vld [vmem:[%s11 + $0x1d4] sm:$0xf]
  %v1653 = vld [vmem:[%s11 + $0x1d8] sm:$0xf]
  %v1654 = vld [vmem:[%s11 + $0x1dc] sm:$0xf]
  %v1655 = vld [vmem:[%s11 + $0x1e0] sm:$0xf]
  %v1656 = vld [vmem:[%s11 + $0x1e4] sm:$0xf]
  %v1657 = vld [vmem:[%s11 + $0x1e8] sm:$0xf]
  %v1658 = vld [vmem:[%s11 + $0x1ec] sm:$0xf]
  %v1659 = vld [vmem:[%s11 + $0x1f0] sm:$0xf]
  %v1660 = vld [vmem:[%s11 + $0x1f4] sm:$0xf]
  %v1661 = vld [vmem:[%s11 + $0x1f8] sm:$0xf]
  %v1662 = vld [vmem:[%s11 + $0x1fc] sm:$0xf]
  %v1727 = vunpack.c.l.b16 %v1599
  %v1728 = vunpack.c.l.b16 %v1600
  %v1729 = vunpack.c.l.b16 %v1601
  %v1730 = vunpack.c.l.b16 %v1602
  %v1731 = vunpack.c.l.b16 %v1603
  %v1732 = vunpack.c.l.b16 %v1604
  %v1733 = vunpack.c.l.b16 %v1605
  %v1734 = vunpack.c.l.b16 %v1606
  %v1735 = vunpack.c.l.b16 %v1607
  %v1736 = vunpack.c.l.b16 %v1608
  %v1737 = vunpack.c.l.b16 %v1609
  %v1738 = vunpack.c.l.b16 %v1610
  %v1739 = vunpack.c.l.b16 %v1611
  %v1740 = vunpack.c.l.b16 %v1612
  %v1741 = vunpack.c.l.b16 %v1613
  %v1742 = vunpack.c.l.b16 %v1614
  %v1743 = vunpack.c.l.b16 %v1615
  %v1744 = vunpack.c.l.b16 %v1616
  %v1745 = vunpack.c.l.b16 %v1617
  %v1746 = vunpack.c.l.b16 %v1618
  %v1747 = vunpack.c.l.b16 %v1619
  %v1748 = vunpack.c.l.b16 %v1620
  %v1749 = vunpack.c.l.b16 %v1621
  %v1750 = vunpack.c.l.b16 %v1622
  %v1751 = vunpack.c.l.b16 %v1623
  %v1752 = vunpack.c.l.b16 %v1624
  %v1753 = vunpack.c.l.b16 %v1625
  %v1754 = vunpack.c.l.b16 %v1626
  %v1755 = vunpack.c.l.b16 %v1627
  %v1756 = vunpack.c.l.b16 %v1628
  %v1757 = vunpack.c.l.b16 %v1629
  %v1758 = vunpack.c.l.b16 %v1630
  %v1759 = vunpack.c.l.b16 %v1631
  %v1760 = vunpack.c.l.b16 %v1632
  %v1761 = vunpack.c.l.b16 %v1633
  %v1762 = vunpack.c.l.b16 %v1634
  %v1763 = vunpack.c.l.b16 %v1635
  %v1764 = vunpack.c.l.b16 %v1636
  %v1765 = vunpack.c.l.b16 %v1637
  %v1766 = vunpack.c.l.b16 %v1638
  %v1767 = vunpack.c.l.b16 %v1639
  %v1768 = vunpack.c.l.b16 %v1640
  %v1769 = vunpack.c.l.b16 %v1641
  %v1770 = vunpack.c.l.b16 %v1642
  %v1771 = vunpack.c.l.b16 %v1643
  %v1772 = vunpack.c.l.b16 %v1644
  %v1773 = vunpack.c.l.b16 %v1645
  %v1774 = vunpack.c.l.b16 %v1646
  %v1775 = vunpack.c.l.b16 %v1647
  %v1776 = vunpack.c.l.b16 %v1648
  %v1777 = vunpack.c.l.b16 %v1649
  %v1778 = vunpack.c.l.b16 %v1650
  %v1779 = vunpack.c.l.b16 %v1651
  %v1780 = vunpack.c.l.b16 %v1652
  %v1781 = vunpack.c.l.b16 %v1653
  %v1782 = vunpack.c.l.b16 %v1654
  %v1783 = vunpack.c.l.b16 %v1655
  %v1784 = vunpack.c.l.b16 %v1656
  %v1785 = vunpack.c.l.b16 %v1657
  %v1786 = vunpack.c.l.b16 %v1658
  %v1787 = vunpack.c.l.b16 %v1659
  %v1788 = vunpack.c.l.b16 %v1660
  %v1789 = vunpack.c.l.b16 %v1661
  %v1790 = vunpack.c.l.b16 %v1662
  %v1791 = vpack.c.b16 %v1728, %v1727
  %v1792 = vpack.c.b16 %v1730, %v1729
  %v1793 = vpack.c.b16 %v1732, %v1731
  %v1794 = vpack.c.b16 %v1734, %v1733
  %v1795 = vpack.c.b16 %v1736, %v1735
  %v1796 = vpack.c.b16 %v1738, %v1737
  %v1797 = vpack.c.b16 %v1740, %v1739
  %v1798 = vpack.c.b16 %v1742, %v1741
  %v1799 = vpack.c.b16 %v1744, %v1743
  %v1800 = vpack.c.b16 %v1746, %v1745
  %v1801 = vpack.c.b16 %v1748, %v1747
  %v1802 = vpack.c.b16 %v1750, %v1749
  %v1803 = vpack.c.b16 %v1752, %v1751
  %v1804 = vpack.c.b16 %v1754, %v1753
  %v1805 = vpack.c.b16 %v1756, %v1755
  %v1806 = vpack.c.b16 %v1758, %v1757
  %v1807 = vpack.c.b16 %v1760, %v1759
  %v1808 = vpack.c.b16 %v1762, %v1761
  %v1809 = vpack.c.b16 %v1764, %v1763
  %v1810 = vpack.c.b16 %v1766, %v1765
  %v1811 = vpack.c.b16 %v1768, %v1767
  %v1812 = vpack.c.b16 %v1770, %v1769
  %v1813 = vpack.c.b16 %v1772, %v1771
  %v1814 = vpack.c.b16 %v1774, %v1773
  %v1815 = vpack.c.b16 %v1776, %v1775
  %v1816 = vpack.c.b16 %v1778, %v1777
  %v1817 = vpack.c.b16 %v1780, %v1779
  %v1818 = vpack.c.b16 %v1782, %v1781
  %v1819 = vpack.c.b16 %v1784, %v1783
  %v1820 = vpack.c.b16 %v1786, %v1785
  %v1821 = vpack.c.b16 %v1788, %v1787
  %v1822 = vpack.c.b16 %v1790, %v1789
  %1855 = vmatprep.subr.bf16.mxu0 0
  %1856 = vmatpush1.bf16.msra.mxu0 %v1791
  %1857 = vmatprep.subr.bf16.mxu0 0
  %1858 = vmatpush1.bf16.msra.mxu0 %v1792
  %1859 = vmatprep.subr.bf16.mxu0 0
  %1860 = vmatpush1.bf16.msra.mxu0 %v1793
  %1861 = vmatprep.subr.bf16.mxu0 0
  %1862 = vmatpush1.bf16.msra.mxu0 %v1794
  %1863 = vmatprep.subr.bf16.mxu0 0
  %1864 = vmatpush1.bf16.msra.mxu0 %v1795
  %1865 = vmatprep.subr.bf16.mxu0 0
  %1866 = vmatpush1.bf16.msra.mxu0 %v1796
  %1867 = vmatprep.subr.bf16.mxu0 0
  %1868 = vmatpush1.bf16.msra.mxu0 %v1797
  %1869 = vmatprep.subr.bf16.mxu0 0
  %1870 = vmatpush1.bf16.msra.mxu0 %v1798
  %1871 = vmatprep.subr.bf16.mxu0 0
  %1872 = vmatpush1.bf16.msra.mxu0 %v1799
  %1873 = vmatprep.subr.bf16.mxu0 0
  %1874 = vmatpush1.bf16.msra.mxu0 %v1800
  %1875 = vmatprep.subr.bf16.mxu0 0
  %1876 = vmatpush1.bf16.msra.mxu0 %v1801
  %1877 = vmatprep.subr.bf16.mxu0 0
  %1878 = vmatpush1.bf16.msra.mxu0 %v1802
  %1879 = vmatprep.subr.bf16.mxu0 0
  %1880 = vmatpush1.bf16.msra.mxu0 %v1803
  %1881 = vmatprep.subr.bf16.mxu0 0
  %1882 = vmatpush1.bf16.msra.mxu0 %v1804
  %1883 = vmatprep.subr.bf16.mxu0 0
  %1884 = vmatpush1.bf16.msra.mxu0 %v1805
  %1885 = vmatprep.subr.bf16.mxu0 0
  %1886 = vmatpush1.bf16.msra.mxu0 %v1806
  %1887 = vmatprep.mubr.bf16.mxu0 %v1596
  %1888 = vmatmul.mubr.bf16.gmra.mrb[0].mxu0 %v1595
  %v1889 = vpop.f32.mrb[0].mxu0
  %v1890 = vadd.f32 0.0, %v1889
  %v1891 = vpop.f32.mrb[0].mxu0
  %v1892 = vpop.f32.mrb[0].mxu0
  %v1893 = vadd.f32 0.0, %v1892
  %v1894 = vpop.f32.mrb[0].mxu0
  %1895 = vdwg.mxu0
  %1896 = vmatprep.subr.bf16.mxu0 0
  %1897 = vmatpush1.bf16.msra.mxu0 %v1807
  %1898 = vmatprep.subr.bf16.mxu0 0
  %1899 = vmatpush1.bf16.msra.mxu0 %v1808
  %1900 = vmatprep.subr.bf16.mxu0 0
  %1901 = vmatpush1.bf16.msra.mxu0 %v1809
  %1902 = vmatprep.subr.bf16.mxu0 0
  %1903 = vmatpush1.bf16.msra.mxu0 %v1810
  %1904 = vmatprep.subr.bf16.mxu0 0
  %1905 = vmatpush1.bf16.msra.mxu0 %v1811
  %1906 = vmatprep.subr.bf16.mxu0 0
  %1907 = vmatpush1.bf16.msra.mxu0 %v1812
  %1908 = vmatprep.subr.bf16.mxu0 0
  %1909 = vmatpush1.bf16.msra.mxu0 %v1813
  %1910 = vmatprep.subr.bf16.mxu0 0
  %1911 = vmatpush1.bf16.msra.mxu0 %v1814
  %1912 = vmatprep.subr.bf16.mxu0 0
  %1913 = vmatpush1.bf16.msra.mxu0 %v1815
  %1914 = vmatprep.subr.bf16.mxu0 0
  %1915 = vmatpush1.bf16.msra.mxu0 %v1816
  %1916 = vmatprep.subr.bf16.mxu0 0
  %1917 = vmatpush1.bf16.msra.mxu0 %v1817
  %1918 = vmatprep.subr.bf16.mxu0 0
  %1919 = vmatpush1.bf16.msra.mxu0 %v1818
  %1920 = vmatprep.subr.bf16.mxu0 0
  %1921 = vmatpush1.bf16.msra.mxu0 %v1819
  %1922 = vmatprep.subr.bf16.mxu0 0
  %1923 = vmatpush1.bf16.msra.mxu0 %v1820
  %1924 = vmatprep.subr.bf16.mxu0 0
  %1925 = vmatpush1.bf16.msra.mxu0 %v1821
  %1926 = vmatprep.subr.bf16.mxu0 0
  %1927 = vmatpush1.bf16.msra.mxu0 %v1822
  %1928 = vmatprep.mubr.bf16.mxu0 %v1598
  %1929 = vmatmul.mubr.bf16.gmra.mrb[0].mxu0 %v1597
  %v1930 = vpop.f32.mrb[0].mxu0
  %v1931 = vadd.f32 %v1890, %v1930
  %v1932 = vpop.f32.mrb[0].mxu0
  %v1933 = vpop.f32.mrb[0].mxu0
  %v1934 = vadd.f32 %v1893, %v1933
  %v1935 = vpop.f32.mrb[0].mxu0
  %1936 = vdwg.mxu0
  %v2001 = vunpack.c.l.b16 %v1367
  %v2002 = vunpack.c.l.b16 %v1368
  %v2003 = vunpack.c.l.b16 %v1369
  %v2004 = vunpack.c.l.b16 %v1370
  %v2005 = vunpack.c.l.b16 %v1371
  %v2006 = vunpack.c.l.b16 %v1372
  %v2007 = vunpack.c.l.b16 %v1373
  %v2008 = vunpack.c.l.b16 %v1374
  %v2009 = vunpack.c.l.b16 %v1375
  %v2010 = vunpack.c.l.b16 %v1376
  %v2011 = vunpack.c.l.b16 %v1377
  %v2012 = vunpack.c.l.b16 %v1378
  %v2013 = vunpack.c.l.b16 %v1379
  %v2014 = vunpack.c.l.b16 %v1380
  %v2015 = vunpack.c.l.b16 %v1381
  %v2016 = vunpack.c.l.b16 %v1382
  %v2017 = vunpack.c.l.b16 %v1383
  %v2018 = vunpack.c.l.b16 %v1384
  %v2019 = vunpack.c.l.b16 %v1385
  %v2020 = vunpack.c.l.b16 %v1386
  %v2021 = vunpack.c.l.b16 %v1387
  %v2022 = vunpack.c.l.b16 %v1388
  %v2023 = vunpack.c.l.b16 %v1389
  %v2024 = vunpack.c.l.b16 %v1390
  %v2025 = vunpack.c.l.b16 %v1391
  %v2026 = vunpack.c.l.b16 %v1392
  %v2027 = vunpack.c.l.b16 %v1393
  %v2028 = vunpack.c.l.b16 %v1394
  %v2029 = vunpack.c.l.b16 %v1395
  %v2030 = vunpack.c.l.b16 %v1396
  %v2031 = vunpack.c.l.b16 %v1397
  %v2032 = vunpack.c.l.b16 %v1398
  %v2033 = vunpack.c.l.b16 %v1399
  %v2034 = vunpack.c.l.b16 %v1400
  %v2035 = vunpack.c.l.b16 %v1401
  %v2036 = vunpack.c.l.b16 %v1402
  %v2037 = vunpack.c.l.b16 %v1403
  %v2038 = vunpack.c.l.b16 %v1404
  %v2039 = vunpack.c.l.b16 %v1405
  %v2040 = vunpack.c.l.b16 %v1406
  %v2041 = vunpack.c.l.b16 %v1407
  %v2042 = vunpack.c.l.b16 %v1408
  %v2043 = vunpack.c.l.b16 %v1409
  %v2044 = vunpack.c.l.b16 %v1410
  %v2045 = vunpack.c.l.b16 %v1411
  %v2046 = vunpack.c.l.b16 %v1412
  %v2047 = vunpack.c.l.b16 %v1413
  %v2048 = vunpack.c.l.b16 %v1414
  %v2049 = vunpack.c.l.b16 %v1415
  %v2050 = vunpack.c.l.b16 %v1416
  %v2051 = vunpack.c.l.b16 %v1417
  %v2052 = vunpack.c.l.b16 %v1418
  %v2053 = vunpack.c.l.b16 %v1419
  %v2054 = vunpack.c.l.b16 %v1420
  %v2055 = vunpack.c.l.b16 %v1421
  %v2056 = vunpack.c.l.b16 %v1422
  %v2057 = vunpack.c.l.b16 %v1423
  %v2058 = vunpack.c.l.b16 %v1424
  %v2059 = vunpack.c.l.b16 %v1425
  %v2060 = vunpack.c.l.b16 %v1426
  %v2061 = vunpack.c.l.b16 %v1427
  %v2062 = vunpack.c.l.b16 %v1428
  %v2063 = vunpack.c.l.b16 %v1429
  %v2064 = vunpack.c.l.b16 %v1430
  %v2065 = vpack.c.b16 %v2002, %v2001
  %v2066 = vpack.c.b16 %v2004, %v2003
  %v2067 = vpack.c.b16 %v2006, %v2005
  %v2068 = vpack.c.b16 %v2008, %v2007
  %v2069 = vpack.c.b16 %v2010, %v2009
  %v2070 = vpack.c.b16 %v2012, %v2011
  %v2071 = vpack.c.b16 %v2014, %v2013
  %v2072 = vpack.c.b16 %v2016, %v2015
  %v2073 = vpack.c.b16 %v2018, %v2017
  %v2074 = vpack.c.b16 %v2020, %v2019
  %v2075 = vpack.c.b16 %v2022, %v2021
  %v2076 = vpack.c.b16 %v2024, %v2023
  %v2077 = vpack.c.b16 %v2026, %v2025
  %v2078 = vpack.c.b16 %v2028, %v2027
  %v2079 = vpack.c.b16 %v2030, %v2029
  %v2080 = vpack.c.b16 %v2032, %v2031
  %v2081 = vpack.c.b16 %v2034, %v2033
  %v2082 = vpack.c.b16 %v2036, %v2035
  %v2083 = vpack.c.b16 %v2038, %v2037
  %v2084 = vpack.c.b16 %v2040, %v2039
  %v2085 = vpack.c.b16 %v2042, %v2041
  %v2086 = vpack.c.b16 %v2044, %v2043
  %v2087 = vpack.c.b16 %v2046, %v2045
  %v2088 = vpack.c.b16 %v2048, %v2047
  %v2089 = vpack.c.b16 %v2050, %v2049
  %v2090 = vpack.c.b16 %v2052, %v2051
  %v2091 = vpack.c.b16 %v2054, %v2053
  %v2092 = vpack.c.b16 %v2056, %v2055
  %v2093 = vpack.c.b16 %v2058, %v2057
  %v2094 = vpack.c.b16 %v2060, %v2059
  %v2095 = vpack.c.b16 %v2062, %v2061
  %v2096 = vpack.c.b16 %v2064, %v2063
  %2129 = vmatprep.subr.bf16.mxu0 0
  %2130 = vmatpush1.bf16.msra.mxu0 %v2065
  %2131 = vmatprep.subr.bf16.mxu0 0
  %2132 = vmatpush1.bf16.msra.mxu0 %v2066
  %2133 = vmatprep.subr.bf16.mxu0 0
  %2134 = vmatpush1.bf16.msra.mxu0 %v2067
  %2135 = vmatprep.subr.bf16.mxu0 0
  %2136 = vmatpush1.bf16.msra.mxu0 %v2068
  %2137 = vmatprep.subr.bf16.mxu0 0
  %2138 = vmatpush1.bf16.msra.mxu0 %v2069
  %2139 = vmatprep.subr.bf16.mxu0 0
  %2140 = vmatpush1.bf16.msra.mxu0 %v2070
  %2141 = vmatprep.subr.bf16.mxu0 0
  %2142 = vmatpush1.bf16.msra.mxu0 %v2071
  %2143 = vmatprep.subr.bf16.mxu0 0
  %2144 = vmatpush1.bf16.msra.mxu0 %v2072
  %2145 = vmatprep.subr.bf16.mxu0 0
  %2146 = vmatpush1.bf16.msra.mxu0 %v2073
  %2147 = vmatprep.subr.bf16.mxu0 0
  %2148 = vmatpush1.bf16.msra.mxu0 %v2074
  %2149 = vmatprep.subr.bf16.mxu0 0
  %2150 = vmatpush1.bf16.msra.mxu0 %v2075
  %2151 = vmatprep.subr.bf16.mxu0 0
  %2152 = vmatpush1.bf16.msra.mxu0 %v2076
  %2153 = vmatprep.subr.bf16.mxu0 0
  %2154 = vmatpush1.bf16.msra.mxu0 %v2077
  %2155 = vmatprep.subr.bf16.mxu0 0
  %2156 = vmatpush1.bf16.msra.mxu0 %v2078
  %2157 = vmatprep.subr.bf16.mxu0 0
  %2158 = vmatpush1.bf16.msra.mxu0 %v2079
  %2159 = vmatprep.subr.bf16.mxu0 0
  %2160 = vmatpush1.bf16.msra.mxu0 %v2080
  %2161 = vmatprep.mubr.bf16.mxu0 %v1364
  %2162 = vmatmul.mubr.bf16.gmra.mrb[0].mxu0 %v1363
  %v2163 = vpop.f32.mrb[0].mxu0
  %v2164 = vadd.f32 %v1931, %v2163
  %v2165 = vpop.f32.mrb[0].mxu0
  %v2166 = vpop.f32.mrb[0].mxu0
  %v2167 = vadd.f32 %v1934, %v2166
  %v2168 = vpop.f32.mrb[0].mxu0
  %2169 = vdwg.mxu0
  %2170 = vmatprep.subr.bf16.mxu0 0
  %2171 = vmatpush1.bf16.msra.mxu0 %v2081
  %2172 = vmatprep.subr.bf16.mxu0 0
  %2173 = vmatpush1.bf16.msra.mxu0 %v2082
  %2174 = vmatprep.subr.bf16.mxu0 0
  %2175 = vmatpush1.bf16.msra.mxu0 %v2083
  %2176 = vmatprep.subr.bf16.mxu0 0
  %2177 = vmatpush1.bf16.msra.mxu0 %v2084
  %2178 = vmatprep.subr.bf16.mxu0 0
  %2179 = vmatpush1.bf16.msra.mxu0 %v2085
  %2180 = vmatprep.subr.bf16.mxu0 0
  %2181 = vmatpush1.bf16.msra.mxu0 %v2086
  %2182 = vmatprep.subr.bf16.mxu0 0
  %2183 = vmatpush1.bf16.msra.mxu0 %v2087
  %2184 = vmatprep.subr.bf16.mxu0 0
  %2185 = vmatpush1.bf16.msra.mxu0 %v2088
  %2186 = vmatprep.subr.bf16.mxu0 0
  %2187 = vmatpush1.bf16.msra.mxu0 %v2089
  %2188 = vmatprep.subr.bf16.mxu0 0
  %2189 = vmatpush1.bf16.msra.mxu0 %v2090
  %2190 = vmatprep.subr.bf16.mxu0 0
  %2191 = vmatpush1.bf16.msra.mxu0 %v2091
  %2192 = vmatprep.subr.bf16.mxu0 0
  %2193 = vmatpush1.bf16.msra.mxu0 %v2092
  %2194 = vmatprep.subr.bf16.mxu0 0
  %2195 = vmatpush1.bf16.msra.mxu0 %v2093
  %2196 = vmatprep.subr.bf16.mxu0 0
  %2197 = vmatpush1.bf16.msra.mxu0 %v2094
  %2198 = vmatprep.subr.bf16.mxu0 0
  %2199 = vmatpush1.bf16.msra.mxu0 %v2095
  %2200 = vmatprep.subr.bf16.mxu0 0
  %2201 = vmatpush1.bf16.msra.mxu0 %v2096
  %2202 = vmatprep.mubr.bf16.mxu0 %v1366
  %2203 = vmatmul.mubr.bf16.gmra.mrb[0].mxu0 %v1365
  %v2204 = vpop.f32.mrb[0].mxu0
  %v2205 = vadd.f32 %v2164, %v2204
  %v2206 = vpop.f32.mrb[0].mxu0
  %v2207 = vpop.f32.mrb[0].mxu0
  %v2208 = vadd.f32 %v2167, %v2207
  %v2209 = vpop.f32.mrb[0].mxu0
  %2210 = vdwg.mxu0
  %v2211 = vld [vmem:[%s9 + $0x20] sm:$0xff]
  %v2212 = vld [vmem:[%s9 + $0x28] sm:$0xff]
  %v2213 = vld [vmem:[%s9 + $0x60] sm:$0xff]
  %v2214 = vld [vmem:[%s9 + $0x68] sm:$0xff]
  %v2215 = vld [vmem:[%s9 + $0xa0] sm:$0xff]
  %v2216 = vld [vmem:[%s9 + $0xa8] sm:$0xff]
  %v2217 = vld [vmem:[%s9 + $0xe0] sm:$0xff]
  %v2218 = vld [vmem:[%s9 + $0xe8] sm:$0xff]
  %v2219 = vld [vmem:[%s10 + $0x8] sm:$0xf]
  %v2221 = vlaneseq
  %v2222 = vshrl.u32 %v2221, 7
  %v2223 = vsub.s32 0, %v2222
  %v2224 = vrot.slane %v2219, %v2223
  %v2225 = vlaneseq
  %v2226 = vshrl.u32 %v2225, 7
  %v2227 = vsub.s32 1, %v2226
  %v2228 = vrot.slane %v2219, %v2227
  %v2229 = vlaneseq
  %v2230 = vshrl.u32 %v2229, 7
  %v2231 = vsub.s32 2, %v2230
  %v2232 = vrot.slane %v2219, %v2231
  %v2233 = vlaneseq
  %v2234 = vshrl.u32 %v2233, 7
  %v2235 = vsub.s32 3, %v2234
  %v2236 = vrot.slane %v2219, %v2235
  %v2249 = vunpack.c.l.b16 %v2211
  %v2250 = vunpack.c.h.b16 %v2211
  %v2251 = vunpack.c.l.b16 %v2212
  %v2252 = vunpack.c.h.b16 %v2212
  %v2253 = vunpack.c.l.b16 %v2213
  %v2254 = vunpack.c.h.b16 %v2213
  %v2255 = vunpack.c.l.b16 %v2214
  %v2256 = vunpack.c.h.b16 %v2214
  %v2257 = vunpack.c.l.b16 %v2215
  %v2258 = vunpack.c.h.b16 %v2215
  %v2259 = vunpack.c.l.b16 %v2216
  %v2260 = vunpack.c.h.b16 %v2216
  %v2261 = vunpack.c.l.b16 %v2217
  %v2262 = vunpack.c.h.b16 %v2217
  %v2263 = vunpack.c.l.b16 %v2218
  %v2264 = vunpack.c.h.b16 %v2218
  %v2265 = vpack.c.b16 %v2253, %v2249
  %v2266 = vpack.c.b16 %v2254, %v2250
  %v2267 = vpack.c.b16 %v2255, %v2251
  %v2268 = vpack.c.b16 %v2256, %v2252
  %v2269 = vpack.c.b16 %v2261, %v2257
  %v2270 = vpack.c.b16 %v2262, %v2258
  %v2271 = vpack.c.b16 %v2263, %v2259
  %v2272 = vpack.c.b16 %v2264, %v2260
  %2281 = vmatprep.subr.bf16.mxu0 %v2266
  %2282 = vmatpush1.bf16.msra.mxu0 %v2265
  %2283 = vmatprep.subr.bf16.mxu0 %v2270
  %2284 = vmatpush1.bf16.msra.mxu0 %v2269
  %2285 = vmatprep.subr.bf16.mxu0 0
  %2286 = vmatpush1.bf16.msra.mxu0 0
  %2287 = vmatprep.subr.bf16.mxu0 0
  %2288 = vmatpush1.bf16.msra.mxu0 0
  %2289 = vmatprep.subr.bf16.mxu0 0
  %2290 = vmatpush1.bf16.msra.mxu0 0
  %2291 = vmatprep.subr.bf16.mxu0 0
  %2292 = vmatpush1.bf16.msra.mxu0 0
  %2293 = vmatprep.subr.bf16.mxu0 0
  %2294 = vmatpush1.bf16.msra.mxu0 0
  %2295 = vmatprep.subr.bf16.mxu0 0
  %2296 = vmatpush1.bf16.msra.mxu0 0
  %2297 = vmatprep.subr.bf16.mxu0 0
  %2298 = vmatpush1.bf16.msra.mxu0 0
  %2299 = vmatprep.subr.bf16.mxu0 0
  %2300 = vmatpush1.bf16.msra.mxu0 0
  %2301 = vmatprep.subr.bf16.mxu0 0
  %2302 = vmatpush1.bf16.msra.mxu0 0
  %2303 = vmatprep.subr.bf16.mxu0 0
  %2304 = vmatpush1.bf16.msra.mxu0 0
  %2305 = vmatprep.subr.bf16.mxu0 0
  %2306 = vmatpush1.bf16.msra.mxu0 0
  %2307 = vmatprep.subr.bf16.mxu0 0
  %2308 = vmatpush1.bf16.msra.mxu0 0
  %2309 = vmatprep.subr.bf16.mxu0 0
  %2310 = vmatpush1.bf16.msra.mxu0 0
  %2311 = vmatprep.subr.bf16.mxu0 0
  %2312 = vmatpush1.bf16.msra.mxu0 0
  %2313 = vmatprep.mubr.bf16.mxu0 0
  %2314 = vmatmul.mubr.bf16.gmra.mrb[0].mxu0 %v1267
  %v2315 = vpop.f32.mrb[0].mxu0
  %v2316 = vadd.f32 %v2224, %v2315
  %v2317 = vpop.f32.mrb[0].mxu0
  %v2318 = vadd.f32 %v2228, %v2317
  %v2319 = vpop.f32.mrb[0].mxu0
  %v2320 = vadd.f32 %v2224, %v2319
  %v2321 = vpop.f32.mrb[0].mxu0
  %v2322 = vadd.f32 %v2228, %v2321
  %2323 = vdwg.mxu0
  %2324 = vmatprep.subr.bf16.mxu0 %v2268
  %2325 = vmatpush1.bf16.msra.mxu0 %v2267
  %2326 = vmatprep.subr.bf16.mxu0 %v2272
  %2327 = vmatpush1.bf16.msra.mxu0 %v2271
  %2328 = vmatprep.subr.bf16.mxu0 0
  %2329 = vmatpush1.bf16.msra.mxu0 0
  %2330 = vmatprep.subr.bf16.mxu0 0
  %2331 = vmatpush1.bf16.msra.mxu0 0
  %2332 = vmatprep.subr.bf16.mxu0 0
  %2333 = vmatpush1.bf16.msra.mxu0 0
  %2334 = vmatprep.subr.bf16.mxu0 0
  %2335 = vmatpush1.bf16.msra.mxu0 0
  %2336 = vmatprep.subr.bf16.mxu0 0
  %2337 = vmatpush1.bf16.msra.mxu0 0
  %2338 = vmatprep.subr.bf16.mxu0 0
  %2339 = vmatpush1.bf16.msra.mxu0 0
  %2340 = vmatprep.subr.bf16.mxu0 0
  %2341 = vmatpush1.bf16.msra.mxu0 0
  %2342 = vmatprep.subr.bf16.mxu0 0
  %2343 = vmatpush1.bf16.msra.mxu0 0
  %2344 = vmatprep.subr.bf16.mxu0 0
  %2345 = vmatpush1.bf16.msra.mxu0 0
  %2346 = vmatprep.subr.bf16.mxu0 0
  %2347 = vmatpush1.bf16.msra.mxu0 0
  %2348 = vmatprep.subr.bf16.mxu0 0
  %2349 = vmatpush1.bf16.msra.mxu0 0
  %2350 = vmatprep.subr.bf16.mxu0 0
  %2351 = vmatpush1.bf16.msra.mxu0 0
  %2352 = vmatprep.subr.bf16.mxu0 0
  %2353 = vmatpush1.bf16.msra.mxu0 0
  %2354 = vmatprep.subr.bf16.mxu0 0
  %2355 = vmatpush1.bf16.msra.mxu0 0
  %2356 = vmatprep.mubr.bf16.mxu0 0
  %2357 = vmatmul.mubr.bf16.gmra.mrb[0].mxu0 %v1267
  %v2358 = vpop.f32.mrb[0].mxu0
  %v2359 = vadd.f32 %v2232, %v2358
  %v2360 = vpop.f32.mrb[0].mxu0
  %v2361 = vadd.f32 %v2236, %v2360
  %v2362 = vpop.f32.mrb[0].mxu0
  %v2363 = vadd.f32 %v2232, %v2362
  %v2364 = vpop.f32.mrb[0].mxu0
  %v2365 = vadd.f32 %v2236, %v2364
  %2366 = vdwg.mxu0
  %v2367 = vmax.f32 %v2316, 0.0
  %v2368 = vmax.f32 %v2318, 0.0
  %v2369 = vmax.f32 %v2359, 0.0
  %v2370 = vmax.f32 %v2361, 0.0
  %v2371 = vmax.f32 %v2320, 0.0
  %v2372 = vmax.f32 %v2322, 0.0
  %v2373 = vmax.f32 %v2363, 0.0
  %v2374 = vmax.f32 %v2365, 0.0
  %v2375 = vpack.c.bf16 %v2371, %v2367
  %v2376 = vpack.c.bf16 %v2372, %v2368
  %v2377 = vpack.c.bf16 %v2373, %v2369
  %v2378 = vpack.c.bf16 %v2374, %v2370
  %v2379 = vld [vmem:[%s11 + $0x200] sm:$0xf]
  %v2380 = vld [vmem:[%s11 + $0x204] sm:$0xf]
  %v2381 = vld [vmem:[%s11 + $0x208] sm:$0xf]
  %v2382 = vld [vmem:[%s11 + $0x20c] sm:$0xf]
  %v2383 = vld [vmem:[%s11 + $0x210] sm:$0xf]
  %v2384 = vld [vmem:[%s11 + $0x214] sm:$0xf]
  %v2385 = vld [vmem:[%s11 + $0x218] sm:$0xf]
  %v2386 = vld [vmem:[%s11 + $0x21c] sm:$0xf]
  %v2387 = vld [vmem:[%s11 + $0x220] sm:$0xf]
  %v2388 = vld [vmem:[%s11 + $0x224] sm:$0xf]
  %v2389 = vld [vmem:[%s11 + $0x228] sm:$0xf]
  %v2390 = vld [vmem:[%s11 + $0x22c] sm:$0xf]
  %v2391 = vld [vmem:[%s11 + $0x230] sm:$0xf]
  %v2392 = vld [vmem:[%s11 + $0x234] sm:$0xf]
  %v2393 = vld [vmem:[%s11 + $0x238] sm:$0xf]
  %v2394 = vld [vmem:[%s11 + $0x23c] sm:$0xf]
  %v2395 = vld [vmem:[%s11 + $0x240] sm:$0xf]
  %v2396 = vld [vmem:[%s11 + $0x244] sm:$0xf]
  %v2397 = vld [vmem:[%s11 + $0x248] sm:$0xf]
  %v2398 = vld [vmem:[%s11 + $0x24c] sm:$0xf]
  %v2399 = vld [vmem:[%s11 + $0x250] sm:$0xf]
  %v2400 = vld [vmem:[%s11 + $0x254] sm:$0xf]
  %v2401 = vld [vmem:[%s11 + $0x258] sm:$0xf]
  %v2402 = vld [vmem:[%s11 + $0x25c] sm:$0xf]
  %v2403 = vld [vmem:[%s11 + $0x260] sm:$0xf]
  %v2404 = vld [vmem:[%s11 + $0x264] sm:$0xf]
  %v2405 = vld [vmem:[%s11 + $0x268] sm:$0xf]
  %v2406 = vld [vmem:[%s11 + $0x26c] sm:$0xf]
  %v2407 = vld [vmem:[%s11 + $0x270] sm:$0xf]
  %v2408 = vld [vmem:[%s11 + $0x274] sm:$0xf]
  %v2409 = vld [vmem:[%s11 + $0x278] sm:$0xf]
  %v2410 = vld [vmem:[%s11 + $0x27c] sm:$0xf]
  %v2411 = vld [vmem:[%s11 + $0x280] sm:$0xf]
  %v2412 = vld [vmem:[%s11 + $0x284] sm:$0xf]
  %v2413 = vld [vmem:[%s11 + $0x288] sm:$0xf]
  %v2414 = vld [vmem:[%s11 + $0x28c] sm:$0xf]
  %v2415 = vld [vmem:[%s11 + $0x290] sm:$0xf]
  %v2416 = vld [vmem:[%s11 + $0x294] sm:$0xf]
  %v2417 = vld [vmem:[%s11 + $0x298] sm:$0xf]
  %v2418 = vld [vmem:[%s11 + $0x29c] sm:$0xf]
  %v2419 = vld [vmem:[%s11 + $0x2a0] sm:$0xf]
  %v2420 = vld [vmem:[%s11 + $0x2a4] sm:$0xf]
  %v2421 = vld [vmem:[%s11 + $0x2a8] sm:$0xf]
  %v2422 = vld [vmem:[%s11 + $0x2ac] sm:$0xf]
  %v2423 = vld [vmem:[%s11 + $0x2b0] sm:$0xf]
  %v2424 = vld [vmem:[%s11 + $0x2b4] sm:$0xf]
  %v2425 = vld [vmem:[%s11 + $0x2b8] sm:$0xf]
  %v2426 = vld [vmem:[%s11 + $0x2bc] sm:$0xf]
  %v2427 = vld [vmem:[%s11 + $0x2c0] sm:$0xf]
  %v2428 = vld [vmem:[%s11 + $0x2c4] sm:$0xf]
  %v2429 = vld [vmem:[%s11 + $0x2c8] sm:$0xf]
  %v2430 = vld [vmem:[%s11 + $0x2cc] sm:$0xf]
  %v2431 = vld [vmem:[%s11 + $0x2d0] sm:$0xf]
  %v2432 = vld [vmem:[%s11 + $0x2d4] sm:$0xf]
  %v2433 = vld [vmem:[%s11 + $0x2d8] sm:$0xf]
  %v2434 = vld [vmem:[%s11 + $0x2dc] sm:$0xf]
  %v2435 = vld [vmem:[%s11 + $0x2e0] sm:$0xf]
  %v2436 = vld [vmem:[%s11 + $0x2e4] sm:$0xf]
  %v2437 = vld [vmem:[%s11 + $0x2e8] sm:$0xf]
  %v2438 = vld [vmem:[%s11 + $0x2ec] sm:$0xf]
  %v2439 = vld [vmem:[%s11 + $0x2f0] sm:$0xf]
  %v2440 = vld [vmem:[%s11 + $0x2f4] sm:$0xf]
  %v2441 = vld [vmem:[%s11 + $0x2f8] sm:$0xf]
  %v2442 = vld [vmem:[%s11 + $0x2fc] sm:$0xf]
  %v2507 = vunpack.c.l.b16 %v2379
  %v2508 = vunpack.c.l.b16 %v2380
  %v2509 = vunpack.c.l.b16 %v2381
  %v2510 = vunpack.c.l.b16 %v2382
  %v2511 = vunpack.c.l.b16 %v2383
  %v2512 = vunpack.c.l.b16 %v2384
  %v2513 = vunpack.c.l.b16 %v2385
  %v2514 = vunpack.c.l.b16 %v2386
  %v2515 = vunpack.c.l.b16 %v2387
  %v2516 = vunpack.c.l.b16 %v2388
  %v2517 = vunpack.c.l.b16 %v2389
  %v2518 = vunpack.c.l.b16 %v2390
  %v2519 = vunpack.c.l.b16 %v2391
  %v2520 = vunpack.c.l.b16 %v2392
  %v2521 = vunpack.c.l.b16 %v2393
  %v2522 = vunpack.c.l.b16 %v2394
  %v2523 = vunpack.c.l.b16 %v2395
  %v2524 = vunpack.c.l.b16 %v2396
  %v2525 = vunpack.c.l.b16 %v2397
  %v2526 = vunpack.c.l.b16 %v2398
  %v2527 = vunpack.c.l.b16 %v2399
  %v2528 = vunpack.c.l.b16 %v2400
  %v2529 = vunpack.c.l.b16 %v2401
  %v2530 = vunpack.c.l.b16 %v2402
  %v2531 = vunpack.c.l.b16 %v2403
  %v2532 = vunpack.c.l.b16 %v2404
  %v2533 = vunpack.c.l.b16 %v2405
  %v2534 = vunpack.c.l.b16 %v2406
  %v2535 = vunpack.c.l.b16 %v2407
  %v2536 = vunpack.c.l.b16 %v2408
  %v2537 = vunpack.c.l.b16 %v2409
  %v2538 = vunpack.c.l.b16 %v2410
  %v2539 = vunpack.c.l.b16 %v2411
  %v2540 = vunpack.c.l.b16 %v2412
  %v2541 = vunpack.c.l.b16 %v2413
  %v2542 = vunpack.c.l.b16 %v2414
  %v2543 = vunpack.c.l.b16 %v2415
  %v2544 = vunpack.c.l.b16 %v2416
  %v2545 = vunpack.c.l.b16 %v2417
  %v2546 = vunpack.c.l.b16 %v2418
  %v2547 = vunpack.c.l.b16 %v2419
  %v2548 = vunpack.c.l.b16 %v2420
  %v2549 = vunpack.c.l.b16 %v2421
  %v2550 = vunpack.c.l.b16 %v2422
  %v2551 = vunpack.c.l.b16 %v2423
  %v2552 = vunpack.c.l.b16 %v2424
  %v2553 = vunpack.c.l.b16 %v2425
  %v2554 = vunpack.c.l.b16 %v2426
  %v2555 = vunpack.c.l.b16 %v2427
  %v2556 = vunpack.c.l.b16 %v2428
  %v2557 = vunpack.c.l.b16 %v2429
  %v2558 = vunpack.c.l.b16 %v2430
  %v2559 = vunpack.c.l.b16 %v2431
  %v2560 = vunpack.c.l.b16 %v2432
  %v2561 = vunpack.c.l.b16 %v2433
  %v2562 = vunpack.c.l.b16 %v2434
  %v2563 = vunpack.c.l.b16 %v2435
  %v2564 = vunpack.c.l.b16 %v2436
  %v2565 = vunpack.c.l.b16 %v2437
  %v2566 = vunpack.c.l.b16 %v2438
  %v2567 = vunpack.c.l.b16 %v2439
  %v2568 = vunpack.c.l.b16 %v2440
  %v2569 = vunpack.c.l.b16 %v2441
  %v2570 = vunpack.c.l.b16 %v2442
  %v2571 = vpack.c.b16 %v2508, %v2507
  %v2572 = vpack.c.b16 %v2510, %v2509
  %v2573 = vpack.c.b16 %v2512, %v2511
  %v2574 = vpack.c.b16 %v2514, %v2513
  %v2575 = vpack.c.b16 %v2516, %v2515
  %v2576 = vpack.c.b16 %v2518, %v2517
  %v2577 = vpack.c.b16 %v2520, %v2519
  %v2578 = vpack.c.b16 %v2522, %v2521
  %v2579 = vpack.c.b16 %v2524, %v2523
  %v2580 = vpack.c.b16 %v2526, %v2525
  %v2581 = vpack.c.b16 %v2528, %v2527
  %v2582 = vpack.c.b16 %v2530, %v2529
  %v2583 = vpack.c.b16 %v2532, %v2531
  %v2584 = vpack.c.b16 %v2534, %v2533
  %v2585 = vpack.c.b16 %v2536, %v2535
  %v2586 = vpack.c.b16 %v2538, %v2537
  %v2587 = vpack.c.b16 %v2540, %v2539
  %v2588 = vpack.c.b16 %v2542, %v2541
  %v2589 = vpack.c.b16 %v2544, %v2543
  %v2590 = vpack.c.b16 %v2546, %v2545
  %v2591 = vpack.c.b16 %v2548, %v2547
  %v2592 = vpack.c.b16 %v2550, %v2549
  %v2593 = vpack.c.b16 %v2552, %v2551
  %v2594 = vpack.c.b16 %v2554, %v2553
  %v2595 = vpack.c.b16 %v2556, %v2555
  %v2596 = vpack.c.b16 %v2558, %v2557
  %v2597 = vpack.c.b16 %v2560, %v2559
  %v2598 = vpack.c.b16 %v2562, %v2561
  %v2599 = vpack.c.b16 %v2564, %v2563
  %v2600 = vpack.c.b16 %v2566, %v2565
  %v2601 = vpack.c.b16 %v2568, %v2567
  %v2602 = vpack.c.b16 %v2570, %v2569
  %2635 = vmatprep.subr.bf16.mxu0 0
  %2636 = vmatpush1.bf16.msra.mxu0 %v2571
  %2637 = vmatprep.subr.bf16.mxu0 0
  %2638 = vmatpush1.bf16.msra.mxu0 %v2572
  %2639 = vmatprep.subr.bf16.mxu0 0
  %2640 = vmatpush1.bf16.msra.mxu0 %v2573
  %2641 = vmatprep.subr.bf16.mxu0 0
  %2642 = vmatpush1.bf16.msra.mxu0 %v2574
  %2643 = vmatprep.subr.bf16.mxu0 0
  %2644 = vmatpush1.bf16.msra.mxu0 %v2575
  %2645 = vmatprep.subr.bf16.mxu0 0
  %2646 = vmatpush1.bf16.msra.mxu0 %v2576
  %2647 = vmatprep.subr.bf16.mxu0 0
  %2648 = vmatpush1.bf16.msra.mxu0 %v2577
  %2649 = vmatprep.subr.bf16.mxu0 0
  %2650 = vmatpush1.bf16.msra.mxu0 %v2578
  %2651 = vmatprep.subr.bf16.mxu0 0
  %2652 = vmatpush1.bf16.msra.mxu0 %v2579
  %2653 = vmatprep.subr.bf16.mxu0 0
  %2654 = vmatpush1.bf16.msra.mxu0 %v2580
  %2655 = vmatprep.subr.bf16.mxu0 0
  %2656 = vmatpush1.bf16.msra.mxu0 %v2581
  %2657 = vmatprep.subr.bf16.mxu0 0
  %2658 = vmatpush1.bf16.msra.mxu0 %v2582
  %2659 = vmatprep.subr.bf16.mxu0 0
  %2660 = vmatpush1.bf16.msra.mxu0 %v2583
  %2661 = vmatprep.subr.bf16.mxu0 0
  %2662 = vmatpush1.bf16.msra.mxu0 %v2584
  %2663 = vmatprep.subr.bf16.mxu0 0
  %2664 = vmatpush1.bf16.msra.mxu0 %v2585
  %2665 = vmatprep.subr.bf16.mxu0 0
  %2666 = vmatpush1.bf16.msra.mxu0 %v2586
  %2667 = vmatprep.mubr.bf16.mxu0 %v2376
  %2668 = vmatmul.mubr.bf16.gmra.mrb[0].mxu0 %v2375
  %v2669 = vpop.f32.mrb[0].mxu0
  %v2670 = vadd.f32 0.0, %v2669
  %v2671 = vpop.f32.mrb[0].mxu0
  %v2672 = vpop.f32.mrb[0].mxu0
  %v2673 = vadd.f32 0.0, %v2672
  %v2674 = vpop.f32.mrb[0].mxu0
  %2675 = vdwg.mxu0
  %2676 = vmatprep.subr.bf16.mxu0 0
  %2677 = vmatpush1.bf16.msra.mxu0 %v2587
  %2678 = vmatprep.subr.bf16.mxu0 0
  %2679 = vmatpush1.bf16.msra.mxu0 %v2588
  %2680 = vmatprep.subr.bf16.mxu0 0
  %2681 = vmatpush1.bf16.msra.mxu0 %v2589
  %2682 = vmatprep.subr.bf16.mxu0 0
  %2683 = vmatpush1.bf16.msra.mxu0 %v2590
  %2684 = vmatprep.subr.bf16.mxu0 0
  %2685 = vmatpush1.bf16.msra.mxu0 %v2591
  %2686 = vmatprep.subr.bf16.mxu0 0
  %2687 = vmatpush1.bf16.msra.mxu0 %v2592
  %2688 = vmatprep.subr.bf16.mxu0 0
  %2689 = vmatpush1.bf16.msra.mxu0 %v2593
  %2690 = vmatprep.subr.bf16.mxu0 0
  %2691 = vmatpush1.bf16.msra.mxu0 %v2594
  %2692 = vmatprep.subr.bf16.mxu0 0
  %2693 = vmatpush1.bf16.msra.mxu0 %v2595
  %2694 = vmatprep.subr.bf16.mxu0 0
  %2695 = vmatpush1.bf16.msra.mxu0 %v2596
  %2696 = vmatprep.subr.bf16.mxu0 0
  %2697 = vmatpush1.bf16.msra.mxu0 %v2597
  %2698 = vmatprep.subr.bf16.mxu0 0
  %2699 = vmatpush1.bf16.msra.mxu0 %v2598
  %2700 = vmatprep.subr.bf16.mxu0 0
  %2701 = vmatpush1.bf16.msra.mxu0 %v2599
  %2702 = vmatprep.subr.bf16.mxu0 0
  %2703 = vmatpush1.bf16.msra.mxu0 %v2600
  %2704 = vmatprep.subr.bf16.mxu0 0
  %2705 = vmatpush1.bf16.msra.mxu0 %v2601
  %2706 = vmatprep.subr.bf16.mxu0 0
  %2707 = vmatpush1.bf16.msra.mxu0 %v2602
  %2708 = vmatprep.mubr.bf16.mxu0 %v2378
  %2709 = vmatmul.mubr.bf16.gmra.mrb[0].mxu0 %v2377
  %v2710 = vpop.f32.mrb[0].mxu0
  %v2711 = vadd.f32 %v2670, %v2710
  %v2712 = vpop.f32.mrb[0].mxu0
  %v2713 = vpop.f32.mrb[0].mxu0
  %v2714 = vadd.f32 %v2673, %v2713
  %v2715 = vpop.f32.mrb[0].mxu0
  %2716 = vdwg.mxu0
  %v2717 = vadd.f32 %v2205, %v2711
  %v2718 = vadd.f32 %v2208, %v2714
  %v2719 = vld [vmem:[%s9 + $0x30] sm:$0xff]
  %v2720 = vld [vmem:[%s9 + $0x38] sm:$0xff]
  %v2721 = vld [vmem:[%s9 + $0x70] sm:$0xff]
  %v2722 = vld [vmem:[%s9 + $0x78] sm:$0xff]
  %v2723 = vld [vmem:[%s9 + $0xb0] sm:$0xff]
  %v2724 = vld [vmem:[%s9 + $0xb8] sm:$0xff]
  %v2725 = vld [vmem:[%s9 + $0xf0] sm:$0xff]
  %v2726 = vld [vmem:[%s9 + $0xf8] sm:$0xff]
  %v2727 = vld [vmem:[%s10 + $0xc] sm:$0xf]
  %v2729 = vlaneseq
  %v2730 = vshrl.u32 %v2729, 7
  %v2731 = vsub.s32 0, %v2730
  %v2732 = vrot.slane %v2727, %v2731
  %v2733 = vlaneseq
  %v2734 = vshrl.u32 %v2733, 7
  %v2735 = vsub.s32 1, %v2734
  %v2736 = vrot.slane %v2727, %v2735
  %v2737 = vlaneseq
  %v2738 = vshrl.u32 %v2737, 7
  %v2739 = vsub.s32 2, %v2738
  %v2740 = vrot.slane %v2727, %v2739
  %v2741 = vlaneseq
  %v2742 = vshrl.u32 %v2741, 7
  %v2743 = vsub.s32 3, %v2742
  %v2744 = vrot.slane %v2727, %v2743
  %v2757 = vunpack.c.l.b16 %v2719
  %v2758 = vunpack.c.h.b16 %v2719
  %v2759 = vunpack.c.l.b16 %v2720
  %v2760 = vunpack.c.h.b16 %v2720
  %v2761 = vunpack.c.l.b16 %v2721
  %v2762 = vunpack.c.h.b16 %v2721
  %v2763 = vunpack.c.l.b16 %v2722
  %v2764 = vunpack.c.h.b16 %v2722
  %v2765 = vunpack.c.l.b16 %v2723
  %v2766 = vunpack.c.h.b16 %v2723
  %v2767 = vunpack.c.l.b16 %v2724
  %v2768 = vunpack.c.h.b16 %v2724
  %v2769 = vunpack.c.l.b16 %v2725
  %v2770 = vunpack.c.h.b16 %v2725
  %v2771 = vunpack.c.l.b16 %v2726
  %v2772 = vunpack.c.h.b16 %v2726
  %v2773 = vpack.c.b16 %v2761, %v2757
  %v2774 = vpack.c.b16 %v2762, %v2758
  %v2775 = vpack.c.b16 %v2763, %v2759
  %v2776 = vpack.c.b16 %v2764, %v2760
  %v2777 = vpack.c.b16 %v2769, %v2765
  %v2778 = vpack.c.b16 %v2770, %v2766
  %v2779 = vpack.c.b16 %v2771, %v2767
  %v2780 = vpack.c.b16 %v2772, %v2768
  %2789 = vmatprep.subr.bf16.mxu0 %v2774
  %2790 = vmatpush1.bf16.msra.mxu0 %v2773
  %2791 = vmatprep.subr.bf16.mxu0 %v2778
  %2792 = vmatpush1.bf16.msra.mxu0 %v2777
  %2793 = vmatprep.subr.bf16.mxu0 0
  %2794 = vmatpush1.bf16.msra.mxu0 0
  %2795 = vmatprep.subr.bf16.mxu0 0
  %2796 = vmatpush1.bf16.msra.mxu0 0
  %2797 = vmatprep.subr.bf16.mxu0 0
  %2798 = vmatpush1.bf16.msra.mxu0 0
  %2799 = vmatprep.subr.bf16.mxu0 0
  %2800 = vmatpush1.bf16.msra.mxu0 0
  %2801 = vmatprep.subr.bf16.mxu0 0
  %2802 = vmatpush1.bf16.msra.mxu0 0
  %2803 = vmatprep.subr.bf16.mxu0 0
  %2804 = vmatpush1.bf16.msra.mxu0 0
  %2805 = vmatprep.subr.bf16.mxu0 0
  %2806 = vmatpush1.bf16.msra.mxu0 0
  %2807 = vmatprep.subr.bf16.mxu0 0
  %2808 = vmatpush1.bf16.msra.mxu0 0
  %2809 = vmatprep.subr.bf16.mxu0 0
  %2810 = vmatpush1.bf16.msra.mxu0 0
  %2811 = vmatprep.subr.bf16.mxu0 0
  %2812 = vmatpush1.bf16.msra.mxu0 0
  %2813 = vmatprep.subr.bf16.mxu0 0
  %2814 = vmatpush1.bf16.msra.mxu0 0
  %2815 = vmatprep.subr.bf16.mxu0 0
  %2816 = vmatpush1.bf16.msra.mxu0 0
  %2817 = vmatprep.subr.bf16.mxu0 0
  %2818 = vmatpush1.bf16.msra.mxu0 0
  %2819 = vmatprep.subr.bf16.mxu0 0
  %2820 = vmatpush1.bf16.msra.mxu0 0
  %2821 = vmatprep.mubr.bf16.mxu0 0
  %2822 = vmatmul.mubr.bf16.gmra.mrb[0].mxu0 %v1267
  %v2823 = vpop.f32.mrb[0].mxu0
  %v2824 = vadd.f32 %v2732, %v2823
  %v2825 = vpop.f32.mrb[0].mxu0
  %v2826 = vadd.f32 %v2736, %v2825
  %v2827 = vpop.f32.mrb[0].mxu0
  %v2828 = vadd.f32 %v2732, %v2827
  %v2829 = vpop.f32.mrb[0].mxu0
  %v2830 = vadd.f32 %v2736, %v2829
  %2831 = vdwg.mxu0
  %2832 = vmatprep.subr.bf16.mxu0 %v2776
  %2833 = vmatpush1.bf16.msra.mxu0 %v2775
  %2834 = vmatprep.subr.bf16.mxu0 %v2780
  %2835 = vmatpush1.bf16.msra.mxu0 %v2779
  %2836 = vmatprep.subr.bf16.mxu0 0
  %2837 = vmatpush1.bf16.msra.mxu0 0
  %2838 = vmatprep.subr.bf16.mxu0 0
  %2839 = vmatpush1.bf16.msra.mxu0 0
  %2840 = vmatprep.subr.bf16.mxu0 0
  %2841 = vmatpush1.bf16.msra.mxu0 0
  %2842 = vmatprep.subr.bf16.mxu0 0
  %2843 = vmatpush1.bf16.msra.mxu0 0
  %2844 = vmatprep.subr.bf16.mxu0 0
  %2845 = vmatpush1.bf16.msra.mxu0 0
  %2846 = vmatprep.subr.bf16.mxu0 0
  %2847 = vmatpush1.bf16.msra.mxu0 0
  %2848 = vmatprep.subr.bf16.mxu0 0
  %2849 = vmatpush1.bf16.msra.mxu0 0
  %2850 = vmatprep.subr.bf16.mxu0 0
  %2851 = vmatpush1.bf16.msra.mxu0 0
  %2852 = vmatprep.subr.bf16.mxu0 0
  %2853 = vmatpush1.bf16.msra.mxu0 0
  %2854 = vmatprep.subr.bf16.mxu0 0
  %2855 = vmatpush1.bf16.msra.mxu0 0
  %2856 = vmatprep.subr.bf16.mxu0 0
  %2857 = vmatpush1.bf16.msra.mxu0 0
  %2858 = vmatprep.subr.bf16.mxu0 0
  %2859 = vmatpush1.bf16.msra.mxu0 0
  %2860 = vmatprep.subr.bf16.mxu0 0
  %2861 = vmatpush1.bf16.msra.mxu0 0
  %2862 = vmatprep.subr.bf16.mxu0 0
  %2863 = vmatpush1.bf16.msra.mxu0 0
  %2864 = vmatprep.mubr.bf16.mxu0 0
  %2865 = vmatmul.mubr.bf16.gmra.mrb[0].mxu0 %v1267
  %v2866 = vpop.f32.mrb[0].mxu0
  %v2867 = vadd.f32 %v2740, %v2866
  %v2868 = vpop.f32.mrb[0].mxu0
  %v2869 = vadd.f32 %v2744, %v2868
  %v2870 = vpop.f32.mrb[0].mxu0
  %v2871 = vadd.f32 %v2740, %v2870
  %v2872 = vpop.f32.mrb[0].mxu0
  %v2873 = vadd.f32 %v2744, %v2872
  %2874 = vdwg.mxu0
  %v2875 = vmax.f32 %v2824, 0.0
  %v2876 = vmax.f32 %v2826, 0.0
  %v2877 = vmax.f32 %v2867, 0.0
  %v2878 = vmax.f32 %v2869, 0.0
  %v2879 = vmax.f32 %v2828, 0.0
  %v2880 = vmax.f32 %v2830, 0.0
  %v2881 = vmax.f32 %v2871, 0.0
  %v2882 = vmax.f32 %v2873, 0.0
  %v2883 = vpack.c.bf16 %v2879, %v2875
  %v2884 = vpack.c.bf16 %v2880, %v2876
  %v2885 = vpack.c.bf16 %v2881, %v2877
  %v2886 = vpack.c.bf16 %v2882, %v2878
  %v2887 = vld [vmem:[%s11 + $0x300] sm:$0xf]
  %v2888 = vld [vmem:[%s11 + $0x304] sm:$0xf]
  %v2889 = vld [vmem:[%s11 + $0x308] sm:$0xf]
  %v2890 = vld [vmem:[%s11 + $0x30c] sm:$0xf]
  %v2891 = vld [vmem:[%s11 + $0x310] sm:$0xf]
  %v2892 = vld [vmem:[%s11 + $0x314] sm:$0xf]
  %v2893 = vld [vmem:[%s11 + $0x318] sm:$0xf]
  %v2894 = vld [vmem:[%s11 + $0x31c] sm:$0xf]
  %v2895 = vld [vmem:[%s11 + $0x320] sm:$0xf]
  %v2896 = vld [vmem:[%s11 + $0x324] sm:$0xf]
  %v2897 = vld [vmem:[%s11 + $0x328] sm:$0xf]
  %v2898 = vld [vmem:[%s11 + $0x32c] sm:$0xf]
  %v2899 = vld [vmem:[%s11 + $0x330] sm:$0xf]
  %v2900 = vld [vmem:[%s11 + $0x334] sm:$0xf]
  %v2901 = vld [vmem:[%s11 + $0x338] sm:$0xf]
  %v2902 = vld [vmem:[%s11 + $0x33c] sm:$0xf]
  %v2903 = vld [vmem:[%s11 + $0x340] sm:$0xf]
  %v2904 = vld [vmem:[%s11 + $0x344] sm:$0xf]
  %v2905 = vld [vmem:[%s11 + $0x348] sm:$0xf]
  %v2906 = vld [vmem:[%s11 + $0x34c] sm:$0xf]
  %v2907 = vld [vmem:[%s11 + $0x350] sm:$0xf]
  %v2908 = vld [vmem:[%s11 + $0x354] sm:$0xf]
  %v2909 = vld [vmem:[%s11 + $0x358] sm:$0xf]
  %v2910 = vld [vmem:[%s11 + $0x35c] sm:$0xf]
  %v2911 = vld [vmem:[%s11 + $0x360] sm:$0xf]
  %v2912 = vld [vmem:[%s11 + $0x364] sm:$0xf]
  %v2913 = vld [vmem:[%s11 + $0x368] sm:$0xf]
  %v2914 = vld [vmem:[%s11 + $0x36c] sm:$0xf]
  %v2915 = vld [vmem:[%s11 + $0x370] sm:$0xf]
  %v2916 = vld [vmem:[%s11 + $0x374] sm:$0xf]
  %v2917 = vld [vmem:[%s11 + $0x378] sm:$0xf]
  %v2918 = vld [vmem:[%s11 + $0x37c] sm:$0xf]
  %v2919 = vld [vmem:[%s11 + $0x380] sm:$0xf]
  %v2920 = vld [vmem:[%s11 + $0x384] sm:$0xf]
  %v2921 = vld [vmem:[%s11 + $0x388] sm:$0xf]
  %v2922 = vld [vmem:[%s11 + $0x38c] sm:$0xf]
  %v2923 = vld [vmem:[%s11 + $0x390] sm:$0xf]
  %v2924 = vld [vmem:[%s11 + $0x394] sm:$0xf]
  %v2925 = vld [vmem:[%s11 + $0x398] sm:$0xf]
  %v2926 = vld [vmem:[%s11 + $0x39c] sm:$0xf]
  %v2927 = vld [vmem:[%s11 + $0x3a0] sm:$0xf]
  %v2928 = vld [vmem:[%s11 + $0x3a4] sm:$0xf]
  %v2929 = vld [vmem:[%s11 + $0x3a8] sm:$0xf]
  %v2930 = vld [vmem:[%s11 + $0x3ac] sm:$0xf]
  %v2931 = vld [vmem:[%s11 + $0x3b0] sm:$0xf]
  %v2932 = vld [vmem:[%s11 + $0x3b4] sm:$0xf]
  %v2933 = vld [vmem:[%s11 + $0x3b8] sm:$0xf]
  %v2934 = vld [vmem:[%s11 + $0x3bc] sm:$0xf]
  %v2935 = vld [vmem:[%s11 + $0x3c0] sm:$0xf]
  %v2936 = vld [vmem:[%s11 + $0x3c4] sm:$0xf]
  %v2937 = vld [vmem:[%s11 + $0x3c8] sm:$0xf]
  %v2938 = vld [vmem:[%s11 + $0x3cc] sm:$0xf]
  %v2939 = vld [vmem:[%s11 + $0x3d0] sm:$0xf]
  %v2940 = vld [vmem:[%s11 + $0x3d4] sm:$0xf]
  %v2941 = vld [vmem:[%s11 + $0x3d8] sm:$0xf]
  %v2942 = vld [vmem:[%s11 + $0x3dc] sm:$0xf]
  %v2943 = vld [vmem:[%s11 + $0x3e0] sm:$0xf]
  %v2944 = vld [vmem:[%s11 + $0x3e4] sm:$0xf]
  %v2945 = vld [vmem:[%s11 + $0x3e8] sm:$0xf]
  %v2946 = vld [vmem:[%s11 + $0x3ec] sm:$0xf]
  %v2947 = vld [vmem:[%s11 + $0x3f0] sm:$0xf]
  %v2948 = vld [vmem:[%s11 + $0x3f4] sm:$0xf]
  %v2949 = vld [vmem:[%s11 + $0x3f8] sm:$0xf]
  %v2950 = vld [vmem:[%s11 + $0x3fc] sm:$0xf]
  %v3015 = vunpack.c.l.b16 %v2887
  %v3016 = vunpack.c.l.b16 %v2888
  %v3017 = vunpack.c.l.b16 %v2889
  %v3018 = vunpack.c.l.b16 %v2890
  %v3019 = vunpack.c.l.b16 %v2891
  %v3020 = vunpack.c.l.b16 %v2892
  %v3021 = vunpack.c.l.b16 %v2893
  %v3022 = vunpack.c.l.b16 %v2894
  %v3023 = vunpack.c.l.b16 %v2895
  %v3024 = vunpack.c.l.b16 %v2896
  %v3025 = vunpack.c.l.b16 %v2897
  %v3026 = vunpack.c.l.b16 %v2898
  %v3027 = vunpack.c.l.b16 %v2899
  %v3028 = vunpack.c.l.b16 %v2900
  %v3029 = vunpack.c.l.b16 %v2901
  %v3030 = vunpack.c.l.b16 %v2902
  %v3031 = vunpack.c.l.b16 %v2903
  %v3032 = vunpack.c.l.b16 %v2904
  %v3033 = vunpack.c.l.b16 %v2905
  %v3034 = vunpack.c.l.b16 %v2906
  %v3035 = vunpack.c.l.b16 %v2907
  %v3036 = vunpack.c.l.b16 %v2908
  %v3037 = vunpack.c.l.b16 %v2909
  %v3038 = vunpack.c.l.b16 %v2910
  %v3039 = vunpack.c.l.b16 %v2911
  %v3040 = vunpack.c.l.b16 %v2912
  %v3041 = vunpack.c.l.b16 %v2913
  %v3042 = vunpack.c.l.b16 %v2914
  %v3043 = vunpack.c.l.b16 %v2915
  %v3044 = vunpack.c.l.b16 %v2916
  %v3045 = vunpack.c.l.b16 %v2917
  %v3046 = vunpack.c.l.b16 %v2918
  %v3047 = vunpack.c.l.b16 %v2919
  %v3048 = vunpack.c.l.b16 %v2920
  %v3049 = vunpack.c.l.b16 %v2921
  %v3050 = vunpack.c.l.b16 %v2922
  %v3051 = vunpack.c.l.b16 %v2923
  %v3052 = vunpack.c.l.b16 %v2924
  %v3053 = vunpack.c.l.b16 %v2925
  %v3054 = vunpack.c.l.b16 %v2926
  %v3055 = vunpack.c.l.b16 %v2927
  %v3056 = vunpack.c.l.b16 %v2928
  %v3057 = vunpack.c.l.b16 %v2929
  %v3058 = vunpack.c.l.b16 %v2930
  %v3059 = vunpack.c.l.b16 %v2931
  %v3060 = vunpack.c.l.b16 %v2932
  %v3061 = vunpack.c.l.b16 %v2933
  %v3062 = vunpack.c.l.b16 %v2934
  %v3063 = vunpack.c.l.b16 %v2935
  %v3064 = vunpack.c.l.b16 %v2936
  %v3065 = vunpack.c.l.b16 %v2937
  %v3066 = vunpack.c.l.b16 %v2938
  %v3067 = vunpack.c.l.b16 %v2939
  %v3068 = vunpack.c.l.b16 %v2940
  %v3069 = vunpack.c.l.b16 %v2941
  %v3070 = vunpack.c.l.b16 %v2942
  %v3071 = vunpack.c.l.b16 %v2943
  %v3072 = vunpack.c.l.b16 %v2944
  %v3073 = vunpack.c.l.b16 %v2945
  %v3074 = vunpack.c.l.b16 %v2946
  %v3075 = vunpack.c.l.b16 %v2947
  %v3076 = vunpack.c.l.b16 %v2948
  %v3077 = vunpack.c.l.b16 %v2949
  %v3078 = vunpack.c.l.b16 %v2950
  %v3079 = vpack.c.b16 %v3016, %v3015
  %v3080 = vpack.c.b16 %v3018, %v3017
  %v3081 = vpack.c.b16 %v3020, %v3019
  %v3082 = vpack.c.b16 %v3022, %v3021
  %v3083 = vpack.c.b16 %v3024, %v3023
  %v3084 = vpack.c.b16 %v3026, %v3025
  %v3085 = vpack.c.b16 %v3028, %v3027
  %v3086 = vpack.c.b16 %v3030, %v3029
  %v3087 = vpack.c.b16 %v3032, %v3031
  %v3088 = vpack.c.b16 %v3034, %v3033
  %v3089 = vpack.c.b16 %v3036, %v3035
  %v3090 = vpack.c.b16 %v3038, %v3037
  %v3091 = vpack.c.b16 %v3040, %v3039
  %v3092 = vpack.c.b16 %v3042, %v3041
  %v3093 = vpack.c.b16 %v3044, %v3043
  %v3094 = vpack.c.b16 %v3046, %v3045
  %v3095 = vpack.c.b16 %v3048, %v3047
  %v3096 = vpack.c.b16 %v3050, %v3049
  %v3097 = vpack.c.b16 %v3052, %v3051
  %v3098 = vpack.c.b16 %v3054, %v3053
  %v3099 = vpack.c.b16 %v3056, %v3055
  %v3100 = vpack.c.b16 %v3058, %v3057
  %v3101 = vpack.c.b16 %v3060, %v3059
  %v3102 = vpack.c.b16 %v3062, %v3061
  %v3103 = vpack.c.b16 %v3064, %v3063
  %v3104 = vpack.c.b16 %v3066, %v3065
  %v3105 = vpack.c.b16 %v3068, %v3067
  %v3106 = vpack.c.b16 %v3070, %v3069
  %v3107 = vpack.c.b16 %v3072, %v3071
  %v3108 = vpack.c.b16 %v3074, %v3073
  %v3109 = vpack.c.b16 %v3076, %v3075
  %v3110 = vpack.c.b16 %v3078, %v3077
  %3143 = vmatprep.subr.bf16.mxu0 0
  %3144 = vmatpush1.bf16.msra.mxu0 %v3079
  %3145 = vmatprep.subr.bf16.mxu0 0
  %3146 = vmatpush1.bf16.msra.mxu0 %v3080
  %3147 = vmatprep.subr.bf16.mxu0 0
  %3148 = vmatpush1.bf16.msra.mxu0 %v3081
  %3149 = vmatprep.subr.bf16.mxu0 0
  %3150 = vmatpush1.bf16.msra.mxu0 %v3082
  %3151 = vmatprep.subr.bf16.mxu0 0
  %3152 = vmatpush1.bf16.msra.mxu0 %v3083
  %3153 = vmatprep.subr.bf16.mxu0 0
  %3154 = vmatpush1.bf16.msra.mxu0 %v3084
  %3155 = vmatprep.subr.bf16.mxu0 0
  %3156 = vmatpush1.bf16.msra.mxu0 %v3085
  %3157 = vmatprep.subr.bf16.mxu0 0
  %3158 = vmatpush1.bf16.msra.mxu0 %v3086
  %3159 = vmatprep.subr.bf16.mxu0 0
  %3160 = vmatpush1.bf16.msra.mxu0 %v3087
  %3161 = vmatprep.subr.bf16.mxu0 0
  %3162 = vmatpush1.bf16.msra.mxu0 %v3088
  %3163 = vmatprep.subr.bf16.mxu0 0
  %3164 = vmatpush1.bf16.msra.mxu0 %v3089
  %3165 = vmatprep.subr.bf16.mxu0 0
  %3166 = vmatpush1.bf16.msra.mxu0 %v3090
  %3167 = vmatprep.subr.bf16.mxu0 0
  %3168 = vmatpush1.bf16.msra.mxu0 %v3091
  %3169 = vmatprep.subr.bf16.mxu0 0
  %3170 = vmatpush1.bf16.msra.mxu0 %v3092
  %3171 = vmatprep.subr.bf16.mxu0 0
  %3172 = vmatpush1.bf16.msra.mxu0 %v3093
  %3173 = vmatprep.subr.bf16.mxu0 0
  %3174 = vmatpush1.bf16.msra.mxu0 %v3094
  %3175 = vmatprep.mubr.bf16.mxu0 %v2884
  %3176 = vmatmul.mubr.bf16.gmra.mrb[0].mxu0 %v2883
  %v3177 = vpop.f32.mrb[0].mxu0
  %v3178 = vadd.f32 0.0, %v3177
  %v3179 = vpop.f32.mrb[0].mxu0
  %v3180 = vpop.f32.mrb[0].mxu0
  %v3181 = vadd.f32 0.0, %v3180
  %v3182 = vpop.f32.mrb[0].mxu0
  %3183 = vdwg.mxu0
  %3184 = vmatprep.subr.bf16.mxu0 0
  %3185 = vmatpush1.bf16.msra.mxu0 %v3095
  %3186 = vmatprep.subr.bf16.mxu0 0
  %3187 = vmatpush1.bf16.msra.mxu0 %v3096
  %3188 = vmatprep.subr.bf16.mxu0 0
  %3189 = vmatpush1.bf16.msra.mxu0 %v3097
  %3190 = vmatprep.subr.bf16.mxu0 0
  %3191 = vmatpush1.bf16.msra.mxu0 %v3098
  %3192 = vmatprep.subr.bf16.mxu0 0
  %3193 = vmatpush1.bf16.msra.mxu0 %v3099
  %3194 = vmatprep.subr.bf16.mxu0 0
  %3195 = vmatpush1.bf16.msra.mxu0 %v3100
  %3196 = vmatprep.subr.bf16.mxu0 0
  %3197 = vmatpush1.bf16.msra.mxu0 %v3101
  %3198 = vmatprep.subr.bf16.mxu0 0
  %3199 = vmatpush1.bf16.msra.mxu0 %v3102
  %3200 = vmatprep.subr.bf16.mxu0 0
  %3201 = vmatpush1.bf16.msra.mxu0 %v3103
  %3202 = vmatprep.subr.bf16.mxu0 0
  %3203 = vmatpush1.bf16.msra.mxu0 %v3104
  %3204 = vmatprep.subr.bf16.mxu0 0
  %3205 = vmatpush1.bf16.msra.mxu0 %v3105
  %3206 = vmatprep.subr.bf16.mxu0 0
  %3207 = vmatpush1.bf16.msra.mxu0 %v3106
  %3208 = vmatprep.subr.bf16.mxu0 0
  %3209 = vmatpush1.bf16.msra.mxu0 %v3107
  %3210 = vmatprep.subr.bf16.mxu0 0
  %3211 = vmatpush1.bf16.msra.mxu0 %v3108
  %3212 = vmatprep.subr.bf16.mxu0 0
  %3213 = vmatpush1.bf16.msra.mxu0 %v3109
  %3214 = vmatprep.subr.bf16.mxu0 0
  %3215 = vmatpush1.bf16.msra.mxu0 %v3110
  %3216 = vmatprep.mubr.bf16.mxu0 %v2886
  %3217 = vmatmul.mubr.bf16.gmra.mrb[0].mxu0 %v2885
  %v3218 = vpop.f32.mrb[0].mxu0
  %v3219 = vadd.f32 %v3178, %v3218
  %v3220 = vpop.f32.mrb[0].mxu0
  %v3221 = vpop.f32.mrb[0].mxu0
  %v3222 = vadd.f32 %v3181, %v3221
  %v3223 = vpop.f32.mrb[0].mxu0
  %3224 = vdwg.mxu0
  %v3225 = vadd.f32 %v2717, %v3219
  %v3226 = vadd.f32 %v2718, %v3222
  %v3227 = vld [vmem:[%s12] sm:$0x1]
  %v3229 = vlaneseq
  %v3230 = vshrl.u32 %v3229, 7
  %v3231 = vsub.s32 0, %v3230
  %v3232 = vrot.slane %v3227, %v3231
  %v3234 = vadd.f32 %v3225, %v3232
  %v3235 = vadd.f32 %v3226, %v3232
  %v3236 = vadd.f32 %v1193, %v3234
  %v3237 = vadd.f32 %v1194, %v3235
  %v3238 = vld [vmem:[%s13] sm:$0x1]
  %v3239 = vld [vmem:[%s14] sm:$0x1]
  %v3240 = vsel %vm113, %v3236, 0.0
  %3241 = vadd.xlane.f32.xlu0 %v3240
  %v3242 = vpop.xlane.xlu0 %3241
  %v3243 = vsel %vm113, %v3237, 0.0
  %3244 = vadd.xlane.f32.xlu0 %v3243
  %v3245 = vpop.xlane.xlu0 %3244
  %v3246 = vmul.f32 %v3242, %v1158
  %v3247 = vmul.f32 %v3245, %v1158
  %v3248 = vsub.f32 %v3236, %v3246
  %v3249 = vsub.f32 %v3237, %v3247
  %v3250 = vmul.f32 %v3248, %v3248
  %v3251 = vmul.f32 %v3249, %v3249
  %v3252 = vsel %vm113, %v3250, 0.0
  %3253 = vadd.xlane.f32.xlu0 %v3252
  %v3254 = vpop.xlane.xlu0 %3253
  %v3255 = vsel %vm113, %v3251, 0.0
  %3256 = vadd.xlane.f32.xlu0 %v3255
  %v3257 = vpop.xlane.xlu0 %3256
  %v3258 = vmul.f32 %v3254, %v1158
  %v3259 = vmul.f32 %v3257, %v1158
  %v3260 = vadd.f32 %v3258, 1e-05
  %v3261 = vadd.f32 %v3259, 1e-05
  %v3262 = vrsqrt.pop %v3260
  %v3263 = vrsqrt.pop %v3261
  %v3264 = vmul.f32 %v3248, %v3262
  %v3265 = vmul.f32 %v3249, %v3263
  %v3267 = vlaneseq
  %v3268 = vshrl.u32 %v3267, 7
  %v3269 = vsub.s32 0, %v3268
  %v3270 = vrot.slane %v3238, %v3269
  %v3272 = vmul.f32 %v3264, %v3270
  %v3273 = vmul.f32 %v3265, %v3270
  %v3275 = vlaneseq
  %v3276 = vshrl.u32 %v3275, 7
  %v3277 = vsub.s32 0, %v3276
  %v3278 = vrot.slane %v3239, %v3277
  %v3280 = vadd.f32 %v3272, %v3278
  %v3281 = vadd.f32 %v3273, %v3278
  %v3282 = vpack.c.bf16 %v3281, %v3280
  %s3283 = scalar_lea.vmem %s3, 16
  %v3284 = vld [vmem:[%s3283] sm:$0xf]
  %v3285 = vld [vmem:[%s3283 + $0x4] sm:$0xf]
  %v3286 = vld [vmem:[%s3283 + $0x8] sm:$0xf]
  %v3287 = vld [vmem:[%s3283 + $0xc] sm:$0xf]
  %s3288 = scalar_lea.vmem %s4, 1
  %v3289 = vld [vmem:[%s3288] sm:$0x1]
  %v3291 = vlaneseq
  %v3292 = vshrl.u32 %v3291, 7
  %v3293 = vsub.s32 0, %v3292
  %v3294 = vrot.slane %v3289, %v3293
  %v3300 = vunpack.c.l.b16 %v3284
  %v3301 = vunpack.c.l.b16 %v3285
  %v3302 = vunpack.c.l.b16 %v3286
  %v3303 = vunpack.c.l.b16 %v3287
  %v3304 = vpack.c.b16 %v3301, %v3300
  %v3305 = vpack.c.b16 %v3303, %v3302
  %v3309 = vsel %vm113, %v3282, 0
  %3311 = vmatprep.subr.bf16.mxu0 0
  %3312 = vmatpush1.bf16.msra.mxu0 %v3304
  %3313 = vmatprep.subr.bf16.mxu0 0
  %3314 = vmatpush1.bf16.msra.mxu0 %v3305
  %3315 = vmatprep.subr.bf16.mxu0 0
  %3316 = vmatpush1.bf16.msra.mxu0 0
  %3317 = vmatprep.subr.bf16.mxu0 0
  %3318 = vmatpush1.bf16.msra.mxu0 0
  %3319 = vmatprep.subr.bf16.mxu0 0
  %3320 = vmatpush1.bf16.msra.mxu0 0
  %3321 = vmatprep.subr.bf16.mxu0 0
  %3322 = vmatpush1.bf16.msra.mxu0 0
  %3323 = vmatprep.subr.bf16.mxu0 0
  %3324 = vmatpush1.bf16.msra.mxu0 0
  %3325 = vmatprep.subr.bf16.mxu0 0
  %3326 = vmatpush1.bf16.msra.mxu0 0
  %3327 = vmatprep.subr.bf16.mxu0 0
  %3328 = vmatpush1.bf16.msra.mxu0 0
  %3329 = vmatprep.subr.bf16.mxu0 0
  %3330 = vmatpush1.bf16.msra.mxu0 0
  %3331 = vmatprep.subr.bf16.mxu0 0
  %3332 = vmatpush1.bf16.msra.mxu0 0
  %3333 = vmatprep.subr.bf16.mxu0 0
  %3334 = vmatpush1.bf16.msra.mxu0 0
  %3335 = vmatprep.subr.bf16.mxu0 0
  %3336 = vmatpush1.bf16.msra.mxu0 0
  %3337 = vmatprep.subr.bf16.mxu0 0
  %3338 = vmatpush1.bf16.msra.mxu0 0
  %3339 = vmatprep.subr.bf16.mxu0 0
  %3340 = vmatpush1.bf16.msra.mxu0 0
  %3341 = vmatprep.subr.bf16.mxu0 0
  %3342 = vmatpush1.bf16.msra.mxu0 0
  %3343 = vmatprep.mubr.bf16.mxu0 0
  %3344 = vmatmul.mubr.bf16.gmra.mrb[0].mxu0 %v3309
  %v3345 = vpop.f32.mrb[0].mxu0
  %v3346 = vadd.f32 %v3294, %v3345
  %v3347 = vpop.f32.mrb[0].mxu0
  %v3348 = vpop.f32.mrb[0].mxu0
  %v3349 = vadd.f32 %v3294, %v3348
  %v3350 = vpop.f32.mrb[0].mxu0
  %3351 = vdwg.mxu0
  %v3352 = vpack.c.bf16 %v3346, %v3346
  %v3353 = vpack.c.bf16 %v3349, %v3349
  %3355 = vrot.lane.b32.xlu0 %v3352, 96
  %v3356 = vpop.permute.xlu0 %3355
  %v3358 = vsel %vm163, %v3352, 0
  %v3361 = vsel %vm163, %v3356, 0
  %3363 = vmatprep.subr.bf16.mxu0 0
  %3364 = vmatpush1.bf16.xpose.msra.mxu0 %v3361
  %3365 = vmatprep.subr.bf16.mxu0 0
  %3366 = vmatpush1.bf16.xpose.msra.mxu0 0
  %3367 = vmatprep.subr.bf16.mxu0 0
  %3368 = vmatpush1.bf16.xpose.msra.mxu0 0
  %3369 = vmatprep.subr.bf16.mxu0 0
  %3370 = vmatpush1.bf16.xpose.msra.mxu0 0
  %3371 = vmatprep.subr.bf16.mxu0 0
  %3372 = vmatpush1.bf16.xpose.msra.mxu0 0
  %3373 = vmatprep.subr.bf16.mxu0 0
  %3374 = vmatpush1.bf16.xpose.msra.mxu0 0
  %3375 = vmatprep.subr.bf16.mxu0 0
  %3376 = vmatpush1.bf16.xpose.msra.mxu0 0
  %3377 = vmatprep.subr.bf16.mxu0 0
  %3378 = vmatpush1.bf16.xpose.msra.mxu0 0
  %3379 = vmatprep.subr.bf16.mxu0 0
  %3380 = vmatpush1.bf16.xpose.msra.mxu0 0
  %3381 = vmatprep.subr.bf16.mxu0 0
  %3382 = vmatpush1.bf16.xpose.msra.mxu0 0
  %3383 = vmatprep.subr.bf16.mxu0 0
  %3384 = vmatpush1.bf16.xpose.msra.mxu0 0
  %3385 = vmatprep.subr.bf16.mxu0 0
  %3386 = vmatpush1.bf16.xpose.msra.mxu0 0
  %3387 = vmatprep.subr.bf16.mxu0 0
  %3388 = vmatpush1.bf16.xpose.msra.mxu0 0
  %3389 = vmatprep.subr.bf16.mxu0 0
  %3390 = vmatpush1.bf16.xpose.msra.mxu0 0
  %3391 = vmatprep.subr.bf16.mxu0 0
  %3392 = vmatpush1.bf16.xpose.msra.mxu0 0
  %3393 = vmatprep.subr.bf16.mxu0 0
  %3394 = vmatpush1.bf16.xpose.msra.mxu0 0
  %3395 = vmatprep.mubr.bf16.mxu0 0
  %3396 = vmatmul.mubr.bf16.gmra.mrb[0].mxu0 %v3358
  %v3397 = vpop.f32.mrb[0].mxu0
  %v3398 = vadd.f32 0.0, %v3397
  %v3399 = vpop.f32.mrb[0].mxu0
  %v3400 = vpop.f32.mrb[0].mxu0
  %v3401 = vpop.f32.mrb[0].mxu0
  %3402 = vdwg.mxu0
  %3404 = vrot.lane.b32.xlu0 %v3353, 96
  %v3405 = vpop.permute.xlu0 %3404
  %v3407 = vsel %vm163, %v3353, 0
  %v3410 = vsel %vm163, %v3405, 0
  %3412 = vmatprep.subr.bf16.mxu0 0
  %3413 = vmatpush1.bf16.xpose.msra.mxu0 %v3410
  %3414 = vmatprep.subr.bf16.mxu0 0
  %3415 = vmatpush1.bf16.xpose.msra.mxu0 0
  %3416 = vmatprep.subr.bf16.mxu0 0
  %3417 = vmatpush1.bf16.xpose.msra.mxu0 0
  %3418 = vmatprep.subr.bf16.mxu0 0
  %3419 = vmatpush1.bf16.xpose.msra.mxu0 0
  %3420 = vmatprep.subr.bf16.mxu0 0
  %3421 = vmatpush1.bf16.xpose.msra.mxu0 0
  %3422 = vmatprep.subr.bf16.mxu0 0
  %3423 = vmatpush1.bf16.xpose.msra.mxu0 0
  %3424 = vmatprep.subr.bf16.mxu0 0
  %3425 = vmatpush1.bf16.xpose.msra.mxu0 0
  %3426 = vmatprep.subr.bf16.mxu0 0
  %3427 = vmatpush1.bf16.xpose.msra.mxu0 0
  %3428 = vmatprep.subr.bf16.mxu0 0
  %3429 = vmatpush1.bf16.xpose.msra.mxu0 0
  %3430 = vmatprep.subr.bf16.mxu0 0
  %3431 = vmatpush1.bf16.xpose.msra.mxu0 0
  %3432 = vmatprep.subr.bf16.mxu0 0
  %3433 = vmatpush1.bf16.xpose.msra.mxu0 0
  %3434 = vmatprep.subr.bf16.mxu0 0
  %3435 = vmatpush1.bf16.xpose.msra.mxu0 0
  %3436 = vmatprep.subr.bf16.mxu0 0
  %3437 = vmatpush1.bf16.xpose.msra.mxu0 0
  %3438 = vmatprep.subr.bf16.mxu0 0
  %3439 = vmatpush1.bf16.xpose.msra.mxu0 0
  %3440 = vmatprep.subr.bf16.mxu0 0
  %3441 = vmatpush1.bf16.xpose.msra.mxu0 0
  %3442 = vmatprep.subr.bf16.mxu0 0
  %3443 = vmatpush1.bf16.xpose.msra.mxu0 0
  %3444 = vmatprep.mubr.bf16.mxu0 0
  %3445 = vmatmul.mubr.bf16.gmra.mrb[0].mxu0 %v3407
  %v3446 = vpop.f32.mrb[0].mxu0
  %v3447 = vadd.f32 0.0, %v3446
  %v3448 = vpop.f32.mrb[0].mxu0
  %v3449 = vpop.f32.mrb[0].mxu0
  %v3450 = vpop.f32.mrb[0].mxu0
  %3451 = vdwg.mxu0
  %v3452 = vmul.f32 %v3398, 0.35355338
  %v3453 = vmul.f32 %v3447, 0.35355338
  %v3454 = vsel %vm163, %v3452, -inf
  %3455 = vmax.xlane.f32.xlu0 %v3454
  %v3456 = vpop.xlane.xlu0 %3455
  %v3457 = vsel %vm163, %v3453, -inf
  %3458 = vmax.xlane.f32.xlu0 %v3457
  %v3459 = vpop.xlane.xlu0 %3458
  %v3460 = vsub.f32 %v3452, %v3456
  %v3461 = vsub.f32 %v3453, %v3459
  %v3462 = vmul.f32 %v3460, 1.442695
  %v3463 = vpow.pop %v3462
  %v3464 = vmul.f32 %v3461, 1.442695
  %v3465 = vpow.pop %v3464
  %v3466 = vsel %vm163, %v3463, 0.0
  %3467 = vadd.xlane.f32.xlu0 %v3466
  %v3468 = vpop.xlane.xlu0 %3467
  %v3469 = vsel %vm163, %v3465, 0.0
  %3470 = vadd.xlane.f32.xlu0 %v3469
  %v3471 = vpop.xlane.xlu0 %3470
  %v3472 = vrcp.pop %v3468
  %v3473 = vrcp.pop %v3471
  %v3474 = vmul.f32 %v3463, %v3472
  %v3475 = vmul.f32 %v3465, %v3473
  %v3476 = vpack.c.bf16 %v3474, %v3474
  %v3477 = vpack.c.bf16 %v3475, %v3475
  %3478 = vrot.lane.b32.xlu0 %v3352, 64
  %v3479 = vpop.permute.xlu0 %3478
  %v3481 = vsel %vm163, %v3476, 0
  %v3484 = vsel %vm290, %v3479, 0
  %3486 = vmatprep.subr.bf16.mxu0 0
  %3487 = vmatpush1.bf16.msra.mxu0 %v3484
  %3488 = vmatprep.subr.bf16.mxu0 0
  %3489 = vmatpush1.bf16.msra.mxu0 0
  %3490 = vmatprep.subr.bf16.mxu0 0
  %3491 = vmatpush1.bf16.msra.mxu0 0
  %3492 = vmatprep.subr.bf16.mxu0 0
  %3493 = vmatpush1.bf16.msra.mxu0 0
  %3494 = vmatprep.subr.bf16.mxu0 0
  %3495 = vmatpush1.bf16.msra.mxu0 0
  %3496 = vmatprep.subr.bf16.mxu0 0
  %3497 = vmatpush1.bf16.msra.mxu0 0
  %3498 = vmatprep.subr.bf16.mxu0 0
  %3499 = vmatpush1.bf16.msra.mxu0 0
  %3500 = vmatprep.subr.bf16.mxu0 0
  %3501 = vmatpush1.bf16.msra.mxu0 0
  %3502 = vmatprep.subr.bf16.mxu0 0
  %3503 = vmatpush1.bf16.msra.mxu0 0
  %3504 = vmatprep.subr.bf16.mxu0 0
  %3505 = vmatpush1.bf16.msra.mxu0 0
  %3506 = vmatprep.subr.bf16.mxu0 0
  %3507 = vmatpush1.bf16.msra.mxu0 0
  %3508 = vmatprep.subr.bf16.mxu0 0
  %3509 = vmatpush1.bf16.msra.mxu0 0
  %3510 = vmatprep.subr.bf16.mxu0 0
  %3511 = vmatpush1.bf16.msra.mxu0 0
  %3512 = vmatprep.subr.bf16.mxu0 0
  %3513 = vmatpush1.bf16.msra.mxu0 0
  %3514 = vmatprep.subr.bf16.mxu0 0
  %3515 = vmatpush1.bf16.msra.mxu0 0
  %3516 = vmatprep.subr.bf16.mxu0 0
  %3517 = vmatpush1.bf16.msra.mxu0 0
  %3518 = vmatprep.mubr.bf16.mxu0 0
  %3519 = vmatmul.mubr.bf16.gmra.mrb[0].mxu0 %v3481
  %v3520 = vpop.f32.mrb[0].mxu0
  %v3521 = vadd.f32 0.0, %v3520
  %v3522 = vpop.f32.mrb[0].mxu0
  %v3523 = vpop.f32.mrb[0].mxu0
  %v3524 = vpop.f32.mrb[0].mxu0
  %3525 = vdwg.mxu0
  %3526 = vrot.lane.b32.xlu0 %v3353, 64
  %v3527 = vpop.permute.xlu0 %3526
  %v3529 = vsel %vm163, %v3477, 0
  %v3532 = vsel %vm290, %v3527, 0
  %3534 = vmatprep.subr.bf16.mxu0 0
  %3535 = vmatpush1.bf16.msra.mxu0 %v3532
  %3536 = vmatprep.subr.bf16.mxu0 0
  %3537 = vmatpush1.bf16.msra.mxu0 0
  %3538 = vmatprep.subr.bf16.mxu0 0
  %3539 = vmatpush1.bf16.msra.mxu0 0
  %3540 = vmatprep.subr.bf16.mxu0 0
  %3541 = vmatpush1.bf16.msra.mxu0 0
  %3542 = vmatprep.subr.bf16.mxu0 0
  %3543 = vmatpush1.bf16.msra.mxu0 0
  %3544 = vmatprep.subr.bf16.mxu0 0
  %3545 = vmatpush1.bf16.msra.mxu0 0
  %3546 = vmatprep.subr.bf16.mxu0 0
  %3547 = vmatpush1.bf16.msra.mxu0 0
  %3548 = vmatprep.subr.bf16.mxu0 0
  %3549 = vmatpush1.bf16.msra.mxu0 0
  %3550 = vmatprep.subr.bf16.mxu0 0
  %3551 = vmatpush1.bf16.msra.mxu0 0
  %3552 = vmatprep.subr.bf16.mxu0 0
  %3553 = vmatpush1.bf16.msra.mxu0 0
  %3554 = vmatprep.subr.bf16.mxu0 0
  %3555 = vmatpush1.bf16.msra.mxu0 0
  %3556 = vmatprep.subr.bf16.mxu0 0
  %3557 = vmatpush1.bf16.msra.mxu0 0
  %3558 = vmatprep.subr.bf16.mxu0 0
  %3559 = vmatpush1.bf16.msra.mxu0 0
  %3560 = vmatprep.subr.bf16.mxu0 0
  %3561 = vmatpush1.bf16.msra.mxu0 0
  %3562 = vmatprep.subr.bf16.mxu0 0
  %3563 = vmatpush1.bf16.msra.mxu0 0
  %3564 = vmatprep.subr.bf16.mxu0 0
  %3565 = vmatpush1.bf16.msra.mxu0 0
  %3566 = vmatprep.mubr.bf16.mxu0 0
  %3567 = vmatmul.mubr.bf16.gmra.mrb[0].mxu0 %v3529
  %v3568 = vpop.f32.mrb[0].mxu0
  %v3569 = vadd.f32 0.0, %v3568
  %v3570 = vpop.f32.mrb[0].mxu0
  %v3571 = vpop.f32.mrb[0].mxu0
  %v3572 = vpop.f32.mrb[0].mxu0
  %3573 = vdwg.mxu0
  %3574 = vrot.lane.b32.xlu0 %v3352, 120
  %v3575 = vpop.permute.xlu0 %3574
  %3576 = vrot.lane.b32.xlu0 %v3352, 88
  %v3577 = vpop.permute.xlu0 %3576
  %v3579 = vsel %vm163, %v3575, 0
  %v3582 = vsel %vm163, %v3577, 0
  %3584 = vmatprep.subr.bf16.mxu0 0
  %3585 = vmatpush1.bf16.xpose.msra.mxu0 %v3582
  %3586 = vmatprep.subr.bf16.mxu0 0
  %3587 = vmatpush1.bf16.xpose.msra.mxu0 0
  %3588 = vmatprep.subr.bf16.mxu0 0
  %3589 = vmatpush1.bf16.xpose.msra.mxu0 0
  %3590 = vmatprep.subr.bf16.mxu0 0
  %3591 = vmatpush1.bf16.xpose.msra.mxu0 0
  %3592 = vmatprep.subr.bf16.mxu0 0
  %3593 = vmatpush1.bf16.xpose.msra.mxu0 0
  %3594 = vmatprep.subr.bf16.mxu0 0
  %3595 = vmatpush1.bf16.xpose.msra.mxu0 0
  %3596 = vmatprep.subr.bf16.mxu0 0
  %3597 = vmatpush1.bf16.xpose.msra.mxu0 0
  %3598 = vmatprep.subr.bf16.mxu0 0
  %3599 = vmatpush1.bf16.xpose.msra.mxu0 0
  %3600 = vmatprep.subr.bf16.mxu0 0
  %3601 = vmatpush1.bf16.xpose.msra.mxu0 0
  %3602 = vmatprep.subr.bf16.mxu0 0
  %3603 = vmatpush1.bf16.xpose.msra.mxu0 0
  %3604 = vmatprep.subr.bf16.mxu0 0
  %3605 = vmatpush1.bf16.xpose.msra.mxu0 0
  %3606 = vmatprep.subr.bf16.mxu0 0
  %3607 = vmatpush1.bf16.xpose.msra.mxu0 0
  %3608 = vmatprep.subr.bf16.mxu0 0
  %3609 = vmatpush1.bf16.xpose.msra.mxu0 0
  %3610 = vmatprep.subr.bf16.mxu0 0
  %3611 = vmatpush1.bf16.xpose.msra.mxu0 0
  %3612 = vmatprep.subr.bf16.mxu0 0
  %3613 = vmatpush1.bf16.xpose.msra.mxu0 0
  %3614 = vmatprep.subr.bf16.mxu0 0
  %3615 = vmatpush1.bf16.xpose.msra.mxu0 0
  %3616 = vmatprep.mubr.bf16.mxu0 0
  %3617 = vmatmul.mubr.bf16.gmra.mrb[0].mxu0 %v3579
  %v3618 = vpop.f32.mrb[0].mxu0
  %v3619 = vadd.f32 0.0, %v3618
  %v3620 = vpop.f32.mrb[0].mxu0
  %v3621 = vpop.f32.mrb[0].mxu0
  %v3622 = vpop.f32.mrb[0].mxu0
  %3623 = vdwg.mxu0
  %3624 = vrot.lane.b32.xlu0 %v3353, 120
  %v3625 = vpop.permute.xlu0 %3624
  %3626 = vrot.lane.b32.xlu0 %v3353, 88
  %v3627 = vpop.permute.xlu0 %3626
  %v3629 = vsel %vm163, %v3625, 0
  %v3632 = vsel %vm163, %v3627, 0
  %3634 = vmatprep.subr.bf16.mxu0 0
  %3635 = vmatpush1.bf16.xpose.msra.mxu0 %v3632
  %3636 = vmatprep.subr.bf16.mxu0 0
  %3637 = vmatpush1.bf16.xpose.msra.mxu0 0
  %3638 = vmatprep.subr.bf16.mxu0 0
  %3639 = vmatpush1.bf16.xpose.msra.mxu0 0
  %3640 = vmatprep.subr.bf16.mxu0 0
  %3641 = vmatpush1.bf16.xpose.msra.mxu0 0
  %3642 = vmatprep.subr.bf16.mxu0 0
  %3643 = vmatpush1.bf16.xpose.msra.mxu0 0
  %3644 = vmatprep.subr.bf16.mxu0 0
  %3645 = vmatpush1.bf16.xpose.msra.mxu0 0
  %3646 = vmatprep.subr.bf16.mxu0 0
  %3647 = vmatpush1.bf16.xpose.msra.mxu0 0
  %3648 = vmatprep.subr.bf16.mxu0 0
  %3649 = vmatpush1.bf16.xpose.msra.mxu0 0
  %3650 = vmatprep.subr.bf16.mxu0 0
  %3651 = vmatpush1.bf16.xpose.msra.mxu0 0
  %3652 = vmatprep.subr.bf16.mxu0 0
  %3653 = vmatpush1.bf16.xpose.msra.mxu0 0
  %3654 = vmatprep.subr.bf16.mxu0 0
  %3655 = vmatpush1.bf16.xpose.msra.mxu0 0
  %3656 = vmatprep.subr.bf16.mxu0 0
  %3657 = vmatpush1.bf16.xpose.msra.mxu0 0
  %3658 = vmatprep.subr.bf16.mxu0 0
  %3659 = vmatpush1.bf16.xpose.msra.mxu0 0
  %3660 = vmatprep.subr.bf16.mxu0 0
  %3661 = vmatpush1.bf16.xpose.msra.mxu0 0
  %3662 = vmatprep.subr.bf16.mxu0 0
  %3663 = vmatpush1.bf16.xpose.msra.mxu0 0
  %3664 = vmatprep.subr.bf16.mxu0 0
  %3665 = vmatpush1.bf16.xpose.msra.mxu0 0
  %3666 = vmatprep.mubr.bf16.mxu0 0
  %3667 = vmatmul.mubr.bf16.gmra.mrb[0].mxu0 %v3629
  %v3668 = vpop.f32.mrb[0].mxu0
  %v3669 = vadd.f32 0.0, %v3668
  %v3670 = vpop.f32.mrb[0].mxu0
  %v3671 = vpop.f32.mrb[0].mxu0
  %v3672 = vpop.f32.mrb[0].mxu0
  %3673 = vdwg.mxu0
  %v3674 = vmul.f32 %v3619, 0.35355338
  %v3675 = vmul.f32 %v3669, 0.35355338
  %v3676 = vsel %vm163, %v3674, -inf
  %3677 = vmax.xlane.f32.xlu0 %v3676
  %v3678 = vpop.xlane.xlu0 %3677
  %v3679 = vsel %vm163, %v3675, -inf
  %3680 = vmax.xlane.f32.xlu0 %v3679
  %v3681 = vpop.xlane.xlu0 %3680
  %v3682 = vsub.f32 %v3674, %v3678
  %v3683 = vsub.f32 %v3675, %v3681
  %v3684 = vmul.f32 %v3682, 1.442695
  %v3685 = vpow.pop %v3684
  %v3686 = vmul.f32 %v3683, 1.442695
  %v3687 = vpow.pop %v3686
  %v3688 = vsel %vm163, %v3685, 0.0
  %3689 = vadd.xlane.f32.xlu0 %v3688
  %v3690 = vpop.xlane.xlu0 %3689
  %v3691 = vsel %vm163, %v3687, 0.0
  %3692 = vadd.xlane.f32.xlu0 %v3691
  %v3693 = vpop.xlane.xlu0 %3692
  %v3694 = vrcp.pop %v3690
  %v3695 = vrcp.pop %v3693
  %v3696 = vmul.f32 %v3685, %v3694
  %v3697 = vmul.f32 %v3687, %v3695
  %v3698 = vpack.c.bf16 %v3696, %v3696
  %v3699 = vpack.c.bf16 %v3697, %v3697
  %3700 = vrot.lane.b32.xlu0 %v3352, 56
  %v3701 = vpop.permute.xlu0 %3700
  %v3703 = vsel %vm163, %v3698, 0
  %v3706 = vsel %vm290, %v3701, 0
  %3708 = vmatprep.subr.bf16.mxu0 0
  %3709 = vmatpush1.bf16.msra.mxu0 %v3706
  %3710 = vmatprep.subr.bf16.mxu0 0
  %3711 = vmatpush1.bf16.msra.mxu0 0
  %3712 = vmatprep.subr.bf16.mxu0 0
  %3713 = vmatpush1.bf16.msra.mxu0 0
  %3714 = vmatprep.subr.bf16.mxu0 0
  %3715 = vmatpush1.bf16.msra.mxu0 0
  %3716 = vmatprep.subr.bf16.mxu0 0
  %3717 = vmatpush1.bf16.msra.mxu0 0
  %3718 = vmatprep.subr.bf16.mxu0 0
  %3719 = vmatpush1.bf16.msra.mxu0 0
  %3720 = vmatprep.subr.bf16.mxu0 0
  %3721 = vmatpush1.bf16.msra.mxu0 0
  %3722 = vmatprep.subr.bf16.mxu0 0
  %3723 = vmatpush1.bf16.msra.mxu0 0
  %3724 = vmatprep.subr.bf16.mxu0 0
  %3725 = vmatpush1.bf16.msra.mxu0 0
  %3726 = vmatprep.subr.bf16.mxu0 0
  %3727 = vmatpush1.bf16.msra.mxu0 0
  %3728 = vmatprep.subr.bf16.mxu0 0
  %3729 = vmatpush1.bf16.msra.mxu0 0
  %3730 = vmatprep.subr.bf16.mxu0 0
  %3731 = vmatpush1.bf16.msra.mxu0 0
  %3732 = vmatprep.subr.bf16.mxu0 0
  %3733 = vmatpush1.bf16.msra.mxu0 0
  %3734 = vmatprep.subr.bf16.mxu0 0
  %3735 = vmatpush1.bf16.msra.mxu0 0
  %3736 = vmatprep.subr.bf16.mxu0 0
  %3737 = vmatpush1.bf16.msra.mxu0 0
  %3738 = vmatprep.subr.bf16.mxu0 0
  %3739 = vmatpush1.bf16.msra.mxu0 0
  %3740 = vmatprep.mubr.bf16.mxu0 0
  %3741 = vmatmul.mubr.bf16.gmra.mrb[0].mxu0 %v3703
  %v3742 = vpop.f32.mrb[0].mxu0
  %v3743 = vadd.f32 0.0, %v3742
  %v3744 = vpop.f32.mrb[0].mxu0
  %v3745 = vpop.f32.mrb[0].mxu0
  %v3746 = vpop.f32.mrb[0].mxu0
  %3747 = vdwg.mxu0
  %3748 = vrot.lane.b32.xlu0 %v3353, 56
  %v3749 = vpop.permute.xlu0 %3748
  %v3751 = vsel %vm163, %v3699, 0
  %v3754 = vsel %vm290, %v3749, 0
  %3756 = vmatprep.subr.bf16.mxu0 0
  %3757 = vmatpush1.bf16.msra.mxu0 %v3754
  %3758 = vmatprep.subr.bf16.mxu0 0
  %3759 = vmatpush1.bf16.msra.mxu0 0
  %3760 = vmatprep.subr.bf16.mxu0 0
  %3761 = vmatpush1.bf16.msra.mxu0 0
  %3762 = vmatprep.subr.bf16.mxu0 0
  %3763 = vmatpush1.bf16.msra.mxu0 0
  %3764 = vmatprep.subr.bf16.mxu0 0
  %3765 = vmatpush1.bf16.msra.mxu0 0
  %3766 = vmatprep.subr.bf16.mxu0 0
  %3767 = vmatpush1.bf16.msra.mxu0 0
  %3768 = vmatprep.subr.bf16.mxu0 0
  %3769 = vmatpush1.bf16.msra.mxu0 0
  %3770 = vmatprep.subr.bf16.mxu0 0
  %3771 = vmatpush1.bf16.msra.mxu0 0
  %3772 = vmatprep.subr.bf16.mxu0 0
  %3773 = vmatpush1.bf16.msra.mxu0 0
  %3774 = vmatprep.subr.bf16.mxu0 0
  %3775 = vmatpush1.bf16.msra.mxu0 0
  %3776 = vmatprep.subr.bf16.mxu0 0
  %3777 = vmatpush1.bf16.msra.mxu0 0
  %3778 = vmatprep.subr.bf16.mxu0 0
  %3779 = vmatpush1.bf16.msra.mxu0 0
  %3780 = vmatprep.subr.bf16.mxu0 0
  %3781 = vmatpush1.bf16.msra.mxu0 0
  %3782 = vmatprep.subr.bf16.mxu0 0
  %3783 = vmatpush1.bf16.msra.mxu0 0
  %3784 = vmatprep.subr.bf16.mxu0 0
  %3785 = vmatpush1.bf16.msra.mxu0 0
  %3786 = vmatprep.subr.bf16.mxu0 0
  %3787 = vmatpush1.bf16.msra.mxu0 0
  %3788 = vmatprep.mubr.bf16.mxu0 0
  %3789 = vmatmul.mubr.bf16.gmra.mrb[0].mxu0 %v3751
  %v3790 = vpop.f32.mrb[0].mxu0
  %v3791 = vadd.f32 0.0, %v3790
  %v3792 = vpop.f32.mrb[0].mxu0
  %v3793 = vpop.f32.mrb[0].mxu0
  %v3794 = vpop.f32.mrb[0].mxu0
  %3795 = vdwg.mxu0
  %3796 = vrot.lane.b32.xlu0 %v3352, 112
  %v3797 = vpop.permute.xlu0 %3796
  %3798 = vrot.lane.b32.xlu0 %v3352, 80
  %v3799 = vpop.permute.xlu0 %3798
  %v3801 = vsel %vm163, %v3797, 0
  %v3804 = vsel %vm163, %v3799, 0
  %3806 = vmatprep.subr.bf16.mxu0 0
  %3807 = vmatpush1.bf16.xpose.msra.mxu0 %v3804
  %3808 = vmatprep.subr.bf16.mxu0 0
  %3809 = vmatpush1.bf16.xpose.msra.mxu0 0
  %3810 = vmatprep.subr.bf16.mxu0 0
  %3811 = vmatpush1.bf16.xpose.msra.mxu0 0
  %3812 = vmatprep.subr.bf16.mxu0 0
  %3813 = vmatpush1.bf16.xpose.msra.mxu0 0
  %3814 = vmatprep.subr.bf16.mxu0 0
  %3815 = vmatpush1.bf16.xpose.msra.mxu0 0
  %3816 = vmatprep.subr.bf16.mxu0 0
  %3817 = vmatpush1.bf16.xpose.msra.mxu0 0
  %3818 = vmatprep.subr.bf16.mxu0 0
  %3819 = vmatpush1.bf16.xpose.msra.mxu0 0
  %3820 = vmatprep.subr.bf16.mxu0 0
  %3821 = vmatpush1.bf16.xpose.msra.mxu0 0
  %3822 = vmatprep.subr.bf16.mxu0 0
  %3823 = vmatpush1.bf16.xpose.msra.mxu0 0
  %3824 = vmatprep.subr.bf16.mxu0 0
  %3825 = vmatpush1.bf16.xpose.msra.mxu0 0
  %3826 = vmatprep.subr.bf16.mxu0 0
  %3827 = vmatpush1.bf16.xpose.msra.mxu0 0
  %3828 = vmatprep.subr.bf16.mxu0 0
  %3829 = vmatpush1.bf16.xpose.msra.mxu0 0
  %3830 = vmatprep.subr.bf16.mxu0 0
  %3831 = vmatpush1.bf16.xpose.msra.mxu0 0
  %3832 = vmatprep.subr.bf16.mxu0 0
  %3833 = vmatpush1.bf16.xpose.msra.mxu0 0
  %3834 = vmatprep.subr.bf16.mxu0 0
  %3835 = vmatpush1.bf16.xpose.msra.mxu0 0
  %3836 = vmatprep.subr.bf16.mxu0 0
  %3837 = vmatpush1.bf16.xpose.msra.mxu0 0
  %3838 = vmatprep.mubr.bf16.mxu0 0
  %3839 = vmatmul.mubr.bf16.gmra.mrb[0].mxu0 %v3801
  %v3840 = vpop.f32.mrb[0].mxu0
  %v3841 = vadd.f32 0.0, %v3840
  %v3842 = vpop.f32.mrb[0].mxu0
  %v3843 = vpop.f32.mrb[0].mxu0
  %v3844 = vpop.f32.mrb[0].mxu0
  %3845 = vdwg.mxu0
  %3846 = vrot.lane.b32.xlu0 %v3353, 112
  %v3847 = vpop.permute.xlu0 %3846
  %3848 = vrot.lane.b32.xlu0 %v3353, 80
  %v3849 = vpop.permute.xlu0 %3848
  %v3851 = vsel %vm163, %v3847, 0
  %v3854 = vsel %vm163, %v3849, 0
  %3856 = vmatprep.subr.bf16.mxu0 0
  %3857 = vmatpush1.bf16.xpose.msra.mxu0 %v3854
  %3858 = vmatprep.subr.bf16.mxu0 0
  %3859 = vmatpush1.bf16.xpose.msra.mxu0 0
  %3860 = vmatprep.subr.bf16.mxu0 0
  %3861 = vmatpush1.bf16.xpose.msra.mxu0 0
  %3862 = vmatprep.subr.bf16.mxu0 0
  %3863 = vmatpush1.bf16.xpose.msra.mxu0 0
  %3864 = vmatprep.subr.bf16.mxu0 0
  %3865 = vmatpush1.bf16.xpose.msra.mxu0 0
  %3866 = vmatprep.subr.bf16.mxu0 0
  %3867 = vmatpush1.bf16.xpose.msra.mxu0 0
  %3868 = vmatprep.subr.bf16.mxu0 0
  %3869 = vmatpush1.bf16.xpose.msra.mxu0 0
  %3870 = vmatprep.subr.bf16.mxu0 0
  %3871 = vmatpush1.bf16.xpose.msra.mxu0 0
  %3872 = vmatprep.subr.bf16.mxu0 0
  %3873 = vmatpush1.bf16.xpose.msra.mxu0 0
  %3874 = vmatprep.subr.bf16.mxu0 0
  %3875 = vmatpush1.bf16.xpose.msra.mxu0 0
  %3876 = vmatprep.subr.bf16.mxu0 0
  %3877 = vmatpush1.bf16.xpose.msra.mxu0 0
  %3878 = vmatprep.subr.bf16.mxu0 0
  %3879 = vmatpush1.bf16.xpose.msra.mxu0 0
  %3880 = vmatprep.subr.bf16.mxu0 0
  %3881 = vmatpush1.bf16.xpose.msra.mxu0 0
  %3882 = vmatprep.subr.bf16.mxu0 0
  %3883 = vmatpush1.bf16.xpose.msra.mxu0 0
  %3884 = vmatprep.subr.bf16.mxu0 0
  %3885 = vmatpush1.bf16.xpose.msra.mxu0 0
  %3886 = vmatprep.subr.bf16.mxu0 0
  %3887 = vmatpush1.bf16.xpose.msra.mxu0 0
  %3888 = vmatprep.mubr.bf16.mxu0 0
  %3889 = vmatmul.mubr.bf16.gmra.mrb[0].mxu0 %v3851
  %v3890 = vpop.f32.mrb[0].mxu0
  %v3891 = vadd.f32 0.0, %v3890
  %v3892 = vpop.f32.mrb[0].mxu0
  %v3893 = vpop.f32.mrb[0].mxu0
  %v3894 = vpop.f32.mrb[0].mxu0
  %3895 = vdwg.mxu0
  %v3896 = vmul.f32 %v3841, 0.35355338
  %v3897 = vmul.f32 %v3891, 0.35355338
  %v3898 = vsel %vm163, %v3896, -inf
  %3899 = vmax.xlane.f32.xlu0 %v3898
  %v3900 = vpop.xlane.xlu0 %3899
  %v3901 = vsel %vm163, %v3897, -inf
  %3902 = vmax.xlane.f32.xlu0 %v3901
  %v3903 = vpop.xlane.xlu0 %3902
  %v3904 = vsub.f32 %v3896, %v3900
  %v3905 = vsub.f32 %v3897, %v3903
  %v3906 = vmul.f32 %v3904, 1.442695
  %v3907 = vpow.pop %v3906
  %v3908 = vmul.f32 %v3905, 1.442695
  %v3909 = vpow.pop %v3908
  %v3910 = vsel %vm163, %v3907, 0.0
  %3911 = vadd.xlane.f32.xlu0 %v3910
  %v3912 = vpop.xlane.xlu0 %3911
  %v3913 = vsel %vm163, %v3909, 0.0
  %3914 = vadd.xlane.f32.xlu0 %v3913
  %v3915 = vpop.xlane.xlu0 %3914
  %v3916 = vrcp.pop %v3912
  %v3917 = vrcp.pop %v3915
  %v3918 = vmul.f32 %v3907, %v3916
  %v3919 = vmul.f32 %v3909, %v3917
  %v3920 = vpack.c.bf16 %v3918, %v3918
  %v3921 = vpack.c.bf16 %v3919, %v3919
  %3922 = vrot.lane.b32.xlu0 %v3352, 48
  %v3923 = vpop.permute.xlu0 %3922
  %v3925 = vsel %vm163, %v3920, 0
  %v3928 = vsel %vm290, %v3923, 0
  %3930 = vmatprep.subr.bf16.mxu0 0
  %3931 = vmatpush1.bf16.msra.mxu0 %v3928
  %3932 = vmatprep.subr.bf16.mxu0 0
  %3933 = vmatpush1.bf16.msra.mxu0 0
  %3934 = vmatprep.subr.bf16.mxu0 0
  %3935 = vmatpush1.bf16.msra.mxu0 0
  %3936 = vmatprep.subr.bf16.mxu0 0
  %3937 = vmatpush1.bf16.msra.mxu0 0
  %3938 = vmatprep.subr.bf16.mxu0 0
  %3939 = vmatpush1.bf16.msra.mxu0 0
  %3940 = vmatprep.subr.bf16.mxu0 0
  %3941 = vmatpush1.bf16.msra.mxu0 0
  %3942 = vmatprep.subr.bf16.mxu0 0
  %3943 = vmatpush1.bf16.msra.mxu0 0
  %3944 = vmatprep.subr.bf16.mxu0 0
  %3945 = vmatpush1.bf16.msra.mxu0 0
  %3946 = vmatprep.subr.bf16.mxu0 0
  %3947 = vmatpush1.bf16.msra.mxu0 0
  %3948 = vmatprep.subr.bf16.mxu0 0
  %3949 = vmatpush1.bf16.msra.mxu0 0
  %3950 = vmatprep.subr.bf16.mxu0 0
  %3951 = vmatpush1.bf16.msra.mxu0 0
  %3952 = vmatprep.subr.bf16.mxu0 0
  %3953 = vmatpush1.bf16.msra.mxu0 0
  %3954 = vmatprep.subr.bf16.mxu0 0
  %3955 = vmatpush1.bf16.msra.mxu0 0
  %3956 = vmatprep.subr.bf16.mxu0 0
  %3957 = vmatpush1.bf16.msra.mxu0 0
  %3958 = vmatprep.subr.bf16.mxu0 0
  %3959 = vmatpush1.bf16.msra.mxu0 0
  %3960 = vmatprep.subr.bf16.mxu0 0
  %3961 = vmatpush1.bf16.msra.mxu0 0
  %3962 = vmatprep.mubr.bf16.mxu0 0
  %3963 = vmatmul.mubr.bf16.gmra.mrb[0].mxu0 %v3925
  %v3964 = vpop.f32.mrb[0].mxu0
  %v3965 = vadd.f32 0.0, %v3964
  %v3966 = vpop.f32.mrb[0].mxu0
  %v3967 = vpop.f32.mrb[0].mxu0
  %v3968 = vpop.f32.mrb[0].mxu0
  %3969 = vdwg.mxu0
  %3970 = vrot.lane.b32.xlu0 %v3353, 48
  %v3971 = vpop.permute.xlu0 %3970
  %v3973 = vsel %vm163, %v3921, 0
  %v3976 = vsel %vm290, %v3971, 0
  %3978 = vmatprep.subr.bf16.mxu0 0
  %3979 = vmatpush1.bf16.msra.mxu0 %v3976
  %3980 = vmatprep.subr.bf16.mxu0 0
  %3981 = vmatpush1.bf16.msra.mxu0 0
  %3982 = vmatprep.subr.bf16.mxu0 0
  %3983 = vmatpush1.bf16.msra.mxu0 0
  %3984 = vmatprep.subr.bf16.mxu0 0
  %3985 = vmatpush1.bf16.msra.mxu0 0
  %3986 = vmatprep.subr.bf16.mxu0 0
  %3987 = vmatpush1.bf16.msra.mxu0 0
  %3988 = vmatprep.subr.bf16.mxu0 0
  %3989 = vmatpush1.bf16.msra.mxu0 0
  %3990 = vmatprep.subr.bf16.mxu0 0
  %3991 = vmatpush1.bf16.msra.mxu0 0
  %3992 = vmatprep.subr.bf16.mxu0 0
  %3993 = vmatpush1.bf16.msra.mxu0 0
  %3994 = vmatprep.subr.bf16.mxu0 0
  %3995 = vmatpush1.bf16.msra.mxu0 0
  %3996 = vmatprep.subr.bf16.mxu0 0
  %3997 = vmatpush1.bf16.msra.mxu0 0
  %3998 = vmatprep.subr.bf16.mxu0 0
  %3999 = vmatpush1.bf16.msra.mxu0 0
  %4000 = vmatprep.subr.bf16.mxu0 0
  %4001 = vmatpush1.bf16.msra.mxu0 0
  %4002 = vmatprep.subr.bf16.mxu0 0
  %4003 = vmatpush1.bf16.msra.mxu0 0
  %4004 = vmatprep.subr.bf16.mxu0 0
  %4005 = vmatpush1.bf16.msra.mxu0 0
  %4006 = vmatprep.subr.bf16.mxu0 0
  %4007 = vmatpush1.bf16.msra.mxu0 0
  %4008 = vmatprep.subr.bf16.mxu0 0
  %4009 = vmatpush1.bf16.msra.mxu0 0
  %4010 = vmatprep.mubr.bf16.mxu0 0
  %4011 = vmatmul.mubr.bf16.gmra.mrb[0].mxu0 %v3973
  %v4012 = vpop.f32.mrb[0].mxu0
  %v4013 = vadd.f32 0.0, %v4012
  %v4014 = vpop.f32.mrb[0].mxu0
  %v4015 = vpop.f32.mrb[0].mxu0
  %v4016 = vpop.f32.mrb[0].mxu0
  %4017 = vdwg.mxu0
  %4018 = vrot.lane.b32.xlu0 %v3352, 104
  %v4019 = vpop.permute.xlu0 %4018
  %4020 = vrot.lane.b32.xlu0 %v3352, 72
  %v4021 = vpop.permute.xlu0 %4020
  %v4023 = vsel %vm163, %v4019, 0
  %v4026 = vsel %vm163, %v4021, 0
  %4028 = vmatprep.subr.bf16.mxu0 0
  %4029 = vmatpush1.bf16.xpose.msra.mxu0 %v4026
  %4030 = vmatprep.subr.bf16.mxu0 0
  %4031 = vmatpush1.bf16.xpose.msra.mxu0 0
  %4032 = vmatprep.subr.bf16.mxu0 0
  %4033 = vmatpush1.bf16.xpose.msra.mxu0 0
  %4034 = vmatprep.subr.bf16.mxu0 0
  %4035 = vmatpush1.bf16.xpose.msra.mxu0 0
  %4036 = vmatprep.subr.bf16.mxu0 0
  %4037 = vmatpush1.bf16.xpose.msra.mxu0 0
  %4038 = vmatprep.subr.bf16.mxu0 0
  %4039 = vmatpush1.bf16.xpose.msra.mxu0 0
  %4040 = vmatprep.subr.bf16.mxu0 0
  %4041 = vmatpush1.bf16.xpose.msra.mxu0 0
  %4042 = vmatprep.subr.bf16.mxu0 0
  %4043 = vmatpush1.bf16.xpose.msra.mxu0 0
  %4044 = vmatprep.subr.bf16.mxu0 0
  %4045 = vmatpush1.bf16.xpose.msra.mxu0 0
  %4046 = vmatprep.subr.bf16.mxu0 0
  %4047 = vmatpush1.bf16.xpose.msra.mxu0 0
  %4048 = vmatprep.subr.bf16.mxu0 0
  %4049 = vmatpush1.bf16.xpose.msra.mxu0 0
  %4050 = vmatprep.subr.bf16.mxu0 0
  %4051 = vmatpush1.bf16.xpose.msra.mxu0 0
  %4052 = vmatprep.subr.bf16.mxu0 0
  %4053 = vmatpush1.bf16.xpose.msra.mxu0 0
  %4054 = vmatprep.subr.bf16.mxu0 0
  %4055 = vmatpush1.bf16.xpose.msra.mxu0 0
  %4056 = vmatprep.subr.bf16.mxu0 0
  %4057 = vmatpush1.bf16.xpose.msra.mxu0 0
  %4058 = vmatprep.subr.bf16.mxu0 0
  %4059 = vmatpush1.bf16.xpose.msra.mxu0 0
  %4060 = vmatprep.mubr.bf16.mxu0 0
  %4061 = vmatmul.mubr.bf16.gmra.mrb[0].mxu0 %v4023
  %v4062 = vpop.f32.mrb[0].mxu0
  %v4063 = vadd.f32 0.0, %v4062
  %v4064 = vpop.f32.mrb[0].mxu0
  %v4065 = vpop.f32.mrb[0].mxu0
  %v4066 = vpop.f32.mrb[0].mxu0
  %4067 = vdwg.mxu0
  %4068 = vrot.lane.b32.xlu0 %v3353, 104
  %v4069 = vpop.permute.xlu0 %4068
  %4070 = vrot.lane.b32.xlu0 %v3353, 72
  %v4071 = vpop.permute.xlu0 %4070
  %v4073 = vsel %vm163, %v4069, 0
  %v4076 = vsel %vm163, %v4071, 0
  %4078 = vmatprep.subr.bf16.mxu0 0
  %4079 = vmatpush1.bf16.xpose.msra.mxu0 %v4076
  %4080 = vmatprep.subr.bf16.mxu0 0
  %4081 = vmatpush1.bf16.xpose.msra.mxu0 0
  %4082 = vmatprep.subr.bf16.mxu0 0
  %4083 = vmatpush1.bf16.xpose.msra.mxu0 0
  %4084 = vmatprep.subr.bf16.mxu0 0
  %4085 = vmatpush1.bf16.xpose.msra.mxu0 0
  %4086 = vmatprep.subr.bf16.mxu0 0
  %4087 = vmatpush1.bf16.xpose.msra.mxu0 0
  %4088 = vmatprep.subr.bf16.mxu0 0
  %4089 = vmatpush1.bf16.xpose.msra.mxu0 0
  %4090 = vmatprep.subr.bf16.mxu0 0
  %4091 = vmatpush1.bf16.xpose.msra.mxu0 0
  %4092 = vmatprep.subr.bf16.mxu0 0
  %4093 = vmatpush1.bf16.xpose.msra.mxu0 0
  %4094 = vmatprep.subr.bf16.mxu0 0
  %4095 = vmatpush1.bf16.xpose.msra.mxu0 0
  %4096 = vmatprep.subr.bf16.mxu0 0
  %4097 = vmatpush1.bf16.xpose.msra.mxu0 0
  %4098 = vmatprep.subr.bf16.mxu0 0
  %4099 = vmatpush1.bf16.xpose.msra.mxu0 0
  %4100 = vmatprep.subr.bf16.mxu0 0
  %4101 = vmatpush1.bf16.xpose.msra.mxu0 0
  %4102 = vmatprep.subr.bf16.mxu0 0
  %4103 = vmatpush1.bf16.xpose.msra.mxu0 0
  %4104 = vmatprep.subr.bf16.mxu0 0
  %4105 = vmatpush1.bf16.xpose.msra.mxu0 0
  %4106 = vmatprep.subr.bf16.mxu0 0
  %4107 = vmatpush1.bf16.xpose.msra.mxu0 0
  %4108 = vmatprep.subr.bf16.mxu0 0
  %4109 = vmatpush1.bf16.xpose.msra.mxu0 0
  %4110 = vmatprep.mubr.bf16.mxu0 0
  %4111 = vmatmul.mubr.bf16.gmra.mrb[0].mxu0 %v4073
  %v4112 = vpop.f32.mrb[0].mxu0
  %v4113 = vadd.f32 0.0, %v4112
  %v4114 = vpop.f32.mrb[0].mxu0
  %v4115 = vpop.f32.mrb[0].mxu0
  %v4116 = vpop.f32.mrb[0].mxu0
  %4117 = vdwg.mxu0
  %v4118 = vmul.f32 %v4063, 0.35355338
  %v4119 = vmul.f32 %v4113, 0.35355338
  %v4120 = vsel %vm163, %v4118, -inf
  %4121 = vmax.xlane.f32.xlu0 %v4120
  %v4122 = vpop.xlane.xlu0 %4121
  %v4123 = vsel %vm163, %v4119, -inf
  %4124 = vmax.xlane.f32.xlu0 %v4123
  %v4125 = vpop.xlane.xlu0 %4124
  %v4126 = vsub.f32 %v4118, %v4122
  %v4127 = vsub.f32 %v4119, %v4125
  %v4128 = vmul.f32 %v4126, 1.442695
  %v4129 = vpow.pop %v4128
  %v4130 = vmul.f32 %v4127, 1.442695
  %v4131 = vpow.pop %v4130
  %v4132 = vsel %vm163, %v4129, 0.0
  %4133 = vadd.xlane.f32.xlu0 %v4132
  %v4134 = vpop.xlane.xlu0 %4133
  %v4135 = vsel %vm163, %v4131, 0.0
  %4136 = vadd.xlane.f32.xlu0 %v4135
  %v4137 = vpop.xlane.xlu0 %4136
  %v4138 = vrcp.pop %v4134
  %v4139 = vrcp.pop %v4137
  %v4140 = vmul.f32 %v4129, %v4138
  %v4141 = vmul.f32 %v4131, %v4139
  %v4142 = vpack.c.bf16 %v4140, %v4140
  %v4143 = vpack.c.bf16 %v4141, %v4141
  %4144 = vrot.lane.b32.xlu0 %v3352, 40
  %v4145 = vpop.permute.xlu0 %4144
  %v4147 = vsel %vm163, %v4142, 0
  %v4150 = vsel %vm290, %v4145, 0
  %4152 = vmatprep.subr.bf16.mxu0 0
  %4153 = vmatpush1.bf16.msra.mxu0 %v4150
  %4154 = vmatprep.subr.bf16.mxu0 0
  %4155 = vmatpush1.bf16.msra.mxu0 0
  %4156 = vmatprep.subr.bf16.mxu0 0
  %4157 = vmatpush1.bf16.msra.mxu0 0
  %4158 = vmatprep.subr.bf16.mxu0 0
  %4159 = vmatpush1.bf16.msra.mxu0 0
  %4160 = vmatprep.subr.bf16.mxu0 0
  %4161 = vmatpush1.bf16.msra.mxu0 0
  %4162 = vmatprep.subr.bf16.mxu0 0
  %4163 = vmatpush1.bf16.msra.mxu0 0
  %4164 = vmatprep.subr.bf16.mxu0 0
  %4165 = vmatpush1.bf16.msra.mxu0 0
  %4166 = vmatprep.subr.bf16.mxu0 0
  %4167 = vmatpush1.bf16.msra.mxu0 0
  %4168 = vmatprep.subr.bf16.mxu0 0
  %4169 = vmatpush1.bf16.msra.mxu0 0
  %4170 = vmatprep.subr.bf16.mxu0 0
  %4171 = vmatpush1.bf16.msra.mxu0 0
  %4172 = vmatprep.subr.bf16.mxu0 0
  %4173 = vmatpush1.bf16.msra.mxu0 0
  %4174 = vmatprep.subr.bf16.mxu0 0
  %4175 = vmatpush1.bf16.msra.mxu0 0
  %4176 = vmatprep.subr.bf16.mxu0 0
  %4177 = vmatpush1.bf16.msra.mxu0 0
  %4178 = vmatprep.subr.bf16.mxu0 0
  %4179 = vmatpush1.bf16.msra.mxu0 0
  %4180 = vmatprep.subr.bf16.mxu0 0
  %4181 = vmatpush1.bf16.msra.mxu0 0
  %4182 = vmatprep.subr.bf16.mxu0 0
  %4183 = vmatpush1.bf16.msra.mxu0 0
  %4184 = vmatprep.mubr.bf16.mxu0 0
  %4185 = vmatmul.mubr.bf16.gmra.mrb[0].mxu0 %v4147
  %v4186 = vpop.f32.mrb[0].mxu0
  %v4187 = vadd.f32 0.0, %v4186
  %v4188 = vpop.f32.mrb[0].mxu0
  %v4189 = vpop.f32.mrb[0].mxu0
  %v4190 = vpop.f32.mrb[0].mxu0
  %4191 = vdwg.mxu0
  %4192 = vrot.lane.b32.xlu0 %v3353, 40
  %v4193 = vpop.permute.xlu0 %4192
  %v4195 = vsel %vm163, %v4143, 0
  %v4198 = vsel %vm290, %v4193, 0
  %4200 = vmatprep.subr.bf16.mxu0 0
  %4201 = vmatpush1.bf16.msra.mxu0 %v4198
  %4202 = vmatprep.subr.bf16.mxu0 0
  %4203 = vmatpush1.bf16.msra.mxu0 0
  %4204 = vmatprep.subr.bf16.mxu0 0
  %4205 = vmatpush1.bf16.msra.mxu0 0
  %4206 = vmatprep.subr.bf16.mxu0 0
  %4207 = vmatpush1.bf16.msra.mxu0 0
  %4208 = vmatprep.subr.bf16.mxu0 0
  %4209 = vmatpush1.bf16.msra.mxu0 0
  %4210 = vmatprep.subr.bf16.mxu0 0
  %4211 = vmatpush1.bf16.msra.mxu0 0
  %4212 = vmatprep.subr.bf16.mxu0 0
  %4213 = vmatpush1.bf16.msra.mxu0 0
  %4214 = vmatprep.subr.bf16.mxu0 0
  %4215 = vmatpush1.bf16.msra.mxu0 0
  %4216 = vmatprep.subr.bf16.mxu0 0
  %4217 = vmatpush1.bf16.msra.mxu0 0
  %4218 = vmatprep.subr.bf16.mxu0 0
  %4219 = vmatpush1.bf16.msra.mxu0 0
  %4220 = vmatprep.subr.bf16.mxu0 0
  %4221 = vmatpush1.bf16.msra.mxu0 0
  %4222 = vmatprep.subr.bf16.mxu0 0
  %4223 = vmatpush1.bf16.msra.mxu0 0
  %4224 = vmatprep.subr.bf16.mxu0 0
  %4225 = vmatpush1.bf16.msra.mxu0 0
  %4226 = vmatprep.subr.bf16.mxu0 0
  %4227 = vmatpush1.bf16.msra.mxu0 0
  %4228 = vmatprep.subr.bf16.mxu0 0
  %4229 = vmatpush1.bf16.msra.mxu0 0
  %4230 = vmatprep.subr.bf16.mxu0 0
  %4231 = vmatpush1.bf16.msra.mxu0 0
  %4232 = vmatprep.mubr.bf16.mxu0 0
  %4233 = vmatmul.mubr.bf16.gmra.mrb[0].mxu0 %v4195
  %v4234 = vpop.f32.mrb[0].mxu0
  %v4235 = vadd.f32 0.0, %v4234
  %v4236 = vpop.f32.mrb[0].mxu0
  %v4237 = vpop.f32.mrb[0].mxu0
  %v4238 = vpop.f32.mrb[0].mxu0
  %4239 = vdwg.mxu0
  %4242 = vrot.lane.b32.xlu0 %v3743, 8
  %v4243 = vpop.permute.xlu0 %4242
  %4244 = vrot.lane.b32.xlu0 %v3791, 8
  %v4245 = vpop.permute.xlu0 %4244
  %4250 = vrot.lane.b32.xlu0 %v3965, 16
  %v4251 = vpop.permute.xlu0 %4250
  %4252 = vrot.lane.b32.xlu0 %v4013, 16
  %v4253 = vpop.permute.xlu0 %4252
  %4258 = vrot.lane.b32.xlu0 %v4187, 24
  %v4259 = vpop.permute.xlu0 %4258
  %4260 = vrot.lane.b32.xlu0 %v4235, 24
  %v4261 = vpop.permute.xlu0 %4260
  %v4264 = vsel %vm163, %v3521, %v4243
  %v4265 = vsel %vm163, %v3569, %v4245
  %v4266 = vsel %vm1074, %v4264, %v4251
  %v4267 = vsel %vm1074, %v4265, %v4253
  %v4268 = vsel %vm1077, %v4266, %v4259
  %v4269 = vsel %vm1077, %v4267, %v4261
  %v4270 = vpack.c.bf16 %v4269, %v4268
  %s4271 = scalar_lea.vmem %s5, 16
  %v4272 = vld [vmem:[%s4271] sm:$0xf]
  %v4273 = vld [vmem:[%s4271 + $0x4] sm:$0xf]
  %v4274 = vld [vmem:[%s4271 + $0x8] sm:$0xf]
  %v4275 = vld [vmem:[%s4271 + $0xc] sm:$0xf]
  %s4276 = scalar_lea.vmem %s6, 1
  %v4277 = vld [vmem:[%s4276] sm:$0x1]
  %v4279 = vlaneseq
  %v4280 = vshrl.u32 %v4279, 7
  %v4281 = vsub.s32 0, %v4280
  %v4282 = vrot.slane %v4277, %v4281
  %v4288 = vunpack.c.l.b16 %v4272
  %v4289 = vunpack.c.l.b16 %v4273
  %v4290 = vunpack.c.l.b16 %v4274
  %v4291 = vunpack.c.l.b16 %v4275
  %v4292 = vpack.c.b16 %v4289, %v4288
  %v4293 = vpack.c.b16 %v4291, %v4290
  %v4297 = vsel %vm113, %v4270, 0
  %4299 = vmatprep.subr.bf16.mxu0 0
  %4300 = vmatpush1.bf16.msra.mxu0 %v4292
  %4301 = vmatprep.subr.bf16.mxu0 0
  %4302 = vmatpush1.bf16.msra.mxu0 %v4293
  %4303 = vmatprep.subr.bf16.mxu0 0
  %4304 = vmatpush1.bf16.msra.mxu0 0
  %4305 = vmatprep.subr.bf16.mxu0 0
  %4306 = vmatpush1.bf16.msra.mxu0 0
  %4307 = vmatprep.subr.bf16.mxu0 0
  %4308 = vmatpush1.bf16.msra.mxu0 0
  %4309 = vmatprep.subr.bf16.mxu0 0
  %4310 = vmatpush1.bf16.msra.mxu0 0
  %4311 = vmatprep.subr.bf16.mxu0 0
  %4312 = vmatpush1.bf16.msra.mxu0 0
  %4313 = vmatprep.subr.bf16.mxu0 0
  %4314 = vmatpush1.bf16.msra.mxu0 0
  %4315 = vmatprep.subr.bf16.mxu0 0
  %4316 = vmatpush1.bf16.msra.mxu0 0
  %4317 = vmatprep.subr.bf16.mxu0 0
  %4318 = vmatpush1.bf16.msra.mxu0 0
  %4319 = vmatprep.subr.bf16.mxu0 0
  %4320 = vmatpush1.bf16.msra.mxu0 0
  %4321 = vmatprep.subr.bf16.mxu0 0
  %4322 = vmatpush1.bf16.msra.mxu0 0
  %4323 = vmatprep.subr.bf16.mxu0 0
  %4324 = vmatpush1.bf16.msra.mxu0 0
  %4325 = vmatprep.subr.bf16.mxu0 0
  %4326 = vmatpush1.bf16.msra.mxu0 0
  %4327 = vmatprep.subr.bf16.mxu0 0
  %4328 = vmatpush1.bf16.msra.mxu0 0
  %4329 = vmatprep.subr.bf16.mxu0 0
  %4330 = vmatpush1.bf16.msra.mxu0 0
  %4331 = vmatprep.mubr.bf16.mxu0 0
  %4332 = vmatmul.mubr.bf16.gmra.mrb[0].mxu0 %v4297
  %v4333 = vpop.f32.mrb[0].mxu0
  %v4334 = vadd.f32 %v4282, %v4333
  %v4335 = vpop.f32.mrb[0].mxu0
  %v4336 = vpop.f32.mrb[0].mxu0
  %v4337 = vadd.f32 %v4282, %v4336
  %v4338 = vpop.f32.mrb[0].mxu0
  %4339 = vdwg.mxu0
  %v4340 = vadd.f32 %v3280, %v4334
  %v4341 = vadd.f32 %v3281, %v4337
  %s4342 = scalar_lea.vmem %s7, 1
  %v4343 = vld [vmem:[%s4342] sm:$0x1]
  %s4344 = scalar_lea.vmem %s8, 1
  %v4345 = vld [vmem:[%s4344] sm:$0x1]
  %v4346 = vsel %vm113, %v4340, 0.0
  %4347 = vadd.xlane.f32.xlu0 %v4346
  %v4348 = vpop.xlane.xlu0 %4347
  %v4349 = vsel %vm113, %v4341, 0.0
  %4350 = vadd.xlane.f32.xlu0 %v4349
  %v4351 = vpop.xlane.xlu0 %4350
  %v4352 = vmul.f32 %v4348, %v1158
  %v4353 = vmul.f32 %v4351, %v1158
  %v4354 = vsub.f32 %v4340, %v4352
  %v4355 = vsub.f32 %v4341, %v4353
  %v4356 = vmul.f32 %v4354, %v4354
  %v4357 = vmul.f32 %v4355, %v4355
  %v4358 = vsel %vm113, %v4356, 0.0
  %4359 = vadd.xlane.f32.xlu0 %v4358
  %v4360 = vpop.xlane.xlu0 %4359
  %v4361 = vsel %vm113, %v4357, 0.0
  %4362 = vadd.xlane.f32.xlu0 %v4361
  %v4363 = vpop.xlane.xlu0 %4362
  %v4364 = vmul.f32 %v4360, %v1158
  %v4365 = vmul.f32 %v4363, %v1158
  %v4366 = vadd.f32 %v4364, 1e-05
  %v4367 = vadd.f32 %v4365, 1e-05
  %v4368 = vrsqrt.pop %v4366
  %v4369 = vrsqrt.pop %v4367
  %v4370 = vmul.f32 %v4354, %v4368
  %v4371 = vmul.f32 %v4355, %v4369
  %v4373 = vlaneseq
  %v4374 = vshrl.u32 %v4373, 7
  %v4375 = vsub.s32 0, %v4374
  %v4376 = vrot.slane %v4343, %v4375
  %v4378 = vmul.f32 %v4370, %v4376
  %v4379 = vmul.f32 %v4371, %v4376
  %v4381 = vlaneseq
  %v4382 = vshrl.u32 %v4381, 7
  %v4383 = vsub.s32 0, %v4382
  %v4384 = vrot.slane %v4345, %v4383
  %v4386 = vadd.f32 %v4378, %v4384
  %v4387 = vadd.f32 %v4379, %v4384
  %v4388 = vpack.c.bf16 %v4387, %v4386
  %s4389 = scalar_lea.vmem %s9, 256
  %v4390 = vld [vmem:[%s4389] sm:$0xff]
  %v4391 = vld [vmem:[%s4389 + $0x8] sm:$0xff]
  %v4392 = vld [vmem:[%s4389 + $0x40] sm:$0xff]
  %v4393 = vld [vmem:[%s4389 + $0x48] sm:$0xff]
  %v4394 = vld [vmem:[%s4389 + $0x80] sm:$0xff]
  %v4395 = vld [vmem:[%s4389 + $0x88] sm:$0xff]
  %v4396 = vld [vmem:[%s4389 + $0xc0] sm:$0xff]
  %v4397 = vld [vmem:[%s4389 + $0xc8] sm:$0xff]
  %s4398 = scalar_lea.vmem %s10, 16
  %v4399 = vld [vmem:[%s4398] sm:$0xf]
  %v4401 = vlaneseq
  %v4402 = vshrl.u32 %v4401, 7
  %v4403 = vsub.s32 0, %v4402
  %v4404 = vrot.slane %v4399, %v4403
  %v4405 = vlaneseq
  %v4406 = vshrl.u32 %v4405, 7
  %v4407 = vsub.s32 1, %v4406
  %v4408 = vrot.slane %v4399, %v4407
  %v4409 = vlaneseq
  %v4410 = vshrl.u32 %v4409, 7
  %v4411 = vsub.s32 2, %v4410
  %v4412 = vrot.slane %v4399, %v4411
  %v4413 = vlaneseq
  %v4414 = vshrl.u32 %v4413, 7
  %v4415 = vsub.s32 3, %v4414
  %v4416 = vrot.slane %v4399, %v4415
  %v4429 = vunpack.c.l.b16 %v4390
  %v4430 = vunpack.c.h.b16 %v4390
  %v4431 = vunpack.c.l.b16 %v4391
  %v4432 = vunpack.c.h.b16 %v4391
  %v4433 = vunpack.c.l.b16 %v4392
  %v4434 = vunpack.c.h.b16 %v4392
  %v4435 = vunpack.c.l.b16 %v4393
  %v4436 = vunpack.c.h.b16 %v4393
  %v4437 = vunpack.c.l.b16 %v4394
  %v4438 = vunpack.c.h.b16 %v4394
  %v4439 = vunpack.c.l.b16 %v4395
  %v4440 = vunpack.c.h.b16 %v4395
  %v4441 = vunpack.c.l.b16 %v4396
  %v4442 = vunpack.c.h.b16 %v4396
  %v4443 = vunpack.c.l.b16 %v4397
  %v4444 = vunpack.c.h.b16 %v4397
  %v4445 = vpack.c.b16 %v4433, %v4429
  %v4446 = vpack.c.b16 %v4434, %v4430
  %v4447 = vpack.c.b16 %v4435, %v4431
  %v4448 = vpack.c.b16 %v4436, %v4432
  %v4449 = vpack.c.b16 %v4441, %v4437
  %v4450 = vpack.c.b16 %v4442, %v4438
  %v4451 = vpack.c.b16 %v4443, %v4439
  %v4452 = vpack.c.b16 %v4444, %v4440
  %v4462 = vsel %vm113, %v4388, 0
  %4464 = vmatprep.subr.bf16.mxu0 %v4446
  %4465 = vmatpush1.bf16.msra.mxu0 %v4445
  %4466 = vmatprep.subr.bf16.mxu0 %v4450
  %4467 = vmatpush1.bf16.msra.mxu0 %v4449
  %4468 = vmatprep.subr.bf16.mxu0 0
  %4469 = vmatpush1.bf16.msra.mxu0 0
  %4470 = vmatprep.subr.bf16.mxu0 0
  %4471 = vmatpush1.bf16.msra.mxu0 0
  %4472 = vmatprep.subr.bf16.mxu0 0
  %4473 = vmatpush1.bf16.msra.mxu0 0
  %4474 = vmatprep.subr.bf16.mxu0 0
  %4475 = vmatpush1.bf16.msra.mxu0 0
  %4476 = vmatprep.subr.bf16.mxu0 0
  %4477 = vmatpush1.bf16.msra.mxu0 0
  %4478 = vmatprep.subr.bf16.mxu0 0
  %4479 = vmatpush1.bf16.msra.mxu0 0
  %4480 = vmatprep.subr.bf16.mxu0 0
  %4481 = vmatpush1.bf16.msra.mxu0 0
  %4482 = vmatprep.subr.bf16.mxu0 0
  %4483 = vmatpush1.bf16.msra.mxu0 0
  %4484 = vmatprep.subr.bf16.mxu0 0
  %4485 = vmatpush1.bf16.msra.mxu0 0
  %4486 = vmatprep.subr.bf16.mxu0 0
  %4487 = vmatpush1.bf16.msra.mxu0 0
  %4488 = vmatprep.subr.bf16.mxu0 0
  %4489 = vmatpush1.bf16.msra.mxu0 0
  %4490 = vmatprep.subr.bf16.mxu0 0
  %4491 = vmatpush1.bf16.msra.mxu0 0
  %4492 = vmatprep.subr.bf16.mxu0 0
  %4493 = vmatpush1.bf16.msra.mxu0 0
  %4494 = vmatprep.subr.bf16.mxu0 0
  %4495 = vmatpush1.bf16.msra.mxu0 0
  %4496 = vmatprep.mubr.bf16.mxu0 0
  %4497 = vmatmul.mubr.bf16.gmra.mrb[0].mxu0 %v4462
  %v4498 = vpop.f32.mrb[0].mxu0
  %v4499 = vadd.f32 %v4404, %v4498
  %v4500 = vpop.f32.mrb[0].mxu0
  %v4501 = vadd.f32 %v4408, %v4500
  %v4502 = vpop.f32.mrb[0].mxu0
  %v4503 = vadd.f32 %v4404, %v4502
  %v4504 = vpop.f32.mrb[0].mxu0
  %v4505 = vadd.f32 %v4408, %v4504
  %4506 = vdwg.mxu0
  %4507 = vmatprep.subr.bf16.mxu0 %v4448
  %4508 = vmatpush1.bf16.msra.mxu0 %v4447
  %4509 = vmatprep.subr.bf16.mxu0 %v4452
  %4510 = vmatpush1.bf16.msra.mxu0 %v4451
  %4511 = vmatprep.subr.bf16.mxu0 0
  %4512 = vmatpush1.bf16.msra.mxu0 0
  %4513 = vmatprep.subr.bf16.mxu0 0
  %4514 = vmatpush1.bf16.msra.mxu0 0
  %4515 = vmatprep.subr.bf16.mxu0 0
  %4516 = vmatpush1.bf16.msra.mxu0 0
  %4517 = vmatprep.subr.bf16.mxu0 0
  %4518 = vmatpush1.bf16.msra.mxu0 0
  %4519 = vmatprep.subr.bf16.mxu0 0
  %4520 = vmatpush1.bf16.msra.mxu0 0
  %4521 = vmatprep.subr.bf16.mxu0 0
  %4522 = vmatpush1.bf16.msra.mxu0 0
  %4523 = vmatprep.subr.bf16.mxu0 0
  %4524 = vmatpush1.bf16.msra.mxu0 0
  %4525 = vmatprep.subr.bf16.mxu0 0
  %4526 = vmatpush1.bf16.msra.mxu0 0
  %4527 = vmatprep.subr.bf16.mxu0 0
  %4528 = vmatpush1.bf16.msra.mxu0 0
  %4529 = vmatprep.subr.bf16.mxu0 0
  %4530 = vmatpush1.bf16.msra.mxu0 0
  %4531 = vmatprep.subr.bf16.mxu0 0
  %4532 = vmatpush1.bf16.msra.mxu0 0
  %4533 = vmatprep.subr.bf16.mxu0 0
  %4534 = vmatpush1.bf16.msra.mxu0 0
  %4535 = vmatprep.subr.bf16.mxu0 0
  %4536 = vmatpush1.bf16.msra.mxu0 0
  %4537 = vmatprep.subr.bf16.mxu0 0
  %4538 = vmatpush1.bf16.msra.mxu0 0
  %4539 = vmatprep.mubr.bf16.mxu0 0
  %4540 = vmatmul.mubr.bf16.gmra.mrb[0].mxu0 %v4462
  %v4541 = vpop.f32.mrb[0].mxu0
  %v4542 = vadd.f32 %v4412, %v4541
  %v4543 = vpop.f32.mrb[0].mxu0
  %v4544 = vadd.f32 %v4416, %v4543
  %v4545 = vpop.f32.mrb[0].mxu0
  %v4546 = vadd.f32 %v4412, %v4545
  %v4547 = vpop.f32.mrb[0].mxu0
  %v4548 = vadd.f32 %v4416, %v4547
  %4549 = vdwg.mxu0
  %v4550 = vmax.f32 %v4499, 0.0
  %v4551 = vmax.f32 %v4501, 0.0
  %v4552 = vmax.f32 %v4542, 0.0
  %v4553 = vmax.f32 %v4544, 0.0
  %v4554 = vmax.f32 %v4503, 0.0
  %v4555 = vmax.f32 %v4505, 0.0
  %v4556 = vmax.f32 %v4546, 0.0
  %v4557 = vmax.f32 %v4548, 0.0
  %v4558 = vpack.c.bf16 %v4554, %v4550
  %v4559 = vpack.c.bf16 %v4555, %v4551
  %v4560 = vpack.c.bf16 %v4556, %v4552
  %v4561 = vpack.c.bf16 %v4557, %v4553
  %s4562 = scalar_lea.vmem %s11, 1024
  %v4563 = vld [vmem:[%s4562] sm:$0xf]
  %v4564 = vld [vmem:[%s4562 + $0x4] sm:$0xf]
  %v4565 = vld [vmem:[%s4562 + $0x8] sm:$0xf]
  %v4566 = vld [vmem:[%s4562 + $0xc] sm:$0xf]
  %v4567 = vld [vmem:[%s4562 + $0x10] sm:$0xf]
  %v4568 = vld [vmem:[%s4562 + $0x14] sm:$0xf]
  %v4569 = vld [vmem:[%s4562 + $0x18] sm:$0xf]
  %v4570 = vld [vmem:[%s4562 + $0x1c] sm:$0xf]
  %v4571 = vld [vmem:[%s4562 + $0x20] sm:$0xf]
  %v4572 = vld [vmem:[%s4562 + $0x24] sm:$0xf]
  %v4573 = vld [vmem:[%s4562 + $0x28] sm:$0xf]
  %v4574 = vld [vmem:[%s4562 + $0x2c] sm:$0xf]
  %v4575 = vld [vmem:[%s4562 + $0x30] sm:$0xf]
  %v4576 = vld [vmem:[%s4562 + $0x34] sm:$0xf]
  %v4577 = vld [vmem:[%s4562 + $0x38] sm:$0xf]
  %v4578 = vld [vmem:[%s4562 + $0x3c] sm:$0xf]
  %v4579 = vld [vmem:[%s4562 + $0x40] sm:$0xf]
  %v4580 = vld [vmem:[%s4562 + $0x44] sm:$0xf]
  %v4581 = vld [vmem:[%s4562 + $0x48] sm:$0xf]
  %v4582 = vld [vmem:[%s4562 + $0x4c] sm:$0xf]
  %v4583 = vld [vmem:[%s4562 + $0x50] sm:$0xf]
  %v4584 = vld [vmem:[%s4562 + $0x54] sm:$0xf]
  %v4585 = vld [vmem:[%s4562 + $0x58] sm:$0xf]
  %v4586 = vld [vmem:[%s4562 + $0x5c] sm:$0xf]
  %v4587 = vld [vmem:[%s4562 + $0x60] sm:$0xf]
  %v4588 = vld [vmem:[%s4562 + $0x64] sm:$0xf]
  %v4589 = vld [vmem:[%s4562 + $0x68] sm:$0xf]
  %v4590 = vld [vmem:[%s4562 + $0x6c] sm:$0xf]
  %v4591 = vld [vmem:[%s4562 + $0x70] sm:$0xf]
  %v4592 = vld [vmem:[%s4562 + $0x74] sm:$0xf]
  %v4593 = vld [vmem:[%s4562 + $0x78] sm:$0xf]
  %v4594 = vld [vmem:[%s4562 + $0x7c] sm:$0xf]
  %v4595 = vld [vmem:[%s4562 + $0x80] sm:$0xf]
  %v4596 = vld [vmem:[%s4562 + $0x84] sm:$0xf]
  %v4597 = vld [vmem:[%s4562 + $0x88] sm:$0xf]
  %v4598 = vld [vmem:[%s4562 + $0x8c] sm:$0xf]
  %v4599 = vld [vmem:[%s4562 + $0x90] sm:$0xf]
  %v4600 = vld [vmem:[%s4562 + $0x94] sm:$0xf]
  %v4601 = vld [vmem:[%s4562 + $0x98] sm:$0xf]
  %v4602 = vld [vmem:[%s4562 + $0x9c] sm:$0xf]
  %v4603 = vld [vmem:[%s4562 + $0xa0] sm:$0xf]
  %v4604 = vld [vmem:[%s4562 + $0xa4] sm:$0xf]
  %v4605 = vld [vmem:[%s4562 + $0xa8] sm:$0xf]
  %v4606 = vld [vmem:[%s4562 + $0xac] sm:$0xf]
  %v4607 = vld [vmem:[%s4562 + $0xb0] sm:$0xf]
  %v4608 = vld [vmem:[%s4562 + $0xb4] sm:$0xf]
  %v4609 = vld [vmem:[%s4562 + $0xb8] sm:$0xf]
  %v4610 = vld [vmem:[%s4562 + $0xbc] sm:$0xf]
  %v4611 = vld [vmem:[%s4562 + $0xc0] sm:$0xf]
  %v4612 = vld [vmem:[%s4562 + $0xc4] sm:$0xf]
  %v4613 = vld [vmem:[%s4562 + $0xc8] sm:$0xf]
  %v4614 = vld [vmem:[%s4562 + $0xcc] sm:$0xf]
  %v4615 = vld [vmem:[%s4562 + $0xd0] sm:$0xf]
  %v4616 = vld [vmem:[%s4562 + $0xd4] sm:$0xf]
  %v4617 = vld [vmem:[%s4562 + $0xd8] sm:$0xf]
  %v4618 = vld [vmem:[%s4562 + $0xdc] sm:$0xf]
  %v4619 = vld [vmem:[%s4562 + $0xe0] sm:$0xf]
  %v4620 = vld [vmem:[%s4562 + $0xe4] sm:$0xf]
  %v4621 = vld [vmem:[%s4562 + $0xe8] sm:$0xf]
  %v4622 = vld [vmem:[%s4562 + $0xec] sm:$0xf]
  %v4623 = vld [vmem:[%s4562 + $0xf0] sm:$0xf]
  %v4624 = vld [vmem:[%s4562 + $0xf4] sm:$0xf]
  %v4625 = vld [vmem:[%s4562 + $0xf8] sm:$0xf]
  %v4626 = vld [vmem:[%s4562 + $0xfc] sm:$0xf]
  %v4627 = vld [vmem:[%s4389 + $0x10] sm:$0xff]
  %v4628 = vld [vmem:[%s4389 + $0x18] sm:$0xff]
  %v4629 = vld [vmem:[%s4389 + $0x50] sm:$0xff]
  %v4630 = vld [vmem:[%s4389 + $0x58] sm:$0xff]
  %v4631 = vld [vmem:[%s4389 + $0x90] sm:$0xff]
  %v4632 = vld [vmem:[%s4389 + $0x98] sm:$0xff]
  %v4633 = vld [vmem:[%s4389 + $0xd0] sm:$0xff]
  %v4634 = vld [vmem:[%s4389 + $0xd8] sm:$0xff]
  %v4635 = vld [vmem:[%s4398 + $0x4] sm:$0xf]
  %v4637 = vlaneseq
  %v4638 = vshrl.u32 %v4637, 7
  %v4639 = vsub.s32 0, %v4638
  %v4640 = vrot.slane %v4635, %v4639
  %v4641 = vlaneseq
  %v4642 = vshrl.u32 %v4641, 7
  %v4643 = vsub.s32 1, %v4642
  %v4644 = vrot.slane %v4635, %v4643
  %v4645 = vlaneseq
  %v4646 = vshrl.u32 %v4645, 7
  %v4647 = vsub.s32 2, %v4646
  %v4648 = vrot.slane %v4635, %v4647
  %v4649 = vlaneseq
  %v4650 = vshrl.u32 %v4649, 7
  %v4651 = vsub.s32 3, %v4650
  %v4652 = vrot.slane %v4635, %v4651
  %v4665 = vunpack.c.l.b16 %v4627
  %v4666 = vunpack.c.h.b16 %v4627
  %v4667 = vunpack.c.l.b16 %v4628
  %v4668 = vunpack.c.h.b16 %v4628
  %v4669 = vunpack.c.l.b16 %v4629
  %v4670 = vunpack.c.h.b16 %v4629
  %v4671 = vunpack.c.l.b16 %v4630
  %v4672 = vunpack.c.h.b16 %v4630
  %v4673 = vunpack.c.l.b16 %v4631
  %v4674 = vunpack.c.h.b16 %v4631
  %v4675 = vunpack.c.l.b16 %v4632
  %v4676 = vunpack.c.h.b16 %v4632
  %v4677 = vunpack.c.l.b16 %v4633
  %v4678 = vunpack.c.h.b16 %v4633
  %v4679 = vunpack.c.l.b16 %v4634
  %v4680 = vunpack.c.h.b16 %v4634
  %v4681 = vpack.c.b16 %v4669, %v4665
  %v4682 = vpack.c.b16 %v4670, %v4666
  %v4683 = vpack.c.b16 %v4671, %v4667
  %v4684 = vpack.c.b16 %v4672, %v4668
  %v4685 = vpack.c.b16 %v4677, %v4673
  %v4686 = vpack.c.b16 %v4678, %v4674
  %v4687 = vpack.c.b16 %v4679, %v4675
  %v4688 = vpack.c.b16 %v4680, %v4676
  %4697 = vmatprep.subr.bf16.mxu0 %v4682
  %4698 = vmatpush1.bf16.msra.mxu0 %v4681
  %4699 = vmatprep.subr.bf16.mxu0 %v4686
  %4700 = vmatpush1.bf16.msra.mxu0 %v4685
  %4701 = vmatprep.subr.bf16.mxu0 0
  %4702 = vmatpush1.bf16.msra.mxu0 0
  %4703 = vmatprep.subr.bf16.mxu0 0
  %4704 = vmatpush1.bf16.msra.mxu0 0
  %4705 = vmatprep.subr.bf16.mxu0 0
  %4706 = vmatpush1.bf16.msra.mxu0 0
  %4707 = vmatprep.subr.bf16.mxu0 0
  %4708 = vmatpush1.bf16.msra.mxu0 0
  %4709 = vmatprep.subr.bf16.mxu0 0
  %4710 = vmatpush1.bf16.msra.mxu0 0
  %4711 = vmatprep.subr.bf16.mxu0 0
  %4712 = vmatpush1.bf16.msra.mxu0 0
  %4713 = vmatprep.subr.bf16.mxu0 0
  %4714 = vmatpush1.bf16.msra.mxu0 0
  %4715 = vmatprep.subr.bf16.mxu0 0
  %4716 = vmatpush1.bf16.msra.mxu0 0
  %4717 = vmatprep.subr.bf16.mxu0 0
  %4718 = vmatpush1.bf16.msra.mxu0 0
  %4719 = vmatprep.subr.bf16.mxu0 0
  %4720 = vmatpush1.bf16.msra.mxu0 0
  %4721 = vmatprep.subr.bf16.mxu0 0
  %4722 = vmatpush1.bf16.msra.mxu0 0
  %4723 = vmatprep.subr.bf16.mxu0 0
  %4724 = vmatpush1.bf16.msra.mxu0 0
  %4725 = vmatprep.subr.bf16.mxu0 0
  %4726 = vmatpush1.bf16.msra.mxu0 0
  %4727 = vmatprep.subr.bf16.mxu0 0
  %4728 = vmatpush1.bf16.msra.mxu0 0
  %4729 = vmatprep.mubr.bf16.mxu0 0
  %4730 = vmatmul.mubr.bf16.gmra.mrb[0].mxu0 %v4462
  %v4731 = vpop.f32.mrb[0].mxu0
  %v4732 = vadd.f32 %v4640, %v4731
  %v4733 = vpop.f32.mrb[0].mxu0
  %v4734 = vadd.f32 %v4644, %v4733
  %v4735 = vpop.f32.mrb[0].mxu0
  %v4736 = vadd.f32 %v4640, %v4735
  %v4737 = vpop.f32.mrb[0].mxu0
  %v4738 = vadd.f32 %v4644, %v4737
  %4739 = vdwg.mxu0
  %4740 = vmatprep.subr.bf16.mxu0 %v4684
  %4741 = vmatpush1.bf16.msra.mxu0 %v4683
  %4742 = vmatprep.subr.bf16.mxu0 %v4688
  %4743 = vmatpush1.bf16.msra.mxu0 %v4687
  %4744 = vmatprep.subr.bf16.mxu0 0
  %4745 = vmatpush1.bf16.msra.mxu0 0
  %4746 = vmatprep.subr.bf16.mxu0 0
  %4747 = vmatpush1.bf16.msra.mxu0 0
  %4748 = vmatprep.subr.bf16.mxu0 0
  %4749 = vmatpush1.bf16.msra.mxu0 0
  %4750 = vmatprep.subr.bf16.mxu0 0
  %4751 = vmatpush1.bf16.msra.mxu0 0
  %4752 = vmatprep.subr.bf16.mxu0 0
  %4753 = vmatpush1.bf16.msra.mxu0 0
  %4754 = vmatprep.subr.bf16.mxu0 0
  %4755 = vmatpush1.bf16.msra.mxu0 0
  %4756 = vmatprep.subr.bf16.mxu0 0
  %4757 = vmatpush1.bf16.msra.mxu0 0
  %4758 = vmatprep.subr.bf16.mxu0 0
  %4759 = vmatpush1.bf16.msra.mxu0 0
  %4760 = vmatprep.subr.bf16.mxu0 0
  %4761 = vmatpush1.bf16.msra.mxu0 0
  %4762 = vmatprep.subr.bf16.mxu0 0
  %4763 = vmatpush1.bf16.msra.mxu0 0
  %4764 = vmatprep.subr.bf16.mxu0 0
  %4765 = vmatpush1.bf16.msra.mxu0 0
  %4766 = vmatprep.subr.bf16.mxu0 0
  %4767 = vmatpush1.bf16.msra.mxu0 0
  %4768 = vmatprep.subr.bf16.mxu0 0
  %4769 = vmatpush1.bf16.msra.mxu0 0
  %4770 = vmatprep.subr.bf16.mxu0 0
  %4771 = vmatpush1.bf16.msra.mxu0 0
  %4772 = vmatprep.mubr.bf16.mxu0 0
  %4773 = vmatmul.mubr.bf16.gmra.mrb[0].mxu0 %v4462
  %v4774 = vpop.f32.mrb[0].mxu0
  %v4775 = vadd.f32 %v4648, %v4774
  %v4776 = vpop.f32.mrb[0].mxu0
  %v4777 = vadd.f32 %v4652, %v4776
  %v4778 = vpop.f32.mrb[0].mxu0
  %v4779 = vadd.f32 %v4648, %v4778
  %v4780 = vpop.f32.mrb[0].mxu0
  %v4781 = vadd.f32 %v4652, %v4780
  %4782 = vdwg.mxu0
  %v4783 = vmax.f32 %v4732, 0.0
  %v4784 = vmax.f32 %v4734, 0.0
  %v4785 = vmax.f32 %v4775, 0.0
  %v4786 = vmax.f32 %v4777, 0.0
  %v4787 = vmax.f32 %v4736, 0.0
  %v4788 = vmax.f32 %v4738, 0.0
  %v4789 = vmax.f32 %v4779, 0.0
  %v4790 = vmax.f32 %v4781, 0.0
  %v4791 = vpack.c.bf16 %v4787, %v4783
  %v4792 = vpack.c.bf16 %v4788, %v4784
  %v4793 = vpack.c.bf16 %v4789, %v4785
  %v4794 = vpack.c.bf16 %v4790, %v4786
  %v4795 = vld [vmem:[%s4562 + $0x100] sm:$0xf]
  %v4796 = vld [vmem:[%s4562 + $0x104] sm:$0xf]
  %v4797 = vld [vmem:[%s4562 + $0x108] sm:$0xf]
  %v4798 = vld [vmem:[%s4562 + $0x10c] sm:$0xf]
  %v4799 = vld [vmem:[%s4562 + $0x110] sm:$0xf]
  %v4800 = vld [vmem:[%s4562 + $0x114] sm:$0xf]
  %v4801 = vld [vmem:[%s4562 + $0x118] sm:$0xf]
  %v4802 = vld [vmem:[%s4562 + $0x11c] sm:$0xf]
  %v4803 = vld [vmem:[%s4562 + $0x120] sm:$0xf]
  %v4804 = vld [vmem:[%s4562 + $0x124] sm:$0xf]
  %v4805 = vld [vmem:[%s4562 + $0x128] sm:$0xf]
  %v4806 = vld [vmem:[%s4562 + $0x12c] sm:$0xf]
  %v4807 = vld [vmem:[%s4562 + $0x130] sm:$0xf]
  %v4808 = vld [vmem:[%s4562 + $0x134] sm:$0xf]
  %v4809 = vld [vmem:[%s4562 + $0x138] sm:$0xf]
  %v4810 = vld [vmem:[%s4562 + $0x13c] sm:$0xf]
  %v4811 = vld [vmem:[%s4562 + $0x140] sm:$0xf]
  %v4812 = vld [vmem:[%s4562 + $0x144] sm:$0xf]
  %v4813 = vld [vmem:[%s4562 + $0x148] sm:$0xf]
  %v4814 = vld [vmem:[%s4562 + $0x14c] sm:$0xf]
  %v4815 = vld [vmem:[%s4562 + $0x150] sm:$0xf]
  %v4816 = vld [vmem:[%s4562 + $0x154] sm:$0xf]
  %v4817 = vld [vmem:[%s4562 + $0x158] sm:$0xf]
  %v4818 = vld [vmem:[%s4562 + $0x15c] sm:$0xf]
  %v4819 = vld [vmem:[%s4562 + $0x160] sm:$0xf]
  %v4820 = vld [vmem:[%s4562 + $0x164] sm:$0xf]
  %v4821 = vld [vmem:[%s4562 + $0x168] sm:$0xf]
  %v4822 = vld [vmem:[%s4562 + $0x16c] sm:$0xf]
  %v4823 = vld [vmem:[%s4562 + $0x170] sm:$0xf]
  %v4824 = vld [vmem:[%s4562 + $0x174] sm:$0xf]
  %v4825 = vld [vmem:[%s4562 + $0x178] sm:$0xf]
  %v4826 = vld [vmem:[%s4562 + $0x17c] sm:$0xf]
  %v4827 = vld [vmem:[%s4562 + $0x180] sm:$0xf]
  %v4828 = vld [vmem:[%s4562 + $0x184] sm:$0xf]
  %v4829 = vld [vmem:[%s4562 + $0x188] sm:$0xf]
  %v4830 = vld [vmem:[%s4562 + $0x18c] sm:$0xf]
  %v4831 = vld [vmem:[%s4562 + $0x190] sm:$0xf]
  %v4832 = vld [vmem:[%s4562 + $0x194] sm:$0xf]
  %v4833 = vld [vmem:[%s4562 + $0x198] sm:$0xf]
  %v4834 = vld [vmem:[%s4562 + $0x19c] sm:$0xf]
  %v4835 = vld [vmem:[%s4562 + $0x1a0] sm:$0xf]
  %v4836 = vld [vmem:[%s4562 + $0x1a4] sm:$0xf]
  %v4837 = vld [vmem:[%s4562 + $0x1a8] sm:$0xf]
  %v4838 = vld [vmem:[%s4562 + $0x1ac] sm:$0xf]
  %v4839 = vld [vmem:[%s4562 + $0x1b0] sm:$0xf]
  %v4840 = vld [vmem:[%s4562 + $0x1b4] sm:$0xf]
  %v4841 = vld [vmem:[%s4562 + $0x1b8] sm:$0xf]
  %v4842 = vld [vmem:[%s4562 + $0x1bc] sm:$0xf]
  %v4843 = vld [vmem:[%s4562 + $0x1c0] sm:$0xf]
  %v4844 = vld [vmem:[%s4562 + $0x1c4] sm:$0xf]
  %v4845 = vld [vmem:[%s4562 + $0x1c8] sm:$0xf]
  %v4846 = vld [vmem:[%s4562 + $0x1cc] sm:$0xf]
  %v4847 = vld [vmem:[%s4562 + $0x1d0] sm:$0xf]
  %v4848 = vld [vmem:[%s4562 + $0x1d4] sm:$0xf]
  %v4849 = vld [vmem:[%s4562 + $0x1d8] sm:$0xf]
  %v4850 = vld [vmem:[%s4562 + $0x1dc] sm:$0xf]
  %v4851 = vld [vmem:[%s4562 + $0x1e0] sm:$0xf]
  %v4852 = vld [vmem:[%s4562 + $0x1e4] sm:$0xf]
  %v4853 = vld [vmem:[%s4562 + $0x1e8] sm:$0xf]
  %v4854 = vld [vmem:[%s4562 + $0x1ec] sm:$0xf]
  %v4855 = vld [vmem:[%s4562 + $0x1f0] sm:$0xf]
  %v4856 = vld [vmem:[%s4562 + $0x1f4] sm:$0xf]
  %v4857 = vld [vmem:[%s4562 + $0x1f8] sm:$0xf]
  %v4858 = vld [vmem:[%s4562 + $0x1fc] sm:$0xf]
  %v4923 = vunpack.c.l.b16 %v4795
  %v4924 = vunpack.c.l.b16 %v4796
  %v4925 = vunpack.c.l.b16 %v4797
  %v4926 = vunpack.c.l.b16 %v4798
  %v4927 = vunpack.c.l.b16 %v4799
  %v4928 = vunpack.c.l.b16 %v4800
  %v4929 = vunpack.c.l.b16 %v4801
  %v4930 = vunpack.c.l.b16 %v4802
  %v4931 = vunpack.c.l.b16 %v4803
  %v4932 = vunpack.c.l.b16 %v4804
  %v4933 = vunpack.c.l.b16 %v4805
  %v4934 = vunpack.c.l.b16 %v4806
  %v4935 = vunpack.c.l.b16 %v4807
  %v4936 = vunpack.c.l.b16 %v4808
  %v4937 = vunpack.c.l.b16 %v4809
  %v4938 = vunpack.c.l.b16 %v4810
  %v4939 = vunpack.c.l.b16 %v4811
  %v4940 = vunpack.c.l.b16 %v4812
  %v4941 = vunpack.c.l.b16 %v4813
  %v4942 = vunpack.c.l.b16 %v4814
  %v4943 = vunpack.c.l.b16 %v4815
  %v4944 = vunpack.c.l.b16 %v4816
  %v4945 = vunpack.c.l.b16 %v4817
  %v4946 = vunpack.c.l.b16 %v4818
  %v4947 = vunpack.c.l.b16 %v4819
  %v4948 = vunpack.c.l.b16 %v4820
  %v4949 = vunpack.c.l.b16 %v4821
  %v4950 = vunpack.c.l.b16 %v4822
  %v4951 = vunpack.c.l.b16 %v4823
  %v4952 = vunpack.c.l.b16 %v4824
  %v4953 = vunpack.c.l.b16 %v4825
  %v4954 = vunpack.c.l.b16 %v4826
  %v4955 = vunpack.c.l.b16 %v4827
  %v4956 = vunpack.c.l.b16 %v4828
  %v4957 = vunpack.c.l.b16 %v4829
  %v4958 = vunpack.c.l.b16 %v4830
  %v4959 = vunpack.c.l.b16 %v4831
  %v4960 = vunpack.c.l.b16 %v4832
  %v4961 = vunpack.c.l.b16 %v4833
  %v4962 = vunpack.c.l.b16 %v4834
  %v4963 = vunpack.c.l.b16 %v4835
  %v4964 = vunpack.c.l.b16 %v4836
  %v4965 = vunpack.c.l.b16 %v4837
  %v4966 = vunpack.c.l.b16 %v4838
  %v4967 = vunpack.c.l.b16 %v4839
  %v4968 = vunpack.c.l.b16 %v4840
  %v4969 = vunpack.c.l.b16 %v4841
  %v4970 = vunpack.c.l.b16 %v4842
  %v4971 = vunpack.c.l.b16 %v4843
  %v4972 = vunpack.c.l.b16 %v4844
  %v4973 = vunpack.c.l.b16 %v4845
  %v4974 = vunpack.c.l.b16 %v4846
  %v4975 = vunpack.c.l.b16 %v4847
  %v4976 = vunpack.c.l.b16 %v4848
  %v4977 = vunpack.c.l.b16 %v4849
  %v4978 = vunpack.c.l.b16 %v4850
  %v4979 = vunpack.c.l.b16 %v4851
  %v4980 = vunpack.c.l.b16 %v4852
  %v4981 = vunpack.c.l.b16 %v4853
  %v4982 = vunpack.c.l.b16 %v4854
  %v4983 = vunpack.c.l.b16 %v4855
  %v4984 = vunpack.c.l.b16 %v4856
  %v4985 = vunpack.c.l.b16 %v4857
  %v4986 = vunpack.c.l.b16 %v4858
  %v4987 = vpack.c.b16 %v4924, %v4923
  %v4988 = vpack.c.b16 %v4926, %v4925
  %v4989 = vpack.c.b16 %v4928, %v4927
  %v4990 = vpack.c.b16 %v4930, %v4929
  %v4991 = vpack.c.b16 %v4932, %v4931
  %v4992 = vpack.c.b16 %v4934, %v4933
  %v4993 = vpack.c.b16 %v4936, %v4935
  %v4994 = vpack.c.b16 %v4938, %v4937
  %v4995 = vpack.c.b16 %v4940, %v4939
  %v4996 = vpack.c.b16 %v4942, %v4941
  %v4997 = vpack.c.b16 %v4944, %v4943
  %v4998 = vpack.c.b16 %v4946, %v4945
  %v4999 = vpack.c.b16 %v4948, %v4947
  %v5000 = vpack.c.b16 %v4950, %v4949
  %v5001 = vpack.c.b16 %v4952, %v4951
  %v5002 = vpack.c.b16 %v4954, %v4953
  %v5003 = vpack.c.b16 %v4956, %v4955
  %v5004 = vpack.c.b16 %v4958, %v4957
  %v5005 = vpack.c.b16 %v4960, %v4959
  %v5006 = vpack.c.b16 %v4962, %v4961
  %v5007 = vpack.c.b16 %v4964, %v4963
  %v5008 = vpack.c.b16 %v4966, %v4965
  %v5009 = vpack.c.b16 %v4968, %v4967
  %v5010 = vpack.c.b16 %v4970, %v4969
  %v5011 = vpack.c.b16 %v4972, %v4971
  %v5012 = vpack.c.b16 %v4974, %v4973
  %v5013 = vpack.c.b16 %v4976, %v4975
  %v5014 = vpack.c.b16 %v4978, %v4977
  %v5015 = vpack.c.b16 %v4980, %v4979
  %v5016 = vpack.c.b16 %v4982, %v4981
  %v5017 = vpack.c.b16 %v4984, %v4983
  %v5018 = vpack.c.b16 %v4986, %v4985
  %5051 = vmatprep.subr.bf16.mxu0 0
  %5052 = vmatpush1.bf16.msra.mxu0 %v4987
  %5053 = vmatprep.subr.bf16.mxu0 0
  %5054 = vmatpush1.bf16.msra.mxu0 %v4988
  %5055 = vmatprep.subr.bf16.mxu0 0
  %5056 = vmatpush1.bf16.msra.mxu0 %v4989
  %5057 = vmatprep.subr.bf16.mxu0 0
  %5058 = vmatpush1.bf16.msra.mxu0 %v4990
  %5059 = vmatprep.subr.bf16.mxu0 0
  %5060 = vmatpush1.bf16.msra.mxu0 %v4991
  %5061 = vmatprep.subr.bf16.mxu0 0
  %5062 = vmatpush1.bf16.msra.mxu0 %v4992
  %5063 = vmatprep.subr.bf16.mxu0 0
  %5064 = vmatpush1.bf16.msra.mxu0 %v4993
  %5065 = vmatprep.subr.bf16.mxu0 0
  %5066 = vmatpush1.bf16.msra.mxu0 %v4994
  %5067 = vmatprep.subr.bf16.mxu0 0
  %5068 = vmatpush1.bf16.msra.mxu0 %v4995
  %5069 = vmatprep.subr.bf16.mxu0 0
  %5070 = vmatpush1.bf16.msra.mxu0 %v4996
  %5071 = vmatprep.subr.bf16.mxu0 0
  %5072 = vmatpush1.bf16.msra.mxu0 %v4997
  %5073 = vmatprep.subr.bf16.mxu0 0
  %5074 = vmatpush1.bf16.msra.mxu0 %v4998
  %5075 = vmatprep.subr.bf16.mxu0 0
  %5076 = vmatpush1.bf16.msra.mxu0 %v4999
  %5077 = vmatprep.subr.bf16.mxu0 0
  %5078 = vmatpush1.bf16.msra.mxu0 %v5000
  %5079 = vmatprep.subr.bf16.mxu0 0
  %5080 = vmatpush1.bf16.msra.mxu0 %v5001
  %5081 = vmatprep.subr.bf16.mxu0 0
  %5082 = vmatpush1.bf16.msra.mxu0 %v5002
  %5083 = vmatprep.mubr.bf16.mxu0 %v4792
  %5084 = vmatmul.mubr.bf16.gmra.mrb[0].mxu0 %v4791
  %v5085 = vpop.f32.mrb[0].mxu0
  %v5086 = vadd.f32 0.0, %v5085
  %v5087 = vpop.f32.mrb[0].mxu0
  %v5088 = vpop.f32.mrb[0].mxu0
  %v5089 = vadd.f32 0.0, %v5088
  %v5090 = vpop.f32.mrb[0].mxu0
  %5091 = vdwg.mxu0
  %5092 = vmatprep.subr.bf16.mxu0 0
  %5093 = vmatpush1.bf16.msra.mxu0 %v5003
  %5094 = vmatprep.subr.bf16.mxu0 0
  %5095 = vmatpush1.bf16.msra.mxu0 %v5004
  %5096 = vmatprep.subr.bf16.mxu0 0
  %5097 = vmatpush1.bf16.msra.mxu0 %v5005
  %5098 = vmatprep.subr.bf16.mxu0 0
  %5099 = vmatpush1.bf16.msra.mxu0 %v5006
  %5100 = vmatprep.subr.bf16.mxu0 0
  %5101 = vmatpush1.bf16.msra.mxu0 %v5007
  %5102 = vmatprep.subr.bf16.mxu0 0
  %5103 = vmatpush1.bf16.msra.mxu0 %v5008
  %5104 = vmatprep.subr.bf16.mxu0 0
  %5105 = vmatpush1.bf16.msra.mxu0 %v5009
  %5106 = vmatprep.subr.bf16.mxu0 0
  %5107 = vmatpush1.bf16.msra.mxu0 %v5010
  %5108 = vmatprep.subr.bf16.mxu0 0
  %5109 = vmatpush1.bf16.msra.mxu0 %v5011
  %5110 = vmatprep.subr.bf16.mxu0 0
  %5111 = vmatpush1.bf16.msra.mxu0 %v5012
  %5112 = vmatprep.subr.bf16.mxu0 0
  %5113 = vmatpush1.bf16.msra.mxu0 %v5013
  %5114 = vmatprep.subr.bf16.mxu0 0
  %5115 = vmatpush1.bf16.msra.mxu0 %v5014
  %5116 = vmatprep.subr.bf16.mxu0 0
  %5117 = vmatpush1.bf16.msra.mxu0 %v5015
  %5118 = vmatprep.subr.bf16.mxu0 0
  %5119 = vmatpush1.bf16.msra.mxu0 %v5016
  %5120 = vmatprep.subr.bf16.mxu0 0
  %5121 = vmatpush1.bf16.msra.mxu0 %v5017
  %5122 = vmatprep.subr.bf16.mxu0 0
  %5123 = vmatpush1.bf16.msra.mxu0 %v5018
  %5124 = vmatprep.mubr.bf16.mxu0 %v4794
  %5125 = vmatmul.mubr.bf16.gmra.mrb[0].mxu0 %v4793
  %v5126 = vpop.f32.mrb[0].mxu0
  %v5127 = vadd.f32 %v5086, %v5126
  %v5128 = vpop.f32.mrb[0].mxu0
  %v5129 = vpop.f32.mrb[0].mxu0
  %v5130 = vadd.f32 %v5089, %v5129
  %v5131 = vpop.f32.mrb[0].mxu0
  %5132 = vdwg.mxu0
  %v5197 = vunpack.c.l.b16 %v4563
  %v5198 = vunpack.c.l.b16 %v4564
  %v5199 = vunpack.c.l.b16 %v4565
  %v5200 = vunpack.c.l.b16 %v4566
  %v5201 = vunpack.c.l.b16 %v4567
  %v5202 = vunpack.c.l.b16 %v4568
  %v5203 = vunpack.c.l.b16 %v4569
  %v5204 = vunpack.c.l.b16 %v4570
  %v5205 = vunpack.c.l.b16 %v4571
  %v5206 = vunpack.c.l.b16 %v4572
  %v5207 = vunpack.c.l.b16 %v4573
  %v5208 = vunpack.c.l.b16 %v4574
  %v5209 = vunpack.c.l.b16 %v4575
  %v5210 = vunpack.c.l.b16 %v4576
  %v5211 = vunpack.c.l.b16 %v4577
  %v5212 = vunpack.c.l.b16 %v4578
  %v5213 = vunpack.c.l.b16 %v4579
  %v5214 = vunpack.c.l.b16 %v4580
  %v5215 = vunpack.c.l.b16 %v4581
  %v5216 = vunpack.c.l.b16 %v4582
  %v5217 = vunpack.c.l.b16 %v4583
  %v5218 = vunpack.c.l.b16 %v4584
  %v5219 = vunpack.c.l.b16 %v4585
  %v5220 = vunpack.c.l.b16 %v4586
  %v5221 = vunpack.c.l.b16 %v4587
  %v5222 = vunpack.c.l.b16 %v4588
  %v5223 = vunpack.c.l.b16 %v4589
  %v5224 = vunpack.c.l.b16 %v4590
  %v5225 = vunpack.c.l.b16 %v4591
  %v5226 = vunpack.c.l.b16 %v4592
  %v5227 = vunpack.c.l.b16 %v4593
  %v5228 = vunpack.c.l.b16 %v4594
  %v5229 = vunpack.c.l.b16 %v4595
  %v5230 = vunpack.c.l.b16 %v4596
  %v5231 = vunpack.c.l.b16 %v4597
  %v5232 = vunpack.c.l.b16 %v4598
  %v5233 = vunpack.c.l.b16 %v4599
  %v5234 = vunpack.c.l.b16 %v4600
  %v5235 = vunpack.c.l.b16 %v4601
  %v5236 = vunpack.c.l.b16 %v4602
  %v5237 = vunpack.c.l.b16 %v4603
  %v5238 = vunpack.c.l.b16 %v4604
  %v5239 = vunpack.c.l.b16 %v4605
  %v5240 = vunpack.c.l.b16 %v4606
  %v5241 = vunpack.c.l.b16 %v4607
  %v5242 = vunpack.c.l.b16 %v4608
  %v5243 = vunpack.c.l.b16 %v4609
  %v5244 = vunpack.c.l.b16 %v4610
  %v5245 = vunpack.c.l.b16 %v4611
  %v5246 = vunpack.c.l.b16 %v4612
  %v5247 = vunpack.c.l.b16 %v4613
  %v5248 = vunpack.c.l.b16 %v4614
  %v5249 = vunpack.c.l.b16 %v4615
  %v5250 = vunpack.c.l.b16 %v4616
  %v5251 = vunpack.c.l.b16 %v4617
  %v5252 = vunpack.c.l.b16 %v4618
  %v5253 = vunpack.c.l.b16 %v4619
  %v5254 = vunpack.c.l.b16 %v4620
  %v5255 = vunpack.c.l.b16 %v4621
  %v5256 = vunpack.c.l.b16 %v4622
  %v5257 = vunpack.c.l.b16 %v4623
  %v5258 = vunpack.c.l.b16 %v4624
  %v5259 = vunpack.c.l.b16 %v4625
  %v5260 = vunpack.c.l.b16 %v4626
  %v5261 = vpack.c.b16 %v5198, %v5197
  %v5262 = vpack.c.b16 %v5200, %v5199
  %v5263 = vpack.c.b16 %v5202, %v5201
  %v5264 = vpack.c.b16 %v5204, %v5203
  %v5265 = vpack.c.b16 %v5206, %v5205
  %v5266 = vpack.c.b16 %v5208, %v5207
  %v5267 = vpack.c.b16 %v5210, %v5209
  %v5268 = vpack.c.b16 %v5212, %v5211
  %v5269 = vpack.c.b16 %v5214, %v5213
  %v5270 = vpack.c.b16 %v5216, %v5215
  %v5271 = vpack.c.b16 %v5218, %v5217
  %v5272 = vpack.c.b16 %v5220, %v5219
  %v5273 = vpack.c.b16 %v5222, %v5221
  %v5274 = vpack.c.b16 %v5224, %v5223
  %v5275 = vpack.c.b16 %v5226, %v5225
  %v5276 = vpack.c.b16 %v5228, %v5227
  %v5277 = vpack.c.b16 %v5230, %v5229
  %v5278 = vpack.c.b16 %v5232, %v5231
  %v5279 = vpack.c.b16 %v5234, %v5233
  %v5280 = vpack.c.b16 %v5236, %v5235
  %v5281 = vpack.c.b16 %v5238, %v5237
  %v5282 = vpack.c.b16 %v5240, %v5239
  %v5283 = vpack.c.b16 %v5242, %v5241
  %v5284 = vpack.c.b16 %v5244, %v5243
  %v5285 = vpack.c.b16 %v5246, %v5245
  %v5286 = vpack.c.b16 %v5248, %v5247
  %v5287 = vpack.c.b16 %v5250, %v5249
  %v5288 = vpack.c.b16 %v5252, %v5251
  %v5289 = vpack.c.b16 %v5254, %v5253
  %v5290 = vpack.c.b16 %v5256, %v5255
  %v5291 = vpack.c.b16 %v5258, %v5257
  %v5292 = vpack.c.b16 %v5260, %v5259
  %5325 = vmatprep.subr.bf16.mxu0 0
  %5326 = vmatpush1.bf16.msra.mxu0 %v5261
  %5327 = vmatprep.subr.bf16.mxu0 0
  %5328 = vmatpush1.bf16.msra.mxu0 %v5262
  %5329 = vmatprep.subr.bf16.mxu0 0
  %5330 = vmatpush1.bf16.msra.mxu0 %v5263
  %5331 = vmatprep.subr.bf16.mxu0 0
  %5332 = vmatpush1.bf16.msra.mxu0 %v5264
  %5333 = vmatprep.subr.bf16.mxu0 0
  %5334 = vmatpush1.bf16.msra.mxu0 %v5265
  %5335 = vmatprep.subr.bf16.mxu0 0
  %5336 = vmatpush1.bf16.msra.mxu0 %v5266
  %5337 = vmatprep.subr.bf16.mxu0 0
  %5338 = vmatpush1.bf16.msra.mxu0 %v5267
  %5339 = vmatprep.subr.bf16.mxu0 0
  %5340 = vmatpush1.bf16.msra.mxu0 %v5268
  %5341 = vmatprep.subr.bf16.mxu0 0
  %5342 = vmatpush1.bf16.msra.mxu0 %v5269
  %5343 = vmatprep.subr.bf16.mxu0 0
  %5344 = vmatpush1.bf16.msra.mxu0 %v5270
  %5345 = vmatprep.subr.bf16.mxu0 0
  %5346 = vmatpush1.bf16.msra.mxu0 %v5271
  %5347 = vmatprep.subr.bf16.mxu0 0
  %5348 = vmatpush1.bf16.msra.mxu0 %v5272
  %5349 = vmatprep.subr.bf16.mxu0 0
  %5350 = vmatpush1.bf16.msra.mxu0 %v5273
  %5351 = vmatprep.subr.bf16.mxu0 0
  %5352 = vmatpush1.bf16.msra.mxu0 %v5274
  %5353 = vmatprep.subr.bf16.mxu0 0
  %5354 = vmatpush1.bf16.msra.mxu0 %v5275
  %5355 = vmatprep.subr.bf16.mxu0 0
  %5356 = vmatpush1.bf16.msra.mxu0 %v5276
  %5357 = vmatprep.mubr.bf16.mxu0 %v4559
  %5358 = vmatmul.mubr.bf16.gmra.mrb[0].mxu0 %v4558
  %v5359 = vpop.f32.mrb[0].mxu0
  %v5360 = vadd.f32 %v5127, %v5359
  %v5361 = vpop.f32.mrb[0].mxu0
  %v5362 = vpop.f32.mrb[0].mxu0
  %v5363 = vadd.f32 %v5130, %v5362
  %v5364 = vpop.f32.mrb[0].mxu0
  %5365 = vdwg.mxu0
  %5366 = vmatprep.subr.bf16.mxu0 0
  %5367 = vmatpush1.bf16.msra.mxu0 %v5277
  %5368 = vmatprep.subr.bf16.mxu0 0
  %5369 = vmatpush1.bf16.msra.mxu0 %v5278
  %5370 = vmatprep.subr.bf16.mxu0 0
  %5371 = vmatpush1.bf16.msra.mxu0 %v5279
  %5372 = vmatprep.subr.bf16.mxu0 0
  %5373 = vmatpush1.bf16.msra.mxu0 %v5280
  %5374 = vmatprep.subr.bf16.mxu0 0
  %5375 = vmatpush1.bf16.msra.mxu0 %v5281
  %5376 = vmatprep.subr.bf16.mxu0 0
  %5377 = vmatpush1.bf16.msra.mxu0 %v5282
  %5378 = vmatprep.subr.bf16.mxu0 0
  %5379 = vmatpush1.bf16.msra.mxu0 %v5283
  %5380 = vmatprep.subr.bf16.mxu0 0
  %5381 = vmatpush1.bf16.msra.mxu0 %v5284
  %5382 = vmatprep.subr.bf16.mxu0 0
  %5383 = vmatpush1.bf16.msra.mxu0 %v5285
  %5384 = vmatprep.subr.bf16.mxu0 0
  %5385 = vmatpush1.bf16.msra.mxu0 %v5286
  %5386 = vmatprep.subr.bf16.mxu0 0
  %5387 = vmatpush1.bf16.msra.mxu0 %v5287
  %5388 = vmatprep.subr.bf16.mxu0 0
  %5389 = vmatpush1.bf16.msra.mxu0 %v5288
  %5390 = vmatprep.subr.bf16.mxu0 0
  %5391 = vmatpush1.bf16.msra.mxu0 %v5289
  %5392 = vmatprep.subr.bf16.mxu0 0
  %5393 = vmatpush1.bf16.msra.mxu0 %v5290
  %5394 = vmatprep.subr.bf16.mxu0 0
  %5395 = vmatpush1.bf16.msra.mxu0 %v5291
  %5396 = vmatprep.subr.bf16.mxu0 0
  %5397 = vmatpush1.bf16.msra.mxu0 %v5292
  %5398 = vmatprep.mubr.bf16.mxu0 %v4561
  %5399 = vmatmul.mubr.bf16.gmra.mrb[0].mxu0 %v4560
  %v5400 = vpop.f32.mrb[0].mxu0
  %v5401 = vadd.f32 %v5360, %v5400
  %v5402 = vpop.f32.mrb[0].mxu0
  %v5403 = vpop.f32.mrb[0].mxu0
  %v5404 = vadd.f32 %v5363, %v5403
  %v5405 = vpop.f32.mrb[0].mxu0
  %5406 = vdwg.mxu0
  %v5407 = vld [vmem:[%s4389 + $0x20] sm:$0xff]
  %v5408 = vld [vmem:[%s4389 + $0x28] sm:$0xff]
  %v5409 = vld [vmem:[%s4389 + $0x60] sm:$0xff]
  %v5410 = vld [vmem:[%s4389 + $0x68] sm:$0xff]
  %v5411 = vld [vmem:[%s4389 + $0xa0] sm:$0xff]
  %v5412 = vld [vmem:[%s4389 + $0xa8] sm:$0xff]
  %v5413 = vld [vmem:[%s4389 + $0xe0] sm:$0xff]
  %v5414 = vld [vmem:[%s4389 + $0xe8] sm:$0xff]
  %v5415 = vld [vmem:[%s4398 + $0x8] sm:$0xf]
  %v5417 = vlaneseq
  %v5418 = vshrl.u32 %v5417, 7
  %v5419 = vsub.s32 0, %v5418
  %v5420 = vrot.slane %v5415, %v5419
  %v5421 = vlaneseq
  %v5422 = vshrl.u32 %v5421, 7
  %v5423 = vsub.s32 1, %v5422
  %v5424 = vrot.slane %v5415, %v5423
  %v5425 = vlaneseq
  %v5426 = vshrl.u32 %v5425, 7
  %v5427 = vsub.s32 2, %v5426
  %v5428 = vrot.slane %v5415, %v5427
  %v5429 = vlaneseq
  %v5430 = vshrl.u32 %v5429, 7
  %v5431 = vsub.s32 3, %v5430
  %v5432 = vrot.slane %v5415, %v5431
  %v5445 = vunpack.c.l.b16 %v5407
  %v5446 = vunpack.c.h.b16 %v5407
  %v5447 = vunpack.c.l.b16 %v5408
  %v5448 = vunpack.c.h.b16 %v5408
  %v5449 = vunpack.c.l.b16 %v5409
  %v5450 = vunpack.c.h.b16 %v5409
  %v5451 = vunpack.c.l.b16 %v5410
  %v5452 = vunpack.c.h.b16 %v5410
  %v5453 = vunpack.c.l.b16 %v5411
  %v5454 = vunpack.c.h.b16 %v5411
  %v5455 = vunpack.c.l.b16 %v5412
  %v5456 = vunpack.c.h.b16 %v5412
  %v5457 = vunpack.c.l.b16 %v5413
  %v5458 = vunpack.c.h.b16 %v5413
  %v5459 = vunpack.c.l.b16 %v5414
  %v5460 = vunpack.c.h.b16 %v5414
  %v5461 = vpack.c.b16 %v5449, %v5445
  %v5462 = vpack.c.b16 %v5450, %v5446
  %v5463 = vpack.c.b16 %v5451, %v5447
  %v5464 = vpack.c.b16 %v5452, %v5448
  %v5465 = vpack.c.b16 %v5457, %v5453
  %v5466 = vpack.c.b16 %v5458, %v5454
  %v5467 = vpack.c.b16 %v5459, %v5455
  %v5468 = vpack.c.b16 %v5460, %v5456
  %5477 = vmatprep.subr.bf16.mxu0 %v5462
  %5478 = vmatpush1.bf16.msra.mxu0 %v5461
  %5479 = vmatprep.subr.bf16.mxu0 %v5466
  %5480 = vmatpush1.bf16.msra.mxu0 %v5465
  %5481 = vmatprep.subr.bf16.mxu0 0
  %5482 = vmatpush1.bf16.msra.mxu0 0
  %5483 = vmatprep.subr.bf16.mxu0 0
  %5484 = vmatpush1.bf16.msra.mxu0 0
  %5485 = vmatprep.subr.bf16.mxu0 0
  %5486 = vmatpush1.bf16.msra.mxu0 0
  %5487 = vmatprep.subr.bf16.mxu0 0
  %5488 = vmatpush1.bf16.msra.mxu0 0
  %5489 = vmatprep.subr.bf16.mxu0 0
  %5490 = vmatpush1.bf16.msra.mxu0 0
  %5491 = vmatprep.subr.bf16.mxu0 0
  %5492 = vmatpush1.bf16.msra.mxu0 0
  %5493 = vmatprep.subr.bf16.mxu0 0
  %5494 = vmatpush1.bf16.msra.mxu0 0
  %5495 = vmatprep.subr.bf16.mxu0 0
  %5496 = vmatpush1.bf16.msra.mxu0 0
  %5497 = vmatprep.subr.bf16.mxu0 0
  %5498 = vmatpush1.bf16.msra.mxu0 0
  %5499 = vmatprep.subr.bf16.mxu0 0
  %5500 = vmatpush1.bf16.msra.mxu0 0
  %5501 = vmatprep.subr.bf16.mxu0 0
  %5502 = vmatpush1.bf16.msra.mxu0 0
  %5503 = vmatprep.subr.bf16.mxu0 0
  %5504 = vmatpush1.bf16.msra.mxu0 0
  %5505 = vmatprep.subr.bf16.mxu0 0
  %5506 = vmatpush1.bf16.msra.mxu0 0
  %5507 = vmatprep.subr.bf16.mxu0 0
  %5508 = vmatpush1.bf16.msra.mxu0 0
  %5509 = vmatprep.mubr.bf16.mxu0 0
  %5510 = vmatmul.mubr.bf16.gmra.mrb[0].mxu0 %v4462
  %v5511 = vpop.f32.mrb[0].mxu0
  %v5512 = vadd.f32 %v5420, %v5511
  %v5513 = vpop.f32.mrb[0].mxu0
  %v5514 = vadd.f32 %v5424, %v5513
  %v5515 = vpop.f32.mrb[0].mxu0
  %v5516 = vadd.f32 %v5420, %v5515
  %v5517 = vpop.f32.mrb[0].mxu0
  %v5518 = vadd.f32 %v5424, %v5517
  %5519 = vdwg.mxu0
  %5520 = vmatprep.subr.bf16.mxu0 %v5464
  %5521 = vmatpush1.bf16.msra.mxu0 %v5463
  %5522 = vmatprep.subr.bf16.mxu0 %v5468
  %5523 = vmatpush1.bf16.msra.mxu0 %v5467
  %5524 = vmatprep.subr.bf16.mxu0 0
  %5525 = vmatpush1.bf16.msra.mxu0 0
  %5526 = vmatprep.subr.bf16.mxu0 0
  %5527 = vmatpush1.bf16.msra.mxu0 0
  %5528 = vmatprep.subr.bf16.mxu0 0
  %5529 = vmatpush1.bf16.msra.mxu0 0
  %5530 = vmatprep.subr.bf16.mxu0 0
  %5531 = vmatpush1.bf16.msra.mxu0 0
  %5532 = vmatprep.subr.bf16.mxu0 0
  %5533 = vmatpush1.bf16.msra.mxu0 0
  %5534 = vmatprep.subr.bf16.mxu0 0
  %5535 = vmatpush1.bf16.msra.mxu0 0
  %5536 = vmatprep.subr.bf16.mxu0 0
  %5537 = vmatpush1.bf16.msra.mxu0 0
  %5538 = vmatprep.subr.bf16.mxu0 0
  %5539 = vmatpush1.bf16.msra.mxu0 0
  %5540 = vmatprep.subr.bf16.mxu0 0
  %5541 = vmatpush1.bf16.msra.mxu0 0
  %5542 = vmatprep.subr.bf16.mxu0 0
  %5543 = vmatpush1.bf16.msra.mxu0 0
  %5544 = vmatprep.subr.bf16.mxu0 0
  %5545 = vmatpush1.bf16.msra.mxu0 0
  %5546 = vmatprep.subr.bf16.mxu0 0
  %5547 = vmatpush1.bf16.msra.mxu0 0
  %5548 = vmatprep.subr.bf16.mxu0 0
  %5549 = vmatpush1.bf16.msra.mxu0 0
  %5550 = vmatprep.subr.bf16.mxu0 0
  %5551 = vmatpush1.bf16.msra.mxu0 0
  %5552 = vmatprep.mubr.bf16.mxu0 0
  %5553 = vmatmul.mubr.bf16.gmra.mrb[0].mxu0 %v4462
  %v5554 = vpop.f32.mrb[0].mxu0
  %v5555 = vadd.f32 %v5428, %v5554
  %v5556 = vpop.f32.mrb[0].mxu0
  %v5557 = vadd.f32 %v5432, %v5556
  %v5558 = vpop.f32.mrb[0].mxu0
  %v5559 = vadd.f32 %v5428, %v5558
  %v5560 = vpop.f32.mrb[0].mxu0
  %v5561 = vadd.f32 %v5432, %v5560
  %5562 = vdwg.mxu0
  %v5563 = vmax.f32 %v5512, 0.0
  %v5564 = vmax.f32 %v5514, 0.0
  %v5565 = vmax.f32 %v5555, 0.0
  %v5566 = vmax.f32 %v5557, 0.0
  %v5567 = vmax.f32 %v5516, 0.0
  %v5568 = vmax.f32 %v5518, 0.0
  %v5569 = vmax.f32 %v5559, 0.0
  %v5570 = vmax.f32 %v5561, 0.0
  %v5571 = vpack.c.bf16 %v5567, %v5563
  %v5572 = vpack.c.bf16 %v5568, %v5564
  %v5573 = vpack.c.bf16 %v5569, %v5565
  %v5574 = vpack.c.bf16 %v5570, %v5566
  %v5575 = vld [vmem:[%s4562 + $0x200] sm:$0xf]
  %v5576 = vld [vmem:[%s4562 + $0x204] sm:$0xf]
  %v5577 = vld [vmem:[%s4562 + $0x208] sm:$0xf]
  %v5578 = vld [vmem:[%s4562 + $0x20c] sm:$0xf]
  %v5579 = vld [vmem:[%s4562 + $0x210] sm:$0xf]
  %v5580 = vld [vmem:[%s4562 + $0x214] sm:$0xf]
  %v5581 = vld [vmem:[%s4562 + $0x218] sm:$0xf]
  %v5582 = vld [vmem:[%s4562 + $0x21c] sm:$0xf]
  %v5583 = vld [vmem:[%s4562 + $0x220] sm:$0xf]
  %v5584 = vld [vmem:[%s4562 + $0x224] sm:$0xf]
  %v5585 = vld [vmem:[%s4562 + $0x228] sm:$0xf]
  %v5586 = vld [vmem:[%s4562 + $0x22c] sm:$0xf]
  %v5587 = vld [vmem:[%s4562 + $0x230] sm:$0xf]
  %v5588 = vld [vmem:[%s4562 + $0x234] sm:$0xf]
  %v5589 = vld [vmem:[%s4562 + $0x238] sm:$0xf]
  %v5590 = vld [vmem:[%s4562 + $0x23c] sm:$0xf]
  %v5591 = vld [vmem:[%s4562 + $0x240] sm:$0xf]
  %v5592 = vld [vmem:[%s4562 + $0x244] sm:$0xf]
  %v5593 = vld [vmem:[%s4562 + $0x248] sm:$0xf]
  %v5594 = vld [vmem:[%s4562 + $0x24c] sm:$0xf]
  %v5595 = vld [vmem:[%s4562 + $0x250] sm:$0xf]
  %v5596 = vld [vmem:[%s4562 + $0x254] sm:$0xf]
  %v5597 = vld [vmem:[%s4562 + $0x258] sm:$0xf]
  %v5598 = vld [vmem:[%s4562 + $0x25c] sm:$0xf]
  %v5599 = vld [vmem:[%s4562 + $0x260] sm:$0xf]
  %v5600 = vld [vmem:[%s4562 + $0x264] sm:$0xf]
  %v5601 = vld [vmem:[%s4562 + $0x268] sm:$0xf]
  %v5602 = vld [vmem:[%s4562 + $0x26c] sm:$0xf]
  %v5603 = vld [vmem:[%s4562 + $0x270] sm:$0xf]
  %v5604 = vld [vmem:[%s4562 + $0x274] sm:$0xf]
  %v5605 = vld [vmem:[%s4562 + $0x278] sm:$0xf]
  %v5606 = vld [vmem:[%s4562 + $0x27c] sm:$0xf]
  %v5607 = vld [vmem:[%s4562 + $0x280] sm:$0xf]
  %v5608 = vld [vmem:[%s4562 + $0x284] sm:$0xf]
  %v5609 = vld [vmem:[%s4562 + $0x288] sm:$0xf]
  %v5610 = vld [vmem:[%s4562 + $0x28c] sm:$0xf]
  %v5611 = vld [vmem:[%s4562 + $0x290] sm:$0xf]
  %v5612 = vld [vmem:[%s4562 + $0x294] sm:$0xf]
  %v5613 = vld [vmem:[%s4562 + $0x298] sm:$0xf]
  %v5614 = vld [vmem:[%s4562 + $0x29c] sm:$0xf]
  %v5615 = vld [vmem:[%s4562 + $0x2a0] sm:$0xf]
  %v5616 = vld [vmem:[%s4562 + $0x2a4] sm:$0xf]
  %v5617 = vld [vmem:[%s4562 + $0x2a8] sm:$0xf]
  %v5618 = vld [vmem:[%s4562 + $0x2ac] sm:$0xf]
  %v5619 = vld [vmem:[%s4562 + $0x2b0] sm:$0xf]
  %v5620 = vld [vmem:[%s4562 + $0x2b4] sm:$0xf]
  %v5621 = vld [vmem:[%s4562 + $0x2b8] sm:$0xf]
  %v5622 = vld [vmem:[%s4562 + $0x2bc] sm:$0xf]
  %v5623 = vld [vmem:[%s4562 + $0x2c0] sm:$0xf]
  %v5624 = vld [vmem:[%s4562 + $0x2c4] sm:$0xf]
  %v5625 = vld [vmem:[%s4562 + $0x2c8] sm:$0xf]
  %v5626 = vld [vmem:[%s4562 + $0x2cc] sm:$0xf]
  %v5627 = vld [vmem:[%s4562 + $0x2d0] sm:$0xf]
  %v5628 = vld [vmem:[%s4562 + $0x2d4] sm:$0xf]
  %v5629 = vld [vmem:[%s4562 + $0x2d8] sm:$0xf]
  %v5630 = vld [vmem:[%s4562 + $0x2dc] sm:$0xf]
  %v5631 = vld [vmem:[%s4562 + $0x2e0] sm:$0xf]
  %v5632 = vld [vmem:[%s4562 + $0x2e4] sm:$0xf]
  %v5633 = vld [vmem:[%s4562 + $0x2e8] sm:$0xf]
  %v5634 = vld [vmem:[%s4562 + $0x2ec] sm:$0xf]
  %v5635 = vld [vmem:[%s4562 + $0x2f0] sm:$0xf]
  %v5636 = vld [vmem:[%s4562 + $0x2f4] sm:$0xf]
  %v5637 = vld [vmem:[%s4562 + $0x2f8] sm:$0xf]
  %v5638 = vld [vmem:[%s4562 + $0x2fc] sm:$0xf]
  %v5703 = vunpack.c.l.b16 %v5575
  %v5704 = vunpack.c.l.b16 %v5576
  %v5705 = vunpack.c.l.b16 %v5577
  %v5706 = vunpack.c.l.b16 %v5578
  %v5707 = vunpack.c.l.b16 %v5579
  %v5708 = vunpack.c.l.b16 %v5580
  %v5709 = vunpack.c.l.b16 %v5581
  %v5710 = vunpack.c.l.b16 %v5582
  %v5711 = vunpack.c.l.b16 %v5583
  %v5712 = vunpack.c.l.b16 %v5584
  %v5713 = vunpack.c.l.b16 %v5585
  %v5714 = vunpack.c.l.b16 %v5586
  %v5715 = vunpack.c.l.b16 %v5587
  %v5716 = vunpack.c.l.b16 %v5588
  %v5717 = vunpack.c.l.b16 %v5589
  %v5718 = vunpack.c.l.b16 %v5590
  %v5719 = vunpack.c.l.b16 %v5591
  %v5720 = vunpack.c.l.b16 %v5592
  %v5721 = vunpack.c.l.b16 %v5593
  %v5722 = vunpack.c.l.b16 %v5594
  %v5723 = vunpack.c.l.b16 %v5595
  %v5724 = vunpack.c.l.b16 %v5596
  %v5725 = vunpack.c.l.b16 %v5597
  %v5726 = vunpack.c.l.b16 %v5598
  %v5727 = vunpack.c.l.b16 %v5599
  %v5728 = vunpack.c.l.b16 %v5600
  %v5729 = vunpack.c.l.b16 %v5601
  %v5730 = vunpack.c.l.b16 %v5602
  %v5731 = vunpack.c.l.b16 %v5603
  %v5732 = vunpack.c.l.b16 %v5604
  %v5733 = vunpack.c.l.b16 %v5605
  %v5734 = vunpack.c.l.b16 %v5606
  %v5735 = vunpack.c.l.b16 %v5607
  %v5736 = vunpack.c.l.b16 %v5608
  %v5737 = vunpack.c.l.b16 %v5609
  %v5738 = vunpack.c.l.b16 %v5610
  %v5739 = vunpack.c.l.b16 %v5611
  %v5740 = vunpack.c.l.b16 %v5612
  %v5741 = vunpack.c.l.b16 %v5613
  %v5742 = vunpack.c.l.b16 %v5614
  %v5743 = vunpack.c.l.b16 %v5615
  %v5744 = vunpack.c.l.b16 %v5616
  %v5745 = vunpack.c.l.b16 %v5617
  %v5746 = vunpack.c.l.b16 %v5618
  %v5747 = vunpack.c.l.b16 %v5619
  %v5748 = vunpack.c.l.b16 %v5620
  %v5749 = vunpack.c.l.b16 %v5621
  %v5750 = vunpack.c.l.b16 %v5622
  %v5751 = vunpack.c.l.b16 %v5623
  %v5752 = vunpack.c.l.b16 %v5624
  %v5753 = vunpack.c.l.b16 %v5625
  %v5754 = vunpack.c.l.b16 %v5626
  %v5755 = vunpack.c.l.b16 %v5627
  %v5756 = vunpack.c.l.b16 %v5628
  %v5757 = vunpack.c.l.b16 %v5629
  %v5758 = vunpack.c.l.b16 %v5630
  %v5759 = vunpack.c.l.b16 %v5631
  %v5760 = vunpack.c.l.b16 %v5632
  %v5761 = vunpack.c.l.b16 %v5633
  %v5762 = vunpack.c.l.b16 %v5634
  %v5763 = vunpack.c.l.b16 %v5635
  %v5764 = vunpack.c.l.b16 %v5636
  %v5765 = vunpack.c.l.b16 %v5637
  %v5766 = vunpack.c.l.b16 %v5638
  %v5767 = vpack.c.b16 %v5704, %v5703
  %v5768 = vpack.c.b16 %v5706, %v5705
  %v5769 = vpack.c.b16 %v5708, %v5707
  %v5770 = vpack.c.b16 %v5710, %v5709
  %v5771 = vpack.c.b16 %v5712, %v5711
  %v5772 = vpack.c.b16 %v5714, %v5713
  %v5773 = vpack.c.b16 %v5716, %v5715
  %v5774 = vpack.c.b16 %v5718, %v5717
  %v5775 = vpack.c.b16 %v5720, %v5719
  %v5776 = vpack.c.b16 %v5722, %v5721
  %v5777 = vpack.c.b16 %v5724, %v5723
  %v5778 = vpack.c.b16 %v5726, %v5725
  %v5779 = vpack.c.b16 %v5728, %v5727
  %v5780 = vpack.c.b16 %v5730, %v5729
  %v5781 = vpack.c.b16 %v5732, %v5731
  %v5782 = vpack.c.b16 %v5734, %v5733
  %v5783 = vpack.c.b16 %v5736, %v5735
  %v5784 = vpack.c.b16 %v5738, %v5737
  %v5785 = vpack.c.b16 %v5740, %v5739
  %v5786 = vpack.c.b16 %v5742, %v5741
  %v5787 = vpack.c.b16 %v5744, %v5743
  %v5788 = vpack.c.b16 %v5746, %v5745
  %v5789 = vpack.c.b16 %v5748, %v5747
  %v5790 = vpack.c.b16 %v5750, %v5749
  %v5791 = vpack.c.b16 %v5752, %v5751
  %v5792 = vpack.c.b16 %v5754, %v5753
  %v5793 = vpack.c.b16 %v5756, %v5755
  %v5794 = vpack.c.b16 %v5758, %v5757
  %v5795 = vpack.c.b16 %v5760, %v5759
  %v5796 = vpack.c.b16 %v5762, %v5761
  %v5797 = vpack.c.b16 %v5764, %v5763
  %v5798 = vpack.c.b16 %v5766, %v5765
  %5831 = vmatprep.subr.bf16.mxu0 0
  %5832 = vmatpush1.bf16.msra.mxu0 %v5767
  %5833 = vmatprep.subr.bf16.mxu0 0
  %5834 = vmatpush1.bf16.msra.mxu0 %v5768
  %5835 = vmatprep.subr.bf16.mxu0 0
  %5836 = vmatpush1.bf16.msra.mxu0 %v5769
  %5837 = vmatprep.subr.bf16.mxu0 0
  %5838 = vmatpush1.bf16.msra.mxu0 %v5770
  %5839 = vmatprep.subr.bf16.mxu0 0
  %5840 = vmatpush1.bf16.msra.mxu0 %v5771
  %5841 = vmatprep.subr.bf16.mxu0 0
  %5842 = vmatpush1.bf16.msra.mxu0 %v5772
  %5843 = vmatprep.subr.bf16.mxu0 0
  %5844 = vmatpush1.bf16.msra.mxu0 %v5773
  %5845 = vmatprep.subr.bf16.mxu0 0
  %5846 = vmatpush1.bf16.msra.mxu0 %v5774
  %5847 = vmatprep.subr.bf16.mxu0 0
  %5848 = vmatpush1.bf16.msra.mxu0 %v5775
  %5849 = vmatprep.subr.bf16.mxu0 0
  %5850 = vmatpush1.bf16.msra.mxu0 %v5776
  %5851 = vmatprep.subr.bf16.mxu0 0
  %5852 = vmatpush1.bf16.msra.mxu0 %v5777
  %5853 = vmatprep.subr.bf16.mxu0 0
  %5854 = vmatpush1.bf16.msra.mxu0 %v5778
  %5855 = vmatprep.subr.bf16.mxu0 0
  %5856 = vmatpush1.bf16.msra.mxu0 %v5779
  %5857 = vmatprep.subr.bf16.mxu0 0
  %5858 = vmatpush1.bf16.msra.mxu0 %v5780
  %5859 = vmatprep.subr.bf16.mxu0 0
  %5860 = vmatpush1.bf16.msra.mxu0 %v5781
  %5861 = vmatprep.subr.bf16.mxu0 0
  %5862 = vmatpush1.bf16.msra.mxu0 %v5782
  %5863 = vmatprep.mubr.bf16.mxu0 %v5572
  %5864 = vmatmul.mubr.bf16.gmra.mrb[0].mxu0 %v5571
  %v5865 = vpop.f32.mrb[0].mxu0
  %v5866 = vadd.f32 0.0, %v5865
  %v5867 = vpop.f32.mrb[0].mxu0
  %v5868 = vpop.f32.mrb[0].mxu0
  %v5869 = vadd.f32 0.0, %v5868
  %v5870 = vpop.f32.mrb[0].mxu0
  %5871 = vdwg.mxu0
  %5872 = vmatprep.subr.bf16.mxu0 0
  %5873 = vmatpush1.bf16.msra.mxu0 %v5783
  %5874 = vmatprep.subr.bf16.mxu0 0
  %5875 = vmatpush1.bf16.msra.mxu0 %v5784
  %5876 = vmatprep.subr.bf16.mxu0 0
  %5877 = vmatpush1.bf16.msra.mxu0 %v5785
  %5878 = vmatprep.subr.bf16.mxu0 0
  %5879 = vmatpush1.bf16.msra.mxu0 %v5786
  %5880 = vmatprep.subr.bf16.mxu0 0
  %5881 = vmatpush1.bf16.msra.mxu0 %v5787
  %5882 = vmatprep.subr.bf16.mxu0 0
  %5883 = vmatpush1.bf16.msra.mxu0 %v5788
  %5884 = vmatprep.subr.bf16.mxu0 0
  %5885 = vmatpush1.bf16.msra.mxu0 %v5789
  %5886 = vmatprep.subr.bf16.mxu0 0
  %5887 = vmatpush1.bf16.msra.mxu0 %v5790
  %5888 = vmatprep.subr.bf16.mxu0 0
  %5889 = vmatpush1.bf16.msra.mxu0 %v5791
  %5890 = vmatprep.subr.bf16.mxu0 0
  %5891 = vmatpush1.bf16.msra.mxu0 %v5792
  %5892 = vmatprep.subr.bf16.mxu0 0
  %5893 = vmatpush1.bf16.msra.mxu0 %v5793
  %5894 = vmatprep.subr.bf16.mxu0 0
  %5895 = vmatpush1.bf16.msra.mxu0 %v5794
  %5896 = vmatprep.subr.bf16.mxu0 0
  %5897 = vmatpush1.bf16.msra.mxu0 %v5795
  %5898 = vmatprep.subr.bf16.mxu0 0
  %5899 = vmatpush1.bf16.msra.mxu0 %v5796
  %5900 = vmatprep.subr.bf16.mxu0 0
  %5901 = vmatpush1.bf16.msra.mxu0 %v5797
  %5902 = vmatprep.subr.bf16.mxu0 0
  %5903 = vmatpush1.bf16.msra.mxu0 %v5798
  %5904 = vmatprep.mubr.bf16.mxu0 %v5574
  %5905 = vmatmul.mubr.bf16.gmra.mrb[0].mxu0 %v5573
  %v5906 = vpop.f32.mrb[0].mxu0
  %v5907 = vadd.f32 %v5866, %v5906
  %v5908 = vpop.f32.mrb[0].mxu0
  %v5909 = vpop.f32.mrb[0].mxu0
  %v5910 = vadd.f32 %v5869, %v5909
  %v5911 = vpop.f32.mrb[0].mxu0
  %5912 = vdwg.mxu0
  %v5913 = vadd.f32 %v5401, %v5907
  %v5914 = vadd.f32 %v5404, %v5910
  %v5915 = vld [vmem:[%s4389 + $0x30] sm:$0xff]
  %v5916 = vld [vmem:[%s4389 + $0x38] sm:$0xff]
  %v5917 = vld [vmem:[%s4389 + $0x70] sm:$0xff]
  %v5918 = vld [vmem:[%s4389 + $0x78] sm:$0xff]
  %v5919 = vld [vmem:[%s4389 + $0xb0] sm:$0xff]
  %v5920 = vld [vmem:[%s4389 + $0xb8] sm:$0xff]
  %v5921 = vld [vmem:[%s4389 + $0xf0] sm:$0xff]
  %v5922 = vld [vmem:[%s4389 + $0xf8] sm:$0xff]
  %v5923 = vld [vmem:[%s4398 + $0xc] sm:$0xf]
  %v5925 = vlaneseq
  %v5926 = vshrl.u32 %v5925, 7
  %v5927 = vsub.s32 0, %v5926
  %v5928 = vrot.slane %v5923, %v5927
  %v5929 = vlaneseq
  %v5930 = vshrl.u32 %v5929, 7
  %v5931 = vsub.s32 1, %v5930
  %v5932 = vrot.slane %v5923, %v5931
  %v5933 = vlaneseq
  %v5934 = vshrl.u32 %v5933, 7
  %v5935 = vsub.s32 2, %v5934
  %v5936 = vrot.slane %v5923, %v5935
  %v5937 = vlaneseq
  %v5938 = vshrl.u32 %v5937, 7
  %v5939 = vsub.s32 3, %v5938
  %v5940 = vrot.slane %v5923, %v5939
  %v5953 = vunpack.c.l.b16 %v5915
  %v5954 = vunpack.c.h.b16 %v5915
  %v5955 = vunpack.c.l.b16 %v5916
  %v5956 = vunpack.c.h.b16 %v5916
  %v5957 = vunpack.c.l.b16 %v5917
  %v5958 = vunpack.c.h.b16 %v5917
  %v5959 = vunpack.c.l.b16 %v5918
  %v5960 = vunpack.c.h.b16 %v5918
  %v5961 = vunpack.c.l.b16 %v5919
  %v5962 = vunpack.c.h.b16 %v5919
  %v5963 = vunpack.c.l.b16 %v5920
  %v5964 = vunpack.c.h.b16 %v5920
  %v5965 = vunpack.c.l.b16 %v5921
  %v5966 = vunpack.c.h.b16 %v5921
  %v5967 = vunpack.c.l.b16 %v5922
  %v5968 = vunpack.c.h.b16 %v5922
  %v5969 = vpack.c.b16 %v5957, %v5953
  %v5970 = vpack.c.b16 %v5958, %v5954
  %v5971 = vpack.c.b16 %v5959, %v5955
  %v5972 = vpack.c.b16 %v5960, %v5956
  %v5973 = vpack.c.b16 %v5965, %v5961
  %v5974 = vpack.c.b16 %v5966, %v5962
  %v5975 = vpack.c.b16 %v5967, %v5963
  %v5976 = vpack.c.b16 %v5968, %v5964
  %5985 = vmatprep.subr.bf16.mxu0 %v5970
  %5986 = vmatpush1.bf16.msra.mxu0 %v5969
  %5987 = vmatprep.subr.bf16.mxu0 %v5974
  %5988 = vmatpush1.bf16.msra.mxu0 %v5973
  %5989 = vmatprep.subr.bf16.mxu0 0
  %5990 = vmatpush1.bf16.msra.mxu0 0
  %5991 = vmatprep.subr.bf16.mxu0 0
  %5992 = vmatpush1.bf16.msra.mxu0 0
  %5993 = vmatprep.subr.bf16.mxu0 0
  %5994 = vmatpush1.bf16.msra.mxu0 0
  %5995 = vmatprep.subr.bf16.mxu0 0
  %5996 = vmatpush1.bf16.msra.mxu0 0
  %5997 = vmatprep.subr.bf16.mxu0 0
  %5998 = vmatpush1.bf16.msra.mxu0 0
  %5999 = vmatprep.subr.bf16.mxu0 0
  %6000 = vmatpush1.bf16.msra.mxu0 0
  %6001 = vmatprep.subr.bf16.mxu0 0
  %6002 = vmatpush1.bf16.msra.mxu0 0
  %6003 = vmatprep.subr.bf16.mxu0 0
  %6004 = vmatpush1.bf16.msra.mxu0 0
  %6005 = vmatprep.subr.bf16.mxu0 0
  %6006 = vmatpush1.bf16.msra.mxu0 0
  %6007 = vmatprep.subr.bf16.mxu0 0
  %6008 = vmatpush1.bf16.msra.mxu0 0
  %6009 = vmatprep.subr.bf16.mxu0 0
  %6010 = vmatpush1.bf16.msra.mxu0 0
  %6011 = vmatprep.subr.bf16.mxu0 0
  %6012 = vmatpush1.bf16.msra.mxu0 0
  %6013 = vmatprep.subr.bf16.mxu0 0
  %6014 = vmatpush1.bf16.msra.mxu0 0
  %6015 = vmatprep.subr.bf16.mxu0 0
  %6016 = vmatpush1.bf16.msra.mxu0 0
  %6017 = vmatprep.mubr.bf16.mxu0 0
  %6018 = vmatmul.mubr.bf16.gmra.mrb[0].mxu0 %v4462
  %v6019 = vpop.f32.mrb[0].mxu0
  %v6020 = vadd.f32 %v5928, %v6019
  %v6021 = vpop.f32.mrb[0].mxu0
  %v6022 = vadd.f32 %v5932, %v6021
  %v6023 = vpop.f32.mrb[0].mxu0
  %v6024 = vadd.f32 %v5928, %v6023
  %v6025 = vpop.f32.mrb[0].mxu0
  %v6026 = vadd.f32 %v5932, %v6025
  %6027 = vdwg.mxu0
  %6028 = vmatprep.subr.bf16.mxu0 %v5972
  %6029 = vmatpush1.bf16.msra.mxu0 %v5971
  %6030 = vmatprep.subr.bf16.mxu0 %v5976
  %6031 = vmatpush1.bf16.msra.mxu0 %v5975
  %6032 = vmatprep.subr.bf16.mxu0 0
  %6033 = vmatpush1.bf16.msra.mxu0 0
  %6034 = vmatprep.subr.bf16.mxu0 0
  %6035 = vmatpush1.bf16.msra.mxu0 0
  %6036 = vmatprep.subr.bf16.mxu0 0
  %6037 = vmatpush1.bf16.msra.mxu0 0
  %6038 = vmatprep.subr.bf16.mxu0 0
  %6039 = vmatpush1.bf16.msra.mxu0 0
  %6040 = vmatprep.subr.bf16.mxu0 0
  %6041 = vmatpush1.bf16.msra.mxu0 0
  %6042 = vmatprep.subr.bf16.mxu0 0
  %6043 = vmatpush1.bf16.msra.mxu0 0
  %6044 = vmatprep.subr.bf16.mxu0 0
  %6045 = vmatpush1.bf16.msra.mxu0 0
  %6046 = vmatprep.subr.bf16.mxu0 0
  %6047 = vmatpush1.bf16.msra.mxu0 0
  %6048 = vmatprep.subr.bf16.mxu0 0
  %6049 = vmatpush1.bf16.msra.mxu0 0
  %6050 = vmatprep.subr.bf16.mxu0 0
  %6051 = vmatpush1.bf16.msra.mxu0 0
  %6052 = vmatprep.subr.bf16.mxu0 0
  %6053 = vmatpush1.bf16.msra.mxu0 0
  %6054 = vmatprep.subr.bf16.mxu0 0
  %6055 = vmatpush1.bf16.msra.mxu0 0
  %6056 = vmatprep.subr.bf16.mxu0 0
  %6057 = vmatpush1.bf16.msra.mxu0 0
  %6058 = vmatprep.subr.bf16.mxu0 0
  %6059 = vmatpush1.bf16.msra.mxu0 0
  %6060 = vmatprep.mubr.bf16.mxu0 0
  %6061 = vmatmul.mubr.bf16.gmra.mrb[0].mxu0 %v4462
  %v6062 = vpop.f32.mrb[0].mxu0
  %v6063 = vadd.f32 %v5936, %v6062
  %v6064 = vpop.f32.mrb[0].mxu0
  %v6065 = vadd.f32 %v5940, %v6064
  %v6066 = vpop.f32.mrb[0].mxu0
  %v6067 = vadd.f32 %v5936, %v6066
  %v6068 = vpop.f32.mrb[0].mxu0
  %v6069 = vadd.f32 %v5940, %v6068
  %6070 = vdwg.mxu0
  %v6071 = vmax.f32 %v6020, 0.0
  %v6072 = vmax.f32 %v6022, 0.0
  %v6073 = vmax.f32 %v6063, 0.0
  %v6074 = vmax.f32 %v6065, 0.0
  %v6075 = vmax.f32 %v6024, 0.0
  %v6076 = vmax.f32 %v6026, 0.0
  %v6077 = vmax.f32 %v6067, 0.0
  %v6078 = vmax.f32 %v6069, 0.0
  %v6079 = vpack.c.bf16 %v6075, %v6071
  %v6080 = vpack.c.bf16 %v6076, %v6072
  %v6081 = vpack.c.bf16 %v6077, %v6073
  %v6082 = vpack.c.bf16 %v6078, %v6074
  %v6083 = vld [vmem:[%s4562 + $0x300] sm:$0xf]
  %v6084 = vld [vmem:[%s4562 + $0x304] sm:$0xf]
  %v6085 = vld [vmem:[%s4562 + $0x308] sm:$0xf]
  %v6086 = vld [vmem:[%s4562 + $0x30c] sm:$0xf]
  %v6087 = vld [vmem:[%s4562 + $0x310] sm:$0xf]
  %v6088 = vld [vmem:[%s4562 + $0x314] sm:$0xf]
  %v6089 = vld [vmem:[%s4562 + $0x318] sm:$0xf]
  %v6090 = vld [vmem:[%s4562 + $0x31c] sm:$0xf]
  %v6091 = vld [vmem:[%s4562 + $0x320] sm:$0xf]
  %v6092 = vld [vmem:[%s4562 + $0x324] sm:$0xf]
  %v6093 = vld [vmem:[%s4562 + $0x328] sm:$0xf]
  %v6094 = vld [vmem:[%s4562 + $0x32c] sm:$0xf]
  %v6095 = vld [vmem:[%s4562 + $0x330] sm:$0xf]
  %v6096 = vld [vmem:[%s4562 + $0x334] sm:$0xf]
  %v6097 = vld [vmem:[%s4562 + $0x338] sm:$0xf]
  %v6098 = vld [vmem:[%s4562 + $0x33c] sm:$0xf]
  %v6099 = vld [vmem:[%s4562 + $0x340] sm:$0xf]
  %v6100 = vld [vmem:[%s4562 + $0x344] sm:$0xf]
  %v6101 = vld [vmem:[%s4562 + $0x348] sm:$0xf]
  %v6102 = vld [vmem:[%s4562 + $0x34c] sm:$0xf]
  %v6103 = vld [vmem:[%s4562 + $0x350] sm:$0xf]
  %v6104 = vld [vmem:[%s4562 + $0x354] sm:$0xf]
  %v6105 = vld [vmem:[%s4562 + $0x358] sm:$0xf]
  %v6106 = vld [vmem:[%s4562 + $0x35c] sm:$0xf]
  %v6107 = vld [vmem:[%s4562 + $0x360] sm:$0xf]
  %v6108 = vld [vmem:[%s4562 + $0x364] sm:$0xf]
  %v6109 = vld [vmem:[%s4562 + $0x368] sm:$0xf]
  %v6110 = vld [vmem:[%s4562 + $0x36c] sm:$0xf]
  %v6111 = vld [vmem:[%s4562 + $0x370] sm:$0xf]
  %v6112 = vld [vmem:[%s4562 + $0x374] sm:$0xf]
  %v6113 = vld [vmem:[%s4562 + $0x378] sm:$0xf]
  %v6114 = vld [vmem:[%s4562 + $0x37c] sm:$0xf]
  %v6115 = vld [vmem:[%s4562 + $0x380] sm:$0xf]
  %v6116 = vld [vmem:[%s4562 + $0x384] sm:$0xf]
  %v6117 = vld [vmem:[%s4562 + $0x388] sm:$0xf]
  %v6118 = vld [vmem:[%s4562 + $0x38c] sm:$0xf]
  %v6119 = vld [vmem:[%s4562 + $0x390] sm:$0xf]
  %v6120 = vld [vmem:[%s4562 + $0x394] sm:$0xf]
  %v6121 = vld [vmem:[%s4562 + $0x398] sm:$0xf]
  %v6122 = vld [vmem:[%s4562 + $0x39c] sm:$0xf]
  %v6123 = vld [vmem:[%s4562 + $0x3a0] sm:$0xf]
  %v6124 = vld [vmem:[%s4562 + $0x3a4] sm:$0xf]
  %v6125 = vld [vmem:[%s4562 + $0x3a8] sm:$0xf]
  %v6126 = vld [vmem:[%s4562 + $0x3ac] sm:$0xf]
  %v6127 = vld [vmem:[%s4562 + $0x3b0] sm:$0xf]
  %v6128 = vld [vmem:[%s4562 + $0x3b4] sm:$0xf]
  %v6129 = vld [vmem:[%s4562 + $0x3b8] sm:$0xf]
  %v6130 = vld [vmem:[%s4562 + $0x3bc] sm:$0xf]
  %v6131 = vld [vmem:[%s4562 + $0x3c0] sm:$0xf]
  %v6132 = vld [vmem:[%s4562 + $0x3c4] sm:$0xf]
  %v6133 = vld [vmem:[%s4562 + $0x3c8] sm:$0xf]
  %v6134 = vld [vmem:[%s4562 + $0x3cc] sm:$0xf]
  %v6135 = vld [vmem:[%s4562 + $0x3d0] sm:$0xf]
  %v6136 = vld [vmem:[%s4562 + $0x3d4] sm:$0xf]
  %v6137 = vld [vmem:[%s4562 + $0x3d8] sm:$0xf]
  %v6138 = vld [vmem:[%s4562 + $0x3dc] sm:$0xf]
  %v6139 = vld [vmem:[%s4562 + $0x3e0] sm:$0xf]
  %v6140 = vld [vmem:[%s4562 + $0x3e4] sm:$0xf]
  %v6141 = vld [vmem:[%s4562 + $0x3e8] sm:$0xf]
  %v6142 = vld [vmem:[%s4562 + $0x3ec] sm:$0xf]
  %v6143 = vld [vmem:[%s4562 + $0x3f0] sm:$0xf]
  %v6144 = vld [vmem:[%s4562 + $0x3f4] sm:$0xf]
  %v6145 = vld [vmem:[%s4562 + $0x3f8] sm:$0xf]
  %v6146 = vld [vmem:[%s4562 + $0x3fc] sm:$0xf]
  %v6211 = vunpack.c.l.b16 %v6083
  %v6212 = vunpack.c.l.b16 %v6084
  %v6213 = vunpack.c.l.b16 %v6085
  %v6214 = vunpack.c.l.b16 %v6086
  %v6215 = vunpack.c.l.b16 %v6087
  %v6216 = vunpack.c.l.b16 %v6088
  %v6217 = vunpack.c.l.b16 %v6089
  %v6218 = vunpack.c.l.b16 %v6090
  %v6219 = vunpack.c.l.b16 %v6091
  %v6220 = vunpack.c.l.b16 %v6092
  %v6221 = vunpack.c.l.b16 %v6093
  %v6222 = vunpack.c.l.b16 %v6094
  %v6223 = vunpack.c.l.b16 %v6095
  %v6224 = vunpack.c.l.b16 %v6096
  %v6225 = vunpack.c.l.b16 %v6097
  %v6226 = vunpack.c.l.b16 %v6098
  %v6227 = vunpack.c.l.b16 %v6099
  %v6228 = vunpack.c.l.b16 %v6100
  %v6229 = vunpack.c.l.b16 %v6101
  %v6230 = vunpack.c.l.b16 %v6102
  %v6231 = vunpack.c.l.b16 %v6103
  %v6232 = vunpack.c.l.b16 %v6104
  %v6233 = vunpack.c.l.b16 %v6105
  %v6234 = vunpack.c.l.b16 %v6106
  %v6235 = vunpack.c.l.b16 %v6107
  %v6236 = vunpack.c.l.b16 %v6108
  %v6237 = vunpack.c.l.b16 %v6109
  %v6238 = vunpack.c.l.b16 %v6110
  %v6239 = vunpack.c.l.b16 %v6111
  %v6240 = vunpack.c.l.b16 %v6112
  %v6241 = vunpack.c.l.b16 %v6113
  %v6242 = vunpack.c.l.b16 %v6114
  %v6243 = vunpack.c.l.b16 %v6115
  %v6244 = vunpack.c.l.b16 %v6116
  %v6245 = vunpack.c.l.b16 %v6117
  %v6246 = vunpack.c.l.b16 %v6118
  %v6247 = vunpack.c.l.b16 %v6119
  %v6248 = vunpack.c.l.b16 %v6120
  %v6249 = vunpack.c.l.b16 %v6121
  %v6250 = vunpack.c.l.b16 %v6122
  %v6251 = vunpack.c.l.b16 %v6123
  %v6252 = vunpack.c.l.b16 %v6124
  %v6253 = vunpack.c.l.b16 %v6125
  %v6254 = vunpack.c.l.b16 %v6126
  %v6255 = vunpack.c.l.b16 %v6127
  %v6256 = vunpack.c.l.b16 %v6128
  %v6257 = vunpack.c.l.b16 %v6129
  %v6258 = vunpack.c.l.b16 %v6130
  %v6259 = vunpack.c.l.b16 %v6131
  %v6260 = vunpack.c.l.b16 %v6132
  %v6261 = vunpack.c.l.b16 %v6133
  %v6262 = vunpack.c.l.b16 %v6134
  %v6263 = vunpack.c.l.b16 %v6135
  %v6264 = vunpack.c.l.b16 %v6136
  %v6265 = vunpack.c.l.b16 %v6137
  %v6266 = vunpack.c.l.b16 %v6138
  %v6267 = vunpack.c.l.b16 %v6139
  %v6268 = vunpack.c.l.b16 %v6140
  %v6269 = vunpack.c.l.b16 %v6141
  %v6270 = vunpack.c.l.b16 %v6142
  %v6271 = vunpack.c.l.b16 %v6143
  %v6272 = vunpack.c.l.b16 %v6144
  %v6273 = vunpack.c.l.b16 %v6145
  %v6274 = vunpack.c.l.b16 %v6146
  %v6275 = vpack.c.b16 %v6212, %v6211
  %v6276 = vpack.c.b16 %v6214, %v6213
  %v6277 = vpack.c.b16 %v6216, %v6215
  %v6278 = vpack.c.b16 %v6218, %v6217
  %v6279 = vpack.c.b16 %v6220, %v6219
  %v6280 = vpack.c.b16 %v6222, %v6221
  %v6281 = vpack.c.b16 %v6224, %v6223
  %v6282 = vpack.c.b16 %v6226, %v6225
  %v6283 = vpack.c.b16 %v6228, %v6227
  %v6284 = vpack.c.b16 %v6230, %v6229
  %v6285 = vpack.c.b16 %v6232, %v6231
  %v6286 = vpack.c.b16 %v6234, %v6233
  %v6287 = vpack.c.b16 %v6236, %v6235
  %v6288 = vpack.c.b16 %v6238, %v6237
  %v6289 = vpack.c.b16 %v6240, %v6239
  %v6290 = vpack.c.b16 %v6242, %v6241
  %v6291 = vpack.c.b16 %v6244, %v6243
  %v6292 = vpack.c.b16 %v6246, %v6245
  %v6293 = vpack.c.b16 %v6248, %v6247
  %v6294 = vpack.c.b16 %v6250, %v6249
  %v6295 = vpack.c.b16 %v6252, %v6251
  %v6296 = vpack.c.b16 %v6254, %v6253
  %v6297 = vpack.c.b16 %v6256, %v6255
  %v6298 = vpack.c.b16 %v6258, %v6257
  %v6299 = vpack.c.b16 %v6260, %v6259
  %v6300 = vpack.c.b16 %v6262, %v6261
  %v6301 = vpack.c.b16 %v6264, %v6263
  %v6302 = vpack.c.b16 %v6266, %v6265
  %v6303 = vpack.c.b16 %v6268, %v6267
  %v6304 = vpack.c.b16 %v6270, %v6269
  %v6305 = vpack.c.b16 %v6272, %v6271
  %v6306 = vpack.c.b16 %v6274, %v6273
  %6339 = vmatprep.subr.bf16.mxu0 0
  %6340 = vmatpush1.bf16.msra.mxu0 %v6275
  %6341 = vmatprep.subr.bf16.mxu0 0
  %6342 = vmatpush1.bf16.msra.mxu0 %v6276
  %6343 = vmatprep.subr.bf16.mxu0 0
  %6344 = vmatpush1.bf16.msra.mxu0 %v6277
  %6345 = vmatprep.subr.bf16.mxu0 0
  %6346 = vmatpush1.bf16.msra.mxu0 %v6278
  %6347 = vmatprep.subr.bf16.mxu0 0
  %6348 = vmatpush1.bf16.msra.mxu0 %v6279
  %6349 = vmatprep.subr.bf16.mxu0 0
  %6350 = vmatpush1.bf16.msra.mxu0 %v6280
  %6351 = vmatprep.subr.bf16.mxu0 0
  %6352 = vmatpush1.bf16.msra.mxu0 %v6281
  %6353 = vmatprep.subr.bf16.mxu0 0
  %6354 = vmatpush1.bf16.msra.mxu0 %v6282
  %6355 = vmatprep.subr.bf16.mxu0 0
  %6356 = vmatpush1.bf16.msra.mxu0 %v6283
  %6357 = vmatprep.subr.bf16.mxu0 0
  %6358 = vmatpush1.bf16.msra.mxu0 %v6284
  %6359 = vmatprep.subr.bf16.mxu0 0
  %6360 = vmatpush1.bf16.msra.mxu0 %v6285
  %6361 = vmatprep.subr.bf16.mxu0 0
  %6362 = vmatpush1.bf16.msra.mxu0 %v6286
  %6363 = vmatprep.subr.bf16.mxu0 0
  %6364 = vmatpush1.bf16.msra.mxu0 %v6287
  %6365 = vmatprep.subr.bf16.mxu0 0
  %6366 = vmatpush1.bf16.msra.mxu0 %v6288
  %6367 = vmatprep.subr.bf16.mxu0 0
  %6368 = vmatpush1.bf16.msra.mxu0 %v6289
  %6369 = vmatprep.subr.bf16.mxu0 0
  %6370 = vmatpush1.bf16.msra.mxu0 %v6290
  %6371 = vmatprep.mubr.bf16.mxu0 %v6080
  %6372 = vmatmul.mubr.bf16.gmra.mrb[0].mxu0 %v6079
  %v6373 = vpop.f32.mrb[0].mxu0
  %v6374 = vadd.f32 0.0, %v6373
  %v6375 = vpop.f32.mrb[0].mxu0
  %v6376 = vpop.f32.mrb[0].mxu0
  %v6377 = vadd.f32 0.0, %v6376
  %v6378 = vpop.f32.mrb[0].mxu0
  %6379 = vdwg.mxu0
  %6380 = vmatprep.subr.bf16.mxu0 0
  %6381 = vmatpush1.bf16.msra.mxu0 %v6291
  %6382 = vmatprep.subr.bf16.mxu0 0
  %6383 = vmatpush1.bf16.msra.mxu0 %v6292
  %6384 = vmatprep.subr.bf16.mxu0 0
  %6385 = vmatpush1.bf16.msra.mxu0 %v6293
  %6386 = vmatprep.subr.bf16.mxu0 0
  %6387 = vmatpush1.bf16.msra.mxu0 %v6294
  %6388 = vmatprep.subr.bf16.mxu0 0
  %6389 = vmatpush1.bf16.msra.mxu0 %v6295
  %6390 = vmatprep.subr.bf16.mxu0 0
  %6391 = vmatpush1.bf16.msra.mxu0 %v6296
  %6392 = vmatprep.subr.bf16.mxu0 0
  %6393 = vmatpush1.bf16.msra.mxu0 %v6297
  %6394 = vmatprep.subr.bf16.mxu0 0
  %6395 = vmatpush1.bf16.msra.mxu0 %v6298
  %6396 = vmatprep.subr.bf16.mxu0 0
  %6397 = vmatpush1.bf16.msra.mxu0 %v6299
  %6398 = vmatprep.subr.bf16.mxu0 0
  %6399 = vmatpush1.bf16.msra.mxu0 %v6300
  %6400 = vmatprep.subr.bf16.mxu0 0
  %6401 = vmatpush1.bf16.msra.mxu0 %v6301
  %6402 = vmatprep.subr.bf16.mxu0 0
  %6403 = vmatpush1.bf16.msra.mxu0 %v6302
  %6404 = vmatprep.subr.bf16.mxu0 0
  %6405 = vmatpush1.bf16.msra.mxu0 %v6303
  %6406 = vmatprep.subr.bf16.mxu0 0
  %6407 = vmatpush1.bf16.msra.mxu0 %v6304
  %6408 = vmatprep.subr.bf16.mxu0 0
  %6409 = vmatpush1.bf16.msra.mxu0 %v6305
  %6410 = vmatprep.subr.bf16.mxu0 0
  %6411 = vmatpush1.bf16.msra.mxu0 %v6306
  %6412 = vmatprep.mubr.bf16.mxu0 %v6082
  %6413 = vmatmul.mubr.bf16.gmra.mrb[0].mxu0 %v6081
  %v6414 = vpop.f32.mrb[0].mxu0
  %v6415 = vadd.f32 %v6374, %v6414
  %v6416 = vpop.f32.mrb[0].mxu0
  %v6417 = vpop.f32.mrb[0].mxu0
  %v6418 = vadd.f32 %v6377, %v6417
  %v6419 = vpop.f32.mrb[0].mxu0
  %6420 = vdwg.mxu0
  %v6421 = vadd.f32 %v5913, %v6415
  %v6422 = vadd.f32 %v5914, %v6418
  %s6423 = scalar_lea.vmem %s12, 1
  %v6424 = vld [vmem:[%s6423] sm:$0x1]
  %v6426 = vlaneseq
  %v6427 = vshrl.u32 %v6426, 7
  %v6428 = vsub.s32 0, %v6427
  %v6429 = vrot.slane %v6424, %v6428
  %v6431 = vadd.f32 %v6421, %v6429
  %v6432 = vadd.f32 %v6422, %v6429
  %v6433 = vadd.f32 %v4386, %v6431
  %v6434 = vadd.f32 %v4387, %v6432
  %s6435 = scalar_lea.vmem %s13, 1
  %v6436 = vld [vmem:[%s6435] sm:$0x1]
  %s6437 = scalar_lea.vmem %s14, 1
  %v6438 = vld [vmem:[%s6437] sm:$0x1]
  %v6439 = vsel %vm113, %v6433, 0.0
  %6440 = vadd.xlane.f32.xlu0 %v6439
  %v6441 = vpop.xlane.xlu0 %6440
  %v6442 = vsel %vm113, %v6434, 0.0
  %6443 = vadd.xlane.f32.xlu0 %v6442
  %v6444 = vpop.xlane.xlu0 %6443
  %v6445 = vmul.f32 %v6441, %v1158
  %v6446 = vmul.f32 %v6444, %v1158
  %v6447 = vsub.f32 %v6433, %v6445
  %v6448 = vsub.f32 %v6434, %v6446
  %v6449 = vmul.f32 %v6447, %v6447
  %v6450 = vmul.f32 %v6448, %v6448
  %v6451 = vsel %vm113, %v6449, 0.0
  %6452 = vadd.xlane.f32.xlu0 %v6451
  %v6453 = vpop.xlane.xlu0 %6452
  %v6454 = vsel %vm113, %v6450, 0.0
  %6455 = vadd.xlane.f32.xlu0 %v6454
  %v6456 = vpop.xlane.xlu0 %6455
  %v6457 = vmul.f32 %v6453, %v1158
  %v6458 = vmul.f32 %v6456, %v1158
  %v6459 = vadd.f32 %v6457, 1e-05
  %v6460 = vadd.f32 %v6458, 1e-05
  %v6461 = vrsqrt.pop %v6459
  %v6462 = vrsqrt.pop %v6460
  %v6463 = vmul.f32 %v6447, %v6461
  %v6464 = vmul.f32 %v6448, %v6462
  %v6466 = vlaneseq
  %v6467 = vshrl.u32 %v6466, 7
  %v6468 = vsub.s32 0, %v6467
  %v6469 = vrot.slane %v6436, %v6468
  %v6471 = vmul.f32 %v6463, %v6469
  %v6472 = vmul.f32 %v6464, %v6469
  %v6474 = vlaneseq
  %v6475 = vshrl.u32 %v6474, 7
  %v6476 = vsub.s32 0, %v6475
  %v6477 = vrot.slane %v6438, %v6476
  %v6479 = vadd.f32 %v6471, %v6477
  %v6480 = vadd.f32 %v6472, %v6477
  %v6481 = vsel %vm113, %v6479, 0.0
  %v6482 = vrot.slane %v6481, 4
  %v6483 = vadd.f32 %v6481, %v6482
  %v6484 = vrot.slane %v6483, 2
  %v6485 = vadd.f32 %v6483, %v6484
  %v6486 = vrot.slane %v6485, 1
  %v6487 = vadd.f32 %v6485, %v6486
  %v6488 = vsel %vm113, %v6480, 0.0
  %v6489 = vrot.slane %v6488, 4
  %v6490 = vadd.f32 %v6488, %v6489
  %v6491 = vrot.slane %v6490, 2
  %v6492 = vadd.f32 %v6490, %v6491
  %v6493 = vrot.slane %v6492, 1
  %v6494 = vadd.f32 %v6492, %v6493
  %v6495 = vrcp.pop 8.0
  %v6496 = vmul.f32 %v6487, %v6495
  %v6497 = vmul.f32 %v6494, %v6495
  %v6498 = vld [vmem:[%s15] sm:$0x1]
  %v6500 = vlaneseq
  %v6501 = vshrl.u32 %v6500, 7
  %v6502 = vsub.s32 0, %v6501
  %v6503 = vrot.slane %v6498, %v6502
  %v6505 = vmul.f32 %v6496, %v6503
  %v6506 = vmul.f32 %v6497, %v6503
  %v6509 = vrot.slane %v6506, 7
  %vm6510 = vcmask 1041409
  %v6511 = vsel %vm6510, %v6509, %v6505
  %vm6513 = vcmask 254976
  %v6514 = vsel %vm6513, %v6511, 0.0
  %6515 = vadd.xlane.f32.xlu0 %v6514
  %v6516 = vpop.xlane.xlu0 %6515
  %v6517 = vld [vmem:[#allocation2] sm:$0x1]
  %v6519 = vlaneseq
  %v6520 = vshrl.u32 %v6519, 7
  %v6521 = vsub.s32 0, %v6520
  %v6522 = vrot.slane %v6517, %v6521
  %v6524 = vadd.f32 %v6516, %v6522
  %vm6525 = vcmask 1024
  %6526 = vst.msk [vmem:[%s17] sm:$0x3] %vm6525, %v6524
  // Predicated region
  $region70: #{tpu_custom_call.1} parent=0 // pred_check
    _
  $region71: #{tpu_custom_call.1} parent=0 // pred_check_branch
    %6528 = sbr.rel (0) target = $region73
  $region72: #{tpu_custom_call.1} parent=0 // pred_region
    _
  $region73: #{tpu_custom_call.1} parent=0 // pred_fallthru
    _
  // Predicated region
  $region74: #{tpu_custom_call.1} parent=0 // pred_check
    _
  $region75: #{tpu_custom_call.1} parent=0 // pred_check_branch
    %6530 = sbr.rel (0) target = $region77
  $region76: #{tpu_custom_call.1} parent=0 // pred_region
    _
  $region77: #{tpu_custom_call.1} parent=0 // pred_fallthru
    _

</llo_original>
